<compile_context>
chip_gen: v6e
topology: v6e:2x2x1
jax: 0.10.0
libtpu: 0.0.40
codegen_flags: <defaults>
</compile_context>

<pallas_src>
import functools

import jax
import jax.numpy as jnp
from jax.experimental import pallas as pl
from jax.experimental.pallas import tpu as pltpu


def _round_up(x, m):
    return ((x + m - 1) // m) * m


# ---------------------------------------------------------------------------
# Pallas kernels
# ---------------------------------------------------------------------------
def matmul_bias_kernel(x_ref, w_ref, b_ref, o_ref):
    # x_ref: (TM, K), w_ref: (K, N), b_ref: (1, N), o_ref: (TM, N)
    o_ref[...] = (
        jnp.dot(x_ref[...], w_ref[...], preferred_element_type=jnp.float32)
        + b_ref[...]
    )


def fused_double_conv_kernel(enc_ref, up_ref, w1_ref, b1_ref, w2_ref, b2_ref,
                             out_ref, slab1_ref, z1pad_ref, slab2_ref, *, wu):
    """Fused [channel-concat -> conv3x3+ReLU -> conv3x3+ReLU] for one image.

    enc_ref / up_ref: ((Hu+2)*(Wu+2)+2, C) zero-padded images, flattened
      row-major with one slack row on each end, so the 9 conv taps for the
      "extended" output grid (Hu rows x Wp=Wu+2 cols) are plain shifted slices
      buf[dh*Wp+dw : dh*Wp+dw+Me].  The two extra columns per row are garbage
      and are masked to zero between the convs / dropped by the wrapper.
    """
    wp = wu + 2
    me, _ = out_ref.shape                 # me = Hu * Wp (extended pixel count)
    c_enc = enc_ref.shape[-1]
    c_up = up_ref.shape[-1]
    c_in = c_enc + c_up
    c_mid = b1_ref.shape[-1]

    # ---- conv1: build the (me, 9*c_in) tap slab in VMEM (concat fused in) ---
    for k in range(9):
        off = (k // 3) * wp + (k % 3)     # dh*Wp + dw
        slab1_ref[:, k * c_in: k * c_in + c_enc] = enc_ref[pl.ds(off, me), :]
        slab1_ref[:, k * c_in + c_enc: (k + 1) * c_in] = up_ref[pl.ds(off, me), :]

    # single long-K MXU matmul (K = 9*Cin) + bias + ReLU
    z = jnp.dot(slab1_ref[...], w1_ref[...], preferred_element_type=jnp.float32)
    z = jnp.maximum(z + b1_ref[...], 0.0)

    # zero the two padded-border columns so they serve as conv2's zero padding
    jc = jax.lax.broadcasted_iota(jnp.int32, (me, 1), 0) % wp
    z = jnp.where(jnp.logical_and(jc >= 1, jc <= wu), z, 0.0)

    # ---- stage z as a zero-padded flattened image (VMEM only, no HBM trip) --
    z1pad_ref[...] = jnp.zeros(z1pad_ref.shape, jnp.float32)
    z1pad_ref[pl.ds(wp + 1, me), :] = z

    # ---- conv2: same tap-slab trick on the VMEM-resident intermediate -------
    for k in range(9):
        off = (k // 3) * wp + (k % 3)
        slab2_ref[:, k * c_mid: (k + 1) * c_mid] = z1pad_ref[pl.ds(off, me), :]

    o = jnp.dot(slab2_ref[...], w2_ref[...], preferred_element_type=jnp.float32)
    out_ref[...] = jnp.maximum(o + b2_ref[...], 0.0)


# ---------------------------------------------------------------------------
# Pallas wrappers
# ---------------------------------------------------------------------------
def pallas_matmul_bias(x, w, b, tile_m_max=512):
    M, K = x.shape
    N = w.shape[1]
    tile_m = min(tile_m_max, _round_up(M, 8))
    Mp = _round_up(M, tile_m)
    if Mp != M:
        x = jnp.pad(x, ((0, Mp - M), (0, 0)))
    out = pl.pallas_call(
        matmul_bias_kernel,
        out_shape=jax.ShapeDtypeStruct((Mp, N), jnp.float32),
        grid=(Mp // tile_m,),
        in_specs=[
            pl.BlockSpec((tile_m, K), lambda i: (i, 0)),
            pl.BlockSpec((K, N), lambda i: (0, 0)),
            pl.BlockSpec((1, N), lambda i: (0, 0)),
        ],
        out_specs=pl.BlockSpec((tile_m, N), lambda i: (i, 0)),
        compiler_params=pltpu.CompilerParams(dimension_semantics=("parallel",)),
    )(x, w, b.reshape(1, N))
    return out[:M]


def fold_conv3x3_weights(w_oihw):
    # PyTorch OIHW (Cout, Cin, 3, 3) -> (9*Cin, Cout); row = (dh*3+dw)*Cin + cin
    co, ci = w_oihw.shape[0], w_oihw.shape[1]
    return jnp.transpose(w_oihw, (2, 3, 1, 0)).reshape(9 * ci, co)


def pad_flatten_nhwc(t):
    # (N, H, W, C) -> (N, (H+2)*(W+2) + 2, C): spatial zero pad, row-major
    # flatten, one slack row on each end (so all 9 tap slices stay in bounds).
    n, h, w, c = t.shape
    tp = jnp.pad(t, ((0, 0), (1, 1), (1, 1), (0, 0)))
    tf = tp.reshape(n, (h + 2) * (w + 2), c)
    return jnp.pad(tf, ((0, 0), (1, 1), (0, 0)))


def pallas_fused_double_conv(enc_pf, up_pf, w1, b1, w2, b2, hu, wu):
    n, L, c_enc = enc_pf.shape
    c_up = up_pf.shape[-1]
    c_in = c_enc + c_up
    c_mid = b1.shape[0]
    c_out = b2.shape[0]
    wp = wu + 2
    me = hu * wp

    kernel = functools.partial(fused_double_conv_kernel, wu=wu)
    return pl.pallas_call(
        kernel,
        out_shape=jax.ShapeDtypeStruct((n, me, c_out), jnp.float32),
        grid=(n,),
        in_specs=[
            pl.BlockSpec((None, L, c_enc), lambda i: (i, 0, 0)),
            pl.BlockSpec((None, L, c_up), lambda i: (i, 0, 0)),
            pl.BlockSpec((9 * c_in, c_mid), lambda i: (0, 0)),
            pl.BlockSpec((1, c_mid), lambda i: (0, 0)),
            pl.BlockSpec((9 * c_mid, c_out), lambda i: (0, 0)),
            pl.BlockSpec((1, c_out), lambda i: (0, 0)),
        ],
        out_specs=pl.BlockSpec((None, me, c_out), lambda i: (i, 0, 0)),
        scratch_shapes=[
            pltpu.VMEM((me, 9 * c_in), jnp.float32),   # conv1 tap slab
            pltpu.VMEM((L, c_mid), jnp.float32),       # padded intermediate z
            pltpu.VMEM((me, 9 * c_mid), jnp.float32),  # conv2 tap slab
        ],
        compiler_params=pltpu.CompilerParams(dimension_semantics=("parallel",)),
    )(enc_pf, up_pf, w1, b1.reshape(1, c_mid), w2, b2.reshape(1, c_out))


# ---------------------------------------------------------------------------
# UNetDecoderBlock forward (with_bn=False)
# ---------------------------------------------------------------------------
def unet_decoder_block_forward(x_nchw, enc_nchw, params):
    N, Ci, H, W = x_nchw.shape
    Co = params["up_b"].shape[0]
    Hu, Wu = 2 * H, 2 * W
    Wp = Wu + 2

    # --- up_conv: ConvTranspose2d(Ci, Co, k=2, s=2, p=0) as one matmul ------
    x = jnp.transpose(x_nchw, (0, 2, 3, 1)).reshape(N * H * W, Ci)
    w_up = jnp.transpose(params["up_w"], (0, 2, 3, 1)).reshape(Ci, 4 * Co)
    b_up = jnp.tile(params["up_b"], 4)
    y = pallas_matmul_bias(x, w_up, b_up)                      # (N*H*W, 4*Co)
    # scatter the (2,2) kernel taps into the 2x upsampled grid (XLA glue)
    up = (
        y.reshape(N, H, W, 2, 2, Co)
        .transpose(0, 1, 3, 2, 4, 5)
        .reshape(N, Hu, Wu, Co)
    )

    # --- fused [concat -> conv3x3+ReLU -> conv3x3+ReLU] ----------------------
    enc = jnp.transpose(enc_nchw, (0, 2, 3, 1))                # NHWC
    enc_pf = pad_flatten_nhwc(enc)                             # (N, L, Ce)
    up_pf = pad_flatten_nhwc(up)                               # (N, L, Co)
    w1 = fold_conv3x3_weights(params["c1_w"])                  # (9*Cin, Cm)
    w2 = fold_conv3x3_weights(params["c2_w"])                  # (9*Cm, Co)
    out_ext = pallas_fused_double_conv(
        enc_pf, up_pf, w1, params["c1_b"], w2, params["c2_b"], Hu, Wu)

    # drop the two garbage border columns per row; NHWC -> NCHW
    out = out_ext.reshape(N, Hu, Wp, Co)[:, :, 1:Wu + 1, :]
    return jnp.transpose(out, (0, 3, 1, 2))


# ---------------------------------------------------------------------------
# Deterministic parameter init (shapes follow the PyTorch module __init__)
# ---------------------------------------------------------------------------
def init_params(key, in_channels, out_channels):
    ks = jax.random.split(key, 6)
    s = 0.1
    return dict(
        up_w=jax.random.normal(ks[0], (in_channels, out_channels, 2, 2), jnp.float32) * s,
        up_b=jax.random.normal(ks[1], (out_channels,), jnp.float32) * s,
        c1_w=jax.random.normal(ks[2], (out_channels, in_channels, 3, 3), jnp.float32) * s,
        c1_b=jax.random.normal(ks[3], (out_channels,), jnp.float32) * s,
        c2_w=jax.random.normal(ks[4], (out_channels, out_channels, 3, 3), jnp.float32) * s,
        c2_b=jax.random.normal(ks[5], (out_channels,), jnp.float32) * s,
    )


# ---------------------------------------------------------------------------
# Pure-JAX reference (independent code path) for verification
# ---------------------------------------------------------------------------
def ref_forward(x_nchw, enc_nchw, params):
    N, Ci, H, W = x_nchw.shape
    Co = params["up_b"].shape[0]
    hp = jax.lax.Precision.HIGHEST
    # ConvTranspose2d(k=2, s=2, p=0): out[n,o,2h+p,2w+q] = sum_i x[n,i,h,w]*W[i,o,p,q]
    y = jnp.einsum("nihw,iopq->nohpwq", x_nchw, params["up_w"], precision=hp)
    y = y.reshape(N, Co, 2 * H, 2 * W) + params["up_b"][None, :, None, None]
    cat = jnp.concatenate([enc_nchw, y], axis=1)

    def conv3(z, w, b):
        out = jax.lax.conv_general_dilated(
            z, w, (1, 1), ((1, 1), (1, 1)),
            dimension_numbers=("NCHW", "OIHW", "NCHW"), precision=hp)
        return jnp.maximum(out + b[None, :, None, None], 0.0)

    z = conv3(cat, params["c1_w"], params["c1_b"])
    z = conv3(z, params["c2_w"], params["c2_b"])
    return z


if __name__ == "__main__":
    key = jax.random.PRNGKey(0)
    kx, ke, kp = jax.random.split(key, 3)

    in_ch, out_ch = 64, 32        # encoder skip has in_ch - out_ch = 32 channels
    N, H, W = 2, 8, 8             # x spatial 8x8 -> upsampled 16x16

    x = jax.random.normal(kx, (N, in_ch, H, W), jnp.float32)
    enc = jax.random.normal(ke, (N, in_ch - out_ch, 2 * H, 2 * W), jnp.float32)
    params = init_params(kp, in_ch, out_ch)

    out = jax.jit(unet_decoder_block_forward)(x, enc, params)
    out = jax.block_until_ready(out)

    ref = ref_forward(x, enc, params)
    assert out.shape == (N, out_ch, 2 * H, 2 * W), out.shape
    max_err = float(jnp.max(jnp.abs(out - ref)))
    assert jnp.allclose(out, ref, rtol=1e-2, atol=1e-2), f"max_err={max_err}"

    print("KERNEL_OK")
</pallas_src>

<mosaic_0001>
module attributes {stable_mosaic.version = 11 : i64} {
  func.func @matmul_bias_kernel(%arg0: i32, %arg1: memref<128x64xf32, #tpu.memory_space<vmem>>, %arg2: memref<64x128xf32, #tpu.memory_space<vmem>>, %arg3: memref<1x128xf32, #tpu.memory_space<vmem>>, %arg4: memref<128x128xf32, #tpu.memory_space<vmem>>) attributes {dimension_semantics = [#tpu.dimension_semantics<parallel>], iteration_bounds = array<i64: 1>, scalar_prefetch = 0 : i64, scratch_operands = 0 : i64, tpu.core_type = #tpu.core_type<tc>, window_params = [{transform_indices = @transform_0, window_bounds = array<i64: 128, 64>}, {pipeline_mode = #tpu.pipeline_mode<synchronous>, transform_indices = @transform_1, window_bounds = array<i64: 64, 128>}, {pipeline_mode = #tpu.pipeline_mode<synchronous>, transform_indices = @transform_2, window_bounds = array<i64: 1, 128>}, {transform_indices = @transform_3, window_bounds = array<i64: 128, 128>}]} {
    %c0 = arith.constant 0 : index
    %c0_0 = arith.constant 0 : index
    %0 = vector.load %arg1[%c0, %c0_0] : memref<128x64xf32, #tpu.memory_space<vmem>>, vector<128x64xf32>
    %c0_1 = arith.constant 0 : index
    %c0_2 = arith.constant 0 : index
    %1 = vector.load %arg2[%c0_1, %c0_2] : memref<64x128xf32, #tpu.memory_space<vmem>>, vector<64x128xf32>
    %cst = arith.constant dense<0.000000e+00> : vector<128x128xf32>
    %2 = tpu.matmul %0, %1, %cst {dimension_numbers = #tpu.dot_dimension_numbers<[1], [0], [0], [1], [0, 0, 1, 1], [], []>} : vector<128x64xf32>, vector<64x128xf32>, vector<128x128xf32> -> vector<128x128xf32>
    %c0_3 = arith.constant 0 : index
    %c0_4 = arith.constant 0 : index
    %3 = vector.load %arg3[%c0_3, %c0_4] : memref<1x128xf32, #tpu.memory_space<vmem>>, vector<1x128xf32>
    %4 = vector.broadcast %3 : vector<1x128xf32> to vector<128x128xf32>
    %5 = arith.addf %2, %4 : vector<128x128xf32>
    %c0_5 = arith.constant 0 : index
    %c0_6 = arith.constant 0 : index
    %6 = vector.load %arg4[%c0_5, %c0_6] : memref<128x128xf32, #tpu.memory_space<vmem>>, vector<128x128xf32>
    tpu.vector_store %arg4[%c0_5, %c0_6], %5 {strides = array<i32>} : memref<128x128xf32, #tpu.memory_space<vmem>>, vector<128x128xf32>,
    return
  }
  func.func @transform_0(%arg0: i32) -> (i32, i32) {
    %c0_i32 = arith.constant 0 : i32
    %c0_i32_0 = arith.constant 0 : i32
    return %arg0, %c0_i32 : i32, i32
  }
  func.func @transform_1(%arg0: i32) -> (i32, i32) {
    %c0_i32 = arith.constant 0 : i32
    %c0_i32_0 = arith.constant 0 : i32
    %c0_i32_1 = arith.constant 0 : i32
    return %c0_i32, %c0_i32_0 : i32, i32
  }
  func.func @transform_2(%arg0: i32) -> (i32, i32) {
    %c0_i32 = arith.constant 0 : i32
    %c0_i32_0 = arith.constant 0 : i32
    %c0_i32_1 = arith.constant 0 : i32
    return %c0_i32, %c0_i32_0 : i32, i32
  }
  func.func @transform_3(%arg0: i32) -> (i32, i32) {
    %c0_i32 = arith.constant 0 : i32
    %c0_i32_0 = arith.constant 0 : i32
    return %arg0, %c0_i32 : i32, i32
  }
}

module attributes {stable_mosaic.version = 11 : i64} {
  func.func @fused_double_conv_kernel(%arg0: i32, %arg1: memref<1x326x32xf32, #tpu.memory_space<vmem>>, %arg2: memref<1x326x32xf32, #tpu.memory_space<vmem>>, %arg3: memref<576x32xf32, #tpu.memory_space<vmem>>, %arg4: memref<1x32xf32, #tpu.memory_space<vmem>>, %arg5: memref<288x32xf32, #tpu.memory_space<vmem>>, %arg6: memref<1x32xf32, #tpu.memory_space<vmem>>, %arg7: memref<1x288x32xf32, #tpu.memory_space<vmem>>, %arg8: memref<288x576xf32, #tpu.memory_space<vmem>>, %arg9: memref<326x32xf32, #tpu.memory_space<vmem>>, %arg10: memref<288x288xf32, #tpu.memory_space<vmem>>) attributes {dimension_semantics = [#tpu.dimension_semantics<parallel>], iteration_bounds = array<i64: 2>, scalar_prefetch = 0 : i64, scratch_operands = 3 : i64, tpu.core_type = #tpu.core_type<tc>, window_params = [{transform_indices = @transform_0, window_bounds = array<i64: 1, 326, 32>}, {transform_indices = @transform_1, window_bounds = array<i64: 1, 326, 32>}, {pipeline_mode = #tpu.pipeline_mode<synchronous>, transform_indices = @transform_2, window_bounds = array<i64: 576, 32>}, {pipeline_mode = #tpu.pipeline_mode<synchronous>, transform_indices = @transform_3, window_bounds = array<i64: 1, 32>}, {pipeline_mode = #tpu.pipeline_mode<synchronous>, transform_indices = @transform_4, window_bounds = array<i64: 288, 32>}, {pipeline_mode = #tpu.pipeline_mode<synchronous>, transform_indices = @transform_5, window_bounds = array<i64: 1, 32>}, {transform_indices = @transform_6, window_bounds = array<i64: 1, 288, 32>}]} {
    %c0 = arith.constant 0 : index
    %c0_0 = arith.constant 0 : index
    %c0_1 = arith.constant 0 : index
    %0 = vector.load %arg1[%c0, %c0_0, %c0_1] : memref<1x326x32xf32, #tpu.memory_space<vmem>>, vector<1x288x32xf32>
    %1 = vector.shape_cast %0 : vector<1x288x32xf32> to vector<288x32xf32>
    %c0_2 = arith.constant 0 : index
    %c0_3 = arith.constant 0 : index
    %2 = vector.load %arg8[%c0_2, %c0_3] : memref<288x576xf32, #tpu.memory_space<vmem>>, vector<288x32xf32>
    tpu.vector_store %arg8[%c0_2, %c0_3], %1 {strides = array<i32>} : memref<288x576xf32, #tpu.memory_space<vmem>>, vector<288x32xf32>,
    %c0_4 = arith.constant 0 : index
    %c0_5 = arith.constant 0 : index
    %c0_6 = arith.constant 0 : index
    %3 = vector.load %arg2[%c0_4, %c0_5, %c0_6] : memref<1x326x32xf32, #tpu.memory_space<vmem>>, vector<1x288x32xf32>
    %4 = vector.shape_cast %3 : vector<1x288x32xf32> to vector<288x32xf32>
    %c0_7 = arith.constant 0 : index
    %c32 = arith.constant 32 : index
    %5 = vector.load %arg8[%c0_7, %c32] : memref<288x576xf32, #tpu.memory_space<vmem>>, vector<288x32xf32>
    tpu.vector_store %arg8[%c0_7, %c32], %4 {strides = array<i32>} : memref<288x576xf32, #tpu.memory_space<vmem>>, vector<288x32xf32>,
    %c0_8 = arith.constant 0 : index
    %c1 = arith.constant 1 : index
    %c0_9 = arith.constant 0 : index
    %6 = vector.load %arg1[%c0_8, %c1, %c0_9] : memref<1x326x32xf32, #tpu.memory_space<vmem>>, vector<1x288x32xf32>
    %7 = vector.shape_cast %6 : vector<1x288x32xf32> to vector<288x32xf32>
    %c0_10 = arith.constant 0 : index
    %c64 = arith.constant 64 : index
    %8 = vector.load %arg8[%c0_10, %c64] : memref<288x576xf32, #tpu.memory_space<vmem>>, vector<288x32xf32>
    tpu.vector_store %arg8[%c0_10, %c64], %7 {strides = array<i32>} : memref<288x576xf32, #tpu.memory_space<vmem>>, vector<288x32xf32>,
    %c0_11 = arith.constant 0 : index
    %c1_12 = arith.constant 1 : index
    %c0_13 = arith.constant 0 : index
    %9 = vector.load %arg2[%c0_11, %c1_12, %c0_13] : memref<1x326x32xf32, #tpu.memory_space<vmem>>, vector<1x288x32xf32>
    %10 = vector.shape_cast %9 : vector<1x288x32xf32> to vector<288x32xf32>
    %c0_14 = arith.constant 0 : index
    %c96 = arith.constant 96 : index
    %11 = vector.load %arg8[%c0_14, %c96] : memref<288x576xf32, #tpu.memory_space<vmem>>, vector<288x32xf32>
    tpu.vector_store %arg8[%c0_14, %c96], %10 {strides = array<i32>} : memref<288x576xf32, #tpu.memory_space<vmem>>, vector<288x32xf32>,
    %c0_15 = arith.constant 0 : index
    %c2 = arith.constant 2 : index
    %c0_16 = arith.constant 0 : index
    %12 = vector.load %arg1[%c0_15, %c2, %c0_16] : memref<1x326x32xf32, #tpu.memory_space<vmem>>, vector<1x288x32xf32>
    %13 = vector.shape_cast %12 : vector<1x288x32xf32> to vector<288x32xf32>
    %c0_17 = arith.constant 0 : index
    %c128 = arith.constant 128 : index
    %14 = vector.load %arg8[%c0_17, %c128] : memref<288x576xf32, #tpu.memory_space<vmem>>, vector<288x32xf32>
    tpu.vector_store %arg8[%c0_17, %c128], %13 {strides = array<i32>} : memref<288x576xf32, #tpu.memory_space<vmem>>, vector<288x32xf32>,
    %c0_18 = arith.constant 0 : index
    %c2_19 = arith.constant 2 : index
    %c0_20 = arith.constant 0 : index
    %15 = vector.load %arg2[%c0_18, %c2_19, %c0_20] : memref<1x326x32xf32, #tpu.memory_space<vmem>>, vector<1x288x32xf32>
    %16 = vector.shape_cast %15 : vector<1x288x32xf32> to vector<288x32xf32>
    %c0_21 = arith.constant 0 : index
    %c160 = arith.constant 160 : index
    %17 = vector.load %arg8[%c0_21, %c160] : memref<288x576xf32, #tpu.memory_space<vmem>>, vector<288x32xf32>
    tpu.vector_store %arg8[%c0_21, %c160], %16 {strides = array<i32>} : memref<288x576xf32, #tpu.memory_space<vmem>>, vector<288x32xf32>,
    %c0_22 = arith.constant 0 : index
    %c18 = arith.constant 18 : index
    %c0_23 = arith.constant 0 : index
    %18 = vector.load %arg1[%c0_22, %c18, %c0_23] : memref<1x326x32xf32, #tpu.memory_space<vmem>>, vector<1x288x32xf32>
    %19 = vector.shape_cast %18 : vector<1x288x32xf32> to vector<288x32xf32>
    %c0_24 = arith.constant 0 : index
    %c192 = arith.constant 192 : index
    %20 = vector.load %arg8[%c0_24, %c192] : memref<288x576xf32, #tpu.memory_space<vmem>>, vector<288x32xf32>
    tpu.vector_store %arg8[%c0_24, %c192], %19 {strides = array<i32>} : memref<288x576xf32, #tpu.memory_space<vmem>>, vector<288x32xf32>,
    %c0_25 = arith.constant 0 : index
    %c18_26 = arith.constant 18 : index
    %c0_27 = arith.constant 0 : index
    %21 = vector.load %arg2[%c0_25, %c18_26, %c0_27] : memref<1x326x32xf32, #tpu.memory_space<vmem>>, vector<1x288x32xf32>
    %22 = vector.shape_cast %21 : vector<1x288x32xf32> to vector<288x32xf32>
    %c0_28 = arith.constant 0 : index
    %c224 = arith.constant 224 : index
    %23 = vector.load %arg8[%c0_28, %c224] : memref<288x576xf32, #tpu.memory_space<vmem>>, vector<288x32xf32>
    tpu.vector_store %arg8[%c0_28, %c224], %22 {strides = array<i32>} : memref<288x576xf32, #tpu.memory_space<vmem>>, vector<288x32xf32>,
    %c0_29 = arith.constant 0 : index
    %c19 = arith.constant 19 : index
    %c0_30 = arith.constant 0 : index
    %24 = vector.load %arg1[%c0_29, %c19, %c0_30] : memref<1x326x32xf32, #tpu.memory_space<vmem>>, vector<1x288x32xf32>
    %25 = vector.shape_cast %24 : vector<1x288x32xf32> to vector<288x32xf32>
    %c0_31 = arith.constant 0 : index
    %c256 = arith.constant 256 : index
    %26 = vector.load %arg8[%c0_31, %c256] : memref<288x576xf32, #tpu.memory_space<vmem>>, vector<288x32xf32>
    tpu.vector_store %arg8[%c0_31, %c256], %25 {strides = array<i32>} : memref<288x576xf32, #tpu.memory_space<vmem>>, vector<288x32xf32>,
    %c0_32 = arith.constant 0 : index
    %c19_33 = arith.constant 19 : index
    %c0_34 = arith.constant 0 : index
    %27 = vector.load %arg2[%c0_32, %c19_33, %c0_34] : memref<1x326x32xf32, #tpu.memory_space<vmem>>, vector<1x288x32xf32>
    %28 = vector.shape_cast %27 : vector<1x288x32xf32> to vector<288x32xf32>
    %c0_35 = arith.constant 0 : index
    %c288 = arith.constant 288 : index
    %29 = vector.load %arg8[%c0_35, %c288] : memref<288x576xf32, #tpu.memory_space<vmem>>, vector<288x32xf32>
    tpu.vector_store %arg8[%c0_35, %c288], %28 {strides = array<i32>} : memref<288x576xf32, #tpu.memory_space<vmem>>, vector<288x32xf32>,
    %c0_36 = arith.constant 0 : index
    %c20 = arith.constant 20 : index
    %c0_37 = arith.constant 0 : index
    %30 = vector.load %arg1[%c0_36, %c20, %c0_37] : memref<1x326x32xf32, #tpu.memory_space<vmem>>, vector<1x288x32xf32>
    %31 = vector.shape_cast %30 : vector<1x288x32xf32> to vector<288x32xf32>
    %c0_38 = arith.constant 0 : index
    %c320 = arith.constant 320 : index
    %32 = vector.load %arg8[%c0_38, %c320] : memref<288x576xf32, #tpu.memory_space<vmem>>, vector<288x32xf32>
    tpu.vector_store %arg8[%c0_38, %c320], %31 {strides = array<i32>} : memref<288x576xf32, #tpu.memory_space<vmem>>, vector<288x32xf32>,
    %c0_39 = arith.constant 0 : index
    %c20_40 = arith.constant 20 : index
    %c0_41 = arith.constant 0 : index
    %33 = vector.load %arg2[%c0_39, %c20_40, %c0_41] : memref<1x326x32xf32, #tpu.memory_space<vmem>>, vector<1x288x32xf32>
    %34 = vector.shape_cast %33 : vector<1x288x32xf32> to vector<288x32xf32>
    %c0_42 = arith.constant 0 : index
    %c352 = arith.constant 352 : index
    %35 = vector.load %arg8[%c0_42, %c352] : memref<288x576xf32, #tpu.memory_space<vmem>>, vector<288x32xf32>
    tpu.vector_store %arg8[%c0_42, %c352], %34 {strides = array<i32>} : memref<288x576xf32, #tpu.memory_space<vmem>>, vector<288x32xf32>,
    %c0_43 = arith.constant 0 : index
    %c36 = arith.constant 36 : index
    %c0_44 = arith.constant 0 : index
    %36 = vector.load %arg1[%c0_43, %c36, %c0_44] : memref<1x326x32xf32, #tpu.memory_space<vmem>>, vector<1x288x32xf32>
    %37 = vector.shape_cast %36 : vector<1x288x32xf32> to vector<288x32xf32>
    %c0_45 = arith.constant 0 : index
    %c384 = arith.constant 384 : index
    %38 = vector.load %arg8[%c0_45, %c384] : memref<288x576xf32, #tpu.memory_space<vmem>>, vector<288x32xf32>
    tpu.vector_store %arg8[%c0_45, %c384], %37 {strides = array<i32>} : memref<288x576xf32, #tpu.memory_space<vmem>>, vector<288x32xf32>,
    %c0_46 = arith.constant 0 : index
    %c36_47 = arith.constant 36 : index
    %c0_48 = arith.constant 0 : index
    %39 = vector.load %arg2[%c0_46, %c36_47, %c0_48] : memref<1x326x32xf32, #tpu.memory_space<vmem>>, vector<1x288x32xf32>
    %40 = vector.shape_cast %39 : vector<1x288x32xf32> to vector<288x32xf32>
    %c0_49 = arith.constant 0 : index
    %c416 = arith.constant 416 : index
    %41 = vector.load %arg8[%c0_49, %c416] : memref<288x576xf32, #tpu.memory_space<vmem>>, vector<288x32xf32>
    tpu.vector_store %arg8[%c0_49, %c416], %40 {strides = array<i32>} : memref<288x576xf32, #tpu.memory_space<vmem>>, vector<288x32xf32>,
    %c0_50 = arith.constant 0 : index
    %c37 = arith.constant 37 : index
    %c0_51 = arith.constant 0 : index
    %42 = vector.load %arg1[%c0_50, %c37, %c0_51] : memref<1x326x32xf32, #tpu.memory_space<vmem>>, vector<1x288x32xf32>
    %43 = vector.shape_cast %42 : vector<1x288x32xf32> to vector<288x32xf32>
    %c0_52 = arith.constant 0 : index
    %c448 = arith.constant 448 : index
    %44 = vector.load %arg8[%c0_52, %c448] : memref<288x576xf32, #tpu.memory_space<vmem>>, vector<288x32xf32>
    tpu.vector_store %arg8[%c0_52, %c448], %43 {strides = array<i32>} : memref<288x576xf32, #tpu.memory_space<vmem>>, vector<288x32xf32>,
    %c0_53 = arith.constant 0 : index
    %c37_54 = arith.constant 37 : index
    %c0_55 = arith.constant 0 : index
    %45 = vector.load %arg2[%c0_53, %c37_54, %c0_55] : memref<1x326x32xf32, #tpu.memory_space<vmem>>, vector<1x288x32xf32>
    %46 = vector.shape_cast %45 : vector<1x288x32xf32> to vector<288x32xf32>
    %c0_56 = arith.constant 0 : index
    %c480 = arith.constant 480 : index
    %47 = vector.load %arg8[%c0_56, %c480] : memref<288x576xf32, #tpu.memory_space<vmem>>, vector<288x32xf32>
    tpu.vector_store %arg8[%c0_56, %c480], %46 {strides = array<i32>} : memref<288x576xf32, #tpu.memory_space<vmem>>, vector<288x32xf32>,
    %c0_57 = arith.constant 0 : index
    %c38 = arith.constant 38 : index
    %c0_58 = arith.constant 0 : index
    %48 = vector.load %arg1[%c0_57, %c38, %c0_58] : memref<1x326x32xf32, #tpu.memory_space<vmem>>, vector<1x288x32xf32>
    %49 = vector.shape_cast %48 : vector<1x288x32xf32> to vector<288x32xf32>
    %c0_59 = arith.constant 0 : index
    %c512 = arith.constant 512 : index
    %50 = vector.load %arg8[%c0_59, %c512] : memref<288x576xf32, #tpu.memory_space<vmem>>, vector<288x32xf32>
    tpu.vector_store %arg8[%c0_59, %c512], %49 {strides = array<i32>} : memref<288x576xf32, #tpu.memory_space<vmem>>, vector<288x32xf32>,
    %c0_60 = arith.constant 0 : index
    %c38_61 = arith.constant 38 : index
    %c0_62 = arith.constant 0 : index
    %51 = vector.load %arg2[%c0_60, %c38_61, %c0_62] : memref<1x326x32xf32, #tpu.memory_space<vmem>>, vector<1x288x32xf32>
    %52 = vector.shape_cast %51 : vector<1x288x32xf32> to vector<288x32xf32>
    %c0_63 = arith.constant 0 : index
    %c544 = arith.constant 544 : index
    %53 = vector.load %arg8[%c0_63, %c544] : memref<288x576xf32, #tpu.memory_space<vmem>>, vector<288x32xf32>
    tpu.vector_store %arg8[%c0_63, %c544], %52 {strides = array<i32>} : memref<288x576xf32, #tpu.memory_space<vmem>>, vector<288x32xf32>,
    %c0_64 = arith.constant 0 : index
    %c0_65 = arith.constant 0 : index
    %54 = vector.load %arg8[%c0_64, %c0_65] : memref<288x576xf32, #tpu.memory_space<vmem>>, vector<288x576xf32>
    %c0_66 = arith.constant 0 : index
    %c0_67 = arith.constant 0 : index
    %55 = vector.load %arg3[%c0_66, %c0_67] : memref<576x32xf32, #tpu.memory_space<vmem>>, vector<576x32xf32>
    %cst = arith.constant dense<0.000000e+00> : vector<288x32xf32>
    %56 = tpu.matmul %54, %55, %cst {dimension_numbers = #tpu.dot_dimension_numbers<[1], [0], [0], [1], [0, 0, 1, 1], [], []>} : vector<288x576xf32>, vector<576x32xf32>, vector<288x32xf32> -> vector<288x32xf32>
    %c0_68 = arith.constant 0 : index
    %c0_69 = arith.constant 0 : index
    %57 = vector.load %arg4[%c0_68, %c0_69] : memref<1x32xf32, #tpu.memory_space<vmem>>, vector<1x32xf32>
    %58 = vector.broadcast %57 : vector<1x32xf32> to vector<288x32xf32>
    %59 = arith.addf %56, %58 : vector<288x32xf32>
    %cst_70 = arith.constant 0.000000e+00 : f32
    %60 = vector.broadcast %cst_70 : f32 to vector<288x32xf32>
    %61 = arith.maximumf %59, %60 : vector<288x32xf32>
    %62 = tpu.iota {dimensions = array<i32: 0>} : vector<288x1xi32>
    %c18_i32 = arith.constant 18 : i32
    %c0_i32 = arith.constant 0 : i32
    %63 = arith.cmpi eq, %c18_i32, %c0_i32 : i32
    %c1_i32 = arith.constant 1 : i32
    %64 = arith.select %63, %c1_i32, %c18_i32 : i32
    %65 = vector.broadcast %64 : i32 to vector<288x1xi32>
    %66 = arith.remsi %62, %65 : vector<288x1xi32>
    %c0_i32_71 = arith.constant 0 : i32
    %67 = vector.broadcast %c0_i32_71 : i32 to vector<288x1xi32>
    %68 = arith.cmpi ne, %66, %67 : vector<288x1xi32>
    %c0_i32_72 = arith.constant 0 : i32
    %69 = vector.broadcast %c0_i32_72 : i32 to vector<288x1xi32>
    %70 = arith.cmpi slt, %66, %69 : vector<288x1xi32>
    %c0_i32_73 = arith.constant 0 : i32
    %71 = arith.cmpi slt, %64, %c0_i32_73 : i32
    %72 = vector.broadcast %71 : i1 to vector<288x1xi1>
    %73 = vector.broadcast %72 : vector<288x1xi1> to vector<288x1xi1>
    %74 = arith.xori %70, %73 : vector<288x1xi1>
    %75 = arith.andi %74, %68 : vector<288x1xi1>
    %76 = vector.broadcast %64 : i32 to vector<288x1xi32>
    %77 = arith.addi %66, %76 : vector<288x1xi32>
    %78 = arith.select %75, %77, %66 : vector<288x1xi1>, vector<288x1xi32>
    %c1_i32_74 = arith.constant 1 : i32
    %79 = vector.broadcast %c1_i32_74 : i32 to vector<288x1xi32>
    %80 = arith.cmpi sge, %78, %79 : vector<288x1xi32>
    %c16_i32 = arith.constant 16 : i32
    %81 = vector.broadcast %c16_i32 : i32 to vector<288x1xi32>
    %82 = arith.cmpi sle, %78, %81 : vector<288x1xi32>
    %83 = arith.andi %80, %82 : vector<288x1xi1>
    %cst_75 = arith.constant 0.000000e+00 : f32
    %84 = vector.shape_cast %83 : vector<288x1xi1> to vector<288x1xi1>
    %85 = vector.broadcast %84 : vector<288x1xi1> to vector<288x32xi1>
    %86 = vector.broadcast %cst_75 : f32 to vector<288x32xf32>
    %87 = arith.select %85, %61, %86 : vector<288x32xi1>, vector<288x32xf32>
    %cst_76 = arith.constant 0.000000e+00 : f32
    %88 = vector.broadcast %cst_76 : f32 to vector<326x32xf32>
    %c0_77 = arith.constant 0 : index
    %c0_78 = arith.constant 0 : index
    %89 = vector.load %arg9[%c0_77, %c0_78] : memref<326x32xf32, #tpu.memory_space<vmem>>, vector<326x32xf32>
    tpu.vector_store %arg9[%c0_77, %c0_78], %88 {strides = array<i32>} : memref<326x32xf32, #tpu.memory_space<vmem>>, vector<326x32xf32>,
    %c19_79 = arith.constant 19 : index
    %c0_80 = arith.constant 0 : index
    %90 = vector.load %arg9[%c19_79, %c0_80] : memref<326x32xf32, #tpu.memory_space<vmem>>, vector<288x32xf32>
    tpu.vector_store %arg9[%c19_79, %c0_80], %87 {strides = array<i32>} : memref<326x32xf32, #tpu.memory_space<vmem>>, vector<288x32xf32>,
    %c0_81 = arith.constant 0 : index
    %c0_82 = arith.constant 0 : index
    %91 = vector.load %arg9[%c0_81, %c0_82] : memref<326x32xf32, #tpu.memory_space<vmem>>, vector<288x32xf32>
    %c0_83 = arith.constant 0 : index
    %c0_84 = arith.constant 0 : index
    %92 = vector.load %arg10[%c0_83, %c0_84] : memref<288x288xf32, #tpu.memory_space<vmem>>, vector<288x32xf32>
    tpu.vector_store %arg10[%c0_83, %c0_84], %91 {strides = array<i32>} : memref<288x288xf32, #tpu.memory_space<vmem>>, vector<288x32xf32>,
    %c1_85 = arith.constant 1 : index
    %c0_86 = arith.constant 0 : index
    %93 = vector.load %arg9[%c1_85, %c0_86] : memref<326x32xf32, #tpu.memory_space<vmem>>, vector<288x32xf32>
    %c0_87 = arith.constant 0 : index
    %c32_88 = arith.constant 32 : index
    %94 = vector.load %arg10[%c0_87, %c32_88] : memref<288x288xf32, #tpu.memory_space<vmem>>, vector<288x32xf32>
    tpu.vector_store %arg10[%c0_87, %c32_88], %93 {strides = array<i32>} : memref<288x288xf32, #tpu.memory_space<vmem>>, vector<288x32xf32>,
    %c2_89 = arith.constant 2 : index
    %c0_90 = arith.constant 0 : index
    %95 = vector.load %arg9[%c2_89, %c0_90] : memref<326x32xf32, #tpu.memory_space<vmem>>, vector<288x32xf32>
    %c0_91 = arith.constant 0 : index
    %c64_92 = arith.constant 64 : index
    %96 = vector.load %arg10[%c0_91, %c64_92] : memref<288x288xf32, #tpu.memory_space<vmem>>, vector<288x32xf32>
    tpu.vector_store %arg10[%c0_91, %c64_92], %95 {strides = array<i32>} : memref<288x288xf32, #tpu.memory_space<vmem>>, vector<288x32xf32>,
    %c18_93 = arith.constant 18 : index
    %c0_94 = arith.constant 0 : index
    %97 = vector.load %arg9[%c18_93, %c0_94] : memref<326x32xf32, #tpu.memory_space<vmem>>, vector<288x32xf32>
    %c0_95 = arith.constant 0 : index
    %c96_96 = arith.constant 96 : index
    %98 = vector.load %arg10[%c0_95, %c96_96] : memref<288x288xf32, #tpu.memory_space<vmem>>, vector<288x32xf32>
    tpu.vector_store %arg10[%c0_95, %c96_96], %97 {strides = array<i32>} : memref<288x288xf32, #tpu.memory_space<vmem>>, vector<288x32xf32>,
    %c19_97 = arith.constant 19 : index
    %c0_98 = arith.constant 0 : index
    %99 = vector.load %arg9[%c19_97, %c0_98] : memref<326x32xf32, #tpu.memory_space<vmem>>, vector<288x32xf32>
    %c0_99 = arith.constant 0 : index
    %c128_100 = arith.constant 128 : index
    %100 = vector.load %arg10[%c0_99, %c128_100] : memref<288x288xf32, #tpu.memory_space<vmem>>, vector<288x32xf32>
    tpu.vector_store %arg10[%c0_99, %c128_100], %99 {strides = array<i32>} : memref<288x288xf32, #tpu.memory_space<vmem>>, vector<288x32xf32>,
    %c20_101 = arith.constant 20 : index
    %c0_102 = arith.constant 0 : index
    %101 = vector.load %arg9[%c20_101, %c0_102] : memref<326x32xf32, #tpu.memory_space<vmem>>, vector<288x32xf32>
    %c0_103 = arith.constant 0 : index
    %c160_104 = arith.constant 160 : index
    %102 = vector.load %arg10[%c0_103, %c160_104] : memref<288x288xf32, #tpu.memory_space<vmem>>, vector<288x32xf32>
    tpu.vector_store %arg10[%c0_103, %c160_104], %101 {strides = array<i32>} : memref<288x288xf32, #tpu.memory_space<vmem>>, vector<288x32xf32>,
    %c36_105 = arith.constant 36 : index
    %c0_106 = arith.constant 0 : index
    %103 = vector.load %arg9[%c36_105, %c0_106] : memref<326x32xf32, #tpu.memory_space<vmem>>, vector<288x32xf32>
    %c0_107 = arith.constant 0 : index
    %c192_108 = arith.constant 192 : index
    %104 = vector.load %arg10[%c0_107, %c192_108] : memref<288x288xf32, #tpu.memory_space<vmem>>, vector<288x32xf32>
    tpu.vector_store %arg10[%c0_107, %c192_108], %103 {strides = array<i32>} : memref<288x288xf32, #tpu.memory_space<vmem>>, vector<288x32xf32>,
    %c37_109 = arith.constant 37 : index
    %c0_110 = arith.constant 0 : index
    %105 = vector.load %arg9[%c37_109, %c0_110] : memref<326x32xf32, #tpu.memory_space<vmem>>, vector<288x32xf32>
    %c0_111 = arith.constant 0 : index
    %c224_112 = arith.constant 224 : index
    %106 = vector.load %arg10[%c0_111, %c224_112] : memref<288x288xf32, #tpu.memory_space<vmem>>, vector<288x32xf32>
    tpu.vector_store %arg10[%c0_111, %c224_112], %105 {strides = array<i32>} : memref<288x288xf32, #tpu.memory_space<vmem>>, vector<288x32xf32>,
    %c38_113 = arith.constant 38 : index
    %c0_114 = arith.constant 0 : index
    %107 = vector.load %arg9[%c38_113, %c0_114] : memref<326x32xf32, #tpu.memory_space<vmem>>, vector<288x32xf32>
    %c0_115 = arith.constant 0 : index
    %c256_116 = arith.constant 256 : index
    %108 = vector.load %arg10[%c0_115, %c256_116] : memref<288x288xf32, #tpu.memory_space<vmem>>, vector<288x32xf32>
    tpu.vector_store %arg10[%c0_115, %c256_116], %107 {strides = array<i32>} : memref<288x288xf32, #tpu.memory_space<vmem>>, vector<288x32xf32>,
    %c0_117 = arith.constant 0 : index
    %c0_118 = arith.constant 0 : index
    %109 = vector.load %arg10[%c0_117, %c0_118] : memref<288x288xf32, #tpu.memory_space<vmem>>, vector<288x288xf32>
    %c0_119 = arith.constant 0 : index
    %c0_120 = arith.constant 0 : index
    %110 = vector.load %arg5[%c0_119, %c0_120] : memref<288x32xf32, #tpu.memory_space<vmem>>, vector<288x32xf32>
    %cst_121 = arith.constant dense<0.000000e+00> : vector<288x32xf32>
    %111 = tpu.matmul %109, %110, %cst_121 {dimension_numbers = #tpu.dot_dimension_numbers<[1], [0], [0], [1], [0, 0, 1, 1], [], []>} : vector<288x288xf32>, vector<288x32xf32>, vector<288x32xf32> -> vector<288x32xf32>
    %c0_122 = arith.constant 0 : index
    %c0_123 = arith.constant 0 : index
    %112 = vector.load %arg6[%c0_122, %c0_123] : memref<1x32xf32, #tpu.memory_space<vmem>>, vector<1x32xf32>
    %113 = vector.broadcast %112 : vector<1x32xf32> to vector<288x32xf32>
    %114 = arith.addf %111, %113 : vector<288x32xf32>
    %cst_124 = arith.constant 0.000000e+00 : f32
    %115 = vector.broadcast %cst_124 : f32 to vector<288x32xf32>
    %116 = arith.maximumf %114, %115 : vector<288x32xf32>
    %c0_125 = arith.constant 0 : index
    %c0_126 = arith.constant 0 : index
    %c0_127 = arith.constant 0 : index
    %117 = vector.load %arg7[%c0_125, %c0_126, %c0_127] : memref<1x288x32xf32, #tpu.memory_space<vmem>>, vector<1x288x32xf32>
    %118 = vector.shape_cast %117 : vector<1x288x32xf32> to vector<288x32xf32>
    %119 = vector.shape_cast %116 : vector<288x32xf32> to vector<1x288x32xf32>
    tpu.vector_store %arg7[%c0_125, %c0_126, %c0_127], %119 {strides = array<i32>} : memref<1x288x32xf32, #tpu.memory_space<vmem>>, vector<1x288x32xf32>,
    return
  }
  func.func @transform_0(%arg0: i32) -> (i32, i32, i32) {
    %c0_i32 = arith.constant 0 : i32
    %c0_i32_0 = arith.constant 0 : i32
    %c0_i32_1 = arith.constant 0 : i32
    return %arg0, %c0_i32, %c0_i32_0 : i32, i32, i32
  }
  func.func @transform_1(%arg0: i32) -> (i32, i32, i32) {
    %c0_i32 = arith.constant 0 : i32
    %c0_i32_0 = arith.constant 0 : i32
    %c0_i32_1 = arith.constant 0 : i32
    return %arg0, %c0_i32, %c0_i32_0 : i32, i32, i32
  }
  func.func @transform_2(%arg0: i32) -> (i32, i32) {
    %c0_i32 = arith.constant 0 : i32
    %c0_i32_0 = arith.constant 0 : i32
    %c0_i32_1 = arith.constant 0 : i32
    return %c0_i32, %c0_i32_0 : i32, i32
  }
  func.func @transform_3(%arg0: i32) -> (i32, i32) {
    %c0_i32 = arith.constant 0 : i32
    %c0_i32_0 = arith.constant 0 : i32
    %c0_i32_1 = arith.constant 0 : i32
    return %c0_i32, %c0_i32_0 : i32, i32
  }
  func.func @transform_4(%arg0: i32) -> (i32, i32) {
    %c0_i32 = arith.constant 0 : i32
    %c0_i32_0 = arith.constant 0 : i32
    %c0_i32_1 = arith.constant 0 : i32
    return %c0_i32, %c0_i32_0 : i32, i32
  }
  func.func @transform_5(%arg0: i32) -> (i32, i32) {
    %c0_i32 = arith.constant 0 : i32
    %c0_i32_0 = arith.constant 0 : i32
    %c0_i32_1 = arith.constant 0 : i32
    return %c0_i32, %c0_i32_0 : i32, i32
  }
  func.func @transform_6(%arg0: i32) -> (i32, i32, i32) {
    %c0_i32 = arith.constant 0 : i32
    %c0_i32_0 = arith.constant 0 : i32
    %c0_i32_1 = arith.constant 0 : i32
    return %arg0, %c0_i32, %c0_i32_0 : i32, i32, i32
  }
}

</mosaic_0001>

<llo_original>
// kernel: tile.9
$region0: #{tile.9}
  %s0 = inlined_call_operand.vmem [shape: f32[4,32], index: 0, kind: input, shape index: {}]
  %s1 = inlined_call_operand.vmem [shape: f32[1,128], index: 1, kind: output, shape index: {}]
  $region1: #{tile.9} parent=0
    #allocation0 [shape = 'u8[4096]{0}', space=vmem, size = 0x1000, scoped, tag = 'scoped mem for output reshape']
    #allocation1 [shape = 'u8[4096]{0}', space=vmem, size = 0x1000, scoped, tag = 'scoped mem for input reshape']
    %s3 = sshll.u32 1, 4
    %s4 = ssub.s32 %s3, 1
    %v5 = vld [vmem:[%s0] sm:%s4]
    %6 = vst [vmem:[#allocation1] sm:%s4] %v5
    %v7 = vld [vmem:[#allocation1] sm:$0x1]
    %vm8 = vcmask 261120
    %9 = vst.msk [vmem:[#allocation0] sm:$0x1] %vm8, %v7
    %s10 = scalar_lea.vmem [#allocation1], 3
    %v11 = vld [vmem:[%s10] sm:$0x1]
    %12 = vrot.lane.b32.xlu0 %v11, 96
    %v13 = vpop.permute.xlu0 %12
    %vm14 = vcmask 1048320
    %15 = vst.msk [vmem:[#allocation0] sm:$0x1] %vm14, %v13
    %s16 = scalar_lea.vmem [#allocation1], 2
    %v17 = vld [vmem:[%s16] sm:$0x1]
    %18 = vrot.lane.b32.xlu0 %v17, 64
    %v19 = vpop.permute.xlu0 %18
    %vm20 = vcmask 785920
    %21 = vst.msk [vmem:[#allocation0] sm:$0x1] %vm20, %v19
    %s22 = scalar_lea.vmem [#allocation1], 1
    %v23 = vld [vmem:[%s22] sm:$0x1]
    %24 = vrot.lane.b32.xlu0 %v23, 32
    %v25 = vpop.permute.xlu0 %24
    %vm26 = vcmask 523520
    %27 = vst.msk [vmem:[#allocation0] sm:$0x1] %vm26, %v25
    %s29 = sshll.u32 1, 1
    %s30 = ssub.s32 %s29, 1
    %v32 = vld [vmem:[#allocation0] sm:%s30]
    %s33 = sshll.u32 1, 1
    %s34 = ssub.s32 %s33, 1
    %35 = vst [vmem:[%s1] sm:%s34] %v32

// kernel: tile.8
$region0: #{tile.8}
  #allocation0 [shape = 's32[1]{0}', space=sflag, size = 0x4, scoped, tag = 'scoped memory for tile.8']
  %s0 = inlined_call_operand.vmem [shape: f32[32], index: 0, kind: input, shape index: {}]
  %s1 = inlined_call_operand.vmem [shape: f32[4,32], index: 1, kind: output, shape index: {}]
  // Predicated region
  $region2: #{tile.8} parent=0 // pred_check
    _
  $region3: #{tile.8} parent=0 // pred_check_branch
    %3 = sbr.rel (0) target = $region5
  $region4: #{tile.8} parent=0 // pred_region
    _
  $region5: #{tile.8} parent=0 // pred_fallthru
    _
  %v4 = vld [vmem:[%s0] ss:$0 sm:$0xff]
  %5 = vst [vmem:[%s1] sm:$0xf] %v4

// kernel: unet_decoder_block_forward.2
$region0: #{unet_decoder_block_forward.2}
  #allocation0 [shape = 'u32[]', space=smem, size = 0x4, offset = 0x4, fixed_abs, tag = 'smem constant byte address 0x4 - core index']
  #allocation1 [shape = 'u32[144,128]{1,0:T(1,128)}', space=vmem, size = 0x12000, scoped, tag = 'internal scratch']
  %s0 = inlined_call_operand.vmem [shape: f32[128,64], index: 0, kind: input, shape index: {}]
  %s1 = inlined_call_operand.vmem [shape: f32[64,128], index: 1, kind: input, shape index: {}]
  %s2 = inlined_call_operand.vmem [shape: f32[1,128], index: 2, kind: input, shape index: {}]
  %s3 = inlined_call_operand.vmem [shape: f32[128,128], index: 3, kind: output, shape index: {}]
  %s4 = sld [smem:[#allocation0]]
  $region22: #{unet_decoder_block_forward.2} parent=0
    _
  %s6 = ssub.s32 1, %s4
  %s7 = scalar_select 0, %s6, %s4
  // Predicated region
  $region2: #{unet_decoder_block_forward.2} parent=0 // pred_check
    _
  $region3: #{unet_decoder_block_forward.2} parent=0 // pred_check_branch
    %9 = sbr.rel (0) target = $region5
  $region4: #{unet_decoder_block_forward.2} parent=0 // pred_region
    _
  $region5: #{unet_decoder_block_forward.2} parent=0 // pred_fallthru
    _
  // Predicated region
  $region6: #{unet_decoder_block_forward.2} parent=0 // pred_check
    _
  $region7: #{unet_decoder_block_forward.2} parent=0 // pred_check_branch
    %11 = sbr.rel (0) target = $region9
  $region8: #{unet_decoder_block_forward.2} parent=0 // pred_region
    _
  $region9: #{unet_decoder_block_forward.2} parent=0 // pred_fallthru
    _
  // Predicated region
  $region10: #{unet_decoder_block_forward.2} parent=0 // pred_check
    _
  $region11: #{unet_decoder_block_forward.2} parent=0 // pred_check_branch
    %13 = sbr.rel (0) target = $region13
  $region12: #{unet_decoder_block_forward.2} parent=0 // pred_region
    _
  $region13: #{unet_decoder_block_forward.2} parent=0 // pred_fallthru
    _
  %v14 = vld [vmem:[%s0] sm:$0xff]
  %v15 = vld [vmem:[%s0 + $0x8] sm:$0xff]
  %v16 = vld [vmem:[%s0 + $0x10] sm:$0xff]
  %v17 = vld [vmem:[%s0 + $0x18] sm:$0xff]
  %v18 = vld [vmem:[%s0 + $0x20] sm:$0xff]
  %v19 = vld [vmem:[%s0 + $0x28] sm:$0xff]
  %v20 = vld [vmem:[%s0 + $0x30] sm:$0xff]
  %v21 = vld [vmem:[%s0 + $0x38] sm:$0xff]
  %v22 = vld [vmem:[%s0 + $0x40] sm:$0xff]
  %v23 = vld [vmem:[%s0 + $0x48] sm:$0xff]
  %v24 = vld [vmem:[%s0 + $0x50] sm:$0xff]
  %v25 = vld [vmem:[%s0 + $0x58] sm:$0xff]
  %v26 = vld [vmem:[%s0 + $0x60] sm:$0xff]
  %v27 = vld [vmem:[%s0 + $0x68] sm:$0xff]
  %v28 = vld [vmem:[%s0 + $0x70] sm:$0xff]
  %v29 = vld [vmem:[%s0 + $0x78] sm:$0xff]
  %v30 = vld [vmem:[%s1] sm:$0xff]
  %v31 = vld [vmem:[%s1 + $0x8] sm:$0xff]
  %v32 = vld [vmem:[%s1 + $0x10] sm:$0xff]
  %v33 = vld [vmem:[%s1 + $0x18] sm:$0xff]
  %v34 = vld [vmem:[%s1 + $0x20] sm:$0xff]
  %v35 = vld [vmem:[%s1 + $0x28] sm:$0xff]
  %v36 = vld [vmem:[%s1 + $0x30] sm:$0xff]
  %v37 = vld [vmem:[%s1 + $0x38] sm:$0xff]
  %v38 = vld [vmem:[%s2] sm:$0x1]
  %v40 = vlaneseq
  %v41 = vshrl.u32 %v40, 7
  %v42 = vsub.s32 0, %v41
  %v43 = vrot.slane %v38, %v42
  %vm45 = vcmask 523264
  %v47 = vsel %vm45, %v14, 0
  %v50 = vsel %vm45, %v15, 0
  %v53 = vsel %vm45, %v16, 0
  %v56 = vsel %vm45, %v17, 0
  %v59 = vsel %vm45, %v18, 0
  %v62 = vsel %vm45, %v19, 0
  %v65 = vsel %vm45, %v20, 0
  %v68 = vsel %vm45, %v21, 0
  %v71 = vsel %vm45, %v22, 0
  %v74 = vsel %vm45, %v23, 0
  %v77 = vsel %vm45, %v24, 0
  %v80 = vsel %vm45, %v25, 0
  %v83 = vsel %vm45, %v26, 0
  %v86 = vsel %vm45, %v27, 0
  %v89 = vsel %vm45, %v28, 0
  %v92 = vsel %vm45, %v29, 0
  %94 = vmatprep.subr.mxu0 0.0
  %95 = vmatpush1.msra.mxu0 0.0
  %96 = vmatprep.subr.mxu0 0.0
  %97 = vmatpush1.msra.mxu0 0.0
  %98 = vmatprep.subr.mxu0 0.0
  %99 = vmatpush1.msra.mxu0 0.0
  %100 = vmatprep.subr.mxu0 0.0
  %101 = vmatpush1.msra.mxu0 0.0
  %102 = vmatprep.subr.mxu0 0.0
  %103 = vmatpush1.msra.mxu0 0.0
  %104 = vmatprep.subr.mxu0 0.0
  %105 = vmatpush1.msra.mxu0 0.0
  %106 = vmatprep.subr.mxu0 0.0
  %107 = vmatpush1.msra.mxu0 0.0
  %108 = vmatprep.subr.mxu0 0.0
  %109 = vmatpush1.msra.mxu0 0.0
  %110 = vmatprep.subr.mxu0 0.0
  %111 = vmatpush1.msra.mxu0 %v37
  %112 = vmatprep.subr.mxu0 0.0
  %113 = vmatpush1.msra.mxu0 %v36
  %114 = vmatprep.subr.mxu0 0.0
  %115 = vmatpush1.msra.mxu0 %v35
  %116 = vmatprep.subr.mxu0 0.0
  %117 = vmatpush1.msra.mxu0 %v34
  %118 = vmatprep.subr.mxu0 0.0
  %119 = vmatpush1.msra.mxu0 %v33
  %120 = vmatprep.subr.mxu0 0.0
  %121 = vmatpush1.msra.mxu0 %v32
  %122 = vmatprep.subr.mxu0 0.0
  %123 = vmatpush1.msra.mxu0 %v31
  %124 = vmatprep.subr.mxu0 0.0
  %125 = vmatpush1.msra.mxu0 %v30
  %126 = vmatprep.subr.mxu0 0.0
  %127 = vmatpush2.msra.mxu0 0.0
  %128 = vmatprep.subr.mxu0 0.0
  %129 = vmatpush2.msra.mxu0 0.0
  %130 = vmatprep.subr.mxu0 0.0
  %131 = vmatpush2.msra.mxu0 0.0
  %132 = vmatprep.subr.mxu0 0.0
  %133 = vmatpush2.msra.mxu0 0.0
  %134 = vmatprep.subr.mxu0 0.0
  %135 = vmatpush2.msra.mxu0 0.0
  %136 = vmatprep.subr.mxu0 0.0
  %137 = vmatpush2.msra.mxu0 0.0
  %138 = vmatprep.subr.mxu0 0.0
  %139 = vmatpush2.msra.mxu0 0.0
  %140 = vmatprep.subr.mxu0 0.0
  %141 = vmatpush2.msra.mxu0 0.0
  %142 = vmatprep.subr.mxu0 0.0
  %143 = vmatpush2.msra.mxu0 0.0
  %144 = vmatprep.subr.mxu0 0.0
  %145 = vmatpush2.msra.mxu0 0.0
  %146 = vmatprep.subr.mxu0 0.0
  %147 = vmatpush2.msra.mxu0 0.0
  %148 = vmatprep.subr.mxu0 0.0
  %149 = vmatpush2.msra.mxu0 0.0
  %150 = vmatprep.subr.mxu0 0.0
  %151 = vmatpush2.msra.mxu0 0.0
  %152 = vmatprep.subr.mxu0 0.0
  %153 = vmatpush2.msra.mxu0 0.0
  %154 = vmatprep.subr.mxu0 0.0
  %155 = vmatpush2.msra.mxu0 0.0
  %156 = vmatprep.subr.mxu0 0.0
  %157 = vmatpush2.msra.mxu0 0.0
  %158 = vmatprep.mubr.f32.mxu0 0.0
  %159 = vmatmul.mubr.f32.gmra.mxu0 %v47
  %v160 = vpop.f32.mrf.mxu0
  %v161 = vadd.f32 %v43, %v160
  %v162 = vpop.f32.mrf.mxu0
  %163 = vmatprep.mubr.f32.mxu0 0.0
  %164 = vmatmul.mubr.f32.gmra.mxu0 %v50
  %v165 = vpop.f32.mrf.mxu0
  %v166 = vadd.f32 %v43, %v165
  %v167 = vpop.f32.mrf.mxu0
  %168 = vmatprep.mubr.f32.mxu0 0.0
  %169 = vmatmul.mubr.f32.gmra.mxu0 %v53
  %v170 = vpop.f32.mrf.mxu0
  %v171 = vadd.f32 %v43, %v170
  %v172 = vpop.f32.mrf.mxu0
  %173 = vmatprep.mubr.f32.mxu0 0.0
  %174 = vmatmul.mubr.f32.gmra.mxu0 %v56
  %v175 = vpop.f32.mrf.mxu0
  %v176 = vadd.f32 %v43, %v175
  %v177 = vpop.f32.mrf.mxu0
  %178 = vmatprep.mubr.f32.mxu0 0.0
  %179 = vmatmul.mubr.f32.gmra.mxu0 %v59
  %v180 = vpop.f32.mrf.mxu0
  %v181 = vadd.f32 %v43, %v180
  %v182 = vpop.f32.mrf.mxu0
  %183 = vmatprep.mubr.f32.mxu0 0.0
  %184 = vmatmul.mubr.f32.gmra.mxu0 %v62
  %v185 = vpop.f32.mrf.mxu0
  %v186 = vadd.f32 %v43, %v185
  %v187 = vpop.f32.mrf.mxu0
  %188 = vmatprep.mubr.f32.mxu0 0.0
  %189 = vmatmul.mubr.f32.gmra.mxu0 %v65
  %v190 = vpop.f32.mrf.mxu0
  %v191 = vadd.f32 %v43, %v190
  %v192 = vpop.f32.mrf.mxu0
  %193 = vmatprep.mubr.f32.mxu0 0.0
  %194 = vmatmul.mubr.f32.gmra.mxu0 %v68
  %v195 = vpop.f32.mrf.mxu0
  %v196 = vadd.f32 %v43, %v195
  %v197 = vpop.f32.mrf.mxu0
  %198 = vmatprep.mubr.f32.mxu0 0.0
  %199 = vmatmul.mubr.f32.gmra.mxu0 %v71
  %v200 = vpop.f32.mrf.mxu0
  %v201 = vadd.f32 %v43, %v200
  %v202 = vpop.f32.mrf.mxu0
  %203 = vmatprep.mubr.f32.mxu0 0.0
  %204 = vmatmul.mubr.f32.gmra.mxu0 %v74
  %v205 = vpop.f32.mrf.mxu0
  %v206 = vadd.f32 %v43, %v205
  %v207 = vpop.f32.mrf.mxu0
  %208 = vmatprep.mubr.f32.mxu0 0.0
  %209 = vmatmul.mubr.f32.gmra.mxu0 %v77
  %v210 = vpop.f32.mrf.mxu0
  %v211 = vadd.f32 %v43, %v210
  %v212 = vpop.f32.mrf.mxu0
  %213 = vmatprep.mubr.f32.mxu0 0.0
  %214 = vmatmul.mubr.f32.gmra.mxu0 %v80
  %v215 = vpop.f32.mrf.mxu0
  %v216 = vadd.f32 %v43, %v215
  %v217 = vpop.f32.mrf.mxu0
  %218 = vmatprep.mubr.f32.mxu0 0.0
  %219 = vmatmul.mubr.f32.gmra.mxu0 %v83
  %v220 = vpop.f32.mrf.mxu0
  %v221 = vadd.f32 %v43, %v220
  %v222 = vpop.f32.mrf.mxu0
  %223 = vmatprep.mubr.f32.mxu0 0.0
  %224 = vmatmul.mubr.f32.gmra.mxu0 %v86
  %v225 = vpop.f32.mrf.mxu0
  %v226 = vadd.f32 %v43, %v225
  %v227 = vpop.f32.mrf.mxu0
  %228 = vmatprep.mubr.f32.mxu0 0.0
  %229 = vmatmul.mubr.f32.gmra.mxu0 %v89
  %v230 = vpop.f32.mrf.mxu0
  %v231 = vadd.f32 %v43, %v230
  %v232 = vpop.f32.mrf.mxu0
  %233 = vmatprep.mubr.f32.mxu0 0.0
  %234 = vmatmul.mubr.f32.gmra.mxu0 %v92
  %v235 = vpop.f32.mrf.mxu0
  %v236 = vadd.f32 %v43, %v235
  %v237 = vpop.f32.mrf.mxu0
  %238 = vdwg.mxu0
  %239 = vst [vmem:[%s3] sm:$0xff] %v161
  %240 = vst [vmem:[%s3 + $0x8] sm:$0xff] %v166
  %241 = vst [vmem:[%s3 + $0x10] sm:$0xff] %v171
  %242 = vst [vmem:[%s3 + $0x18] sm:$0xff] %v176
  %243 = vst [vmem:[%s3 + $0x20] sm:$0xff] %v181
  %244 = vst [vmem:[%s3 + $0x28] sm:$0xff] %v186
  %245 = vst [vmem:[%s3 + $0x30] sm:$0xff] %v191
  %246 = vst [vmem:[%s3 + $0x38] sm:$0xff] %v196
  %247 = vst [vmem:[%s3 + $0x40] sm:$0xff] %v201
  %248 = vst [vmem:[%s3 + $0x48] sm:$0xff] %v206
  %249 = vst [vmem:[%s3 + $0x50] sm:$0xff] %v211
  %250 = vst [vmem:[%s3 + $0x58] sm:$0xff] %v216
  %251 = vst [vmem:[%s3 + $0x60] sm:$0xff] %v221
  %252 = vst [vmem:[%s3 + $0x68] sm:$0xff] %v226
  %253 = vst [vmem:[%s3 + $0x70] sm:$0xff] %v231
  %254 = vst [vmem:[%s3 + $0x78] sm:$0xff] %v236
  // Predicated region
  $region14: #{unet_decoder_block_forward.2} parent=0 // pred_check
    _
  $region15: #{unet_decoder_block_forward.2} parent=0 // pred_check_branch
    %256 = sbr.rel (0) target = $region17
  $region16: #{unet_decoder_block_forward.2} parent=0 // pred_region
    _
  $region17: #{unet_decoder_block_forward.2} parent=0 // pred_fallthru
    _
  // Predicated region
  $region18: #{unet_decoder_block_forward.2} parent=0 // pred_check
    _
  $region19: #{unet_decoder_block_forward.2} parent=0 // pred_check_branch
    %258 = sbr.rel (0) target = $region21
  $region20: #{unet_decoder_block_forward.2} parent=0 // pred_region
    _
  $region21: #{unet_decoder_block_forward.2} parent=0 // pred_fallthru
    _

// kernel: unet_decoder_block_forward.3
$region0: #{unet_decoder_block_forward.3}
  #allocation0 [shape = 'u32[]', space=smem, size = 0x4, offset = 0x4, fixed_abs, tag = 'smem constant byte address 0x4 - core index']
  #allocation1 [shape = 'u32[144,128]{1,0:T(1,128)}', space=vmem, size = 0x12000, scoped, tag = 'internal scratch']
  #allocation2 [shape = 'f32[288,576]{1,0:T(8,128)}', space=vmem, size = 0xb4000, scoped, tag = 'scratch operand']
  #allocation3 [shape = 'f32[326,32]{1,0:T(8,128)}', space=vmem, size = 0x29000, scoped, tag = 'scratch operand']
  #allocation4 [shape = 'f32[288,288]{1,0:T(8,128)}', space=vmem, size = 0x6c000, scoped, tag = 'scratch operand']
  %s0 = inlined_call_operand.vmem [shape: f32[2,326,32], index: 0, kind: input, shape index: {}]
  %s1 = inlined_call_operand.vmem [shape: f32[2,326,32], index: 1, kind: input, shape index: {}]
  %s2 = inlined_call_operand.vmem [shape: f32[576,32], index: 2, kind: input, shape index: {}]
  %s3 = inlined_call_operand.vmem [shape: f32[1,32], index: 3, kind: input, shape index: {}]
  %s4 = inlined_call_operand.vmem [shape: f32[288,32], index: 4, kind: input, shape index: {}]
  %s5 = inlined_call_operand.vmem [shape: f32[1,32], index: 5, kind: input, shape index: {}]
  %s6 = inlined_call_operand.vmem [shape: f32[2,288,32], index: 6, kind: output, shape index: {}]
  %s7 = sld [smem:[#allocation0]]
  $region57: #{unet_decoder_block_forward.3} parent=0
    _
  %s9 = ssub.s32 1, %s7
  %s10 = scalar_select 0, %s9, %s7
  loop: start=0, step=1, limit=4
  $region2: #{unet_decoder_block_forward.3} parent=0 // loop_pre_header
    _
  $region3: #{unet_decoder_block_forward.3} parent=0 // loop_header
    %s12 = sphi 0, %s16
    %p13 = scmp.ge.s32.totalorder %s12, 4
    %s22 = sphi 0, %s24
    %s25 = sphi 0, %s22
    %s26 = sphi 0, %s25
    %s42 = sphi 0, %s26
    %s48 = sphi 0, %s50
    %s51 = sphi 0, %s48
    %s52 = sphi 0, %s51
    %s68 = sphi 0, %s52
    %s72 = sphi 0, %s72
    %s74 = sphi 0, %s72
    %s75 = sphi 0, %s74
    %s89 = sphi 0, %s75
    %s93 = sphi 0, %s93
    %s95 = sphi 0, %s93
    %s96 = sphi 0, %s95
    %s110 = sphi 0, %s96
    %s114 = sphi 0, %s114
    %s116 = sphi 0, %s114
    %s117 = sphi 0, %s116
    %s131 = sphi 0, %s117
    %s135 = sphi 0, %s135
    %s137 = sphi 0, %s135
    %s138 = sphi 0, %s137
    %s152 = sphi 0, %s138
    %s158 = sphi 0, %s160
    %s161 = sphi 0, %s158
    %s162 = sphi 0, %s161
    %s178 = sphi 0, %s162
  $region4: #{unet_decoder_block_forward.3} parent=0 // loop_header_branch
    %15 = sbr.rel (%p13) target = $region8
  $region5: #{unet_decoder_block_forward.3} parent=0 // loop_body
    %s17 = ssub.s32 %s12, 1
    %s18 = ssub.s32 %s12, 2
    %s19 = sadd.s32 %s12, 1
    %s20 = ssub.s32 %s12, %s19
    %p21 = scmp.eq.s32.totalorder %s20, 0
    %s23 = sadd.s32 %s22, 1
    %s24 = scalar_select %p21, %s22, %s23
    %p27 = pneg %p21
    %p28 = scmp.eq.s32.totalorder %s12, 1
    %p29 = por %p27, %p28
    %p30 = scmp.ne.s32.totalorder %s22, %s25
    %p31 = scmp.eq.s32.totalorder %s12, 0
    %p32 = por %p30, %p31
    %p33 = scmp.ne.s32.totalorder %s22, %s25
    %p34 = scmp.eq.s32.totalorder %s17, 1
    %p35 = por %p33, %p34
    %p36 = scmp.ne.s32.totalorder %s25, %s26
    %p37 = scmp.eq.s32.totalorder %s17, 0
    %p38 = por %p36, %p37
    %p39 = scmp.ne.s32.totalorder %s25, %s26
    %p40 = scmp.eq.s32.totalorder %s18, 1
    %p41 = por %p39, %p40
    %p43 = scmp.ne.s32.totalorder %s26, %s42
    %p44 = scmp.eq.s32.totalorder %s18, 0
    %p45 = por %p43, %p44
    %s46 = ssub.s32 %s12, %s19
    %p47 = scmp.eq.s32.totalorder %s46, 0
    %s49 = sadd.s32 %s48, 1
    %s50 = scalar_select %p47, %s48, %s49
    %p53 = pneg %p47
    %p54 = scmp.eq.s32.totalorder %s12, 1
    %p55 = por %p53, %p54
    %p56 = scmp.ne.s32.totalorder %s48, %s51
    %p57 = scmp.eq.s32.totalorder %s12, 0
    %p58 = por %p56, %p57
    %p59 = scmp.ne.s32.totalorder %s48, %s51
    %p60 = scmp.eq.s32.totalorder %s17, 1
    %p61 = por %p59, %p60
    %p62 = scmp.ne.s32.totalorder %s51, %s52
    %p63 = scmp.eq.s32.totalorder %s17, 0
    %p64 = por %p62, %p63
    %p65 = scmp.ne.s32.totalorder %s51, %s52
    %p66 = scmp.eq.s32.totalorder %s18, 1
    %p67 = por %p65, %p66
    %p69 = scmp.ne.s32.totalorder %s52, %s68
    %p70 = scmp.eq.s32.totalorder %s18, 0
    %p71 = por %p69, %p70
    %s73 = sadd.s32 %s72, 1
    %p76 = scmp.eq.s32.totalorder %s12, 1
    %p77 = scmp.ne.s32.totalorder %s72, %s74
    %p78 = scmp.eq.s32.totalorder %s12, 0
    %p79 = por %p77, %p78
    %p80 = scmp.ne.s32.totalorder %s72, %s74
    %p81 = scmp.eq.s32.totalorder %s17, 1
    %p82 = por %p80, %p81
    %p83 = scmp.ne.s32.totalorder %s74, %s75
    %p84 = scmp.eq.s32.totalorder %s17, 0
    %p85 = por %p83, %p84
    %p86 = scmp.ne.s32.totalorder %s74, %s75
    %p87 = scmp.eq.s32.totalorder %s18, 1
    %p88 = por %p86, %p87
    %p90 = scmp.ne.s32.totalorder %s75, %s89
    %p91 = scmp.eq.s32.totalorder %s18, 0
    %p92 = por %p90, %p91
    %s94 = sadd.s32 %s93, 1
    %p97 = scmp.eq.s32.totalorder %s12, 1
    %p98 = scmp.ne.s32.totalorder %s93, %s95
    %p99 = scmp.eq.s32.totalorder %s12, 0
    %p100 = por %p98, %p99
    %p101 = scmp.ne.s32.totalorder %s93, %s95
    %p102 = scmp.eq.s32.totalorder %s17, 1
    %p103 = por %p101, %p102
    %p104 = scmp.ne.s32.totalorder %s95, %s96
    %p105 = scmp.eq.s32.totalorder %s17, 0
    %p106 = por %p104, %p105
    %p107 = scmp.ne.s32.totalorder %s95, %s96
    %p108 = scmp.eq.s32.totalorder %s18, 1
    %p109 = por %p107, %p108
    %p111 = scmp.ne.s32.totalorder %s96, %s110
    %p112 = scmp.eq.s32.totalorder %s18, 0
    %p113 = por %p111, %p112
    %s115 = sadd.s32 %s114, 1
    %p118 = scmp.eq.s32.totalorder %s12, 1
    %p119 = scmp.ne.s32.totalorder %s114, %s116
    %p120 = scmp.eq.s32.totalorder %s12, 0
    %p121 = por %p119, %p120
    %p122 = scmp.ne.s32.totalorder %s114, %s116
    %p123 = scmp.eq.s32.totalorder %s17, 1
    %p124 = por %p122, %p123
    %p125 = scmp.ne.s32.totalorder %s116, %s117
    %p126 = scmp.eq.s32.totalorder %s17, 0
    %p127 = por %p125, %p126
    %p128 = scmp.ne.s32.totalorder %s116, %s117
    %p129 = scmp.eq.s32.totalorder %s18, 1
    %p130 = por %p128, %p129
    %p132 = scmp.ne.s32.totalorder %s117, %s131
    %p133 = scmp.eq.s32.totalorder %s18, 0
    %p134 = por %p132, %p133
    %s136 = sadd.s32 %s135, 1
    %p139 = scmp.eq.s32.totalorder %s12, 1
    %p140 = scmp.ne.s32.totalorder %s135, %s137
    %p141 = scmp.eq.s32.totalorder %s12, 0
    %p142 = por %p140, %p141
    %p143 = scmp.ne.s32.totalorder %s135, %s137
    %p144 = scmp.eq.s32.totalorder %s17, 1
    %p145 = por %p143, %p144
    %p146 = scmp.ne.s32.totalorder %s137, %s138
    %p147 = scmp.eq.s32.totalorder %s17, 0
    %p148 = por %p146, %p147
    %p149 = scmp.ne.s32.totalorder %s137, %s138
    %p150 = scmp.eq.s32.totalorder %s18, 1
    %p151 = por %p149, %p150
    %p153 = scmp.ne.s32.totalorder %s138, %s152
    %p154 = scmp.eq.s32.totalorder %s18, 0
    %p155 = por %p153, %p154
    %s156 = ssub.s32 %s12, %s19
    %p157 = scmp.eq.s32.totalorder %s156, 0
    %s159 = sadd.s32 %s158, 1
    %s160 = scalar_select %p157, %s158, %s159
    %p163 = pneg %p157
    %p164 = scmp.eq.s32.totalorder %s12, 1
    %p165 = por %p163, %p164
    %p166 = scmp.ne.s32.totalorder %s158, %s161
    %p167 = scmp.eq.s32.totalorder %s12, 0
    %p168 = por %p166, %p167
    %p169 = scmp.ne.s32.totalorder %s158, %s161
    %p170 = scmp.eq.s32.totalorder %s17, 1
    %p171 = por %p169, %p170
    %p172 = scmp.ne.s32.totalorder %s161, %s162
    %p173 = scmp.eq.s32.totalorder %s17, 0
    %p174 = por %p172, %p173
    %p175 = scmp.ne.s32.totalorder %s161, %s162
    %p176 = scmp.eq.s32.totalorder %s18, 1
    %p177 = por %p175, %p176
    %p179 = scmp.ne.s32.totalorder %s162, %s178
    %p180 = scmp.eq.s32.totalorder %s18, 0
    %p181 = por %p179, %p180
    %p182 = scmp.le.s32.totalorder 1, %s12
    %p183 = scmp.lt.s32.totalorder %s12, 3
    %p184 = pnand %p182, %p183
    %p185 = pneg %p184
    // Predicated region
    $region9: #{unet_decoder_block_forward.3} parent=5 // pred_check
      _
    $region10: #{unet_decoder_block_forward.3} parent=5 // pred_check_branch
      %187 = sbr.rel (%p184) target = $region12
    $region11: #{unet_decoder_block_forward.3} parent=5 // pred_region
      %s188 = ssub.s32 %s12, 1
      // Predicated region
      $region13: #{unet_decoder_block_forward.3} parent=11 // pred_check
        %p189 = pneg %p85
      $region14: #{unet_decoder_block_forward.3} parent=11 // pred_check_branch
        %191 = sbr.rel (%p189) target = $region16
      $region15: #{unet_decoder_block_forward.3} parent=11 // pred_region
        _
      $region16: #{unet_decoder_block_forward.3} parent=11 // pred_fallthru
        _
      // Predicated region
      $region17: #{unet_decoder_block_forward.3} parent=11 // pred_check
        %p192 = pneg %p106
      $region18: #{unet_decoder_block_forward.3} parent=11 // pred_check_branch
        %194 = sbr.rel (%p192) target = $region20
      $region19: #{unet_decoder_block_forward.3} parent=11 // pred_region
        _
      $region20: #{unet_decoder_block_forward.3} parent=11 // pred_fallthru
        _
      // Predicated region
      $region21: #{unet_decoder_block_forward.3} parent=11 // pred_check
        %p195 = pneg %p127
      $region22: #{unet_decoder_block_forward.3} parent=11 // pred_check_branch
        %197 = sbr.rel (%p195) target = $region24
      $region23: #{unet_decoder_block_forward.3} parent=11 // pred_region
        _
      $region24: #{unet_decoder_block_forward.3} parent=11 // pred_fallthru
        _
      // Predicated region
      $region25: #{unet_decoder_block_forward.3} parent=11 // pred_check
        %p198 = pneg %p148
      $region26: #{unet_decoder_block_forward.3} parent=11 // pred_check_branch
        %200 = sbr.rel (%p198) target = $region28
      $region27: #{unet_decoder_block_forward.3} parent=11 // pred_region
        _
      $region28: #{unet_decoder_block_forward.3} parent=11 // pred_fallthru
        _
    $region12: #{unet_decoder_block_forward.3} parent=5 // pred_fallthru
      _
    %p201 = scmp.lt.s32.totalorder %s12, 2
    // Predicated region
    $region29: #{unet_decoder_block_forward.3} parent=5 // pred_check
      %p202 = pneg %p201
    $region30: #{unet_decoder_block_forward.3} parent=5 // pred_check_branch
      %204 = sbr.rel (%p202) target = $region32
    $region31: #{unet_decoder_block_forward.3} parent=5 // pred_region
      // Predicated region
      $region33: #{unet_decoder_block_forward.3} parent=31 // pred_check
        %p205 = pneg %p32
      $region34: #{unet_decoder_block_forward.3} parent=31 // pred_check_branch
        %207 = sbr.rel (%p205) target = $region36
      $region35: #{unet_decoder_block_forward.3} parent=31 // pred_region
        %p208 = scmp.lt.s32.totalorder %s12, 1
        %s209 = scalar_select %p208, %s12, 1
        %s210 = smul.addr %s209, 41
        %s211 = smul.addr %s210, 8
        %s212 = scalar_lea.vmem %s0, %s211
      $region36: #{unet_decoder_block_forward.3} parent=31 // pred_fallthru
        _
      // Predicated region
      $region37: #{unet_decoder_block_forward.3} parent=31 // pred_check
        %p213 = pneg %p58
      $region38: #{unet_decoder_block_forward.3} parent=31 // pred_check_branch
        %215 = sbr.rel (%p213) target = $region40
      $region39: #{unet_decoder_block_forward.3} parent=31 // pred_region
        %p216 = scmp.lt.s32.totalorder %s12, 1
        %s217 = scalar_select %p216, %s12, 1
        %s218 = smul.addr %s217, 41
        %s219 = smul.addr %s218, 8
        %s220 = scalar_lea.vmem %s1, %s219
      $region40: #{unet_decoder_block_forward.3} parent=31 // pred_fallthru
        _
    $region32: #{unet_decoder_block_forward.3} parent=5 // pred_fallthru
      _
    %p221 = scmp.le.s32.totalorder 1, %s12
    %p222 = scmp.lt.s32.totalorder %s12, 3
    %p223 = pnand %p221, %p222
    %p224 = pneg %p223
    // Predicated region
    $region41: #{unet_decoder_block_forward.3} parent=5 // pred_check
      _
    $region42: #{unet_decoder_block_forward.3} parent=5 // pred_check_branch
      %226 = sbr.rel (%p223) target = $region44
    $region43: #{unet_decoder_block_forward.3} parent=5 // pred_region
      %s227 = ssub.s32 %s12, 1
      %p228 = scmp.lt.s32.totalorder %s17, 1
      %s229 = scalar_select %p228, %s17, 1
      %s230 = smul.addr %s229, 41
      %s231 = smul.addr %s230, 8
      %s232 = scalar_lea.vmem %s0, %s231
      %p233 = pneg %p38
      %p234 = pneg %p35
      %p235 = scmp.lt.s32.totalorder %s17, 1
      %s236 = scalar_select %p235, %s17, 1
      %s237 = smul.addr %s236, 41
      %s238 = smul.addr %s237, 8
      %s239 = scalar_lea.vmem %s1, %s238
      %p240 = pneg %p64
      %p241 = pneg %p61
      %p242 = pneg %p85
      %p243 = pneg %p82
      %p244 = pneg %p106
      %p245 = pneg %p103
      %p246 = pneg %p127
      %p247 = pneg %p124
      %p248 = pneg %p148
      %p249 = pneg %p145
      %p250 = pneg %p174
      %p251 = pneg %p171
      %p252 = scmp.lt.s32.totalorder %s17, 1
      %s253 = scalar_select %p252, %s17, 1
      %s254 = smul.addr %s253, 36
      %s255 = smul.addr %s254, 8
      %s256 = scalar_lea.vmem %s6, %s255
      %p257 = scmp.lt.s32.totalorder %s17, 1
      %s258 = scalar_select %p257, %s17, 1
      %s259 = smul.addr %s258, 41
      %s260 = smul.addr %s259, 8
      %s261 = scalar_lea.vmem %s0, %s260
      %p262 = scmp.lt.s32.totalorder %s17, 1
      %s263 = scalar_select %p262, %s17, 1
      %s264 = smul.addr %s263, 41
      %s265 = smul.addr %s264, 8
      %s266 = scalar_lea.vmem %s1, %s265
      %p267 = scmp.lt.s32.totalorder %s17, 1
      %s268 = scalar_select %p267, %s17, 1
      %s269 = smul.addr %s268, 36
      %s270 = smul.addr %s269, 8
      %s271 = scalar_lea.vmem %s6, %s270
      %v272 = vld [vmem:[%s261] sm:$0xff]
      %v273 = vld [vmem:[%s261 + $0x8] sm:$0xff]
      %v274 = vld [vmem:[%s261 + $0x10] sm:$0xff]
      %v275 = vld [vmem:[%s261 + $0x18] sm:$0xff]
      %v276 = vld [vmem:[%s261 + $0x20] sm:$0xff]
      %v277 = vld [vmem:[%s261 + $0x28] sm:$0xff]
      %v278 = vld [vmem:[%s261 + $0x30] sm:$0xff]
      %v279 = vld [vmem:[%s261 + $0x38] sm:$0xff]
      %v280 = vld [vmem:[%s261 + $0x40] sm:$0xff]
      %v281 = vld [vmem:[%s261 + $0x48] sm:$0xff]
      %v282 = vld [vmem:[%s261 + $0x50] sm:$0xff]
      %v283 = vld [vmem:[%s261 + $0x58] sm:$0xff]
      %v284 = vld [vmem:[%s261 + $0x60] sm:$0xff]
      %v285 = vld [vmem:[%s261 + $0x68] sm:$0xff]
      %v286 = vld [vmem:[%s261 + $0x70] sm:$0xff]
      %v287 = vld [vmem:[%s261 + $0x78] sm:$0xff]
      %v288 = vld [vmem:[%s261 + $0x80] sm:$0xff]
      %v289 = vld [vmem:[%s261 + $0x88] sm:$0xff]
      %v290 = vld [vmem:[%s261 + $0x90] sm:$0xff]
      %v291 = vld [vmem:[%s261 + $0x98] sm:$0xff]
      %v292 = vld [vmem:[%s261 + $0xa0] sm:$0xff]
      %v293 = vld [vmem:[%s261 + $0xa8] sm:$0xff]
      %v294 = vld [vmem:[%s261 + $0xb0] sm:$0xff]
      %v295 = vld [vmem:[%s261 + $0xb8] sm:$0xff]
      %v296 = vld [vmem:[%s261 + $0xc0] sm:$0xff]
      %v297 = vld [vmem:[%s261 + $0xc8] sm:$0xff]
      %v298 = vld [vmem:[%s261 + $0xd0] sm:$0xff]
      %v299 = vld [vmem:[%s261 + $0xd8] sm:$0xff]
      %v300 = vld [vmem:[%s261 + $0xe0] sm:$0xff]
      %v301 = vld [vmem:[%s261 + $0xe8] sm:$0xff]
      %v302 = vld [vmem:[%s261 + $0xf0] sm:$0xff]
      %v303 = vld [vmem:[%s261 + $0xf8] sm:$0xff]
      %v304 = vld [vmem:[%s261 + $0x100] sm:$0xff]
      %v305 = vld [vmem:[%s261 + $0x108] sm:$0xff]
      %v306 = vld [vmem:[%s261 + $0x110] sm:$0xff]
      %v307 = vld [vmem:[%s261 + $0x118] sm:$0xff]
      %vm308 = vcmask 261120
      %309 = vst.msk [vmem:[#allocation2] sm:$0xff] %vm308, %v272
      %310 = vst.msk [vmem:[#allocation2 + $0x28] sm:$0xff] %vm308, %v273
      %311 = vst.msk [vmem:[#allocation2 + $0x50] sm:$0xff] %vm308, %v274
      %312 = vst.msk [vmem:[#allocation2 + $0x78] sm:$0xff] %vm308, %v275
      %313 = vst.msk [vmem:[#allocation2 + $0xa0] sm:$0xff] %vm308, %v276
      %314 = vst.msk [vmem:[#allocation2 + $0xc8] sm:$0xff] %vm308, %v277
      %315 = vst.msk [vmem:[#allocation2 + $0xf0] sm:$0xff] %vm308, %v278
      %316 = vst.msk [vmem:[#allocation2 + $0x118] sm:$0xff] %vm308, %v279
      %317 = vst.msk [vmem:[#allocation2 + $0x140] sm:$0xff] %vm308, %v280
      %318 = vst.msk [vmem:[#allocation2 + $0x168] sm:$0xff] %vm308, %v281
      %319 = vst.msk [vmem:[#allocation2 + $0x190] sm:$0xff] %vm308, %v282
      %320 = vst.msk [vmem:[#allocation2 + $0x1b8] sm:$0xff] %vm308, %v283
      %321 = vst.msk [vmem:[#allocation2 + $0x1e0] sm:$0xff] %vm308, %v284
      %322 = vst.msk [vmem:[#allocation2 + $0x208] sm:$0xff] %vm308, %v285
      %323 = vst.msk [vmem:[#allocation2 + $0x230] sm:$0xff] %vm308, %v286
      %324 = vst.msk [vmem:[#allocation2 + $0x258] sm:$0xff] %vm308, %v287
      %325 = vst.msk [vmem:[#allocation2 + $0x280] sm:$0xff] %vm308, %v288
      %326 = vst.msk [vmem:[#allocation2 + $0x2a8] sm:$0xff] %vm308, %v289
      %327 = vst.msk [vmem:[#allocation2 + $0x2d0] sm:$0xff] %vm308, %v290
      %328 = vst.msk [vmem:[#allocation2 + $0x2f8] sm:$0xff] %vm308, %v291
      %329 = vst.msk [vmem:[#allocation2 + $0x320] sm:$0xff] %vm308, %v292
      %330 = vst.msk [vmem:[#allocation2 + $0x348] sm:$0xff] %vm308, %v293
      %331 = vst.msk [vmem:[#allocation2 + $0x370] sm:$0xff] %vm308, %v294
      %332 = vst.msk [vmem:[#allocation2 + $0x398] sm:$0xff] %vm308, %v295
      %333 = vst.msk [vmem:[#allocation2 + $0x3c0] sm:$0xff] %vm308, %v296
      %334 = vst.msk [vmem:[#allocation2 + $0x3e8] sm:$0xff] %vm308, %v297
      %335 = vst.msk [vmem:[#allocation2 + $0x410] sm:$0xff] %vm308, %v298
      %336 = vst.msk [vmem:[#allocation2 + $0x438] sm:$0xff] %vm308, %v299
      %337 = vst.msk [vmem:[#allocation2 + $0x460] sm:$0xff] %vm308, %v300
      %338 = vst.msk [vmem:[#allocation2 + $0x488] sm:$0xff] %vm308, %v301
      %339 = vst.msk [vmem:[#allocation2 + $0x4b0] sm:$0xff] %vm308, %v302
      %340 = vst.msk [vmem:[#allocation2 + $0x4d8] sm:$0xff] %vm308, %v303
      %341 = vst.msk [vmem:[#allocation2 + $0x500] sm:$0xff] %vm308, %v304
      %342 = vst.msk [vmem:[#allocation2 + $0x528] sm:$0xff] %vm308, %v305
      %343 = vst.msk [vmem:[#allocation2 + $0x550] sm:$0xff] %vm308, %v306
      %344 = vst.msk [vmem:[#allocation2 + $0x578] sm:$0xff] %vm308, %v307
      %v345 = vld [vmem:[%s266] sm:$0xff]
      %v346 = vld [vmem:[%s266 + $0x8] sm:$0xff]
      %v347 = vld [vmem:[%s266 + $0x10] sm:$0xff]
      %v348 = vld [vmem:[%s266 + $0x18] sm:$0xff]
      %v349 = vld [vmem:[%s266 + $0x20] sm:$0xff]
      %v350 = vld [vmem:[%s266 + $0x28] sm:$0xff]
      %v351 = vld [vmem:[%s266 + $0x30] sm:$0xff]
      %v352 = vld [vmem:[%s266 + $0x38] sm:$0xff]
      %v353 = vld [vmem:[%s266 + $0x40] sm:$0xff]
      %v354 = vld [vmem:[%s266 + $0x48] sm:$0xff]
      %v355 = vld [vmem:[%s266 + $0x50] sm:$0xff]
      %v356 = vld [vmem:[%s266 + $0x58] sm:$0xff]
      %v357 = vld [vmem:[%s266 + $0x60] sm:$0xff]
      %v358 = vld [vmem:[%s266 + $0x68] sm:$0xff]
      %v359 = vld [vmem:[%s266 + $0x70] sm:$0xff]
      %v360 = vld [vmem:[%s266 + $0x78] sm:$0xff]
      %v361 = vld [vmem:[%s266 + $0x80] sm:$0xff]
      %v362 = vld [vmem:[%s266 + $0x88] sm:$0xff]
      %v363 = vld [vmem:[%s266 + $0x90] sm:$0xff]
      %v364 = vld [vmem:[%s266 + $0x98] sm:$0xff]
      %v365 = vld [vmem:[%s266 + $0xa0] sm:$0xff]
      %v366 = vld [vmem:[%s266 + $0xa8] sm:$0xff]
      %v367 = vld [vmem:[%s266 + $0xb0] sm:$0xff]
      %v368 = vld [vmem:[%s266 + $0xb8] sm:$0xff]
      %v369 = vld [vmem:[%s266 + $0xc0] sm:$0xff]
      %v370 = vld [vmem:[%s266 + $0xc8] sm:$0xff]
      %v371 = vld [vmem:[%s266 + $0xd0] sm:$0xff]
      %v372 = vld [vmem:[%s266 + $0xd8] sm:$0xff]
      %v373 = vld [vmem:[%s266 + $0xe0] sm:$0xff]
      %v374 = vld [vmem:[%s266 + $0xe8] sm:$0xff]
      %v375 = vld [vmem:[%s266 + $0xf0] sm:$0xff]
      %v376 = vld [vmem:[%s266 + $0xf8] sm:$0xff]
      %v377 = vld [vmem:[%s266 + $0x100] sm:$0xff]
      %v378 = vld [vmem:[%s266 + $0x108] sm:$0xff]
      %v379 = vld [vmem:[%s266 + $0x110] sm:$0xff]
      %v380 = vld [vmem:[%s266 + $0x118] sm:$0xff]
      %417 = vrot.lane.b32.xlu0 %v345, 32
      %v418 = vpop.permute.xlu0 %417
      %419 = vrot.lane.b32.xlu0 %v346, 32
      %v420 = vpop.permute.xlu0 %419
      %421 = vrot.lane.b32.xlu0 %v347, 32
      %v422 = vpop.permute.xlu0 %421
      %423 = vrot.lane.b32.xlu0 %v348, 32
      %v424 = vpop.permute.xlu0 %423
      %425 = vrot.lane.b32.xlu0 %v349, 32
      %v426 = vpop.permute.xlu0 %425
      %427 = vrot.lane.b32.xlu0 %v350, 32
      %v428 = vpop.permute.xlu0 %427
      %429 = vrot.lane.b32.xlu0 %v351, 32
      %v430 = vpop.permute.xlu0 %429
      %431 = vrot.lane.b32.xlu0 %v352, 32
      %v432 = vpop.permute.xlu0 %431
      %433 = vrot.lane.b32.xlu0 %v353, 32
      %v434 = vpop.permute.xlu0 %433
      %435 = vrot.lane.b32.xlu0 %v354, 32
      %v436 = vpop.permute.xlu0 %435
      %437 = vrot.lane.b32.xlu0 %v355, 32
      %v438 = vpop.permute.xlu0 %437
      %439 = vrot.lane.b32.xlu0 %v356, 32
      %v440 = vpop.permute.xlu0 %439
      %441 = vrot.lane.b32.xlu0 %v357, 32
      %v442 = vpop.permute.xlu0 %441
      %443 = vrot.lane.b32.xlu0 %v358, 32
      %v444 = vpop.permute.xlu0 %443
      %445 = vrot.lane.b32.xlu0 %v359, 32
      %v446 = vpop.permute.xlu0 %445
      %447 = vrot.lane.b32.xlu0 %v360, 32
      %v448 = vpop.permute.xlu0 %447
      %449 = vrot.lane.b32.xlu0 %v361, 32
      %v450 = vpop.permute.xlu0 %449
      %451 = vrot.lane.b32.xlu0 %v362, 32
      %v452 = vpop.permute.xlu0 %451
      %453 = vrot.lane.b32.xlu0 %v363, 32
      %v454 = vpop.permute.xlu0 %453
      %455 = vrot.lane.b32.xlu0 %v364, 32
      %v456 = vpop.permute.xlu0 %455
      %457 = vrot.lane.b32.xlu0 %v365, 32
      %v458 = vpop.permute.xlu0 %457
      %459 = vrot.lane.b32.xlu0 %v366, 32
      %v460 = vpop.permute.xlu0 %459
      %461 = vrot.lane.b32.xlu0 %v367, 32
      %v462 = vpop.permute.xlu0 %461
      %463 = vrot.lane.b32.xlu0 %v368, 32
      %v464 = vpop.permute.xlu0 %463
      %465 = vrot.lane.b32.xlu0 %v369, 32
      %v466 = vpop.permute.xlu0 %465
      %467 = vrot.lane.b32.xlu0 %v370, 32
      %v468 = vpop.permute.xlu0 %467
      %469 = vrot.lane.b32.xlu0 %v371, 32
      %v470 = vpop.permute.xlu0 %469
      %471 = vrot.lane.b32.xlu0 %v372, 32
      %v472 = vpop.permute.xlu0 %471
      %473 = vrot.lane.b32.xlu0 %v373, 32
      %v474 = vpop.permute.xlu0 %473
      %475 = vrot.lane.b32.xlu0 %v374, 32
      %v476 = vpop.permute.xlu0 %475
      %477 = vrot.lane.b32.xlu0 %v375, 32
      %v478 = vpop.permute.xlu0 %477
      %479 = vrot.lane.b32.xlu0 %v376, 32
      %v480 = vpop.permute.xlu0 %479
      %481 = vrot.lane.b32.xlu0 %v377, 32
      %v482 = vpop.permute.xlu0 %481
      %483 = vrot.lane.b32.xlu0 %v378, 32
      %v484 = vpop.permute.xlu0 %483
      %485 = vrot.lane.b32.xlu0 %v379, 32
      %v486 = vpop.permute.xlu0 %485
      %487 = vrot.lane.b32.xlu0 %v380, 32
      %v488 = vpop.permute.xlu0 %487
      %vm525 = vcmask 523520
      %526 = vst.msk [vmem:[#allocation2] sm:$0xff] %vm525, %v418
      %527 = vst.msk [vmem:[#allocation2 + $0x28] sm:$0xff] %vm525, %v420
      %528 = vst.msk [vmem:[#allocation2 + $0x50] sm:$0xff] %vm525, %v422
      %529 = vst.msk [vmem:[#allocation2 + $0x78] sm:$0xff] %vm525, %v424
      %530 = vst.msk [vmem:[#allocation2 + $0xa0] sm:$0xff] %vm525, %v426
      %531 = vst.msk [vmem:[#allocation2 + $0xc8] sm:$0xff] %vm525, %v428
      %532 = vst.msk [vmem:[#allocation2 + $0xf0] sm:$0xff] %vm525, %v430
      %533 = vst.msk [vmem:[#allocation2 + $0x118] sm:$0xff] %vm525, %v432
      %534 = vst.msk [vmem:[#allocation2 + $0x140] sm:$0xff] %vm525, %v434
      %535 = vst.msk [vmem:[#allocation2 + $0x168] sm:$0xff] %vm525, %v436
      %536 = vst.msk [vmem:[#allocation2 + $0x190] sm:$0xff] %vm525, %v438
      %537 = vst.msk [vmem:[#allocation2 + $0x1b8] sm:$0xff] %vm525, %v440
      %538 = vst.msk [vmem:[#allocation2 + $0x1e0] sm:$0xff] %vm525, %v442
      %539 = vst.msk [vmem:[#allocation2 + $0x208] sm:$0xff] %vm525, %v444
      %540 = vst.msk [vmem:[#allocation2 + $0x230] sm:$0xff] %vm525, %v446
      %541 = vst.msk [vmem:[#allocation2 + $0x258] sm:$0xff] %vm525, %v448
      %542 = vst.msk [vmem:[#allocation2 + $0x280] sm:$0xff] %vm525, %v450
      %543 = vst.msk [vmem:[#allocation2 + $0x2a8] sm:$0xff] %vm525, %v452
      %544 = vst.msk [vmem:[#allocation2 + $0x2d0] sm:$0xff] %vm525, %v454
      %545 = vst.msk [vmem:[#allocation2 + $0x2f8] sm:$0xff] %vm525, %v456
      %546 = vst.msk [vmem:[#allocation2 + $0x320] sm:$0xff] %vm525, %v458
      %547 = vst.msk [vmem:[#allocation2 + $0x348] sm:$0xff] %vm525, %v460
      %548 = vst.msk [vmem:[#allocation2 + $0x370] sm:$0xff] %vm525, %v462
      %549 = vst.msk [vmem:[#allocation2 + $0x398] sm:$0xff] %vm525, %v464
      %550 = vst.msk [vmem:[#allocation2 + $0x3c0] sm:$0xff] %vm525, %v466
      %551 = vst.msk [vmem:[#allocation2 + $0x3e8] sm:$0xff] %vm525, %v468
      %552 = vst.msk [vmem:[#allocation2 + $0x410] sm:$0xff] %vm525, %v470
      %553 = vst.msk [vmem:[#allocation2 + $0x438] sm:$0xff] %vm525, %v472
      %554 = vst.msk [vmem:[#allocation2 + $0x460] sm:$0xff] %vm525, %v474
      %555 = vst.msk [vmem:[#allocation2 + $0x488] sm:$0xff] %vm525, %v476
      %556 = vst.msk [vmem:[#allocation2 + $0x4b0] sm:$0xff] %vm525, %v478
      %557 = vst.msk [vmem:[#allocation2 + $0x4d8] sm:$0xff] %vm525, %v480
      %558 = vst.msk [vmem:[#allocation2 + $0x500] sm:$0xff] %vm525, %v482
      %559 = vst.msk [vmem:[#allocation2 + $0x528] sm:$0xff] %vm525, %v484
      %560 = vst.msk [vmem:[#allocation2 + $0x550] sm:$0xff] %vm525, %v486
      %561 = vst.msk [vmem:[#allocation2 + $0x578] sm:$0xff] %vm525, %v488
      %v562 = vld [vmem:[%s261 + $0x1] sm:$0xff]
      %v563 = vld [vmem:[%s261 + $0x9] sm:$0xff]
      %v564 = vld [vmem:[%s261 + $0x11] sm:$0xff]
      %v565 = vld [vmem:[%s261 + $0x19] sm:$0xff]
      %v566 = vld [vmem:[%s261 + $0x21] sm:$0xff]
      %v567 = vld [vmem:[%s261 + $0x29] sm:$0xff]
      %v568 = vld [vmem:[%s261 + $0x31] sm:$0xff]
      %v569 = vld [vmem:[%s261 + $0x39] sm:$0xff]
      %v570 = vld [vmem:[%s261 + $0x41] sm:$0xff]
      %v571 = vld [vmem:[%s261 + $0x49] sm:$0xff]
      %v572 = vld [vmem:[%s261 + $0x51] sm:$0xff]
      %v573 = vld [vmem:[%s261 + $0x59] sm:$0xff]
      %v574 = vld [vmem:[%s261 + $0x61] sm:$0xff]
      %v575 = vld [vmem:[%s261 + $0x69] sm:$0xff]
      %v576 = vld [vmem:[%s261 + $0x71] sm:$0xff]
      %v577 = vld [vmem:[%s261 + $0x79] sm:$0xff]
      %v578 = vld [vmem:[%s261 + $0x81] sm:$0xff]
      %v579 = vld [vmem:[%s261 + $0x89] sm:$0xff]
      %v580 = vld [vmem:[%s261 + $0x91] sm:$0xff]
      %v581 = vld [vmem:[%s261 + $0x99] sm:$0xff]
      %v582 = vld [vmem:[%s261 + $0xa1] sm:$0xff]
      %v583 = vld [vmem:[%s261 + $0xa9] sm:$0xff]
      %v584 = vld [vmem:[%s261 + $0xb1] sm:$0xff]
      %v585 = vld [vmem:[%s261 + $0xb9] sm:$0xff]
      %v586 = vld [vmem:[%s261 + $0xc1] sm:$0xff]
      %v587 = vld [vmem:[%s261 + $0xc9] sm:$0xff]
      %v588 = vld [vmem:[%s261 + $0xd1] sm:$0xff]
      %v589 = vld [vmem:[%s261 + $0xd9] sm:$0xff]
      %v590 = vld [vmem:[%s261 + $0xe1] sm:$0xff]
      %v591 = vld [vmem:[%s261 + $0xe9] sm:$0xff]
      %v592 = vld [vmem:[%s261 + $0xf1] sm:$0xff]
      %v593 = vld [vmem:[%s261 + $0xf9] sm:$0xff]
      %v594 = vld [vmem:[%s261 + $0x101] sm:$0xff]
      %v595 = vld [vmem:[%s261 + $0x109] sm:$0xff]
      %v596 = vld [vmem:[%s261 + $0x111] sm:$0xff]
      %v597 = vld [vmem:[%s261 + $0x119] sm:$0xff]
      %634 = vrot.lane.b32.xlu0 %v562, 64
      %v635 = vpop.permute.xlu0 %634
      %636 = vrot.lane.b32.xlu0 %v563, 64
      %v637 = vpop.permute.xlu0 %636
      %638 = vrot.lane.b32.xlu0 %v564, 64
      %v639 = vpop.permute.xlu0 %638
      %640 = vrot.lane.b32.xlu0 %v565, 64
      %v641 = vpop.permute.xlu0 %640
      %642 = vrot.lane.b32.xlu0 %v566, 64
      %v643 = vpop.permute.xlu0 %642
      %644 = vrot.lane.b32.xlu0 %v567, 64
      %v645 = vpop.permute.xlu0 %644
      %646 = vrot.lane.b32.xlu0 %v568, 64
      %v647 = vpop.permute.xlu0 %646
      %648 = vrot.lane.b32.xlu0 %v569, 64
      %v649 = vpop.permute.xlu0 %648
      %650 = vrot.lane.b32.xlu0 %v570, 64
      %v651 = vpop.permute.xlu0 %650
      %652 = vrot.lane.b32.xlu0 %v571, 64
      %v653 = vpop.permute.xlu0 %652
      %654 = vrot.lane.b32.xlu0 %v572, 64
      %v655 = vpop.permute.xlu0 %654
      %656 = vrot.lane.b32.xlu0 %v573, 64
      %v657 = vpop.permute.xlu0 %656
      %658 = vrot.lane.b32.xlu0 %v574, 64
      %v659 = vpop.permute.xlu0 %658
      %660 = vrot.lane.b32.xlu0 %v575, 64
      %v661 = vpop.permute.xlu0 %660
      %662 = vrot.lane.b32.xlu0 %v576, 64
      %v663 = vpop.permute.xlu0 %662
      %664 = vrot.lane.b32.xlu0 %v577, 64
      %v665 = vpop.permute.xlu0 %664
      %666 = vrot.lane.b32.xlu0 %v578, 64
      %v667 = vpop.permute.xlu0 %666
      %668 = vrot.lane.b32.xlu0 %v579, 64
      %v669 = vpop.permute.xlu0 %668
      %670 = vrot.lane.b32.xlu0 %v580, 64
      %v671 = vpop.permute.xlu0 %670
      %672 = vrot.lane.b32.xlu0 %v581, 64
      %v673 = vpop.permute.xlu0 %672
      %674 = vrot.lane.b32.xlu0 %v582, 64
      %v675 = vpop.permute.xlu0 %674
      %676 = vrot.lane.b32.xlu0 %v583, 64
      %v677 = vpop.permute.xlu0 %676
      %678 = vrot.lane.b32.xlu0 %v584, 64
      %v679 = vpop.permute.xlu0 %678
      %680 = vrot.lane.b32.xlu0 %v585, 64
      %v681 = vpop.permute.xlu0 %680
      %682 = vrot.lane.b32.xlu0 %v586, 64
      %v683 = vpop.permute.xlu0 %682
      %684 = vrot.lane.b32.xlu0 %v587, 64
      %v685 = vpop.permute.xlu0 %684
      %686 = vrot.lane.b32.xlu0 %v588, 64
      %v687 = vpop.permute.xlu0 %686
      %688 = vrot.lane.b32.xlu0 %v589, 64
      %v689 = vpop.permute.xlu0 %688
      %690 = vrot.lane.b32.xlu0 %v590, 64
      %v691 = vpop.permute.xlu0 %690
      %692 = vrot.lane.b32.xlu0 %v591, 64
      %v693 = vpop.permute.xlu0 %692
      %694 = vrot.lane.b32.xlu0 %v592, 64
      %v695 = vpop.permute.xlu0 %694
      %696 = vrot.lane.b32.xlu0 %v593, 64
      %v697 = vpop.permute.xlu0 %696
      %698 = vrot.lane.b32.xlu0 %v594, 64
      %v699 = vpop.permute.xlu0 %698
      %700 = vrot.lane.b32.xlu0 %v595, 64
      %v701 = vpop.permute.xlu0 %700
      %702 = vrot.lane.b32.xlu0 %v596, 64
      %v703 = vpop.permute.xlu0 %702
      %704 = vrot.lane.b32.xlu0 %v597, 64
      %v705 = vpop.permute.xlu0 %704
      %vm742 = vcmask 785920
      %743 = vst.msk [vmem:[#allocation2] sm:$0xff] %vm742, %v635
      %744 = vst.msk [vmem:[#allocation2 + $0x28] sm:$0xff] %vm742, %v637
      %745 = vst.msk [vmem:[#allocation2 + $0x50] sm:$0xff] %vm742, %v639
      %746 = vst.msk [vmem:[#allocation2 + $0x78] sm:$0xff] %vm742, %v641
      %747 = vst.msk [vmem:[#allocation2 + $0xa0] sm:$0xff] %vm742, %v643
      %748 = vst.msk [vmem:[#allocation2 + $0xc8] sm:$0xff] %vm742, %v645
      %749 = vst.msk [vmem:[#allocation2 + $0xf0] sm:$0xff] %vm742, %v647
      %750 = vst.msk [vmem:[#allocation2 + $0x118] sm:$0xff] %vm742, %v649
      %751 = vst.msk [vmem:[#allocation2 + $0x140] sm:$0xff] %vm742, %v651
      %752 = vst.msk [vmem:[#allocation2 + $0x168] sm:$0xff] %vm742, %v653
      %753 = vst.msk [vmem:[#allocation2 + $0x190] sm:$0xff] %vm742, %v655
      %754 = vst.msk [vmem:[#allocation2 + $0x1b8] sm:$0xff] %vm742, %v657
      %755 = vst.msk [vmem:[#allocation2 + $0x1e0] sm:$0xff] %vm742, %v659
      %756 = vst.msk [vmem:[#allocation2 + $0x208] sm:$0xff] %vm742, %v661
      %757 = vst.msk [vmem:[#allocation2 + $0x230] sm:$0xff] %vm742, %v663
      %758 = vst.msk [vmem:[#allocation2 + $0x258] sm:$0xff] %vm742, %v665
      %759 = vst.msk [vmem:[#allocation2 + $0x280] sm:$0xff] %vm742, %v667
      %760 = vst.msk [vmem:[#allocation2 + $0x2a8] sm:$0xff] %vm742, %v669
      %761 = vst.msk [vmem:[#allocation2 + $0x2d0] sm:$0xff] %vm742, %v671
      %762 = vst.msk [vmem:[#allocation2 + $0x2f8] sm:$0xff] %vm742, %v673
      %763 = vst.msk [vmem:[#allocation2 + $0x320] sm:$0xff] %vm742, %v675
      %764 = vst.msk [vmem:[#allocation2 + $0x348] sm:$0xff] %vm742, %v677
      %765 = vst.msk [vmem:[#allocation2 + $0x370] sm:$0xff] %vm742, %v679
      %766 = vst.msk [vmem:[#allocation2 + $0x398] sm:$0xff] %vm742, %v681
      %767 = vst.msk [vmem:[#allocation2 + $0x3c0] sm:$0xff] %vm742, %v683
      %768 = vst.msk [vmem:[#allocation2 + $0x3e8] sm:$0xff] %vm742, %v685
      %769 = vst.msk [vmem:[#allocation2 + $0x410] sm:$0xff] %vm742, %v687
      %770 = vst.msk [vmem:[#allocation2 + $0x438] sm:$0xff] %vm742, %v689
      %771 = vst.msk [vmem:[#allocation2 + $0x460] sm:$0xff] %vm742, %v691
      %772 = vst.msk [vmem:[#allocation2 + $0x488] sm:$0xff] %vm742, %v693
      %773 = vst.msk [vmem:[#allocation2 + $0x4b0] sm:$0xff] %vm742, %v695
      %774 = vst.msk [vmem:[#allocation2 + $0x4d8] sm:$0xff] %vm742, %v697
      %775 = vst.msk [vmem:[#allocation2 + $0x500] sm:$0xff] %vm742, %v699
      %776 = vst.msk [vmem:[#allocation2 + $0x528] sm:$0xff] %vm742, %v701
      %777 = vst.msk [vmem:[#allocation2 + $0x550] sm:$0xff] %vm742, %v703
      %778 = vst.msk [vmem:[#allocation2 + $0x578] sm:$0xff] %vm742, %v705
      %v779 = vld [vmem:[%s266 + $0x1] sm:$0xff]
      %v780 = vld [vmem:[%s266 + $0x9] sm:$0xff]
      %v781 = vld [vmem:[%s266 + $0x11] sm:$0xff]
      %v782 = vld [vmem:[%s266 + $0x19] sm:$0xff]
      %v783 = vld [vmem:[%s266 + $0x21] sm:$0xff]
      %v784 = vld [vmem:[%s266 + $0x29] sm:$0xff]
      %v785 = vld [vmem:[%s266 + $0x31] sm:$0xff]
      %v786 = vld [vmem:[%s266 + $0x39] sm:$0xff]
      %v787 = vld [vmem:[%s266 + $0x41] sm:$0xff]
      %v788 = vld [vmem:[%s266 + $0x49] sm:$0xff]
      %v789 = vld [vmem:[%s266 + $0x51] sm:$0xff]
      %v790 = vld [vmem:[%s266 + $0x59] sm:$0xff]
      %v791 = vld [vmem:[%s266 + $0x61] sm:$0xff]
      %v792 = vld [vmem:[%s266 + $0x69] sm:$0xff]
      %v793 = vld [vmem:[%s266 + $0x71] sm:$0xff]
      %v794 = vld [vmem:[%s266 + $0x79] sm:$0xff]
      %v795 = vld [vmem:[%s266 + $0x81] sm:$0xff]
      %v796 = vld [vmem:[%s266 + $0x89] sm:$0xff]
      %v797 = vld [vmem:[%s266 + $0x91] sm:$0xff]
      %v798 = vld [vmem:[%s266 + $0x99] sm:$0xff]
      %v799 = vld [vmem:[%s266 + $0xa1] sm:$0xff]
      %v800 = vld [vmem:[%s266 + $0xa9] sm:$0xff]
      %v801 = vld [vmem:[%s266 + $0xb1] sm:$0xff]
      %v802 = vld [vmem:[%s266 + $0xb9] sm:$0xff]
      %v803 = vld [vmem:[%s266 + $0xc1] sm:$0xff]
      %v804 = vld [vmem:[%s266 + $0xc9] sm:$0xff]
      %v805 = vld [vmem:[%s266 + $0xd1] sm:$0xff]
      %v806 = vld [vmem:[%s266 + $0xd9] sm:$0xff]
      %v807 = vld [vmem:[%s266 + $0xe1] sm:$0xff]
      %v808 = vld [vmem:[%s266 + $0xe9] sm:$0xff]
      %v809 = vld [vmem:[%s266 + $0xf1] sm:$0xff]
      %v810 = vld [vmem:[%s266 + $0xf9] sm:$0xff]
      %v811 = vld [vmem:[%s266 + $0x101] sm:$0xff]
      %v812 = vld [vmem:[%s266 + $0x109] sm:$0xff]
      %v813 = vld [vmem:[%s266 + $0x111] sm:$0xff]
      %v814 = vld [vmem:[%s266 + $0x119] sm:$0xff]
      %851 = vrot.lane.b32.xlu0 %v779, 96
      %v852 = vpop.permute.xlu0 %851
      %853 = vrot.lane.b32.xlu0 %v780, 96
      %v854 = vpop.permute.xlu0 %853
      %855 = vrot.lane.b32.xlu0 %v781, 96
      %v856 = vpop.permute.xlu0 %855
      %857 = vrot.lane.b32.xlu0 %v782, 96
      %v858 = vpop.permute.xlu0 %857
      %859 = vrot.lane.b32.xlu0 %v783, 96
      %v860 = vpop.permute.xlu0 %859
      %861 = vrot.lane.b32.xlu0 %v784, 96
      %v862 = vpop.permute.xlu0 %861
      %863 = vrot.lane.b32.xlu0 %v785, 96
      %v864 = vpop.permute.xlu0 %863
      %865 = vrot.lane.b32.xlu0 %v786, 96
      %v866 = vpop.permute.xlu0 %865
      %867 = vrot.lane.b32.xlu0 %v787, 96
      %v868 = vpop.permute.xlu0 %867
      %869 = vrot.lane.b32.xlu0 %v788, 96
      %v870 = vpop.permute.xlu0 %869
      %871 = vrot.lane.b32.xlu0 %v789, 96
      %v872 = vpop.permute.xlu0 %871
      %873 = vrot.lane.b32.xlu0 %v790, 96
      %v874 = vpop.permute.xlu0 %873
      %875 = vrot.lane.b32.xlu0 %v791, 96
      %v876 = vpop.permute.xlu0 %875
      %877 = vrot.lane.b32.xlu0 %v792, 96
      %v878 = vpop.permute.xlu0 %877
      %879 = vrot.lane.b32.xlu0 %v793, 96
      %v880 = vpop.permute.xlu0 %879
      %881 = vrot.lane.b32.xlu0 %v794, 96
      %v882 = vpop.permute.xlu0 %881
      %883 = vrot.lane.b32.xlu0 %v795, 96
      %v884 = vpop.permute.xlu0 %883
      %885 = vrot.lane.b32.xlu0 %v796, 96
      %v886 = vpop.permute.xlu0 %885
      %887 = vrot.lane.b32.xlu0 %v797, 96
      %v888 = vpop.permute.xlu0 %887
      %889 = vrot.lane.b32.xlu0 %v798, 96
      %v890 = vpop.permute.xlu0 %889
      %891 = vrot.lane.b32.xlu0 %v799, 96
      %v892 = vpop.permute.xlu0 %891
      %893 = vrot.lane.b32.xlu0 %v800, 96
      %v894 = vpop.permute.xlu0 %893
      %895 = vrot.lane.b32.xlu0 %v801, 96
      %v896 = vpop.permute.xlu0 %895
      %897 = vrot.lane.b32.xlu0 %v802, 96
      %v898 = vpop.permute.xlu0 %897
      %899 = vrot.lane.b32.xlu0 %v803, 96
      %v900 = vpop.permute.xlu0 %899
      %901 = vrot.lane.b32.xlu0 %v804, 96
      %v902 = vpop.permute.xlu0 %901
      %903 = vrot.lane.b32.xlu0 %v805, 96
      %v904 = vpop.permute.xlu0 %903
      %905 = vrot.lane.b32.xlu0 %v806, 96
      %v906 = vpop.permute.xlu0 %905
      %907 = vrot.lane.b32.xlu0 %v807, 96
      %v908 = vpop.permute.xlu0 %907
      %909 = vrot.lane.b32.xlu0 %v808, 96
      %v910 = vpop.permute.xlu0 %909
      %911 = vrot.lane.b32.xlu0 %v809, 96
      %v912 = vpop.permute.xlu0 %911
      %913 = vrot.lane.b32.xlu0 %v810, 96
      %v914 = vpop.permute.xlu0 %913
      %915 = vrot.lane.b32.xlu0 %v811, 96
      %v916 = vpop.permute.xlu0 %915
      %917 = vrot.lane.b32.xlu0 %v812, 96
      %v918 = vpop.permute.xlu0 %917
      %919 = vrot.lane.b32.xlu0 %v813, 96
      %v920 = vpop.permute.xlu0 %919
      %921 = vrot.lane.b32.xlu0 %v814, 96
      %v922 = vpop.permute.xlu0 %921
      %vm959 = vcmask 1048320
      %960 = vst.msk [vmem:[#allocation2] sm:$0xff] %vm959, %v852
      %961 = vst.msk [vmem:[#allocation2 + $0x28] sm:$0xff] %vm959, %v854
      %962 = vst.msk [vmem:[#allocation2 + $0x50] sm:$0xff] %vm959, %v856
      %963 = vst.msk [vmem:[#allocation2 + $0x78] sm:$0xff] %vm959, %v858
      %964 = vst.msk [vmem:[#allocation2 + $0xa0] sm:$0xff] %vm959, %v860
      %965 = vst.msk [vmem:[#allocation2 + $0xc8] sm:$0xff] %vm959, %v862
      %966 = vst.msk [vmem:[#allocation2 + $0xf0] sm:$0xff] %vm959, %v864
      %967 = vst.msk [vmem:[#allocation2 + $0x118] sm:$0xff] %vm959, %v866
      %968 = vst.msk [vmem:[#allocation2 + $0x140] sm:$0xff] %vm959, %v868
      %969 = vst.msk [vmem:[#allocation2 + $0x168] sm:$0xff] %vm959, %v870
      %970 = vst.msk [vmem:[#allocation2 + $0x190] sm:$0xff] %vm959, %v872
      %971 = vst.msk [vmem:[#allocation2 + $0x1b8] sm:$0xff] %vm959, %v874
      %972 = vst.msk [vmem:[#allocation2 + $0x1e0] sm:$0xff] %vm959, %v876
      %973 = vst.msk [vmem:[#allocation2 + $0x208] sm:$0xff] %vm959, %v878
      %974 = vst.msk [vmem:[#allocation2 + $0x230] sm:$0xff] %vm959, %v880
      %975 = vst.msk [vmem:[#allocation2 + $0x258] sm:$0xff] %vm959, %v882
      %976 = vst.msk [vmem:[#allocation2 + $0x280] sm:$0xff] %vm959, %v884
      %977 = vst.msk [vmem:[#allocation2 + $0x2a8] sm:$0xff] %vm959, %v886
      %978 = vst.msk [vmem:[#allocation2 + $0x2d0] sm:$0xff] %vm959, %v888
      %979 = vst.msk [vmem:[#allocation2 + $0x2f8] sm:$0xff] %vm959, %v890
      %980 = vst.msk [vmem:[#allocation2 + $0x320] sm:$0xff] %vm959, %v892
      %981 = vst.msk [vmem:[#allocation2 + $0x348] sm:$0xff] %vm959, %v894
      %982 = vst.msk [vmem:[#allocation2 + $0x370] sm:$0xff] %vm959, %v896
      %983 = vst.msk [vmem:[#allocation2 + $0x398] sm:$0xff] %vm959, %v898
      %984 = vst.msk [vmem:[#allocation2 + $0x3c0] sm:$0xff] %vm959, %v900
      %985 = vst.msk [vmem:[#allocation2 + $0x3e8] sm:$0xff] %vm959, %v902
      %986 = vst.msk [vmem:[#allocation2 + $0x410] sm:$0xff] %vm959, %v904
      %987 = vst.msk [vmem:[#allocation2 + $0x438] sm:$0xff] %vm959, %v906
      %988 = vst.msk [vmem:[#allocation2 + $0x460] sm:$0xff] %vm959, %v908
      %989 = vst.msk [vmem:[#allocation2 + $0x488] sm:$0xff] %vm959, %v910
      %990 = vst.msk [vmem:[#allocation2 + $0x4b0] sm:$0xff] %vm959, %v912
      %991 = vst.msk [vmem:[#allocation2 + $0x4d8] sm:$0xff] %vm959, %v914
      %992 = vst.msk [vmem:[#allocation2 + $0x500] sm:$0xff] %vm959, %v916
      %993 = vst.msk [vmem:[#allocation2 + $0x528] sm:$0xff] %vm959, %v918
      %994 = vst.msk [vmem:[#allocation2 + $0x550] sm:$0xff] %vm959, %v920
      %995 = vst.msk [vmem:[#allocation2 + $0x578] sm:$0xff] %vm959, %v922
      %v996 = vld [vmem:[%s261 + $0x2] sm:$0xff]
      %v997 = vld [vmem:[%s261 + $0xa] sm:$0xff]
      %v998 = vld [vmem:[%s261 + $0x12] sm:$0xff]
      %v999 = vld [vmem:[%s261 + $0x1a] sm:$0xff]
      %v1000 = vld [vmem:[%s261 + $0x22] sm:$0xff]
      %v1001 = vld [vmem:[%s261 + $0x2a] sm:$0xff]
      %v1002 = vld [vmem:[%s261 + $0x32] sm:$0xff]
      %v1003 = vld [vmem:[%s261 + $0x3a] sm:$0xff]
      %v1004 = vld [vmem:[%s261 + $0x42] sm:$0xff]
      %v1005 = vld [vmem:[%s261 + $0x4a] sm:$0xff]
      %v1006 = vld [vmem:[%s261 + $0x52] sm:$0xff]
      %v1007 = vld [vmem:[%s261 + $0x5a] sm:$0xff]
      %v1008 = vld [vmem:[%s261 + $0x62] sm:$0xff]
      %v1009 = vld [vmem:[%s261 + $0x6a] sm:$0xff]
      %v1010 = vld [vmem:[%s261 + $0x72] sm:$0xff]
      %v1011 = vld [vmem:[%s261 + $0x7a] sm:$0xff]
      %v1012 = vld [vmem:[%s261 + $0x82] sm:$0xff]
      %v1013 = vld [vmem:[%s261 + $0x8a] sm:$0xff]
      %v1014 = vld [vmem:[%s261 + $0x92] sm:$0xff]
      %v1015 = vld [vmem:[%s261 + $0x9a] sm:$0xff]
      %v1016 = vld [vmem:[%s261 + $0xa2] sm:$0xff]
      %v1017 = vld [vmem:[%s261 + $0xaa] sm:$0xff]
      %v1018 = vld [vmem:[%s261 + $0xb2] sm:$0xff]
      %v1019 = vld [vmem:[%s261 + $0xba] sm:$0xff]
      %v1020 = vld [vmem:[%s261 + $0xc2] sm:$0xff]
      %v1021 = vld [vmem:[%s261 + $0xca] sm:$0xff]
      %v1022 = vld [vmem:[%s261 + $0xd2] sm:$0xff]
      %v1023 = vld [vmem:[%s261 + $0xda] sm:$0xff]
      %v1024 = vld [vmem:[%s261 + $0xe2] sm:$0xff]
      %v1025 = vld [vmem:[%s261 + $0xea] sm:$0xff]
      %v1026 = vld [vmem:[%s261 + $0xf2] sm:$0xff]
      %v1027 = vld [vmem:[%s261 + $0xfa] sm:$0xff]
      %v1028 = vld [vmem:[%s261 + $0x102] sm:$0xff]
      %v1029 = vld [vmem:[%s261 + $0x10a] sm:$0xff]
      %v1030 = vld [vmem:[%s261 + $0x112] sm:$0xff]
      %v1031 = vld [vmem:[%s261 + $0x11a] sm:$0xff]
      %1032 = vst.msk [vmem:[#allocation2 + $0x8] sm:$0xff] %vm308, %v996
      %1033 = vst.msk [vmem:[#allocation2 + $0x30] sm:$0xff] %vm308, %v997
      %1034 = vst.msk [vmem:[#allocation2 + $0x58] sm:$0xff] %vm308, %v998
      %1035 = vst.msk [vmem:[#allocation2 + $0x80] sm:$0xff] %vm308, %v999
      %1036 = vst.msk [vmem:[#allocation2 + $0xa8] sm:$0xff] %vm308, %v1000
      %1037 = vst.msk [vmem:[#allocation2 + $0xd0] sm:$0xff] %vm308, %v1001
      %1038 = vst.msk [vmem:[#allocation2 + $0xf8] sm:$0xff] %vm308, %v1002
      %1039 = vst.msk [vmem:[#allocation2 + $0x120] sm:$0xff] %vm308, %v1003
      %1040 = vst.msk [vmem:[#allocation2 + $0x148] sm:$0xff] %vm308, %v1004
      %1041 = vst.msk [vmem:[#allocation2 + $0x170] sm:$0xff] %vm308, %v1005
      %1042 = vst.msk [vmem:[#allocation2 + $0x198] sm:$0xff] %vm308, %v1006
      %1043 = vst.msk [vmem:[#allocation2 + $0x1c0] sm:$0xff] %vm308, %v1007
      %1044 = vst.msk [vmem:[#allocation2 + $0x1e8] sm:$0xff] %vm308, %v1008
      %1045 = vst.msk [vmem:[#allocation2 + $0x210] sm:$0xff] %vm308, %v1009
      %1046 = vst.msk [vmem:[#allocation2 + $0x238] sm:$0xff] %vm308, %v1010
      %1047 = vst.msk [vmem:[#allocation2 + $0x260] sm:$0xff] %vm308, %v1011
      %1048 = vst.msk [vmem:[#allocation2 + $0x288] sm:$0xff] %vm308, %v1012
      %1049 = vst.msk [vmem:[#allocation2 + $0x2b0] sm:$0xff] %vm308, %v1013
      %1050 = vst.msk [vmem:[#allocation2 + $0x2d8] sm:$0xff] %vm308, %v1014
      %1051 = vst.msk [vmem:[#allocation2 + $0x300] sm:$0xff] %vm308, %v1015
      %1052 = vst.msk [vmem:[#allocation2 + $0x328] sm:$0xff] %vm308, %v1016
      %1053 = vst.msk [vmem:[#allocation2 + $0x350] sm:$0xff] %vm308, %v1017
      %1054 = vst.msk [vmem:[#allocation2 + $0x378] sm:$0xff] %vm308, %v1018
      %1055 = vst.msk [vmem:[#allocation2 + $0x3a0] sm:$0xff] %vm308, %v1019
      %1056 = vst.msk [vmem:[#allocation2 + $0x3c8] sm:$0xff] %vm308, %v1020
      %1057 = vst.msk [vmem:[#allocation2 + $0x3f0] sm:$0xff] %vm308, %v1021
      %1058 = vst.msk [vmem:[#allocation2 + $0x418] sm:$0xff] %vm308, %v1022
      %1059 = vst.msk [vmem:[#allocation2 + $0x440] sm:$0xff] %vm308, %v1023
      %1060 = vst.msk [vmem:[#allocation2 + $0x468] sm:$0xff] %vm308, %v1024
      %1061 = vst.msk [vmem:[#allocation2 + $0x490] sm:$0xff] %vm308, %v1025
      %1062 = vst.msk [vmem:[#allocation2 + $0x4b8] sm:$0xff] %vm308, %v1026
      %1063 = vst.msk [vmem:[#allocation2 + $0x4e0] sm:$0xff] %vm308, %v1027
      %1064 = vst.msk [vmem:[#allocation2 + $0x508] sm:$0xff] %vm308, %v1028
      %1065 = vst.msk [vmem:[#allocation2 + $0x530] sm:$0xff] %vm308, %v1029
      %1066 = vst.msk [vmem:[#allocation2 + $0x558] sm:$0xff] %vm308, %v1030
      %1067 = vst.msk [vmem:[#allocation2 + $0x580] sm:$0xff] %vm308, %v1031
      %v1068 = vld [vmem:[%s266 + $0x2] sm:$0xff]
      %v1069 = vld [vmem:[%s266 + $0xa] sm:$0xff]
      %v1070 = vld [vmem:[%s266 + $0x12] sm:$0xff]
      %v1071 = vld [vmem:[%s266 + $0x1a] sm:$0xff]
      %v1072 = vld [vmem:[%s266 + $0x22] sm:$0xff]
      %v1073 = vld [vmem:[%s266 + $0x2a] sm:$0xff]
      %v1074 = vld [vmem:[%s266 + $0x32] sm:$0xff]
      %v1075 = vld [vmem:[%s266 + $0x3a] sm:$0xff]
      %v1076 = vld [vmem:[%s266 + $0x42] sm:$0xff]
      %v1077 = vld [vmem:[%s266 + $0x4a] sm:$0xff]
      %v1078 = vld [vmem:[%s266 + $0x52] sm:$0xff]
      %v1079 = vld [vmem:[%s266 + $0x5a] sm:$0xff]
      %v1080 = vld [vmem:[%s266 + $0x62] sm:$0xff]
      %v1081 = vld [vmem:[%s266 + $0x6a] sm:$0xff]
      %v1082 = vld [vmem:[%s266 + $0x72] sm:$0xff]
      %v1083 = vld [vmem:[%s266 + $0x7a] sm:$0xff]
      %v1084 = vld [vmem:[%s266 + $0x82] sm:$0xff]
      %v1085 = vld [vmem:[%s266 + $0x8a] sm:$0xff]
      %v1086 = vld [vmem:[%s266 + $0x92] sm:$0xff]
      %v1087 = vld [vmem:[%s266 + $0x9a] sm:$0xff]
      %v1088 = vld [vmem:[%s266 + $0xa2] sm:$0xff]
      %v1089 = vld [vmem:[%s266 + $0xaa] sm:$0xff]
      %v1090 = vld [vmem:[%s266 + $0xb2] sm:$0xff]
      %v1091 = vld [vmem:[%s266 + $0xba] sm:$0xff]
      %v1092 = vld [vmem:[%s266 + $0xc2] sm:$0xff]
      %v1093 = vld [vmem:[%s266 + $0xca] sm:$0xff]
      %v1094 = vld [vmem:[%s266 + $0xd2] sm:$0xff]
      %v1095 = vld [vmem:[%s266 + $0xda] sm:$0xff]
      %v1096 = vld [vmem:[%s266 + $0xe2] sm:$0xff]
      %v1097 = vld [vmem:[%s266 + $0xea] sm:$0xff]
      %v1098 = vld [vmem:[%s266 + $0xf2] sm:$0xff]
      %v1099 = vld [vmem:[%s266 + $0xfa] sm:$0xff]
      %v1100 = vld [vmem:[%s266 + $0x102] sm:$0xff]
      %v1101 = vld [vmem:[%s266 + $0x10a] sm:$0xff]
      %v1102 = vld [vmem:[%s266 + $0x112] sm:$0xff]
      %v1103 = vld [vmem:[%s266 + $0x11a] sm:$0xff]
      %1140 = vrot.lane.b32.xlu0 %v1068, 32
      %v1141 = vpop.permute.xlu0 %1140
      %1142 = vrot.lane.b32.xlu0 %v1069, 32
      %v1143 = vpop.permute.xlu0 %1142
      %1144 = vrot.lane.b32.xlu0 %v1070, 32
      %v1145 = vpop.permute.xlu0 %1144
      %1146 = vrot.lane.b32.xlu0 %v1071, 32
      %v1147 = vpop.permute.xlu0 %1146
      %1148 = vrot.lane.b32.xlu0 %v1072, 32
      %v1149 = vpop.permute.xlu0 %1148
      %1150 = vrot.lane.b32.xlu0 %v1073, 32
      %v1151 = vpop.permute.xlu0 %1150
      %1152 = vrot.lane.b32.xlu0 %v1074, 32
      %v1153 = vpop.permute.xlu0 %1152
      %1154 = vrot.lane.b32.xlu0 %v1075, 32
      %v1155 = vpop.permute.xlu0 %1154
      %1156 = vrot.lane.b32.xlu0 %v1076, 32
      %v1157 = vpop.permute.xlu0 %1156
      %1158 = vrot.lane.b32.xlu0 %v1077, 32
      %v1159 = vpop.permute.xlu0 %1158
      %1160 = vrot.lane.b32.xlu0 %v1078, 32
      %v1161 = vpop.permute.xlu0 %1160
      %1162 = vrot.lane.b32.xlu0 %v1079, 32
      %v1163 = vpop.permute.xlu0 %1162
      %1164 = vrot.lane.b32.xlu0 %v1080, 32
      %v1165 = vpop.permute.xlu0 %1164
      %1166 = vrot.lane.b32.xlu0 %v1081, 32
      %v1167 = vpop.permute.xlu0 %1166
      %1168 = vrot.lane.b32.xlu0 %v1082, 32
      %v1169 = vpop.permute.xlu0 %1168
      %1170 = vrot.lane.b32.xlu0 %v1083, 32
      %v1171 = vpop.permute.xlu0 %1170
      %1172 = vrot.lane.b32.xlu0 %v1084, 32
      %v1173 = vpop.permute.xlu0 %1172
      %1174 = vrot.lane.b32.xlu0 %v1085, 32
      %v1175 = vpop.permute.xlu0 %1174
      %1176 = vrot.lane.b32.xlu0 %v1086, 32
      %v1177 = vpop.permute.xlu0 %1176
      %1178 = vrot.lane.b32.xlu0 %v1087, 32
      %v1179 = vpop.permute.xlu0 %1178
      %1180 = vrot.lane.b32.xlu0 %v1088, 32
      %v1181 = vpop.permute.xlu0 %1180
      %1182 = vrot.lane.b32.xlu0 %v1089, 32
      %v1183 = vpop.permute.xlu0 %1182
      %1184 = vrot.lane.b32.xlu0 %v1090, 32
      %v1185 = vpop.permute.xlu0 %1184
      %1186 = vrot.lane.b32.xlu0 %v1091, 32
      %v1187 = vpop.permute.xlu0 %1186
      %1188 = vrot.lane.b32.xlu0 %v1092, 32
      %v1189 = vpop.permute.xlu0 %1188
      %1190 = vrot.lane.b32.xlu0 %v1093, 32
      %v1191 = vpop.permute.xlu0 %1190
      %1192 = vrot.lane.b32.xlu0 %v1094, 32
      %v1193 = vpop.permute.xlu0 %1192
      %1194 = vrot.lane.b32.xlu0 %v1095, 32
      %v1195 = vpop.permute.xlu0 %1194
      %1196 = vrot.lane.b32.xlu0 %v1096, 32
      %v1197 = vpop.permute.xlu0 %1196
      %1198 = vrot.lane.b32.xlu0 %v1097, 32
      %v1199 = vpop.permute.xlu0 %1198
      %1200 = vrot.lane.b32.xlu0 %v1098, 32
      %v1201 = vpop.permute.xlu0 %1200
      %1202 = vrot.lane.b32.xlu0 %v1099, 32
      %v1203 = vpop.permute.xlu0 %1202
      %1204 = vrot.lane.b32.xlu0 %v1100, 32
      %v1205 = vpop.permute.xlu0 %1204
      %1206 = vrot.lane.b32.xlu0 %v1101, 32
      %v1207 = vpop.permute.xlu0 %1206
      %1208 = vrot.lane.b32.xlu0 %v1102, 32
      %v1209 = vpop.permute.xlu0 %1208
      %1210 = vrot.lane.b32.xlu0 %v1103, 32
      %v1211 = vpop.permute.xlu0 %1210
      %1248 = vst.msk [vmem:[#allocation2 + $0x8] sm:$0xff] %vm525, %v1141
      %1249 = vst.msk [vmem:[#allocation2 + $0x30] sm:$0xff] %vm525, %v1143
      %1250 = vst.msk [vmem:[#allocation2 + $0x58] sm:$0xff] %vm525, %v1145
      %1251 = vst.msk [vmem:[#allocation2 + $0x80] sm:$0xff] %vm525, %v1147
      %1252 = vst.msk [vmem:[#allocation2 + $0xa8] sm:$0xff] %vm525, %v1149
      %1253 = vst.msk [vmem:[#allocation2 + $0xd0] sm:$0xff] %vm525, %v1151
      %1254 = vst.msk [vmem:[#allocation2 + $0xf8] sm:$0xff] %vm525, %v1153
      %1255 = vst.msk [vmem:[#allocation2 + $0x120] sm:$0xff] %vm525, %v1155
      %1256 = vst.msk [vmem:[#allocation2 + $0x148] sm:$0xff] %vm525, %v1157
      %1257 = vst.msk [vmem:[#allocation2 + $0x170] sm:$0xff] %vm525, %v1159
      %1258 = vst.msk [vmem:[#allocation2 + $0x198] sm:$0xff] %vm525, %v1161
      %1259 = vst.msk [vmem:[#allocation2 + $0x1c0] sm:$0xff] %vm525, %v1163
      %1260 = vst.msk [vmem:[#allocation2 + $0x1e8] sm:$0xff] %vm525, %v1165
      %1261 = vst.msk [vmem:[#allocation2 + $0x210] sm:$0xff] %vm525, %v1167
      %1262 = vst.msk [vmem:[#allocation2 + $0x238] sm:$0xff] %vm525, %v1169
      %1263 = vst.msk [vmem:[#allocation2 + $0x260] sm:$0xff] %vm525, %v1171
      %1264 = vst.msk [vmem:[#allocation2 + $0x288] sm:$0xff] %vm525, %v1173
      %1265 = vst.msk [vmem:[#allocation2 + $0x2b0] sm:$0xff] %vm525, %v1175
      %1266 = vst.msk [vmem:[#allocation2 + $0x2d8] sm:$0xff] %vm525, %v1177
      %1267 = vst.msk [vmem:[#allocation2 + $0x300] sm:$0xff] %vm525, %v1179
      %1268 = vst.msk [vmem:[#allocation2 + $0x328] sm:$0xff] %vm525, %v1181
      %1269 = vst.msk [vmem:[#allocation2 + $0x350] sm:$0xff] %vm525, %v1183
      %1270 = vst.msk [vmem:[#allocation2 + $0x378] sm:$0xff] %vm525, %v1185
      %1271 = vst.msk [vmem:[#allocation2 + $0x3a0] sm:$0xff] %vm525, %v1187
      %1272 = vst.msk [vmem:[#allocation2 + $0x3c8] sm:$0xff] %vm525, %v1189
      %1273 = vst.msk [vmem:[#allocation2 + $0x3f0] sm:$0xff] %vm525, %v1191
      %1274 = vst.msk [vmem:[#allocation2 + $0x418] sm:$0xff] %vm525, %v1193
      %1275 = vst.msk [vmem:[#allocation2 + $0x440] sm:$0xff] %vm525, %v1195
      %1276 = vst.msk [vmem:[#allocation2 + $0x468] sm:$0xff] %vm525, %v1197
      %1277 = vst.msk [vmem:[#allocation2 + $0x490] sm:$0xff] %vm525, %v1199
      %1278 = vst.msk [vmem:[#allocation2 + $0x4b8] sm:$0xff] %vm525, %v1201
      %1279 = vst.msk [vmem:[#allocation2 + $0x4e0] sm:$0xff] %vm525, %v1203
      %1280 = vst.msk [vmem:[#allocation2 + $0x508] sm:$0xff] %vm525, %v1205
      %1281 = vst.msk [vmem:[#allocation2 + $0x530] sm:$0xff] %vm525, %v1207
      %1282 = vst.msk [vmem:[#allocation2 + $0x558] sm:$0xff] %vm525, %v1209
      %1283 = vst.msk [vmem:[#allocation2 + $0x580] sm:$0xff] %vm525, %v1211
      %v1284 = vld [vmem:[%s261 + $0x12] sm:$0xff]
      %v1285 = vld [vmem:[%s261 + $0x1a] sm:$0xff]
      %v1286 = vld [vmem:[%s261 + $0x22] sm:$0xff]
      %v1287 = vld [vmem:[%s261 + $0x2a] sm:$0xff]
      %v1288 = vld [vmem:[%s261 + $0x32] sm:$0xff]
      %v1289 = vld [vmem:[%s261 + $0x3a] sm:$0xff]
      %v1290 = vld [vmem:[%s261 + $0x42] sm:$0xff]
      %v1291 = vld [vmem:[%s261 + $0x4a] sm:$0xff]
      %v1292 = vld [vmem:[%s261 + $0x52] sm:$0xff]
      %v1293 = vld [vmem:[%s261 + $0x5a] sm:$0xff]
      %v1294 = vld [vmem:[%s261 + $0x62] sm:$0xff]
      %v1295 = vld [vmem:[%s261 + $0x6a] sm:$0xff]
      %v1296 = vld [vmem:[%s261 + $0x72] sm:$0xff]
      %v1297 = vld [vmem:[%s261 + $0x7a] sm:$0xff]
      %v1298 = vld [vmem:[%s261 + $0x82] sm:$0xff]
      %v1299 = vld [vmem:[%s261 + $0x8a] sm:$0xff]
      %v1300 = vld [vmem:[%s261 + $0x92] sm:$0xff]
      %v1301 = vld [vmem:[%s261 + $0x9a] sm:$0xff]
      %v1302 = vld [vmem:[%s261 + $0xa2] sm:$0xff]
      %v1303 = vld [vmem:[%s261 + $0xaa] sm:$0xff]
      %v1304 = vld [vmem:[%s261 + $0xb2] sm:$0xff]
      %v1305 = vld [vmem:[%s261 + $0xba] sm:$0xff]
      %v1306 = vld [vmem:[%s261 + $0xc2] sm:$0xff]
      %v1307 = vld [vmem:[%s261 + $0xca] sm:$0xff]
      %v1308 = vld [vmem:[%s261 + $0xd2] sm:$0xff]
      %v1309 = vld [vmem:[%s261 + $0xda] sm:$0xff]
      %v1310 = vld [vmem:[%s261 + $0xe2] sm:$0xff]
      %v1311 = vld [vmem:[%s261 + $0xea] sm:$0xff]
      %v1312 = vld [vmem:[%s261 + $0xf2] sm:$0xff]
      %v1313 = vld [vmem:[%s261 + $0xfa] sm:$0xff]
      %v1314 = vld [vmem:[%s261 + $0x102] sm:$0xff]
      %v1315 = vld [vmem:[%s261 + $0x10a] sm:$0xff]
      %v1316 = vld [vmem:[%s261 + $0x112] sm:$0xff]
      %v1317 = vld [vmem:[%s261 + $0x11a] sm:$0xff]
      %v1318 = vld [vmem:[%s261 + $0x122] sm:$0xff]
      %v1319 = vld [vmem:[%s261 + $0x12a] sm:$0xff]
      %1356 = vrot.lane.b32.xlu0 %v1284, 64
      %v1357 = vpop.permute.xlu0 %1356
      %1358 = vrot.lane.b32.xlu0 %v1285, 64
      %v1359 = vpop.permute.xlu0 %1358
      %1360 = vrot.lane.b32.xlu0 %v1286, 64
      %v1361 = vpop.permute.xlu0 %1360
      %1362 = vrot.lane.b32.xlu0 %v1287, 64
      %v1363 = vpop.permute.xlu0 %1362
      %1364 = vrot.lane.b32.xlu0 %v1288, 64
      %v1365 = vpop.permute.xlu0 %1364
      %1366 = vrot.lane.b32.xlu0 %v1289, 64
      %v1367 = vpop.permute.xlu0 %1366
      %1368 = vrot.lane.b32.xlu0 %v1290, 64
      %v1369 = vpop.permute.xlu0 %1368
      %1370 = vrot.lane.b32.xlu0 %v1291, 64
      %v1371 = vpop.permute.xlu0 %1370
      %1372 = vrot.lane.b32.xlu0 %v1292, 64
      %v1373 = vpop.permute.xlu0 %1372
      %1374 = vrot.lane.b32.xlu0 %v1293, 64
      %v1375 = vpop.permute.xlu0 %1374
      %1376 = vrot.lane.b32.xlu0 %v1294, 64
      %v1377 = vpop.permute.xlu0 %1376
      %1378 = vrot.lane.b32.xlu0 %v1295, 64
      %v1379 = vpop.permute.xlu0 %1378
      %1380 = vrot.lane.b32.xlu0 %v1296, 64
      %v1381 = vpop.permute.xlu0 %1380
      %1382 = vrot.lane.b32.xlu0 %v1297, 64
      %v1383 = vpop.permute.xlu0 %1382
      %1384 = vrot.lane.b32.xlu0 %v1298, 64
      %v1385 = vpop.permute.xlu0 %1384
      %1386 = vrot.lane.b32.xlu0 %v1299, 64
      %v1387 = vpop.permute.xlu0 %1386
      %1388 = vrot.lane.b32.xlu0 %v1300, 64
      %v1389 = vpop.permute.xlu0 %1388
      %1390 = vrot.lane.b32.xlu0 %v1301, 64
      %v1391 = vpop.permute.xlu0 %1390
      %1392 = vrot.lane.b32.xlu0 %v1302, 64
      %v1393 = vpop.permute.xlu0 %1392
      %1394 = vrot.lane.b32.xlu0 %v1303, 64
      %v1395 = vpop.permute.xlu0 %1394
      %1396 = vrot.lane.b32.xlu0 %v1304, 64
      %v1397 = vpop.permute.xlu0 %1396
      %1398 = vrot.lane.b32.xlu0 %v1305, 64
      %v1399 = vpop.permute.xlu0 %1398
      %1400 = vrot.lane.b32.xlu0 %v1306, 64
      %v1401 = vpop.permute.xlu0 %1400
      %1402 = vrot.lane.b32.xlu0 %v1307, 64
      %v1403 = vpop.permute.xlu0 %1402
      %1404 = vrot.lane.b32.xlu0 %v1308, 64
      %v1405 = vpop.permute.xlu0 %1404
      %1406 = vrot.lane.b32.xlu0 %v1309, 64
      %v1407 = vpop.permute.xlu0 %1406
      %1408 = vrot.lane.b32.xlu0 %v1310, 64
      %v1409 = vpop.permute.xlu0 %1408
      %1410 = vrot.lane.b32.xlu0 %v1311, 64
      %v1411 = vpop.permute.xlu0 %1410
      %1412 = vrot.lane.b32.xlu0 %v1312, 64
      %v1413 = vpop.permute.xlu0 %1412
      %1414 = vrot.lane.b32.xlu0 %v1313, 64
      %v1415 = vpop.permute.xlu0 %1414
      %1416 = vrot.lane.b32.xlu0 %v1314, 64
      %v1417 = vpop.permute.xlu0 %1416
      %1418 = vrot.lane.b32.xlu0 %v1315, 64
      %v1419 = vpop.permute.xlu0 %1418
      %1420 = vrot.lane.b32.xlu0 %v1316, 64
      %v1421 = vpop.permute.xlu0 %1420
      %1422 = vrot.lane.b32.xlu0 %v1317, 64
      %v1423 = vpop.permute.xlu0 %1422
      %1424 = vrot.lane.b32.xlu0 %v1318, 64
      %v1425 = vpop.permute.xlu0 %1424
      %1426 = vrot.lane.b32.xlu0 %v1319, 64
      %v1427 = vpop.permute.xlu0 %1426
      %1464 = vst.msk [vmem:[#allocation2 + $0x8] sm:$0xff] %vm742, %v1357
      %1465 = vst.msk [vmem:[#allocation2 + $0x30] sm:$0xff] %vm742, %v1359
      %1466 = vst.msk [vmem:[#allocation2 + $0x58] sm:$0xff] %vm742, %v1361
      %1467 = vst.msk [vmem:[#allocation2 + $0x80] sm:$0xff] %vm742, %v1363
      %1468 = vst.msk [vmem:[#allocation2 + $0xa8] sm:$0xff] %vm742, %v1365
      %1469 = vst.msk [vmem:[#allocation2 + $0xd0] sm:$0xff] %vm742, %v1367
      %1470 = vst.msk [vmem:[#allocation2 + $0xf8] sm:$0xff] %vm742, %v1369
      %1471 = vst.msk [vmem:[#allocation2 + $0x120] sm:$0xff] %vm742, %v1371
      %1472 = vst.msk [vmem:[#allocation2 + $0x148] sm:$0xff] %vm742, %v1373
      %1473 = vst.msk [vmem:[#allocation2 + $0x170] sm:$0xff] %vm742, %v1375
      %1474 = vst.msk [vmem:[#allocation2 + $0x198] sm:$0xff] %vm742, %v1377
      %1475 = vst.msk [vmem:[#allocation2 + $0x1c0] sm:$0xff] %vm742, %v1379
      %1476 = vst.msk [vmem:[#allocation2 + $0x1e8] sm:$0xff] %vm742, %v1381
      %1477 = vst.msk [vmem:[#allocation2 + $0x210] sm:$0xff] %vm742, %v1383
      %1478 = vst.msk [vmem:[#allocation2 + $0x238] sm:$0xff] %vm742, %v1385
      %1479 = vst.msk [vmem:[#allocation2 + $0x260] sm:$0xff] %vm742, %v1387
      %1480 = vst.msk [vmem:[#allocation2 + $0x288] sm:$0xff] %vm742, %v1389
      %1481 = vst.msk [vmem:[#allocation2 + $0x2b0] sm:$0xff] %vm742, %v1391
      %1482 = vst.msk [vmem:[#allocation2 + $0x2d8] sm:$0xff] %vm742, %v1393
      %1483 = vst.msk [vmem:[#allocation2 + $0x300] sm:$0xff] %vm742, %v1395
      %1484 = vst.msk [vmem:[#allocation2 + $0x328] sm:$0xff] %vm742, %v1397
      %1485 = vst.msk [vmem:[#allocation2 + $0x350] sm:$0xff] %vm742, %v1399
      %1486 = vst.msk [vmem:[#allocation2 + $0x378] sm:$0xff] %vm742, %v1401
      %1487 = vst.msk [vmem:[#allocation2 + $0x3a0] sm:$0xff] %vm742, %v1403
      %1488 = vst.msk [vmem:[#allocation2 + $0x3c8] sm:$0xff] %vm742, %v1405
      %1489 = vst.msk [vmem:[#allocation2 + $0x3f0] sm:$0xff] %vm742, %v1407
      %1490 = vst.msk [vmem:[#allocation2 + $0x418] sm:$0xff] %vm742, %v1409
      %1491 = vst.msk [vmem:[#allocation2 + $0x440] sm:$0xff] %vm742, %v1411
      %1492 = vst.msk [vmem:[#allocation2 + $0x468] sm:$0xff] %vm742, %v1413
      %1493 = vst.msk [vmem:[#allocation2 + $0x490] sm:$0xff] %vm742, %v1415
      %1494 = vst.msk [vmem:[#allocation2 + $0x4b8] sm:$0xff] %vm742, %v1417
      %1495 = vst.msk [vmem:[#allocation2 + $0x4e0] sm:$0xff] %vm742, %v1419
      %1496 = vst.msk [vmem:[#allocation2 + $0x508] sm:$0xff] %vm742, %v1421
      %1497 = vst.msk [vmem:[#allocation2 + $0x530] sm:$0xff] %vm742, %v1423
      %1498 = vst.msk [vmem:[#allocation2 + $0x558] sm:$0xff] %vm742, %v1425
      %1499 = vst.msk [vmem:[#allocation2 + $0x580] sm:$0xff] %vm742, %v1427
      %v1500 = vld [vmem:[%s266 + $0x12] sm:$0xff]
      %v1501 = vld [vmem:[%s266 + $0x1a] sm:$0xff]
      %v1502 = vld [vmem:[%s266 + $0x22] sm:$0xff]
      %v1503 = vld [vmem:[%s266 + $0x2a] sm:$0xff]
      %v1504 = vld [vmem:[%s266 + $0x32] sm:$0xff]
      %v1505 = vld [vmem:[%s266 + $0x3a] sm:$0xff]
      %v1506 = vld [vmem:[%s266 + $0x42] sm:$0xff]
      %v1507 = vld [vmem:[%s266 + $0x4a] sm:$0xff]
      %v1508 = vld [vmem:[%s266 + $0x52] sm:$0xff]
      %v1509 = vld [vmem:[%s266 + $0x5a] sm:$0xff]
      %v1510 = vld [vmem:[%s266 + $0x62] sm:$0xff]
      %v1511 = vld [vmem:[%s266 + $0x6a] sm:$0xff]
      %v1512 = vld [vmem:[%s266 + $0x72] sm:$0xff]
      %v1513 = vld [vmem:[%s266 + $0x7a] sm:$0xff]
      %v1514 = vld [vmem:[%s266 + $0x82] sm:$0xff]
      %v1515 = vld [vmem:[%s266 + $0x8a] sm:$0xff]
      %v1516 = vld [vmem:[%s266 + $0x92] sm:$0xff]
      %v1517 = vld [vmem:[%s266 + $0x9a] sm:$0xff]
      %v1518 = vld [vmem:[%s266 + $0xa2] sm:$0xff]
      %v1519 = vld [vmem:[%s266 + $0xaa] sm:$0xff]
      %v1520 = vld [vmem:[%s266 + $0xb2] sm:$0xff]
      %v1521 = vld [vmem:[%s266 + $0xba] sm:$0xff]
      %v1522 = vld [vmem:[%s266 + $0xc2] sm:$0xff]
      %v1523 = vld [vmem:[%s266 + $0xca] sm:$0xff]
      %v1524 = vld [vmem:[%s266 + $0xd2] sm:$0xff]
      %v1525 = vld [vmem:[%s266 + $0xda] sm:$0xff]
      %v1526 = vld [vmem:[%s266 + $0xe2] sm:$0xff]
      %v1527 = vld [vmem:[%s266 + $0xea] sm:$0xff]
      %v1528 = vld [vmem:[%s266 + $0xf2] sm:$0xff]
      %v1529 = vld [vmem:[%s266 + $0xfa] sm:$0xff]
      %v1530 = vld [vmem:[%s266 + $0x102] sm:$0xff]
      %v1531 = vld [vmem:[%s266 + $0x10a] sm:$0xff]
      %v1532 = vld [vmem:[%s266 + $0x112] sm:$0xff]
      %v1533 = vld [vmem:[%s266 + $0x11a] sm:$0xff]
      %v1534 = vld [vmem:[%s266 + $0x122] sm:$0xff]
      %v1535 = vld [vmem:[%s266 + $0x12a] sm:$0xff]
      %1572 = vrot.lane.b32.xlu0 %v1500, 96
      %v1573 = vpop.permute.xlu0 %1572
      %1574 = vrot.lane.b32.xlu0 %v1501, 96
      %v1575 = vpop.permute.xlu0 %1574
      %1576 = vrot.lane.b32.xlu0 %v1502, 96
      %v1577 = vpop.permute.xlu0 %1576
      %1578 = vrot.lane.b32.xlu0 %v1503, 96
      %v1579 = vpop.permute.xlu0 %1578
      %1580 = vrot.lane.b32.xlu0 %v1504, 96
      %v1581 = vpop.permute.xlu0 %1580
      %1582 = vrot.lane.b32.xlu0 %v1505, 96
      %v1583 = vpop.permute.xlu0 %1582
      %1584 = vrot.lane.b32.xlu0 %v1506, 96
      %v1585 = vpop.permute.xlu0 %1584
      %1586 = vrot.lane.b32.xlu0 %v1507, 96
      %v1587 = vpop.permute.xlu0 %1586
      %1588 = vrot.lane.b32.xlu0 %v1508, 96
      %v1589 = vpop.permute.xlu0 %1588
      %1590 = vrot.lane.b32.xlu0 %v1509, 96
      %v1591 = vpop.permute.xlu0 %1590
      %1592 = vrot.lane.b32.xlu0 %v1510, 96
      %v1593 = vpop.permute.xlu0 %1592
      %1594 = vrot.lane.b32.xlu0 %v1511, 96
      %v1595 = vpop.permute.xlu0 %1594
      %1596 = vrot.lane.b32.xlu0 %v1512, 96
      %v1597 = vpop.permute.xlu0 %1596
      %1598 = vrot.lane.b32.xlu0 %v1513, 96
      %v1599 = vpop.permute.xlu0 %1598
      %1600 = vrot.lane.b32.xlu0 %v1514, 96
      %v1601 = vpop.permute.xlu0 %1600
      %1602 = vrot.lane.b32.xlu0 %v1515, 96
      %v1603 = vpop.permute.xlu0 %1602
      %1604 = vrot.lane.b32.xlu0 %v1516, 96
      %v1605 = vpop.permute.xlu0 %1604
      %1606 = vrot.lane.b32.xlu0 %v1517, 96
      %v1607 = vpop.permute.xlu0 %1606
      %1608 = vrot.lane.b32.xlu0 %v1518, 96
      %v1609 = vpop.permute.xlu0 %1608
      %1610 = vrot.lane.b32.xlu0 %v1519, 96
      %v1611 = vpop.permute.xlu0 %1610
      %1612 = vrot.lane.b32.xlu0 %v1520, 96
      %v1613 = vpop.permute.xlu0 %1612
      %1614 = vrot.lane.b32.xlu0 %v1521, 96
      %v1615 = vpop.permute.xlu0 %1614
      %1616 = vrot.lane.b32.xlu0 %v1522, 96
      %v1617 = vpop.permute.xlu0 %1616
      %1618 = vrot.lane.b32.xlu0 %v1523, 96
      %v1619 = vpop.permute.xlu0 %1618
      %1620 = vrot.lane.b32.xlu0 %v1524, 96
      %v1621 = vpop.permute.xlu0 %1620
      %1622 = vrot.lane.b32.xlu0 %v1525, 96
      %v1623 = vpop.permute.xlu0 %1622
      %1624 = vrot.lane.b32.xlu0 %v1526, 96
      %v1625 = vpop.permute.xlu0 %1624
      %1626 = vrot.lane.b32.xlu0 %v1527, 96
      %v1627 = vpop.permute.xlu0 %1626
      %1628 = vrot.lane.b32.xlu0 %v1528, 96
      %v1629 = vpop.permute.xlu0 %1628
      %1630 = vrot.lane.b32.xlu0 %v1529, 96
      %v1631 = vpop.permute.xlu0 %1630
      %1632 = vrot.lane.b32.xlu0 %v1530, 96
      %v1633 = vpop.permute.xlu0 %1632
      %1634 = vrot.lane.b32.xlu0 %v1531, 96
      %v1635 = vpop.permute.xlu0 %1634
      %1636 = vrot.lane.b32.xlu0 %v1532, 96
      %v1637 = vpop.permute.xlu0 %1636
      %1638 = vrot.lane.b32.xlu0 %v1533, 96
      %v1639 = vpop.permute.xlu0 %1638
      %1640 = vrot.lane.b32.xlu0 %v1534, 96
      %v1641 = vpop.permute.xlu0 %1640
      %1642 = vrot.lane.b32.xlu0 %v1535, 96
      %v1643 = vpop.permute.xlu0 %1642
      %1680 = vst.msk [vmem:[#allocation2 + $0x8] sm:$0xff] %vm959, %v1573
      %1681 = vst.msk [vmem:[#allocation2 + $0x30] sm:$0xff] %vm959, %v1575
      %1682 = vst.msk [vmem:[#allocation2 + $0x58] sm:$0xff] %vm959, %v1577
      %1683 = vst.msk [vmem:[#allocation2 + $0x80] sm:$0xff] %vm959, %v1579
      %1684 = vst.msk [vmem:[#allocation2 + $0xa8] sm:$0xff] %vm959, %v1581
      %1685 = vst.msk [vmem:[#allocation2 + $0xd0] sm:$0xff] %vm959, %v1583
      %1686 = vst.msk [vmem:[#allocation2 + $0xf8] sm:$0xff] %vm959, %v1585
      %1687 = vst.msk [vmem:[#allocation2 + $0x120] sm:$0xff] %vm959, %v1587
      %1688 = vst.msk [vmem:[#allocation2 + $0x148] sm:$0xff] %vm959, %v1589
      %1689 = vst.msk [vmem:[#allocation2 + $0x170] sm:$0xff] %vm959, %v1591
      %1690 = vst.msk [vmem:[#allocation2 + $0x198] sm:$0xff] %vm959, %v1593
      %1691 = vst.msk [vmem:[#allocation2 + $0x1c0] sm:$0xff] %vm959, %v1595
      %1692 = vst.msk [vmem:[#allocation2 + $0x1e8] sm:$0xff] %vm959, %v1597
      %1693 = vst.msk [vmem:[#allocation2 + $0x210] sm:$0xff] %vm959, %v1599
      %1694 = vst.msk [vmem:[#allocation2 + $0x238] sm:$0xff] %vm959, %v1601
      %1695 = vst.msk [vmem:[#allocation2 + $0x260] sm:$0xff] %vm959, %v1603
      %1696 = vst.msk [vmem:[#allocation2 + $0x288] sm:$0xff] %vm959, %v1605
      %1697 = vst.msk [vmem:[#allocation2 + $0x2b0] sm:$0xff] %vm959, %v1607
      %1698 = vst.msk [vmem:[#allocation2 + $0x2d8] sm:$0xff] %vm959, %v1609
      %1699 = vst.msk [vmem:[#allocation2 + $0x300] sm:$0xff] %vm959, %v1611
      %1700 = vst.msk [vmem:[#allocation2 + $0x328] sm:$0xff] %vm959, %v1613
      %1701 = vst.msk [vmem:[#allocation2 + $0x350] sm:$0xff] %vm959, %v1615
      %1702 = vst.msk [vmem:[#allocation2 + $0x378] sm:$0xff] %vm959, %v1617
      %1703 = vst.msk [vmem:[#allocation2 + $0x3a0] sm:$0xff] %vm959, %v1619
      %1704 = vst.msk [vmem:[#allocation2 + $0x3c8] sm:$0xff] %vm959, %v1621
      %1705 = vst.msk [vmem:[#allocation2 + $0x3f0] sm:$0xff] %vm959, %v1623
      %1706 = vst.msk [vmem:[#allocation2 + $0x418] sm:$0xff] %vm959, %v1625
      %1707 = vst.msk [vmem:[#allocation2 + $0x440] sm:$0xff] %vm959, %v1627
      %1708 = vst.msk [vmem:[#allocation2 + $0x468] sm:$0xff] %vm959, %v1629
      %1709 = vst.msk [vmem:[#allocation2 + $0x490] sm:$0xff] %vm959, %v1631
      %1710 = vst.msk [vmem:[#allocation2 + $0x4b8] sm:$0xff] %vm959, %v1633
      %1711 = vst.msk [vmem:[#allocation2 + $0x4e0] sm:$0xff] %vm959, %v1635
      %1712 = vst.msk [vmem:[#allocation2 + $0x508] sm:$0xff] %vm959, %v1637
      %1713 = vst.msk [vmem:[#allocation2 + $0x530] sm:$0xff] %vm959, %v1639
      %1714 = vst.msk [vmem:[#allocation2 + $0x558] sm:$0xff] %vm959, %v1641
      %1715 = vst.msk [vmem:[#allocation2 + $0x580] sm:$0xff] %vm959, %v1643
      %v1716 = vld [vmem:[%s261 + $0x13] sm:$0xff]
      %v1717 = vld [vmem:[%s261 + $0x1b] sm:$0xff]
      %v1718 = vld [vmem:[%s261 + $0x23] sm:$0xff]
      %v1719 = vld [vmem:[%s261 + $0x2b] sm:$0xff]
      %v1720 = vld [vmem:[%s261 + $0x33] sm:$0xff]
      %v1721 = vld [vmem:[%s261 + $0x3b] sm:$0xff]
      %v1722 = vld [vmem:[%s261 + $0x43] sm:$0xff]
      %v1723 = vld [vmem:[%s261 + $0x4b] sm:$0xff]
      %v1724 = vld [vmem:[%s261 + $0x53] sm:$0xff]
      %v1725 = vld [vmem:[%s261 + $0x5b] sm:$0xff]
      %v1726 = vld [vmem:[%s261 + $0x63] sm:$0xff]
      %v1727 = vld [vmem:[%s261 + $0x6b] sm:$0xff]
      %v1728 = vld [vmem:[%s261 + $0x73] sm:$0xff]
      %v1729 = vld [vmem:[%s261 + $0x7b] sm:$0xff]
      %v1730 = vld [vmem:[%s261 + $0x83] sm:$0xff]
      %v1731 = vld [vmem:[%s261 + $0x8b] sm:$0xff]
      %v1732 = vld [vmem:[%s261 + $0x93] sm:$0xff]
      %v1733 = vld [vmem:[%s261 + $0x9b] sm:$0xff]
      %v1734 = vld [vmem:[%s261 + $0xa3] sm:$0xff]
      %v1735 = vld [vmem:[%s261 + $0xab] sm:$0xff]
      %v1736 = vld [vmem:[%s261 + $0xb3] sm:$0xff]
      %v1737 = vld [vmem:[%s261 + $0xbb] sm:$0xff]
      %v1738 = vld [vmem:[%s261 + $0xc3] sm:$0xff]
      %v1739 = vld [vmem:[%s261 + $0xcb] sm:$0xff]
      %v1740 = vld [vmem:[%s261 + $0xd3] sm:$0xff]
      %v1741 = vld [vmem:[%s261 + $0xdb] sm:$0xff]
      %v1742 = vld [vmem:[%s261 + $0xe3] sm:$0xff]
      %v1743 = vld [vmem:[%s261 + $0xeb] sm:$0xff]
      %v1744 = vld [vmem:[%s261 + $0xf3] sm:$0xff]
      %v1745 = vld [vmem:[%s261 + $0xfb] sm:$0xff]
      %v1746 = vld [vmem:[%s261 + $0x103] sm:$0xff]
      %v1747 = vld [vmem:[%s261 + $0x10b] sm:$0xff]
      %v1748 = vld [vmem:[%s261 + $0x113] sm:$0xff]
      %v1749 = vld [vmem:[%s261 + $0x11b] sm:$0xff]
      %v1750 = vld [vmem:[%s261 + $0x123] sm:$0xff]
      %v1751 = vld [vmem:[%s261 + $0x12b] sm:$0xff]
      %1752 = vst.msk [vmem:[#allocation2 + $0x10] sm:$0xff] %vm308, %v1716
      %1753 = vst.msk [vmem:[#allocation2 + $0x38] sm:$0xff] %vm308, %v1717
      %1754 = vst.msk [vmem:[#allocation2 + $0x60] sm:$0xff] %vm308, %v1718
      %1755 = vst.msk [vmem:[#allocation2 + $0x88] sm:$0xff] %vm308, %v1719
      %1756 = vst.msk [vmem:[#allocation2 + $0xb0] sm:$0xff] %vm308, %v1720
      %1757 = vst.msk [vmem:[#allocation2 + $0xd8] sm:$0xff] %vm308, %v1721
      %1758 = vst.msk [vmem:[#allocation2 + $0x100] sm:$0xff] %vm308, %v1722
      %1759 = vst.msk [vmem:[#allocation2 + $0x128] sm:$0xff] %vm308, %v1723
      %1760 = vst.msk [vmem:[#allocation2 + $0x150] sm:$0xff] %vm308, %v1724
      %1761 = vst.msk [vmem:[#allocation2 + $0x178] sm:$0xff] %vm308, %v1725
      %1762 = vst.msk [vmem:[#allocation2 + $0x1a0] sm:$0xff] %vm308, %v1726
      %1763 = vst.msk [vmem:[#allocation2 + $0x1c8] sm:$0xff] %vm308, %v1727
      %1764 = vst.msk [vmem:[#allocation2 + $0x1f0] sm:$0xff] %vm308, %v1728
      %1765 = vst.msk [vmem:[#allocation2 + $0x218] sm:$0xff] %vm308, %v1729
      %1766 = vst.msk [vmem:[#allocation2 + $0x240] sm:$0xff] %vm308, %v1730
      %1767 = vst.msk [vmem:[#allocation2 + $0x268] sm:$0xff] %vm308, %v1731
      %1768 = vst.msk [vmem:[#allocation2 + $0x290] sm:$0xff] %vm308, %v1732
      %1769 = vst.msk [vmem:[#allocation2 + $0x2b8] sm:$0xff] %vm308, %v1733
      %1770 = vst.msk [vmem:[#allocation2 + $0x2e0] sm:$0xff] %vm308, %v1734
      %1771 = vst.msk [vmem:[#allocation2 + $0x308] sm:$0xff] %vm308, %v1735
      %1772 = vst.msk [vmem:[#allocation2 + $0x330] sm:$0xff] %vm308, %v1736
      %1773 = vst.msk [vmem:[#allocation2 + $0x358] sm:$0xff] %vm308, %v1737
      %1774 = vst.msk [vmem:[#allocation2 + $0x380] sm:$0xff] %vm308, %v1738
      %1775 = vst.msk [vmem:[#allocation2 + $0x3a8] sm:$0xff] %vm308, %v1739
      %1776 = vst.msk [vmem:[#allocation2 + $0x3d0] sm:$0xff] %vm308, %v1740
      %1777 = vst.msk [vmem:[#allocation2 + $0x3f8] sm:$0xff] %vm308, %v1741
      %1778 = vst.msk [vmem:[#allocation2 + $0x420] sm:$0xff] %vm308, %v1742
      %1779 = vst.msk [vmem:[#allocation2 + $0x448] sm:$0xff] %vm308, %v1743
      %1780 = vst.msk [vmem:[#allocation2 + $0x470] sm:$0xff] %vm308, %v1744
      %1781 = vst.msk [vmem:[#allocation2 + $0x498] sm:$0xff] %vm308, %v1745
      %1782 = vst.msk [vmem:[#allocation2 + $0x4c0] sm:$0xff] %vm308, %v1746
      %1783 = vst.msk [vmem:[#allocation2 + $0x4e8] sm:$0xff] %vm308, %v1747
      %1784 = vst.msk [vmem:[#allocation2 + $0x510] sm:$0xff] %vm308, %v1748
      %1785 = vst.msk [vmem:[#allocation2 + $0x538] sm:$0xff] %vm308, %v1749
      %1786 = vst.msk [vmem:[#allocation2 + $0x560] sm:$0xff] %vm308, %v1750
      %1787 = vst.msk [vmem:[#allocation2 + $0x588] sm:$0xff] %vm308, %v1751
      %v1788 = vld [vmem:[%s266 + $0x13] sm:$0xff]
      %v1789 = vld [vmem:[%s266 + $0x1b] sm:$0xff]
      %v1790 = vld [vmem:[%s266 + $0x23] sm:$0xff]
      %v1791 = vld [vmem:[%s266 + $0x2b] sm:$0xff]
      %v1792 = vld [vmem:[%s266 + $0x33] sm:$0xff]
      %v1793 = vld [vmem:[%s266 + $0x3b] sm:$0xff]
      %v1794 = vld [vmem:[%s266 + $0x43] sm:$0xff]
      %v1795 = vld [vmem:[%s266 + $0x4b] sm:$0xff]
      %v1796 = vld [vmem:[%s266 + $0x53] sm:$0xff]
      %v1797 = vld [vmem:[%s266 + $0x5b] sm:$0xff]
      %v1798 = vld [vmem:[%s266 + $0x63] sm:$0xff]
      %v1799 = vld [vmem:[%s266 + $0x6b] sm:$0xff]
      %v1800 = vld [vmem:[%s266 + $0x73] sm:$0xff]
      %v1801 = vld [vmem:[%s266 + $0x7b] sm:$0xff]
      %v1802 = vld [vmem:[%s266 + $0x83] sm:$0xff]
      %v1803 = vld [vmem:[%s266 + $0x8b] sm:$0xff]
      %v1804 = vld [vmem:[%s266 + $0x93] sm:$0xff]
      %v1805 = vld [vmem:[%s266 + $0x9b] sm:$0xff]
      %v1806 = vld [vmem:[%s266 + $0xa3] sm:$0xff]
      %v1807 = vld [vmem:[%s266 + $0xab] sm:$0xff]
      %v1808 = vld [vmem:[%s266 + $0xb3] sm:$0xff]
      %v1809 = vld [vmem:[%s266 + $0xbb] sm:$0xff]
      %v1810 = vld [vmem:[%s266 + $0xc3] sm:$0xff]
      %v1811 = vld [vmem:[%s266 + $0xcb] sm:$0xff]
      %v1812 = vld [vmem:[%s266 + $0xd3] sm:$0xff]
      %v1813 = vld [vmem:[%s266 + $0xdb] sm:$0xff]
      %v1814 = vld [vmem:[%s266 + $0xe3] sm:$0xff]
      %v1815 = vld [vmem:[%s266 + $0xeb] sm:$0xff]
      %v1816 = vld [vmem:[%s266 + $0xf3] sm:$0xff]
      %v1817 = vld [vmem:[%s266 + $0xfb] sm:$0xff]
      %v1818 = vld [vmem:[%s266 + $0x103] sm:$0xff]
      %v1819 = vld [vmem:[%s266 + $0x10b] sm:$0xff]
      %v1820 = vld [vmem:[%s266 + $0x113] sm:$0xff]
      %v1821 = vld [vmem:[%s266 + $0x11b] sm:$0xff]
      %v1822 = vld [vmem:[%s266 + $0x123] sm:$0xff]
      %v1823 = vld [vmem:[%s266 + $0x12b] sm:$0xff]
      %1860 = vrot.lane.b32.xlu0 %v1788, 32
      %v1861 = vpop.permute.xlu0 %1860
      %1862 = vrot.lane.b32.xlu0 %v1789, 32
      %v1863 = vpop.permute.xlu0 %1862
      %1864 = vrot.lane.b32.xlu0 %v1790, 32
      %v1865 = vpop.permute.xlu0 %1864
      %1866 = vrot.lane.b32.xlu0 %v1791, 32
      %v1867 = vpop.permute.xlu0 %1866
      %1868 = vrot.lane.b32.xlu0 %v1792, 32
      %v1869 = vpop.permute.xlu0 %1868
      %1870 = vrot.lane.b32.xlu0 %v1793, 32
      %v1871 = vpop.permute.xlu0 %1870
      %1872 = vrot.lane.b32.xlu0 %v1794, 32
      %v1873 = vpop.permute.xlu0 %1872
      %1874 = vrot.lane.b32.xlu0 %v1795, 32
      %v1875 = vpop.permute.xlu0 %1874
      %1876 = vrot.lane.b32.xlu0 %v1796, 32
      %v1877 = vpop.permute.xlu0 %1876
      %1878 = vrot.lane.b32.xlu0 %v1797, 32
      %v1879 = vpop.permute.xlu0 %1878
      %1880 = vrot.lane.b32.xlu0 %v1798, 32
      %v1881 = vpop.permute.xlu0 %1880
      %1882 = vrot.lane.b32.xlu0 %v1799, 32
      %v1883 = vpop.permute.xlu0 %1882
      %1884 = vrot.lane.b32.xlu0 %v1800, 32
      %v1885 = vpop.permute.xlu0 %1884
      %1886 = vrot.lane.b32.xlu0 %v1801, 32
      %v1887 = vpop.permute.xlu0 %1886
      %1888 = vrot.lane.b32.xlu0 %v1802, 32
      %v1889 = vpop.permute.xlu0 %1888
      %1890 = vrot.lane.b32.xlu0 %v1803, 32
      %v1891 = vpop.permute.xlu0 %1890
      %1892 = vrot.lane.b32.xlu0 %v1804, 32
      %v1893 = vpop.permute.xlu0 %1892
      %1894 = vrot.lane.b32.xlu0 %v1805, 32
      %v1895 = vpop.permute.xlu0 %1894
      %1896 = vrot.lane.b32.xlu0 %v1806, 32
      %v1897 = vpop.permute.xlu0 %1896
      %1898 = vrot.lane.b32.xlu0 %v1807, 32
      %v1899 = vpop.permute.xlu0 %1898
      %1900 = vrot.lane.b32.xlu0 %v1808, 32
      %v1901 = vpop.permute.xlu0 %1900
      %1902 = vrot.lane.b32.xlu0 %v1809, 32
      %v1903 = vpop.permute.xlu0 %1902
      %1904 = vrot.lane.b32.xlu0 %v1810, 32
      %v1905 = vpop.permute.xlu0 %1904
      %1906 = vrot.lane.b32.xlu0 %v1811, 32
      %v1907 = vpop.permute.xlu0 %1906
      %1908 = vrot.lane.b32.xlu0 %v1812, 32
      %v1909 = vpop.permute.xlu0 %1908
      %1910 = vrot.lane.b32.xlu0 %v1813, 32
      %v1911 = vpop.permute.xlu0 %1910
      %1912 = vrot.lane.b32.xlu0 %v1814, 32
      %v1913 = vpop.permute.xlu0 %1912
      %1914 = vrot.lane.b32.xlu0 %v1815, 32
      %v1915 = vpop.permute.xlu0 %1914
      %1916 = vrot.lane.b32.xlu0 %v1816, 32
      %v1917 = vpop.permute.xlu0 %1916
      %1918 = vrot.lane.b32.xlu0 %v1817, 32
      %v1919 = vpop.permute.xlu0 %1918
      %1920 = vrot.lane.b32.xlu0 %v1818, 32
      %v1921 = vpop.permute.xlu0 %1920
      %1922 = vrot.lane.b32.xlu0 %v1819, 32
      %v1923 = vpop.permute.xlu0 %1922
      %1924 = vrot.lane.b32.xlu0 %v1820, 32
      %v1925 = vpop.permute.xlu0 %1924
      %1926 = vrot.lane.b32.xlu0 %v1821, 32
      %v1927 = vpop.permute.xlu0 %1926
      %1928 = vrot.lane.b32.xlu0 %v1822, 32
      %v1929 = vpop.permute.xlu0 %1928
      %1930 = vrot.lane.b32.xlu0 %v1823, 32
      %v1931 = vpop.permute.xlu0 %1930
      %1968 = vst.msk [vmem:[#allocation2 + $0x10] sm:$0xff] %vm525, %v1861
      %1969 = vst.msk [vmem:[#allocation2 + $0x38] sm:$0xff] %vm525, %v1863
      %1970 = vst.msk [vmem:[#allocation2 + $0x60] sm:$0xff] %vm525, %v1865
      %1971 = vst.msk [vmem:[#allocation2 + $0x88] sm:$0xff] %vm525, %v1867
      %1972 = vst.msk [vmem:[#allocation2 + $0xb0] sm:$0xff] %vm525, %v1869
      %1973 = vst.msk [vmem:[#allocation2 + $0xd8] sm:$0xff] %vm525, %v1871
      %1974 = vst.msk [vmem:[#allocation2 + $0x100] sm:$0xff] %vm525, %v1873
      %1975 = vst.msk [vmem:[#allocation2 + $0x128] sm:$0xff] %vm525, %v1875
      %1976 = vst.msk [vmem:[#allocation2 + $0x150] sm:$0xff] %vm525, %v1877
      %1977 = vst.msk [vmem:[#allocation2 + $0x178] sm:$0xff] %vm525, %v1879
      %1978 = vst.msk [vmem:[#allocation2 + $0x1a0] sm:$0xff] %vm525, %v1881
      %1979 = vst.msk [vmem:[#allocation2 + $0x1c8] sm:$0xff] %vm525, %v1883
      %1980 = vst.msk [vmem:[#allocation2 + $0x1f0] sm:$0xff] %vm525, %v1885
      %1981 = vst.msk [vmem:[#allocation2 + $0x218] sm:$0xff] %vm525, %v1887
      %1982 = vst.msk [vmem:[#allocation2 + $0x240] sm:$0xff] %vm525, %v1889
      %1983 = vst.msk [vmem:[#allocation2 + $0x268] sm:$0xff] %vm525, %v1891
      %1984 = vst.msk [vmem:[#allocation2 + $0x290] sm:$0xff] %vm525, %v1893
      %1985 = vst.msk [vmem:[#allocation2 + $0x2b8] sm:$0xff] %vm525, %v1895
      %1986 = vst.msk [vmem:[#allocation2 + $0x2e0] sm:$0xff] %vm525, %v1897
      %1987 = vst.msk [vmem:[#allocation2 + $0x308] sm:$0xff] %vm525, %v1899
      %1988 = vst.msk [vmem:[#allocation2 + $0x330] sm:$0xff] %vm525, %v1901
      %1989 = vst.msk [vmem:[#allocation2 + $0x358] sm:$0xff] %vm525, %v1903
      %1990 = vst.msk [vmem:[#allocation2 + $0x380] sm:$0xff] %vm525, %v1905
      %1991 = vst.msk [vmem:[#allocation2 + $0x3a8] sm:$0xff] %vm525, %v1907
      %1992 = vst.msk [vmem:[#allocation2 + $0x3d0] sm:$0xff] %vm525, %v1909
      %1993 = vst.msk [vmem:[#allocation2 + $0x3f8] sm:$0xff] %vm525, %v1911
      %1994 = vst.msk [vmem:[#allocation2 + $0x420] sm:$0xff] %vm525, %v1913
      %1995 = vst.msk [vmem:[#allocation2 + $0x448] sm:$0xff] %vm525, %v1915
      %1996 = vst.msk [vmem:[#allocation2 + $0x470] sm:$0xff] %vm525, %v1917
      %1997 = vst.msk [vmem:[#allocation2 + $0x498] sm:$0xff] %vm525, %v1919
      %1998 = vst.msk [vmem:[#allocation2 + $0x4c0] sm:$0xff] %vm525, %v1921
      %1999 = vst.msk [vmem:[#allocation2 + $0x4e8] sm:$0xff] %vm525, %v1923
      %2000 = vst.msk [vmem:[#allocation2 + $0x510] sm:$0xff] %vm525, %v1925
      %2001 = vst.msk [vmem:[#allocation2 + $0x538] sm:$0xff] %vm525, %v1927
      %2002 = vst.msk [vmem:[#allocation2 + $0x560] sm:$0xff] %vm525, %v1929
      %2003 = vst.msk [vmem:[#allocation2 + $0x588] sm:$0xff] %vm525, %v1931
      %v2004 = vld [vmem:[%s261 + $0x14] sm:$0xff]
      %v2005 = vld [vmem:[%s261 + $0x1c] sm:$0xff]
      %v2006 = vld [vmem:[%s261 + $0x24] sm:$0xff]
      %v2007 = vld [vmem:[%s261 + $0x2c] sm:$0xff]
      %v2008 = vld [vmem:[%s261 + $0x34] sm:$0xff]
      %v2009 = vld [vmem:[%s261 + $0x3c] sm:$0xff]
      %v2010 = vld [vmem:[%s261 + $0x44] sm:$0xff]
      %v2011 = vld [vmem:[%s261 + $0x4c] sm:$0xff]
      %v2012 = vld [vmem:[%s261 + $0x54] sm:$0xff]
      %v2013 = vld [vmem:[%s261 + $0x5c] sm:$0xff]
      %v2014 = vld [vmem:[%s261 + $0x64] sm:$0xff]
      %v2015 = vld [vmem:[%s261 + $0x6c] sm:$0xff]
      %v2016 = vld [vmem:[%s261 + $0x74] sm:$0xff]
      %v2017 = vld [vmem:[%s261 + $0x7c] sm:$0xff]
      %v2018 = vld [vmem:[%s261 + $0x84] sm:$0xff]
      %v2019 = vld [vmem:[%s261 + $0x8c] sm:$0xff]
      %v2020 = vld [vmem:[%s261 + $0x94] sm:$0xff]
      %v2021 = vld [vmem:[%s261 + $0x9c] sm:$0xff]
      %v2022 = vld [vmem:[%s261 + $0xa4] sm:$0xff]
      %v2023 = vld [vmem:[%s261 + $0xac] sm:$0xff]
      %v2024 = vld [vmem:[%s261 + $0xb4] sm:$0xff]
      %v2025 = vld [vmem:[%s261 + $0xbc] sm:$0xff]
      %v2026 = vld [vmem:[%s261 + $0xc4] sm:$0xff]
      %v2027 = vld [vmem:[%s261 + $0xcc] sm:$0xff]
      %v2028 = vld [vmem:[%s261 + $0xd4] sm:$0xff]
      %v2029 = vld [vmem:[%s261 + $0xdc] sm:$0xff]
      %v2030 = vld [vmem:[%s261 + $0xe4] sm:$0xff]
      %v2031 = vld [vmem:[%s261 + $0xec] sm:$0xff]
      %v2032 = vld [vmem:[%s261 + $0xf4] sm:$0xff]
      %v2033 = vld [vmem:[%s261 + $0xfc] sm:$0xff]
      %v2034 = vld [vmem:[%s261 + $0x104] sm:$0xff]
      %v2035 = vld [vmem:[%s261 + $0x10c] sm:$0xff]
      %v2036 = vld [vmem:[%s261 + $0x114] sm:$0xff]
      %v2037 = vld [vmem:[%s261 + $0x11c] sm:$0xff]
      %v2038 = vld [vmem:[%s261 + $0x124] sm:$0xff]
      %v2039 = vld [vmem:[%s261 + $0x12c] sm:$0xff]
      %2076 = vrot.lane.b32.xlu0 %v2004, 64
      %v2077 = vpop.permute.xlu0 %2076
      %2078 = vrot.lane.b32.xlu0 %v2005, 64
      %v2079 = vpop.permute.xlu0 %2078
      %2080 = vrot.lane.b32.xlu0 %v2006, 64
      %v2081 = vpop.permute.xlu0 %2080
      %2082 = vrot.lane.b32.xlu0 %v2007, 64
      %v2083 = vpop.permute.xlu0 %2082
      %2084 = vrot.lane.b32.xlu0 %v2008, 64
      %v2085 = vpop.permute.xlu0 %2084
      %2086 = vrot.lane.b32.xlu0 %v2009, 64
      %v2087 = vpop.permute.xlu0 %2086
      %2088 = vrot.lane.b32.xlu0 %v2010, 64
      %v2089 = vpop.permute.xlu0 %2088
      %2090 = vrot.lane.b32.xlu0 %v2011, 64
      %v2091 = vpop.permute.xlu0 %2090
      %2092 = vrot.lane.b32.xlu0 %v2012, 64
      %v2093 = vpop.permute.xlu0 %2092
      %2094 = vrot.lane.b32.xlu0 %v2013, 64
      %v2095 = vpop.permute.xlu0 %2094
      %2096 = vrot.lane.b32.xlu0 %v2014, 64
      %v2097 = vpop.permute.xlu0 %2096
      %2098 = vrot.lane.b32.xlu0 %v2015, 64
      %v2099 = vpop.permute.xlu0 %2098
      %2100 = vrot.lane.b32.xlu0 %v2016, 64
      %v2101 = vpop.permute.xlu0 %2100
      %2102 = vrot.lane.b32.xlu0 %v2017, 64
      %v2103 = vpop.permute.xlu0 %2102
      %2104 = vrot.lane.b32.xlu0 %v2018, 64
      %v2105 = vpop.permute.xlu0 %2104
      %2106 = vrot.lane.b32.xlu0 %v2019, 64
      %v2107 = vpop.permute.xlu0 %2106
      %2108 = vrot.lane.b32.xlu0 %v2020, 64
      %v2109 = vpop.permute.xlu0 %2108
      %2110 = vrot.lane.b32.xlu0 %v2021, 64
      %v2111 = vpop.permute.xlu0 %2110
      %2112 = vrot.lane.b32.xlu0 %v2022, 64
      %v2113 = vpop.permute.xlu0 %2112
      %2114 = vrot.lane.b32.xlu0 %v2023, 64
      %v2115 = vpop.permute.xlu0 %2114
      %2116 = vrot.lane.b32.xlu0 %v2024, 64
      %v2117 = vpop.permute.xlu0 %2116
      %2118 = vrot.lane.b32.xlu0 %v2025, 64
      %v2119 = vpop.permute.xlu0 %2118
      %2120 = vrot.lane.b32.xlu0 %v2026, 64
      %v2121 = vpop.permute.xlu0 %2120
      %2122 = vrot.lane.b32.xlu0 %v2027, 64
      %v2123 = vpop.permute.xlu0 %2122
      %2124 = vrot.lane.b32.xlu0 %v2028, 64
      %v2125 = vpop.permute.xlu0 %2124
      %2126 = vrot.lane.b32.xlu0 %v2029, 64
      %v2127 = vpop.permute.xlu0 %2126
      %2128 = vrot.lane.b32.xlu0 %v2030, 64
      %v2129 = vpop.permute.xlu0 %2128
      %2130 = vrot.lane.b32.xlu0 %v2031, 64
      %v2131 = vpop.permute.xlu0 %2130
      %2132 = vrot.lane.b32.xlu0 %v2032, 64
      %v2133 = vpop.permute.xlu0 %2132
      %2134 = vrot.lane.b32.xlu0 %v2033, 64
      %v2135 = vpop.permute.xlu0 %2134
      %2136 = vrot.lane.b32.xlu0 %v2034, 64
      %v2137 = vpop.permute.xlu0 %2136
      %2138 = vrot.lane.b32.xlu0 %v2035, 64
      %v2139 = vpop.permute.xlu0 %2138
      %2140 = vrot.lane.b32.xlu0 %v2036, 64
      %v2141 = vpop.permute.xlu0 %2140
      %2142 = vrot.lane.b32.xlu0 %v2037, 64
      %v2143 = vpop.permute.xlu0 %2142
      %2144 = vrot.lane.b32.xlu0 %v2038, 64
      %v2145 = vpop.permute.xlu0 %2144
      %2146 = vrot.lane.b32.xlu0 %v2039, 64
      %v2147 = vpop.permute.xlu0 %2146
      %2184 = vst.msk [vmem:[#allocation2 + $0x10] sm:$0xff] %vm742, %v2077
      %2185 = vst.msk [vmem:[#allocation2 + $0x38] sm:$0xff] %vm742, %v2079
      %2186 = vst.msk [vmem:[#allocation2 + $0x60] sm:$0xff] %vm742, %v2081
      %2187 = vst.msk [vmem:[#allocation2 + $0x88] sm:$0xff] %vm742, %v2083
      %2188 = vst.msk [vmem:[#allocation2 + $0xb0] sm:$0xff] %vm742, %v2085
      %2189 = vst.msk [vmem:[#allocation2 + $0xd8] sm:$0xff] %vm742, %v2087
      %2190 = vst.msk [vmem:[#allocation2 + $0x100] sm:$0xff] %vm742, %v2089
      %2191 = vst.msk [vmem:[#allocation2 + $0x128] sm:$0xff] %vm742, %v2091
      %2192 = vst.msk [vmem:[#allocation2 + $0x150] sm:$0xff] %vm742, %v2093
      %2193 = vst.msk [vmem:[#allocation2 + $0x178] sm:$0xff] %vm742, %v2095
      %2194 = vst.msk [vmem:[#allocation2 + $0x1a0] sm:$0xff] %vm742, %v2097
      %2195 = vst.msk [vmem:[#allocation2 + $0x1c8] sm:$0xff] %vm742, %v2099
      %2196 = vst.msk [vmem:[#allocation2 + $0x1f0] sm:$0xff] %vm742, %v2101
      %2197 = vst.msk [vmem:[#allocation2 + $0x218] sm:$0xff] %vm742, %v2103
      %2198 = vst.msk [vmem:[#allocation2 + $0x240] sm:$0xff] %vm742, %v2105
      %2199 = vst.msk [vmem:[#allocation2 + $0x268] sm:$0xff] %vm742, %v2107
      %2200 = vst.msk [vmem:[#allocation2 + $0x290] sm:$0xff] %vm742, %v2109
      %2201 = vst.msk [vmem:[#allocation2 + $0x2b8] sm:$0xff] %vm742, %v2111
      %2202 = vst.msk [vmem:[#allocation2 + $0x2e0] sm:$0xff] %vm742, %v2113
      %2203 = vst.msk [vmem:[#allocation2 + $0x308] sm:$0xff] %vm742, %v2115
      %2204 = vst.msk [vmem:[#allocation2 + $0x330] sm:$0xff] %vm742, %v2117
      %2205 = vst.msk [vmem:[#allocation2 + $0x358] sm:$0xff] %vm742, %v2119
      %2206 = vst.msk [vmem:[#allocation2 + $0x380] sm:$0xff] %vm742, %v2121
      %2207 = vst.msk [vmem:[#allocation2 + $0x3a8] sm:$0xff] %vm742, %v2123
      %2208 = vst.msk [vmem:[#allocation2 + $0x3d0] sm:$0xff] %vm742, %v2125
      %2209 = vst.msk [vmem:[#allocation2 + $0x3f8] sm:$0xff] %vm742, %v2127
      %2210 = vst.msk [vmem:[#allocation2 + $0x420] sm:$0xff] %vm742, %v2129
      %2211 = vst.msk [vmem:[#allocation2 + $0x448] sm:$0xff] %vm742, %v2131
      %2212 = vst.msk [vmem:[#allocation2 + $0x470] sm:$0xff] %vm742, %v2133
      %2213 = vst.msk [vmem:[#allocation2 + $0x498] sm:$0xff] %vm742, %v2135
      %2214 = vst.msk [vmem:[#allocation2 + $0x4c0] sm:$0xff] %vm742, %v2137
      %2215 = vst.msk [vmem:[#allocation2 + $0x4e8] sm:$0xff] %vm742, %v2139
      %2216 = vst.msk [vmem:[#allocation2 + $0x510] sm:$0xff] %vm742, %v2141
      %2217 = vst.msk [vmem:[#allocation2 + $0x538] sm:$0xff] %vm742, %v2143
      %2218 = vst.msk [vmem:[#allocation2 + $0x560] sm:$0xff] %vm742, %v2145
      %2219 = vst.msk [vmem:[#allocation2 + $0x588] sm:$0xff] %vm742, %v2147
      %v2220 = vld [vmem:[%s266 + $0x14] sm:$0xff]
      %v2221 = vld [vmem:[%s266 + $0x1c] sm:$0xff]
      %v2222 = vld [vmem:[%s266 + $0x24] sm:$0xff]
      %v2223 = vld [vmem:[%s266 + $0x2c] sm:$0xff]
      %v2224 = vld [vmem:[%s266 + $0x34] sm:$0xff]
      %v2225 = vld [vmem:[%s266 + $0x3c] sm:$0xff]
      %v2226 = vld [vmem:[%s266 + $0x44] sm:$0xff]
      %v2227 = vld [vmem:[%s266 + $0x4c] sm:$0xff]
      %v2228 = vld [vmem:[%s266 + $0x54] sm:$0xff]
      %v2229 = vld [vmem:[%s266 + $0x5c] sm:$0xff]
      %v2230 = vld [vmem:[%s266 + $0x64] sm:$0xff]
      %v2231 = vld [vmem:[%s266 + $0x6c] sm:$0xff]
      %v2232 = vld [vmem:[%s266 + $0x74] sm:$0xff]
      %v2233 = vld [vmem:[%s266 + $0x7c] sm:$0xff]
      %v2234 = vld [vmem:[%s266 + $0x84] sm:$0xff]
      %v2235 = vld [vmem:[%s266 + $0x8c] sm:$0xff]
      %v2236 = vld [vmem:[%s266 + $0x94] sm:$0xff]
      %v2237 = vld [vmem:[%s266 + $0x9c] sm:$0xff]
      %v2238 = vld [vmem:[%s266 + $0xa4] sm:$0xff]
      %v2239 = vld [vmem:[%s266 + $0xac] sm:$0xff]
      %v2240 = vld [vmem:[%s266 + $0xb4] sm:$0xff]
      %v2241 = vld [vmem:[%s266 + $0xbc] sm:$0xff]
      %v2242 = vld [vmem:[%s266 + $0xc4] sm:$0xff]
      %v2243 = vld [vmem:[%s266 + $0xcc] sm:$0xff]
      %v2244 = vld [vmem:[%s266 + $0xd4] sm:$0xff]
      %v2245 = vld [vmem:[%s266 + $0xdc] sm:$0xff]
      %v2246 = vld [vmem:[%s266 + $0xe4] sm:$0xff]
      %v2247 = vld [vmem:[%s266 + $0xec] sm:$0xff]
      %v2248 = vld [vmem:[%s266 + $0xf4] sm:$0xff]
      %v2249 = vld [vmem:[%s266 + $0xfc] sm:$0xff]
      %v2250 = vld [vmem:[%s266 + $0x104] sm:$0xff]
      %v2251 = vld [vmem:[%s266 + $0x10c] sm:$0xff]
      %v2252 = vld [vmem:[%s266 + $0x114] sm:$0xff]
      %v2253 = vld [vmem:[%s266 + $0x11c] sm:$0xff]
      %v2254 = vld [vmem:[%s266 + $0x124] sm:$0xff]
      %v2255 = vld [vmem:[%s266 + $0x12c] sm:$0xff]
      %2292 = vrot.lane.b32.xlu0 %v2220, 96
      %v2293 = vpop.permute.xlu0 %2292
      %2294 = vrot.lane.b32.xlu0 %v2221, 96
      %v2295 = vpop.permute.xlu0 %2294
      %2296 = vrot.lane.b32.xlu0 %v2222, 96
      %v2297 = vpop.permute.xlu0 %2296
      %2298 = vrot.lane.b32.xlu0 %v2223, 96
      %v2299 = vpop.permute.xlu0 %2298
      %2300 = vrot.lane.b32.xlu0 %v2224, 96
      %v2301 = vpop.permute.xlu0 %2300
      %2302 = vrot.lane.b32.xlu0 %v2225, 96
      %v2303 = vpop.permute.xlu0 %2302
      %2304 = vrot.lane.b32.xlu0 %v2226, 96
      %v2305 = vpop.permute.xlu0 %2304
      %2306 = vrot.lane.b32.xlu0 %v2227, 96
      %v2307 = vpop.permute.xlu0 %2306
      %2308 = vrot.lane.b32.xlu0 %v2228, 96
      %v2309 = vpop.permute.xlu0 %2308
      %2310 = vrot.lane.b32.xlu0 %v2229, 96
      %v2311 = vpop.permute.xlu0 %2310
      %2312 = vrot.lane.b32.xlu0 %v2230, 96
      %v2313 = vpop.permute.xlu0 %2312
      %2314 = vrot.lane.b32.xlu0 %v2231, 96
      %v2315 = vpop.permute.xlu0 %2314
      %2316 = vrot.lane.b32.xlu0 %v2232, 96
      %v2317 = vpop.permute.xlu0 %2316
      %2318 = vrot.lane.b32.xlu0 %v2233, 96
      %v2319 = vpop.permute.xlu0 %2318
      %2320 = vrot.lane.b32.xlu0 %v2234, 96
      %v2321 = vpop.permute.xlu0 %2320
      %2322 = vrot.lane.b32.xlu0 %v2235, 96
      %v2323 = vpop.permute.xlu0 %2322
      %2324 = vrot.lane.b32.xlu0 %v2236, 96
      %v2325 = vpop.permute.xlu0 %2324
      %2326 = vrot.lane.b32.xlu0 %v2237, 96
      %v2327 = vpop.permute.xlu0 %2326
      %2328 = vrot.lane.b32.xlu0 %v2238, 96
      %v2329 = vpop.permute.xlu0 %2328
      %2330 = vrot.lane.b32.xlu0 %v2239, 96
      %v2331 = vpop.permute.xlu0 %2330
      %2332 = vrot.lane.b32.xlu0 %v2240, 96
      %v2333 = vpop.permute.xlu0 %2332
      %2334 = vrot.lane.b32.xlu0 %v2241, 96
      %v2335 = vpop.permute.xlu0 %2334
      %2336 = vrot.lane.b32.xlu0 %v2242, 96
      %v2337 = vpop.permute.xlu0 %2336
      %2338 = vrot.lane.b32.xlu0 %v2243, 96
      %v2339 = vpop.permute.xlu0 %2338
      %2340 = vrot.lane.b32.xlu0 %v2244, 96
      %v2341 = vpop.permute.xlu0 %2340
      %2342 = vrot.lane.b32.xlu0 %v2245, 96
      %v2343 = vpop.permute.xlu0 %2342
      %2344 = vrot.lane.b32.xlu0 %v2246, 96
      %v2345 = vpop.permute.xlu0 %2344
      %2346 = vrot.lane.b32.xlu0 %v2247, 96
      %v2347 = vpop.permute.xlu0 %2346
      %2348 = vrot.lane.b32.xlu0 %v2248, 96
      %v2349 = vpop.permute.xlu0 %2348
      %2350 = vrot.lane.b32.xlu0 %v2249, 96
      %v2351 = vpop.permute.xlu0 %2350
      %2352 = vrot.lane.b32.xlu0 %v2250, 96
      %v2353 = vpop.permute.xlu0 %2352
      %2354 = vrot.lane.b32.xlu0 %v2251, 96
      %v2355 = vpop.permute.xlu0 %2354
      %2356 = vrot.lane.b32.xlu0 %v2252, 96
      %v2357 = vpop.permute.xlu0 %2356
      %2358 = vrot.lane.b32.xlu0 %v2253, 96
      %v2359 = vpop.permute.xlu0 %2358
      %2360 = vrot.lane.b32.xlu0 %v2254, 96
      %v2361 = vpop.permute.xlu0 %2360
      %2362 = vrot.lane.b32.xlu0 %v2255, 96
      %v2363 = vpop.permute.xlu0 %2362
      %2400 = vst.msk [vmem:[#allocation2 + $0x10] sm:$0xff] %vm959, %v2293
      %2401 = vst.msk [vmem:[#allocation2 + $0x38] sm:$0xff] %vm959, %v2295
      %2402 = vst.msk [vmem:[#allocation2 + $0x60] sm:$0xff] %vm959, %v2297
      %2403 = vst.msk [vmem:[#allocation2 + $0x88] sm:$0xff] %vm959, %v2299
      %2404 = vst.msk [vmem:[#allocation2 + $0xb0] sm:$0xff] %vm959, %v2301
      %2405 = vst.msk [vmem:[#allocation2 + $0xd8] sm:$0xff] %vm959, %v2303
      %2406 = vst.msk [vmem:[#allocation2 + $0x100] sm:$0xff] %vm959, %v2305
      %2407 = vst.msk [vmem:[#allocation2 + $0x128] sm:$0xff] %vm959, %v2307
      %2408 = vst.msk [vmem:[#allocation2 + $0x150] sm:$0xff] %vm959, %v2309
      %2409 = vst.msk [vmem:[#allocation2 + $0x178] sm:$0xff] %vm959, %v2311
      %2410 = vst.msk [vmem:[#allocation2 + $0x1a0] sm:$0xff] %vm959, %v2313
      %2411 = vst.msk [vmem:[#allocation2 + $0x1c8] sm:$0xff] %vm959, %v2315
      %2412 = vst.msk [vmem:[#allocation2 + $0x1f0] sm:$0xff] %vm959, %v2317
      %2413 = vst.msk [vmem:[#allocation2 + $0x218] sm:$0xff] %vm959, %v2319
      %2414 = vst.msk [vmem:[#allocation2 + $0x240] sm:$0xff] %vm959, %v2321
      %2415 = vst.msk [vmem:[#allocation2 + $0x268] sm:$0xff] %vm959, %v2323
      %2416 = vst.msk [vmem:[#allocation2 + $0x290] sm:$0xff] %vm959, %v2325
      %2417 = vst.msk [vmem:[#allocation2 + $0x2b8] sm:$0xff] %vm959, %v2327
      %2418 = vst.msk [vmem:[#allocation2 + $0x2e0] sm:$0xff] %vm959, %v2329
      %2419 = vst.msk [vmem:[#allocation2 + $0x308] sm:$0xff] %vm959, %v2331
      %2420 = vst.msk [vmem:[#allocation2 + $0x330] sm:$0xff] %vm959, %v2333
      %2421 = vst.msk [vmem:[#allocation2 + $0x358] sm:$0xff] %vm959, %v2335
      %2422 = vst.msk [vmem:[#allocation2 + $0x380] sm:$0xff] %vm959, %v2337
      %2423 = vst.msk [vmem:[#allocation2 + $0x3a8] sm:$0xff] %vm959, %v2339
      %2424 = vst.msk [vmem:[#allocation2 + $0x3d0] sm:$0xff] %vm959, %v2341
      %2425 = vst.msk [vmem:[#allocation2 + $0x3f8] sm:$0xff] %vm959, %v2343
      %2426 = vst.msk [vmem:[#allocation2 + $0x420] sm:$0xff] %vm959, %v2345
      %2427 = vst.msk [vmem:[#allocation2 + $0x448] sm:$0xff] %vm959, %v2347
      %2428 = vst.msk [vmem:[#allocation2 + $0x470] sm:$0xff] %vm959, %v2349
      %2429 = vst.msk [vmem:[#allocation2 + $0x498] sm:$0xff] %vm959, %v2351
      %2430 = vst.msk [vmem:[#allocation2 + $0x4c0] sm:$0xff] %vm959, %v2353
      %2431 = vst.msk [vmem:[#allocation2 + $0x4e8] sm:$0xff] %vm959, %v2355
      %2432 = vst.msk [vmem:[#allocation2 + $0x510] sm:$0xff] %vm959, %v2357
      %2433 = vst.msk [vmem:[#allocation2 + $0x538] sm:$0xff] %vm959, %v2359
      %2434 = vst.msk [vmem:[#allocation2 + $0x560] sm:$0xff] %vm959, %v2361
      %2435 = vst.msk [vmem:[#allocation2 + $0x588] sm:$0xff] %vm959, %v2363
      %v2436 = vld [vmem:[%s261 + $0x24] sm:$0xff]
      %v2437 = vld [vmem:[%s261 + $0x2c] sm:$0xff]
      %v2438 = vld [vmem:[%s261 + $0x34] sm:$0xff]
      %v2439 = vld [vmem:[%s261 + $0x3c] sm:$0xff]
      %v2440 = vld [vmem:[%s261 + $0x44] sm:$0xff]
      %v2441 = vld [vmem:[%s261 + $0x4c] sm:$0xff]
      %v2442 = vld [vmem:[%s261 + $0x54] sm:$0xff]
      %v2443 = vld [vmem:[%s261 + $0x5c] sm:$0xff]
      %v2444 = vld [vmem:[%s261 + $0x64] sm:$0xff]
      %v2445 = vld [vmem:[%s261 + $0x6c] sm:$0xff]
      %v2446 = vld [vmem:[%s261 + $0x74] sm:$0xff]
      %v2447 = vld [vmem:[%s261 + $0x7c] sm:$0xff]
      %v2448 = vld [vmem:[%s261 + $0x84] sm:$0xff]
      %v2449 = vld [vmem:[%s261 + $0x8c] sm:$0xff]
      %v2450 = vld [vmem:[%s261 + $0x94] sm:$0xff]
      %v2451 = vld [vmem:[%s261 + $0x9c] sm:$0xff]
      %v2452 = vld [vmem:[%s261 + $0xa4] sm:$0xff]
      %v2453 = vld [vmem:[%s261 + $0xac] sm:$0xff]
      %v2454 = vld [vmem:[%s261 + $0xb4] sm:$0xff]
      %v2455 = vld [vmem:[%s261 + $0xbc] sm:$0xff]
      %v2456 = vld [vmem:[%s261 + $0xc4] sm:$0xff]
      %v2457 = vld [vmem:[%s261 + $0xcc] sm:$0xff]
      %v2458 = vld [vmem:[%s261 + $0xd4] sm:$0xff]
      %v2459 = vld [vmem:[%s261 + $0xdc] sm:$0xff]
      %v2460 = vld [vmem:[%s261 + $0xe4] sm:$0xff]
      %v2461 = vld [vmem:[%s261 + $0xec] sm:$0xff]
      %v2462 = vld [vmem:[%s261 + $0xf4] sm:$0xff]
      %v2463 = vld [vmem:[%s261 + $0xfc] sm:$0xff]
      %v2464 = vld [vmem:[%s261 + $0x104] sm:$0xff]
      %v2465 = vld [vmem:[%s261 + $0x10c] sm:$0xff]
      %v2466 = vld [vmem:[%s261 + $0x114] sm:$0xff]
      %v2467 = vld [vmem:[%s261 + $0x11c] sm:$0xff]
      %v2468 = vld [vmem:[%s261 + $0x124] sm:$0xff]
      %v2469 = vld [vmem:[%s261 + $0x12c] sm:$0xff]
      %v2470 = vld [vmem:[%s261 + $0x134] sm:$0xff]
      %v2471 = vld [vmem:[%s261 + $0x13c] sm:$0xff]
      %2472 = vst.msk [vmem:[#allocation2 + $0x18] sm:$0xff] %vm308, %v2436
      %2473 = vst.msk [vmem:[#allocation2 + $0x40] sm:$0xff] %vm308, %v2437
      %2474 = vst.msk [vmem:[#allocation2 + $0x68] sm:$0xff] %vm308, %v2438
      %2475 = vst.msk [vmem:[#allocation2 + $0x90] sm:$0xff] %vm308, %v2439
      %2476 = vst.msk [vmem:[#allocation2 + $0xb8] sm:$0xff] %vm308, %v2440
      %2477 = vst.msk [vmem:[#allocation2 + $0xe0] sm:$0xff] %vm308, %v2441
      %2478 = vst.msk [vmem:[#allocation2 + $0x108] sm:$0xff] %vm308, %v2442
      %2479 = vst.msk [vmem:[#allocation2 + $0x130] sm:$0xff] %vm308, %v2443
      %2480 = vst.msk [vmem:[#allocation2 + $0x158] sm:$0xff] %vm308, %v2444
      %2481 = vst.msk [vmem:[#allocation2 + $0x180] sm:$0xff] %vm308, %v2445
      %2482 = vst.msk [vmem:[#allocation2 + $0x1a8] sm:$0xff] %vm308, %v2446
      %2483 = vst.msk [vmem:[#allocation2 + $0x1d0] sm:$0xff] %vm308, %v2447
      %2484 = vst.msk [vmem:[#allocation2 + $0x1f8] sm:$0xff] %vm308, %v2448
      %2485 = vst.msk [vmem:[#allocation2 + $0x220] sm:$0xff] %vm308, %v2449
      %2486 = vst.msk [vmem:[#allocation2 + $0x248] sm:$0xff] %vm308, %v2450
      %2487 = vst.msk [vmem:[#allocation2 + $0x270] sm:$0xff] %vm308, %v2451
      %2488 = vst.msk [vmem:[#allocation2 + $0x298] sm:$0xff] %vm308, %v2452
      %2489 = vst.msk [vmem:[#allocation2 + $0x2c0] sm:$0xff] %vm308, %v2453
      %2490 = vst.msk [vmem:[#allocation2 + $0x2e8] sm:$0xff] %vm308, %v2454
      %2491 = vst.msk [vmem:[#allocation2 + $0x310] sm:$0xff] %vm308, %v2455
      %2492 = vst.msk [vmem:[#allocation2 + $0x338] sm:$0xff] %vm308, %v2456
      %2493 = vst.msk [vmem:[#allocation2 + $0x360] sm:$0xff] %vm308, %v2457
      %2494 = vst.msk [vmem:[#allocation2 + $0x388] sm:$0xff] %vm308, %v2458
      %2495 = vst.msk [vmem:[#allocation2 + $0x3b0] sm:$0xff] %vm308, %v2459
      %2496 = vst.msk [vmem:[#allocation2 + $0x3d8] sm:$0xff] %vm308, %v2460
      %2497 = vst.msk [vmem:[#allocation2 + $0x400] sm:$0xff] %vm308, %v2461
      %2498 = vst.msk [vmem:[#allocation2 + $0x428] sm:$0xff] %vm308, %v2462
      %2499 = vst.msk [vmem:[#allocation2 + $0x450] sm:$0xff] %vm308, %v2463
      %2500 = vst.msk [vmem:[#allocation2 + $0x478] sm:$0xff] %vm308, %v2464
      %2501 = vst.msk [vmem:[#allocation2 + $0x4a0] sm:$0xff] %vm308, %v2465
      %2502 = vst.msk [vmem:[#allocation2 + $0x4c8] sm:$0xff] %vm308, %v2466
      %2503 = vst.msk [vmem:[#allocation2 + $0x4f0] sm:$0xff] %vm308, %v2467
      %2504 = vst.msk [vmem:[#allocation2 + $0x518] sm:$0xff] %vm308, %v2468
      %2505 = vst.msk [vmem:[#allocation2 + $0x540] sm:$0xff] %vm308, %v2469
      %2506 = vst.msk [vmem:[#allocation2 + $0x568] sm:$0xff] %vm308, %v2470
      %2507 = vst.msk [vmem:[#allocation2 + $0x590] sm:$0xff] %vm308, %v2471
      %v2508 = vld [vmem:[%s266 + $0x24] sm:$0xff]
      %v2509 = vld [vmem:[%s266 + $0x2c] sm:$0xff]
      %v2510 = vld [vmem:[%s266 + $0x34] sm:$0xff]
      %v2511 = vld [vmem:[%s266 + $0x3c] sm:$0xff]
      %v2512 = vld [vmem:[%s266 + $0x44] sm:$0xff]
      %v2513 = vld [vmem:[%s266 + $0x4c] sm:$0xff]
      %v2514 = vld [vmem:[%s266 + $0x54] sm:$0xff]
      %v2515 = vld [vmem:[%s266 + $0x5c] sm:$0xff]
      %v2516 = vld [vmem:[%s266 + $0x64] sm:$0xff]
      %v2517 = vld [vmem:[%s266 + $0x6c] sm:$0xff]
      %v2518 = vld [vmem:[%s266 + $0x74] sm:$0xff]
      %v2519 = vld [vmem:[%s266 + $0x7c] sm:$0xff]
      %v2520 = vld [vmem:[%s266 + $0x84] sm:$0xff]
      %v2521 = vld [vmem:[%s266 + $0x8c] sm:$0xff]
      %v2522 = vld [vmem:[%s266 + $0x94] sm:$0xff]
      %v2523 = vld [vmem:[%s266 + $0x9c] sm:$0xff]
      %v2524 = vld [vmem:[%s266 + $0xa4] sm:$0xff]
      %v2525 = vld [vmem:[%s266 + $0xac] sm:$0xff]
      %v2526 = vld [vmem:[%s266 + $0xb4] sm:$0xff]
      %v2527 = vld [vmem:[%s266 + $0xbc] sm:$0xff]
      %v2528 = vld [vmem:[%s266 + $0xc4] sm:$0xff]
      %v2529 = vld [vmem:[%s266 + $0xcc] sm:$0xff]
      %v2530 = vld [vmem:[%s266 + $0xd4] sm:$0xff]
      %v2531 = vld [vmem:[%s266 + $0xdc] sm:$0xff]
      %v2532 = vld [vmem:[%s266 + $0xe4] sm:$0xff]
      %v2533 = vld [vmem:[%s266 + $0xec] sm:$0xff]
      %v2534 = vld [vmem:[%s266 + $0xf4] sm:$0xff]
      %v2535 = vld [vmem:[%s266 + $0xfc] sm:$0xff]
      %v2536 = vld [vmem:[%s266 + $0x104] sm:$0xff]
      %v2537 = vld [vmem:[%s266 + $0x10c] sm:$0xff]
      %v2538 = vld [vmem:[%s266 + $0x114] sm:$0xff]
      %v2539 = vld [vmem:[%s266 + $0x11c] sm:$0xff]
      %v2540 = vld [vmem:[%s266 + $0x124] sm:$0xff]
      %v2541 = vld [vmem:[%s266 + $0x12c] sm:$0xff]
      %v2542 = vld [vmem:[%s266 + $0x134] sm:$0xff]
      %v2543 = vld [vmem:[%s266 + $0x13c] sm:$0xff]
      %2580 = vrot.lane.b32.xlu0 %v2508, 32
      %v2581 = vpop.permute.xlu0 %2580
      %2582 = vrot.lane.b32.xlu0 %v2509, 32
      %v2583 = vpop.permute.xlu0 %2582
      %2584 = vrot.lane.b32.xlu0 %v2510, 32
      %v2585 = vpop.permute.xlu0 %2584
      %2586 = vrot.lane.b32.xlu0 %v2511, 32
      %v2587 = vpop.permute.xlu0 %2586
      %2588 = vrot.lane.b32.xlu0 %v2512, 32
      %v2589 = vpop.permute.xlu0 %2588
      %2590 = vrot.lane.b32.xlu0 %v2513, 32
      %v2591 = vpop.permute.xlu0 %2590
      %2592 = vrot.lane.b32.xlu0 %v2514, 32
      %v2593 = vpop.permute.xlu0 %2592
      %2594 = vrot.lane.b32.xlu0 %v2515, 32
      %v2595 = vpop.permute.xlu0 %2594
      %2596 = vrot.lane.b32.xlu0 %v2516, 32
      %v2597 = vpop.permute.xlu0 %2596
      %2598 = vrot.lane.b32.xlu0 %v2517, 32
      %v2599 = vpop.permute.xlu0 %2598
      %2600 = vrot.lane.b32.xlu0 %v2518, 32
      %v2601 = vpop.permute.xlu0 %2600
      %2602 = vrot.lane.b32.xlu0 %v2519, 32
      %v2603 = vpop.permute.xlu0 %2602
      %2604 = vrot.lane.b32.xlu0 %v2520, 32
      %v2605 = vpop.permute.xlu0 %2604
      %2606 = vrot.lane.b32.xlu0 %v2521, 32
      %v2607 = vpop.permute.xlu0 %2606
      %2608 = vrot.lane.b32.xlu0 %v2522, 32
      %v2609 = vpop.permute.xlu0 %2608
      %2610 = vrot.lane.b32.xlu0 %v2523, 32
      %v2611 = vpop.permute.xlu0 %2610
      %2612 = vrot.lane.b32.xlu0 %v2524, 32
      %v2613 = vpop.permute.xlu0 %2612
      %2614 = vrot.lane.b32.xlu0 %v2525, 32
      %v2615 = vpop.permute.xlu0 %2614
      %2616 = vrot.lane.b32.xlu0 %v2526, 32
      %v2617 = vpop.permute.xlu0 %2616
      %2618 = vrot.lane.b32.xlu0 %v2527, 32
      %v2619 = vpop.permute.xlu0 %2618
      %2620 = vrot.lane.b32.xlu0 %v2528, 32
      %v2621 = vpop.permute.xlu0 %2620
      %2622 = vrot.lane.b32.xlu0 %v2529, 32
      %v2623 = vpop.permute.xlu0 %2622
      %2624 = vrot.lane.b32.xlu0 %v2530, 32
      %v2625 = vpop.permute.xlu0 %2624
      %2626 = vrot.lane.b32.xlu0 %v2531, 32
      %v2627 = vpop.permute.xlu0 %2626
      %2628 = vrot.lane.b32.xlu0 %v2532, 32
      %v2629 = vpop.permute.xlu0 %2628
      %2630 = vrot.lane.b32.xlu0 %v2533, 32
      %v2631 = vpop.permute.xlu0 %2630
      %2632 = vrot.lane.b32.xlu0 %v2534, 32
      %v2633 = vpop.permute.xlu0 %2632
      %2634 = vrot.lane.b32.xlu0 %v2535, 32
      %v2635 = vpop.permute.xlu0 %2634
      %2636 = vrot.lane.b32.xlu0 %v2536, 32
      %v2637 = vpop.permute.xlu0 %2636
      %2638 = vrot.lane.b32.xlu0 %v2537, 32
      %v2639 = vpop.permute.xlu0 %2638
      %2640 = vrot.lane.b32.xlu0 %v2538, 32
      %v2641 = vpop.permute.xlu0 %2640
      %2642 = vrot.lane.b32.xlu0 %v2539, 32
      %v2643 = vpop.permute.xlu0 %2642
      %2644 = vrot.lane.b32.xlu0 %v2540, 32
      %v2645 = vpop.permute.xlu0 %2644
      %2646 = vrot.lane.b32.xlu0 %v2541, 32
      %v2647 = vpop.permute.xlu0 %2646
      %2648 = vrot.lane.b32.xlu0 %v2542, 32
      %v2649 = vpop.permute.xlu0 %2648
      %2650 = vrot.lane.b32.xlu0 %v2543, 32
      %v2651 = vpop.permute.xlu0 %2650
      %2688 = vst.msk [vmem:[#allocation2 + $0x18] sm:$0xff] %vm525, %v2581
      %2689 = vst.msk [vmem:[#allocation2 + $0x40] sm:$0xff] %vm525, %v2583
      %2690 = vst.msk [vmem:[#allocation2 + $0x68] sm:$0xff] %vm525, %v2585
      %2691 = vst.msk [vmem:[#allocation2 + $0x90] sm:$0xff] %vm525, %v2587
      %2692 = vst.msk [vmem:[#allocation2 + $0xb8] sm:$0xff] %vm525, %v2589
      %2693 = vst.msk [vmem:[#allocation2 + $0xe0] sm:$0xff] %vm525, %v2591
      %2694 = vst.msk [vmem:[#allocation2 + $0x108] sm:$0xff] %vm525, %v2593
      %2695 = vst.msk [vmem:[#allocation2 + $0x130] sm:$0xff] %vm525, %v2595
      %2696 = vst.msk [vmem:[#allocation2 + $0x158] sm:$0xff] %vm525, %v2597
      %2697 = vst.msk [vmem:[#allocation2 + $0x180] sm:$0xff] %vm525, %v2599
      %2698 = vst.msk [vmem:[#allocation2 + $0x1a8] sm:$0xff] %vm525, %v2601
      %2699 = vst.msk [vmem:[#allocation2 + $0x1d0] sm:$0xff] %vm525, %v2603
      %2700 = vst.msk [vmem:[#allocation2 + $0x1f8] sm:$0xff] %vm525, %v2605
      %2701 = vst.msk [vmem:[#allocation2 + $0x220] sm:$0xff] %vm525, %v2607
      %2702 = vst.msk [vmem:[#allocation2 + $0x248] sm:$0xff] %vm525, %v2609
      %2703 = vst.msk [vmem:[#allocation2 + $0x270] sm:$0xff] %vm525, %v2611
      %2704 = vst.msk [vmem:[#allocation2 + $0x298] sm:$0xff] %vm525, %v2613
      %2705 = vst.msk [vmem:[#allocation2 + $0x2c0] sm:$0xff] %vm525, %v2615
      %2706 = vst.msk [vmem:[#allocation2 + $0x2e8] sm:$0xff] %vm525, %v2617
      %2707 = vst.msk [vmem:[#allocation2 + $0x310] sm:$0xff] %vm525, %v2619
      %2708 = vst.msk [vmem:[#allocation2 + $0x338] sm:$0xff] %vm525, %v2621
      %2709 = vst.msk [vmem:[#allocation2 + $0x360] sm:$0xff] %vm525, %v2623
      %2710 = vst.msk [vmem:[#allocation2 + $0x388] sm:$0xff] %vm525, %v2625
      %2711 = vst.msk [vmem:[#allocation2 + $0x3b0] sm:$0xff] %vm525, %v2627
      %2712 = vst.msk [vmem:[#allocation2 + $0x3d8] sm:$0xff] %vm525, %v2629
      %2713 = vst.msk [vmem:[#allocation2 + $0x400] sm:$0xff] %vm525, %v2631
      %2714 = vst.msk [vmem:[#allocation2 + $0x428] sm:$0xff] %vm525, %v2633
      %2715 = vst.msk [vmem:[#allocation2 + $0x450] sm:$0xff] %vm525, %v2635
      %2716 = vst.msk [vmem:[#allocation2 + $0x478] sm:$0xff] %vm525, %v2637
      %2717 = vst.msk [vmem:[#allocation2 + $0x4a0] sm:$0xff] %vm525, %v2639
      %2718 = vst.msk [vmem:[#allocation2 + $0x4c8] sm:$0xff] %vm525, %v2641
      %2719 = vst.msk [vmem:[#allocation2 + $0x4f0] sm:$0xff] %vm525, %v2643
      %2720 = vst.msk [vmem:[#allocation2 + $0x518] sm:$0xff] %vm525, %v2645
      %2721 = vst.msk [vmem:[#allocation2 + $0x540] sm:$0xff] %vm525, %v2647
      %2722 = vst.msk [vmem:[#allocation2 + $0x568] sm:$0xff] %vm525, %v2649
      %2723 = vst.msk [vmem:[#allocation2 + $0x590] sm:$0xff] %vm525, %v2651
      %v2724 = vld [vmem:[%s261 + $0x25] sm:$0xff]
      %v2725 = vld [vmem:[%s261 + $0x2d] sm:$0xff]
      %v2726 = vld [vmem:[%s261 + $0x35] sm:$0xff]
      %v2727 = vld [vmem:[%s261 + $0x3d] sm:$0xff]
      %v2728 = vld [vmem:[%s261 + $0x45] sm:$0xff]
      %v2729 = vld [vmem:[%s261 + $0x4d] sm:$0xff]
      %v2730 = vld [vmem:[%s261 + $0x55] sm:$0xff]
      %v2731 = vld [vmem:[%s261 + $0x5d] sm:$0xff]
      %v2732 = vld [vmem:[%s261 + $0x65] sm:$0xff]
      %v2733 = vld [vmem:[%s261 + $0x6d] sm:$0xff]
      %v2734 = vld [vmem:[%s261 + $0x75] sm:$0xff]
      %v2735 = vld [vmem:[%s261 + $0x7d] sm:$0xff]
      %v2736 = vld [vmem:[%s261 + $0x85] sm:$0xff]
      %v2737 = vld [vmem:[%s261 + $0x8d] sm:$0xff]
      %v2738 = vld [vmem:[%s261 + $0x95] sm:$0xff]
      %v2739 = vld [vmem:[%s261 + $0x9d] sm:$0xff]
      %v2740 = vld [vmem:[%s261 + $0xa5] sm:$0xff]
      %v2741 = vld [vmem:[%s261 + $0xad] sm:$0xff]
      %v2742 = vld [vmem:[%s261 + $0xb5] sm:$0xff]
      %v2743 = vld [vmem:[%s261 + $0xbd] sm:$0xff]
      %v2744 = vld [vmem:[%s261 + $0xc5] sm:$0xff]
      %v2745 = vld [vmem:[%s261 + $0xcd] sm:$0xff]
      %v2746 = vld [vmem:[%s261 + $0xd5] sm:$0xff]
      %v2747 = vld [vmem:[%s261 + $0xdd] sm:$0xff]
      %v2748 = vld [vmem:[%s261 + $0xe5] sm:$0xff]
      %v2749 = vld [vmem:[%s261 + $0xed] sm:$0xff]
      %v2750 = vld [vmem:[%s261 + $0xf5] sm:$0xff]
      %v2751 = vld [vmem:[%s261 + $0xfd] sm:$0xff]
      %v2752 = vld [vmem:[%s261 + $0x105] sm:$0xff]
      %v2753 = vld [vmem:[%s261 + $0x10d] sm:$0xff]
      %v2754 = vld [vmem:[%s261 + $0x115] sm:$0xff]
      %v2755 = vld [vmem:[%s261 + $0x11d] sm:$0xff]
      %v2756 = vld [vmem:[%s261 + $0x125] sm:$0xff]
      %v2757 = vld [vmem:[%s261 + $0x12d] sm:$0xff]
      %v2758 = vld [vmem:[%s261 + $0x135] sm:$0xff]
      %v2759 = vld [vmem:[%s261 + $0x13d] sm:$0xff]
      %2796 = vrot.lane.b32.xlu0 %v2724, 64
      %v2797 = vpop.permute.xlu0 %2796
      %2798 = vrot.lane.b32.xlu0 %v2725, 64
      %v2799 = vpop.permute.xlu0 %2798
      %2800 = vrot.lane.b32.xlu0 %v2726, 64
      %v2801 = vpop.permute.xlu0 %2800
      %2802 = vrot.lane.b32.xlu0 %v2727, 64
      %v2803 = vpop.permute.xlu0 %2802
      %2804 = vrot.lane.b32.xlu0 %v2728, 64
      %v2805 = vpop.permute.xlu0 %2804
      %2806 = vrot.lane.b32.xlu0 %v2729, 64
      %v2807 = vpop.permute.xlu0 %2806
      %2808 = vrot.lane.b32.xlu0 %v2730, 64
      %v2809 = vpop.permute.xlu0 %2808
      %2810 = vrot.lane.b32.xlu0 %v2731, 64
      %v2811 = vpop.permute.xlu0 %2810
      %2812 = vrot.lane.b32.xlu0 %v2732, 64
      %v2813 = vpop.permute.xlu0 %2812
      %2814 = vrot.lane.b32.xlu0 %v2733, 64
      %v2815 = vpop.permute.xlu0 %2814
      %2816 = vrot.lane.b32.xlu0 %v2734, 64
      %v2817 = vpop.permute.xlu0 %2816
      %2818 = vrot.lane.b32.xlu0 %v2735, 64
      %v2819 = vpop.permute.xlu0 %2818
      %2820 = vrot.lane.b32.xlu0 %v2736, 64
      %v2821 = vpop.permute.xlu0 %2820
      %2822 = vrot.lane.b32.xlu0 %v2737, 64
      %v2823 = vpop.permute.xlu0 %2822
      %2824 = vrot.lane.b32.xlu0 %v2738, 64
      %v2825 = vpop.permute.xlu0 %2824
      %2826 = vrot.lane.b32.xlu0 %v2739, 64
      %v2827 = vpop.permute.xlu0 %2826
      %2828 = vrot.lane.b32.xlu0 %v2740, 64
      %v2829 = vpop.permute.xlu0 %2828
      %2830 = vrot.lane.b32.xlu0 %v2741, 64
      %v2831 = vpop.permute.xlu0 %2830
      %2832 = vrot.lane.b32.xlu0 %v2742, 64
      %v2833 = vpop.permute.xlu0 %2832
      %2834 = vrot.lane.b32.xlu0 %v2743, 64
      %v2835 = vpop.permute.xlu0 %2834
      %2836 = vrot.lane.b32.xlu0 %v2744, 64
      %v2837 = vpop.permute.xlu0 %2836
      %2838 = vrot.lane.b32.xlu0 %v2745, 64
      %v2839 = vpop.permute.xlu0 %2838
      %2840 = vrot.lane.b32.xlu0 %v2746, 64
      %v2841 = vpop.permute.xlu0 %2840
      %2842 = vrot.lane.b32.xlu0 %v2747, 64
      %v2843 = vpop.permute.xlu0 %2842
      %2844 = vrot.lane.b32.xlu0 %v2748, 64
      %v2845 = vpop.permute.xlu0 %2844
      %2846 = vrot.lane.b32.xlu0 %v2749, 64
      %v2847 = vpop.permute.xlu0 %2846
      %2848 = vrot.lane.b32.xlu0 %v2750, 64
      %v2849 = vpop.permute.xlu0 %2848
      %2850 = vrot.lane.b32.xlu0 %v2751, 64
      %v2851 = vpop.permute.xlu0 %2850
      %2852 = vrot.lane.b32.xlu0 %v2752, 64
      %v2853 = vpop.permute.xlu0 %2852
      %2854 = vrot.lane.b32.xlu0 %v2753, 64
      %v2855 = vpop.permute.xlu0 %2854
      %2856 = vrot.lane.b32.xlu0 %v2754, 64
      %v2857 = vpop.permute.xlu0 %2856
      %2858 = vrot.lane.b32.xlu0 %v2755, 64
      %v2859 = vpop.permute.xlu0 %2858
      %2860 = vrot.lane.b32.xlu0 %v2756, 64
      %v2861 = vpop.permute.xlu0 %2860
      %2862 = vrot.lane.b32.xlu0 %v2757, 64
      %v2863 = vpop.permute.xlu0 %2862
      %2864 = vrot.lane.b32.xlu0 %v2758, 64
      %v2865 = vpop.permute.xlu0 %2864
      %2866 = vrot.lane.b32.xlu0 %v2759, 64
      %v2867 = vpop.permute.xlu0 %2866
      %2904 = vst.msk [vmem:[#allocation2 + $0x18] sm:$0xff] %vm742, %v2797
      %2905 = vst.msk [vmem:[#allocation2 + $0x40] sm:$0xff] %vm742, %v2799
      %2906 = vst.msk [vmem:[#allocation2 + $0x68] sm:$0xff] %vm742, %v2801
      %2907 = vst.msk [vmem:[#allocation2 + $0x90] sm:$0xff] %vm742, %v2803
      %2908 = vst.msk [vmem:[#allocation2 + $0xb8] sm:$0xff] %vm742, %v2805
      %2909 = vst.msk [vmem:[#allocation2 + $0xe0] sm:$0xff] %vm742, %v2807
      %2910 = vst.msk [vmem:[#allocation2 + $0x108] sm:$0xff] %vm742, %v2809
      %2911 = vst.msk [vmem:[#allocation2 + $0x130] sm:$0xff] %vm742, %v2811
      %2912 = vst.msk [vmem:[#allocation2 + $0x158] sm:$0xff] %vm742, %v2813
      %2913 = vst.msk [vmem:[#allocation2 + $0x180] sm:$0xff] %vm742, %v2815
      %2914 = vst.msk [vmem:[#allocation2 + $0x1a8] sm:$0xff] %vm742, %v2817
      %2915 = vst.msk [vmem:[#allocation2 + $0x1d0] sm:$0xff] %vm742, %v2819
      %2916 = vst.msk [vmem:[#allocation2 + $0x1f8] sm:$0xff] %vm742, %v2821
      %2917 = vst.msk [vmem:[#allocation2 + $0x220] sm:$0xff] %vm742, %v2823
      %2918 = vst.msk [vmem:[#allocation2 + $0x248] sm:$0xff] %vm742, %v2825
      %2919 = vst.msk [vmem:[#allocation2 + $0x270] sm:$0xff] %vm742, %v2827
      %2920 = vst.msk [vmem:[#allocation2 + $0x298] sm:$0xff] %vm742, %v2829
      %2921 = vst.msk [vmem:[#allocation2 + $0x2c0] sm:$0xff] %vm742, %v2831
      %2922 = vst.msk [vmem:[#allocation2 + $0x2e8] sm:$0xff] %vm742, %v2833
      %2923 = vst.msk [vmem:[#allocation2 + $0x310] sm:$0xff] %vm742, %v2835
      %2924 = vst.msk [vmem:[#allocation2 + $0x338] sm:$0xff] %vm742, %v2837
      %2925 = vst.msk [vmem:[#allocation2 + $0x360] sm:$0xff] %vm742, %v2839
      %2926 = vst.msk [vmem:[#allocation2 + $0x388] sm:$0xff] %vm742, %v2841
      %2927 = vst.msk [vmem:[#allocation2 + $0x3b0] sm:$0xff] %vm742, %v2843
      %2928 = vst.msk [vmem:[#allocation2 + $0x3d8] sm:$0xff] %vm742, %v2845
      %2929 = vst.msk [vmem:[#allocation2 + $0x400] sm:$0xff] %vm742, %v2847
      %2930 = vst.msk [vmem:[#allocation2 + $0x428] sm:$0xff] %vm742, %v2849
      %2931 = vst.msk [vmem:[#allocation2 + $0x450] sm:$0xff] %vm742, %v2851
      %2932 = vst.msk [vmem:[#allocation2 + $0x478] sm:$0xff] %vm742, %v2853
      %2933 = vst.msk [vmem:[#allocation2 + $0x4a0] sm:$0xff] %vm742, %v2855
      %2934 = vst.msk [vmem:[#allocation2 + $0x4c8] sm:$0xff] %vm742, %v2857
      %2935 = vst.msk [vmem:[#allocation2 + $0x4f0] sm:$0xff] %vm742, %v2859
      %2936 = vst.msk [vmem:[#allocation2 + $0x518] sm:$0xff] %vm742, %v2861
      %2937 = vst.msk [vmem:[#allocation2 + $0x540] sm:$0xff] %vm742, %v2863
      %2938 = vst.msk [vmem:[#allocation2 + $0x568] sm:$0xff] %vm742, %v2865
      %2939 = vst.msk [vmem:[#allocation2 + $0x590] sm:$0xff] %vm742, %v2867
      %v2940 = vld [vmem:[%s266 + $0x25] sm:$0xff]
      %v2941 = vld [vmem:[%s266 + $0x2d] sm:$0xff]
      %v2942 = vld [vmem:[%s266 + $0x35] sm:$0xff]
      %v2943 = vld [vmem:[%s266 + $0x3d] sm:$0xff]
      %v2944 = vld [vmem:[%s266 + $0x45] sm:$0xff]
      %v2945 = vld [vmem:[%s266 + $0x4d] sm:$0xff]
      %v2946 = vld [vmem:[%s266 + $0x55] sm:$0xff]
      %v2947 = vld [vmem:[%s266 + $0x5d] sm:$0xff]
      %v2948 = vld [vmem:[%s266 + $0x65] sm:$0xff]
      %v2949 = vld [vmem:[%s266 + $0x6d] sm:$0xff]
      %v2950 = vld [vmem:[%s266 + $0x75] sm:$0xff]
      %v2951 = vld [vmem:[%s266 + $0x7d] sm:$0xff]
      %v2952 = vld [vmem:[%s266 + $0x85] sm:$0xff]
      %v2953 = vld [vmem:[%s266 + $0x8d] sm:$0xff]
      %v2954 = vld [vmem:[%s266 + $0x95] sm:$0xff]
      %v2955 = vld [vmem:[%s266 + $0x9d] sm:$0xff]
      %v2956 = vld [vmem:[%s266 + $0xa5] sm:$0xff]
      %v2957 = vld [vmem:[%s266 + $0xad] sm:$0xff]
      %v2958 = vld [vmem:[%s266 + $0xb5] sm:$0xff]
      %v2959 = vld [vmem:[%s266 + $0xbd] sm:$0xff]
      %v2960 = vld [vmem:[%s266 + $0xc5] sm:$0xff]
      %v2961 = vld [vmem:[%s266 + $0xcd] sm:$0xff]
      %v2962 = vld [vmem:[%s266 + $0xd5] sm:$0xff]
      %v2963 = vld [vmem:[%s266 + $0xdd] sm:$0xff]
      %v2964 = vld [vmem:[%s266 + $0xe5] sm:$0xff]
      %v2965 = vld [vmem:[%s266 + $0xed] sm:$0xff]
      %v2966 = vld [vmem:[%s266 + $0xf5] sm:$0xff]
      %v2967 = vld [vmem:[%s266 + $0xfd] sm:$0xff]
      %v2968 = vld [vmem:[%s266 + $0x105] sm:$0xff]
      %v2969 = vld [vmem:[%s266 + $0x10d] sm:$0xff]
      %v2970 = vld [vmem:[%s266 + $0x115] sm:$0xff]
      %v2971 = vld [vmem:[%s266 + $0x11d] sm:$0xff]
      %v2972 = vld [vmem:[%s266 + $0x125] sm:$0xff]
      %v2973 = vld [vmem:[%s266 + $0x12d] sm:$0xff]
      %v2974 = vld [vmem:[%s266 + $0x135] sm:$0xff]
      %v2975 = vld [vmem:[%s266 + $0x13d] sm:$0xff]
      %3012 = vrot.lane.b32.xlu0 %v2940, 96
      %v3013 = vpop.permute.xlu0 %3012
      %3014 = vrot.lane.b32.xlu0 %v2941, 96
      %v3015 = vpop.permute.xlu0 %3014
      %3016 = vrot.lane.b32.xlu0 %v2942, 96
      %v3017 = vpop.permute.xlu0 %3016
      %3018 = vrot.lane.b32.xlu0 %v2943, 96
      %v3019 = vpop.permute.xlu0 %3018
      %3020 = vrot.lane.b32.xlu0 %v2944, 96
      %v3021 = vpop.permute.xlu0 %3020
      %3022 = vrot.lane.b32.xlu0 %v2945, 96
      %v3023 = vpop.permute.xlu0 %3022
      %3024 = vrot.lane.b32.xlu0 %v2946, 96
      %v3025 = vpop.permute.xlu0 %3024
      %3026 = vrot.lane.b32.xlu0 %v2947, 96
      %v3027 = vpop.permute.xlu0 %3026
      %3028 = vrot.lane.b32.xlu0 %v2948, 96
      %v3029 = vpop.permute.xlu0 %3028
      %3030 = vrot.lane.b32.xlu0 %v2949, 96
      %v3031 = vpop.permute.xlu0 %3030
      %3032 = vrot.lane.b32.xlu0 %v2950, 96
      %v3033 = vpop.permute.xlu0 %3032
      %3034 = vrot.lane.b32.xlu0 %v2951, 96
      %v3035 = vpop.permute.xlu0 %3034
      %3036 = vrot.lane.b32.xlu0 %v2952, 96
      %v3037 = vpop.permute.xlu0 %3036
      %3038 = vrot.lane.b32.xlu0 %v2953, 96
      %v3039 = vpop.permute.xlu0 %3038
      %3040 = vrot.lane.b32.xlu0 %v2954, 96
      %v3041 = vpop.permute.xlu0 %3040
      %3042 = vrot.lane.b32.xlu0 %v2955, 96
      %v3043 = vpop.permute.xlu0 %3042
      %3044 = vrot.lane.b32.xlu0 %v2956, 96
      %v3045 = vpop.permute.xlu0 %3044
      %3046 = vrot.lane.b32.xlu0 %v2957, 96
      %v3047 = vpop.permute.xlu0 %3046
      %3048 = vrot.lane.b32.xlu0 %v2958, 96
      %v3049 = vpop.permute.xlu0 %3048
      %3050 = vrot.lane.b32.xlu0 %v2959, 96
      %v3051 = vpop.permute.xlu0 %3050
      %3052 = vrot.lane.b32.xlu0 %v2960, 96
      %v3053 = vpop.permute.xlu0 %3052
      %3054 = vrot.lane.b32.xlu0 %v2961, 96
      %v3055 = vpop.permute.xlu0 %3054
      %3056 = vrot.lane.b32.xlu0 %v2962, 96
      %v3057 = vpop.permute.xlu0 %3056
      %3058 = vrot.lane.b32.xlu0 %v2963, 96
      %v3059 = vpop.permute.xlu0 %3058
      %3060 = vrot.lane.b32.xlu0 %v2964, 96
      %v3061 = vpop.permute.xlu0 %3060
      %3062 = vrot.lane.b32.xlu0 %v2965, 96
      %v3063 = vpop.permute.xlu0 %3062
      %3064 = vrot.lane.b32.xlu0 %v2966, 96
      %v3065 = vpop.permute.xlu0 %3064
      %3066 = vrot.lane.b32.xlu0 %v2967, 96
      %v3067 = vpop.permute.xlu0 %3066
      %3068 = vrot.lane.b32.xlu0 %v2968, 96
      %v3069 = vpop.permute.xlu0 %3068
      %3070 = vrot.lane.b32.xlu0 %v2969, 96
      %v3071 = vpop.permute.xlu0 %3070
      %3072 = vrot.lane.b32.xlu0 %v2970, 96
      %v3073 = vpop.permute.xlu0 %3072
      %3074 = vrot.lane.b32.xlu0 %v2971, 96
      %v3075 = vpop.permute.xlu0 %3074
      %3076 = vrot.lane.b32.xlu0 %v2972, 96
      %v3077 = vpop.permute.xlu0 %3076
      %3078 = vrot.lane.b32.xlu0 %v2973, 96
      %v3079 = vpop.permute.xlu0 %3078
      %3080 = vrot.lane.b32.xlu0 %v2974, 96
      %v3081 = vpop.permute.xlu0 %3080
      %3082 = vrot.lane.b32.xlu0 %v2975, 96
      %v3083 = vpop.permute.xlu0 %3082
      %3120 = vst.msk [vmem:[#allocation2 + $0x18] sm:$0xff] %vm959, %v3013
      %3121 = vst.msk [vmem:[#allocation2 + $0x40] sm:$0xff] %vm959, %v3015
      %3122 = vst.msk [vmem:[#allocation2 + $0x68] sm:$0xff] %vm959, %v3017
      %3123 = vst.msk [vmem:[#allocation2 + $0x90] sm:$0xff] %vm959, %v3019
      %3124 = vst.msk [vmem:[#allocation2 + $0xb8] sm:$0xff] %vm959, %v3021
      %3125 = vst.msk [vmem:[#allocation2 + $0xe0] sm:$0xff] %vm959, %v3023
      %3126 = vst.msk [vmem:[#allocation2 + $0x108] sm:$0xff] %vm959, %v3025
      %3127 = vst.msk [vmem:[#allocation2 + $0x130] sm:$0xff] %vm959, %v3027
      %3128 = vst.msk [vmem:[#allocation2 + $0x158] sm:$0xff] %vm959, %v3029
      %3129 = vst.msk [vmem:[#allocation2 + $0x180] sm:$0xff] %vm959, %v3031
      %3130 = vst.msk [vmem:[#allocation2 + $0x1a8] sm:$0xff] %vm959, %v3033
      %3131 = vst.msk [vmem:[#allocation2 + $0x1d0] sm:$0xff] %vm959, %v3035
      %3132 = vst.msk [vmem:[#allocation2 + $0x1f8] sm:$0xff] %vm959, %v3037
      %3133 = vst.msk [vmem:[#allocation2 + $0x220] sm:$0xff] %vm959, %v3039
      %3134 = vst.msk [vmem:[#allocation2 + $0x248] sm:$0xff] %vm959, %v3041
      %3135 = vst.msk [vmem:[#allocation2 + $0x270] sm:$0xff] %vm959, %v3043
      %3136 = vst.msk [vmem:[#allocation2 + $0x298] sm:$0xff] %vm959, %v3045
      %3137 = vst.msk [vmem:[#allocation2 + $0x2c0] sm:$0xff] %vm959, %v3047
      %3138 = vst.msk [vmem:[#allocation2 + $0x2e8] sm:$0xff] %vm959, %v3049
      %3139 = vst.msk [vmem:[#allocation2 + $0x310] sm:$0xff] %vm959, %v3051
      %3140 = vst.msk [vmem:[#allocation2 + $0x338] sm:$0xff] %vm959, %v3053
      %3141 = vst.msk [vmem:[#allocation2 + $0x360] sm:$0xff] %vm959, %v3055
      %3142 = vst.msk [vmem:[#allocation2 + $0x388] sm:$0xff] %vm959, %v3057
      %3143 = vst.msk [vmem:[#allocation2 + $0x3b0] sm:$0xff] %vm959, %v3059
      %3144 = vst.msk [vmem:[#allocation2 + $0x3d8] sm:$0xff] %vm959, %v3061
      %3145 = vst.msk [vmem:[#allocation2 + $0x400] sm:$0xff] %vm959, %v3063
      %3146 = vst.msk [vmem:[#allocation2 + $0x428] sm:$0xff] %vm959, %v3065
      %3147 = vst.msk [vmem:[#allocation2 + $0x450] sm:$0xff] %vm959, %v3067
      %3148 = vst.msk [vmem:[#allocation2 + $0x478] sm:$0xff] %vm959, %v3069
      %3149 = vst.msk [vmem:[#allocation2 + $0x4a0] sm:$0xff] %vm959, %v3071
      %3150 = vst.msk [vmem:[#allocation2 + $0x4c8] sm:$0xff] %vm959, %v3073
      %3151 = vst.msk [vmem:[#allocation2 + $0x4f0] sm:$0xff] %vm959, %v3075
      %3152 = vst.msk [vmem:[#allocation2 + $0x518] sm:$0xff] %vm959, %v3077
      %3153 = vst.msk [vmem:[#allocation2 + $0x540] sm:$0xff] %vm959, %v3079
      %3154 = vst.msk [vmem:[#allocation2 + $0x568] sm:$0xff] %vm959, %v3081
      %3155 = vst.msk [vmem:[#allocation2 + $0x590] sm:$0xff] %vm959, %v3083
      %v3156 = vld [vmem:[%s261 + $0x26] sm:$0xff]
      %v3157 = vld [vmem:[%s261 + $0x2e] sm:$0xff]
      %v3158 = vld [vmem:[%s261 + $0x36] sm:$0xff]
      %v3159 = vld [vmem:[%s261 + $0x3e] sm:$0xff]
      %v3160 = vld [vmem:[%s261 + $0x46] sm:$0xff]
      %v3161 = vld [vmem:[%s261 + $0x4e] sm:$0xff]
      %v3162 = vld [vmem:[%s261 + $0x56] sm:$0xff]
      %v3163 = vld [vmem:[%s261 + $0x5e] sm:$0xff]
      %v3164 = vld [vmem:[%s261 + $0x66] sm:$0xff]
      %v3165 = vld [vmem:[%s261 + $0x6e] sm:$0xff]
      %v3166 = vld [vmem:[%s261 + $0x76] sm:$0xff]
      %v3167 = vld [vmem:[%s261 + $0x7e] sm:$0xff]
      %v3168 = vld [vmem:[%s261 + $0x86] sm:$0xff]
      %v3169 = vld [vmem:[%s261 + $0x8e] sm:$0xff]
      %v3170 = vld [vmem:[%s261 + $0x96] sm:$0xff]
      %v3171 = vld [vmem:[%s261 + $0x9e] sm:$0xff]
      %v3172 = vld [vmem:[%s261 + $0xa6] sm:$0xff]
      %v3173 = vld [vmem:[%s261 + $0xae] sm:$0xff]
      %v3174 = vld [vmem:[%s261 + $0xb6] sm:$0xff]
      %v3175 = vld [vmem:[%s261 + $0xbe] sm:$0xff]
      %v3176 = vld [vmem:[%s261 + $0xc6] sm:$0xff]
      %v3177 = vld [vmem:[%s261 + $0xce] sm:$0xff]
      %v3178 = vld [vmem:[%s261 + $0xd6] sm:$0xff]
      %v3179 = vld [vmem:[%s261 + $0xde] sm:$0xff]
      %v3180 = vld [vmem:[%s261 + $0xe6] sm:$0xff]
      %v3181 = vld [vmem:[%s261 + $0xee] sm:$0xff]
      %v3182 = vld [vmem:[%s261 + $0xf6] sm:$0xff]
      %v3183 = vld [vmem:[%s261 + $0xfe] sm:$0xff]
      %v3184 = vld [vmem:[%s261 + $0x106] sm:$0xff]
      %v3185 = vld [vmem:[%s261 + $0x10e] sm:$0xff]
      %v3186 = vld [vmem:[%s261 + $0x116] sm:$0xff]
      %v3187 = vld [vmem:[%s261 + $0x11e] sm:$0xff]
      %v3188 = vld [vmem:[%s261 + $0x126] sm:$0xff]
      %v3189 = vld [vmem:[%s261 + $0x12e] sm:$0xff]
      %v3190 = vld [vmem:[%s261 + $0x136] sm:$0xff]
      %v3191 = vld [vmem:[%s261 + $0x13e] sm:$0xff]
      %3192 = vst.msk [vmem:[#allocation2 + $0x20] sm:$0xff] %vm308, %v3156
      %3193 = vst.msk [vmem:[#allocation2 + $0x48] sm:$0xff] %vm308, %v3157
      %3194 = vst.msk [vmem:[#allocation2 + $0x70] sm:$0xff] %vm308, %v3158
      %3195 = vst.msk [vmem:[#allocation2 + $0x98] sm:$0xff] %vm308, %v3159
      %3196 = vst.msk [vmem:[#allocation2 + $0xc0] sm:$0xff] %vm308, %v3160
      %3197 = vst.msk [vmem:[#allocation2 + $0xe8] sm:$0xff] %vm308, %v3161
      %3198 = vst.msk [vmem:[#allocation2 + $0x110] sm:$0xff] %vm308, %v3162
      %3199 = vst.msk [vmem:[#allocation2 + $0x138] sm:$0xff] %vm308, %v3163
      %3200 = vst.msk [vmem:[#allocation2 + $0x160] sm:$0xff] %vm308, %v3164
      %3201 = vst.msk [vmem:[#allocation2 + $0x188] sm:$0xff] %vm308, %v3165
      %3202 = vst.msk [vmem:[#allocation2 + $0x1b0] sm:$0xff] %vm308, %v3166
      %3203 = vst.msk [vmem:[#allocation2 + $0x1d8] sm:$0xff] %vm308, %v3167
      %3204 = vst.msk [vmem:[#allocation2 + $0x200] sm:$0xff] %vm308, %v3168
      %3205 = vst.msk [vmem:[#allocation2 + $0x228] sm:$0xff] %vm308, %v3169
      %3206 = vst.msk [vmem:[#allocation2 + $0x250] sm:$0xff] %vm308, %v3170
      %3207 = vst.msk [vmem:[#allocation2 + $0x278] sm:$0xff] %vm308, %v3171
      %3208 = vst.msk [vmem:[#allocation2 + $0x2a0] sm:$0xff] %vm308, %v3172
      %3209 = vst.msk [vmem:[#allocation2 + $0x2c8] sm:$0xff] %vm308, %v3173
      %3210 = vst.msk [vmem:[#allocation2 + $0x2f0] sm:$0xff] %vm308, %v3174
      %3211 = vst.msk [vmem:[#allocation2 + $0x318] sm:$0xff] %vm308, %v3175
      %3212 = vst.msk [vmem:[#allocation2 + $0x340] sm:$0xff] %vm308, %v3176
      %3213 = vst.msk [vmem:[#allocation2 + $0x368] sm:$0xff] %vm308, %v3177
      %3214 = vst.msk [vmem:[#allocation2 + $0x390] sm:$0xff] %vm308, %v3178
      %3215 = vst.msk [vmem:[#allocation2 + $0x3b8] sm:$0xff] %vm308, %v3179
      %3216 = vst.msk [vmem:[#allocation2 + $0x3e0] sm:$0xff] %vm308, %v3180
      %3217 = vst.msk [vmem:[#allocation2 + $0x408] sm:$0xff] %vm308, %v3181
      %3218 = vst.msk [vmem:[#allocation2 + $0x430] sm:$0xff] %vm308, %v3182
      %3219 = vst.msk [vmem:[#allocation2 + $0x458] sm:$0xff] %vm308, %v3183
      %3220 = vst.msk [vmem:[#allocation2 + $0x480] sm:$0xff] %vm308, %v3184
      %3221 = vst.msk [vmem:[#allocation2 + $0x4a8] sm:$0xff] %vm308, %v3185
      %3222 = vst.msk [vmem:[#allocation2 + $0x4d0] sm:$0xff] %vm308, %v3186
      %3223 = vst.msk [vmem:[#allocation2 + $0x4f8] sm:$0xff] %vm308, %v3187
      %3224 = vst.msk [vmem:[#allocation2 + $0x520] sm:$0xff] %vm308, %v3188
      %3225 = vst.msk [vmem:[#allocation2 + $0x548] sm:$0xff] %vm308, %v3189
      %3226 = vst.msk [vmem:[#allocation2 + $0x570] sm:$0xff] %vm308, %v3190
      %3227 = vst.msk [vmem:[#allocation2 + $0x598] sm:$0xff] %vm308, %v3191
      %v3228 = vld [vmem:[%s266 + $0x26] sm:$0xff]
      %v3229 = vld [vmem:[%s266 + $0x2e] sm:$0xff]
      %v3230 = vld [vmem:[%s266 + $0x36] sm:$0xff]
      %v3231 = vld [vmem:[%s266 + $0x3e] sm:$0xff]
      %v3232 = vld [vmem:[%s266 + $0x46] sm:$0xff]
      %v3233 = vld [vmem:[%s266 + $0x4e] sm:$0xff]
      %v3234 = vld [vmem:[%s266 + $0x56] sm:$0xff]
      %v3235 = vld [vmem:[%s266 + $0x5e] sm:$0xff]
      %v3236 = vld [vmem:[%s266 + $0x66] sm:$0xff]
      %v3237 = vld [vmem:[%s266 + $0x6e] sm:$0xff]
      %v3238 = vld [vmem:[%s266 + $0x76] sm:$0xff]
      %v3239 = vld [vmem:[%s266 + $0x7e] sm:$0xff]
      %v3240 = vld [vmem:[%s266 + $0x86] sm:$0xff]
      %v3241 = vld [vmem:[%s266 + $0x8e] sm:$0xff]
      %v3242 = vld [vmem:[%s266 + $0x96] sm:$0xff]
      %v3243 = vld [vmem:[%s266 + $0x9e] sm:$0xff]
      %v3244 = vld [vmem:[%s266 + $0xa6] sm:$0xff]
      %v3245 = vld [vmem:[%s266 + $0xae] sm:$0xff]
      %v3246 = vld [vmem:[%s266 + $0xb6] sm:$0xff]
      %v3247 = vld [vmem:[%s266 + $0xbe] sm:$0xff]
      %v3248 = vld [vmem:[%s266 + $0xc6] sm:$0xff]
      %v3249 = vld [vmem:[%s266 + $0xce] sm:$0xff]
      %v3250 = vld [vmem:[%s266 + $0xd6] sm:$0xff]
      %v3251 = vld [vmem:[%s266 + $0xde] sm:$0xff]
      %v3252 = vld [vmem:[%s266 + $0xe6] sm:$0xff]
      %v3253 = vld [vmem:[%s266 + $0xee] sm:$0xff]
      %v3254 = vld [vmem:[%s266 + $0xf6] sm:$0xff]
      %v3255 = vld [vmem:[%s266 + $0xfe] sm:$0xff]
      %v3256 = vld [vmem:[%s266 + $0x106] sm:$0xff]
      %v3257 = vld [vmem:[%s266 + $0x10e] sm:$0xff]
      %v3258 = vld [vmem:[%s266 + $0x116] sm:$0xff]
      %v3259 = vld [vmem:[%s266 + $0x11e] sm:$0xff]
      %v3260 = vld [vmem:[%s266 + $0x126] sm:$0xff]
      %v3261 = vld [vmem:[%s266 + $0x12e] sm:$0xff]
      %v3262 = vld [vmem:[%s266 + $0x136] sm:$0xff]
      %v3263 = vld [vmem:[%s266 + $0x13e] sm:$0xff]
      %3300 = vrot.lane.b32.xlu0 %v3228, 32
      %v3301 = vpop.permute.xlu0 %3300
      %3302 = vrot.lane.b32.xlu0 %v3229, 32
      %v3303 = vpop.permute.xlu0 %3302
      %3304 = vrot.lane.b32.xlu0 %v3230, 32
      %v3305 = vpop.permute.xlu0 %3304
      %3306 = vrot.lane.b32.xlu0 %v3231, 32
      %v3307 = vpop.permute.xlu0 %3306
      %3308 = vrot.lane.b32.xlu0 %v3232, 32
      %v3309 = vpop.permute.xlu0 %3308
      %3310 = vrot.lane.b32.xlu0 %v3233, 32
      %v3311 = vpop.permute.xlu0 %3310
      %3312 = vrot.lane.b32.xlu0 %v3234, 32
      %v3313 = vpop.permute.xlu0 %3312
      %3314 = vrot.lane.b32.xlu0 %v3235, 32
      %v3315 = vpop.permute.xlu0 %3314
      %3316 = vrot.lane.b32.xlu0 %v3236, 32
      %v3317 = vpop.permute.xlu0 %3316
      %3318 = vrot.lane.b32.xlu0 %v3237, 32
      %v3319 = vpop.permute.xlu0 %3318
      %3320 = vrot.lane.b32.xlu0 %v3238, 32
      %v3321 = vpop.permute.xlu0 %3320
      %3322 = vrot.lane.b32.xlu0 %v3239, 32
      %v3323 = vpop.permute.xlu0 %3322
      %3324 = vrot.lane.b32.xlu0 %v3240, 32
      %v3325 = vpop.permute.xlu0 %3324
      %3326 = vrot.lane.b32.xlu0 %v3241, 32
      %v3327 = vpop.permute.xlu0 %3326
      %3328 = vrot.lane.b32.xlu0 %v3242, 32
      %v3329 = vpop.permute.xlu0 %3328
      %3330 = vrot.lane.b32.xlu0 %v3243, 32
      %v3331 = vpop.permute.xlu0 %3330
      %3332 = vrot.lane.b32.xlu0 %v3244, 32
      %v3333 = vpop.permute.xlu0 %3332
      %3334 = vrot.lane.b32.xlu0 %v3245, 32
      %v3335 = vpop.permute.xlu0 %3334
      %3336 = vrot.lane.b32.xlu0 %v3246, 32
      %v3337 = vpop.permute.xlu0 %3336
      %3338 = vrot.lane.b32.xlu0 %v3247, 32
      %v3339 = vpop.permute.xlu0 %3338
      %3340 = vrot.lane.b32.xlu0 %v3248, 32
      %v3341 = vpop.permute.xlu0 %3340
      %3342 = vrot.lane.b32.xlu0 %v3249, 32
      %v3343 = vpop.permute.xlu0 %3342
      %3344 = vrot.lane.b32.xlu0 %v3250, 32
      %v3345 = vpop.permute.xlu0 %3344
      %3346 = vrot.lane.b32.xlu0 %v3251, 32
      %v3347 = vpop.permute.xlu0 %3346
      %3348 = vrot.lane.b32.xlu0 %v3252, 32
      %v3349 = vpop.permute.xlu0 %3348
      %3350 = vrot.lane.b32.xlu0 %v3253, 32
      %v3351 = vpop.permute.xlu0 %3350
      %3352 = vrot.lane.b32.xlu0 %v3254, 32
      %v3353 = vpop.permute.xlu0 %3352
      %3354 = vrot.lane.b32.xlu0 %v3255, 32
      %v3355 = vpop.permute.xlu0 %3354
      %3356 = vrot.lane.b32.xlu0 %v3256, 32
      %v3357 = vpop.permute.xlu0 %3356
      %3358 = vrot.lane.b32.xlu0 %v3257, 32
      %v3359 = vpop.permute.xlu0 %3358
      %3360 = vrot.lane.b32.xlu0 %v3258, 32
      %v3361 = vpop.permute.xlu0 %3360
      %3362 = vrot.lane.b32.xlu0 %v3259, 32
      %v3363 = vpop.permute.xlu0 %3362
      %3364 = vrot.lane.b32.xlu0 %v3260, 32
      %v3365 = vpop.permute.xlu0 %3364
      %3366 = vrot.lane.b32.xlu0 %v3261, 32
      %v3367 = vpop.permute.xlu0 %3366
      %3368 = vrot.lane.b32.xlu0 %v3262, 32
      %v3369 = vpop.permute.xlu0 %3368
      %3370 = vrot.lane.b32.xlu0 %v3263, 32
      %v3371 = vpop.permute.xlu0 %3370
      %3408 = vst.msk [vmem:[#allocation2 + $0x20] sm:$0xff] %vm525, %v3301
      %3409 = vst.msk [vmem:[#allocation2 + $0x48] sm:$0xff] %vm525, %v3303
      %3410 = vst.msk [vmem:[#allocation2 + $0x70] sm:$0xff] %vm525, %v3305
      %3411 = vst.msk [vmem:[#allocation2 + $0x98] sm:$0xff] %vm525, %v3307
      %3412 = vst.msk [vmem:[#allocation2 + $0xc0] sm:$0xff] %vm525, %v3309
      %3413 = vst.msk [vmem:[#allocation2 + $0xe8] sm:$0xff] %vm525, %v3311
      %3414 = vst.msk [vmem:[#allocation2 + $0x110] sm:$0xff] %vm525, %v3313
      %3415 = vst.msk [vmem:[#allocation2 + $0x138] sm:$0xff] %vm525, %v3315
      %3416 = vst.msk [vmem:[#allocation2 + $0x160] sm:$0xff] %vm525, %v3317
      %3417 = vst.msk [vmem:[#allocation2 + $0x188] sm:$0xff] %vm525, %v3319
      %3418 = vst.msk [vmem:[#allocation2 + $0x1b0] sm:$0xff] %vm525, %v3321
      %3419 = vst.msk [vmem:[#allocation2 + $0x1d8] sm:$0xff] %vm525, %v3323
      %3420 = vst.msk [vmem:[#allocation2 + $0x200] sm:$0xff] %vm525, %v3325
      %3421 = vst.msk [vmem:[#allocation2 + $0x228] sm:$0xff] %vm525, %v3327
      %3422 = vst.msk [vmem:[#allocation2 + $0x250] sm:$0xff] %vm525, %v3329
      %3423 = vst.msk [vmem:[#allocation2 + $0x278] sm:$0xff] %vm525, %v3331
      %3424 = vst.msk [vmem:[#allocation2 + $0x2a0] sm:$0xff] %vm525, %v3333
      %3425 = vst.msk [vmem:[#allocation2 + $0x2c8] sm:$0xff] %vm525, %v3335
      %3426 = vst.msk [vmem:[#allocation2 + $0x2f0] sm:$0xff] %vm525, %v3337
      %3427 = vst.msk [vmem:[#allocation2 + $0x318] sm:$0xff] %vm525, %v3339
      %3428 = vst.msk [vmem:[#allocation2 + $0x340] sm:$0xff] %vm525, %v3341
      %3429 = vst.msk [vmem:[#allocation2 + $0x368] sm:$0xff] %vm525, %v3343
      %3430 = vst.msk [vmem:[#allocation2 + $0x390] sm:$0xff] %vm525, %v3345
      %3431 = vst.msk [vmem:[#allocation2 + $0x3b8] sm:$0xff] %vm525, %v3347
      %3432 = vst.msk [vmem:[#allocation2 + $0x3e0] sm:$0xff] %vm525, %v3349
      %3433 = vst.msk [vmem:[#allocation2 + $0x408] sm:$0xff] %vm525, %v3351
      %3434 = vst.msk [vmem:[#allocation2 + $0x430] sm:$0xff] %vm525, %v3353
      %3435 = vst.msk [vmem:[#allocation2 + $0x458] sm:$0xff] %vm525, %v3355
      %3436 = vst.msk [vmem:[#allocation2 + $0x480] sm:$0xff] %vm525, %v3357
      %3437 = vst.msk [vmem:[#allocation2 + $0x4a8] sm:$0xff] %vm525, %v3359
      %3438 = vst.msk [vmem:[#allocation2 + $0x4d0] sm:$0xff] %vm525, %v3361
      %3439 = vst.msk [vmem:[#allocation2 + $0x4f8] sm:$0xff] %vm525, %v3363
      %3440 = vst.msk [vmem:[#allocation2 + $0x520] sm:$0xff] %vm525, %v3365
      %3441 = vst.msk [vmem:[#allocation2 + $0x548] sm:$0xff] %vm525, %v3367
      %3442 = vst.msk [vmem:[#allocation2 + $0x570] sm:$0xff] %vm525, %v3369
      %3443 = vst.msk [vmem:[#allocation2 + $0x598] sm:$0xff] %vm525, %v3371
      %v3444 = vld [vmem:[#allocation2] sm:$0xff]
      %v3445 = vld [vmem:[#allocation2 + $0x8] sm:$0xff]
      %v3446 = vld [vmem:[#allocation2 + $0x10] sm:$0xff]
      %v3447 = vld [vmem:[#allocation2 + $0x18] sm:$0xff]
      %v3448 = vld [vmem:[#allocation2 + $0x20] sm:$0xff]
      %v3449 = vld [vmem:[#allocation2 + $0x28] sm:$0xff]
      %v3450 = vld [vmem:[#allocation2 + $0x30] sm:$0xff]
      %v3451 = vld [vmem:[#allocation2 + $0x38] sm:$0xff]
      %v3452 = vld [vmem:[#allocation2 + $0x40] sm:$0xff]
      %v3453 = vld [vmem:[#allocation2 + $0x48] sm:$0xff]
      %v3454 = vld [vmem:[#allocation2 + $0x50] sm:$0xff]
      %v3455 = vld [vmem:[#allocation2 + $0x58] sm:$0xff]
      %v3456 = vld [vmem:[#allocation2 + $0x60] sm:$0xff]
      %v3457 = vld [vmem:[#allocation2 + $0x68] sm:$0xff]
      %v3458 = vld [vmem:[#allocation2 + $0x70] sm:$0xff]
      %v3459 = vld [vmem:[#allocation2 + $0x78] sm:$0xff]
      %v3460 = vld [vmem:[#allocation2 + $0x80] sm:$0xff]
      %v3461 = vld [vmem:[#allocation2 + $0x88] sm:$0xff]
      %v3462 = vld [vmem:[#allocation2 + $0x90] sm:$0xff]
      %v3463 = vld [vmem:[#allocation2 + $0x98] sm:$0xff]
      %v3464 = vld [vmem:[#allocation2 + $0xa0] sm:$0xff]
      %v3465 = vld [vmem:[#allocation2 + $0xa8] sm:$0xff]
      %v3466 = vld [vmem:[#allocation2 + $0xb0] sm:$0xff]
      %v3467 = vld [vmem:[#allocation2 + $0xb8] sm:$0xff]
      %v3468 = vld [vmem:[#allocation2 + $0xc0] sm:$0xff]
      %v3469 = vld [vmem:[#allocation2 + $0xc8] sm:$0xff]
      %v3470 = vld [vmem:[#allocation2 + $0xd0] sm:$0xff]
      %v3471 = vld [vmem:[#allocation2 + $0xd8] sm:$0xff]
      %v3472 = vld [vmem:[#allocation2 + $0xe0] sm:$0xff]
      %v3473 = vld [vmem:[#allocation2 + $0xe8] sm:$0xff]
      %v3474 = vld [vmem:[#allocation2 + $0xf0] sm:$0xff]
      %v3475 = vld [vmem:[#allocation2 + $0xf8] sm:$0xff]
      %v3476 = vld [vmem:[#allocation2 + $0x100] sm:$0xff]
      %v3477 = vld [vmem:[#allocation2 + $0x108] sm:$0xff]
      %v3478 = vld [vmem:[#allocation2 + $0x110] sm:$0xff]
      %v3479 = vld [vmem:[#allocation2 + $0x118] sm:$0xff]
      %v3480 = vld [vmem:[#allocation2 + $0x120] sm:$0xff]
      %v3481 = vld [vmem:[#allocation2 + $0x128] sm:$0xff]
      %v3482 = vld [vmem:[#allocation2 + $0x130] sm:$0xff]
      %v3483 = vld [vmem:[#allocation2 + $0x138] sm:$0xff]
      %v3484 = vld [vmem:[#allocation2 + $0x140] sm:$0xff]
      %v3485 = vld [vmem:[#allocation2 + $0x148] sm:$0xff]
      %v3486 = vld [vmem:[#allocation2 + $0x150] sm:$0xff]
      %v3487 = vld [vmem:[#allocation2 + $0x158] sm:$0xff]
      %v3488 = vld [vmem:[#allocation2 + $0x160] sm:$0xff]
      %v3489 = vld [vmem:[#allocation2 + $0x168] sm:$0xff]
      %v3490 = vld [vmem:[#allocation2 + $0x170] sm:$0xff]
      %v3491 = vld [vmem:[#allocation2 + $0x178] sm:$0xff]
      %v3492 = vld [vmem:[#allocation2 + $0x180] sm:$0xff]
      %v3493 = vld [vmem:[#allocation2 + $0x188] sm:$0xff]
      %v3494 = vld [vmem:[#allocation2 + $0x190] sm:$0xff]
      %v3495 = vld [vmem:[#allocation2 + $0x198] sm:$0xff]
      %v3496 = vld [vmem:[#allocation2 + $0x1a0] sm:$0xff]
      %v3497 = vld [vmem:[#allocation2 + $0x1a8] sm:$0xff]
      %v3498 = vld [vmem:[#allocation2 + $0x1b0] sm:$0xff]
      %v3499 = vld [vmem:[#allocation2 + $0x1b8] sm:$0xff]
      %v3500 = vld [vmem:[#allocation2 + $0x1c0] sm:$0xff]
      %v3501 = vld [vmem:[#allocation2 + $0x1c8] sm:$0xff]
      %v3502 = vld [vmem:[#allocation2 + $0x1d0] sm:$0xff]
      %v3503 = vld [vmem:[#allocation2 + $0x1d8] sm:$0xff]
      %v3504 = vld [vmem:[#allocation2 + $0x1e0] sm:$0xff]
      %v3505 = vld [vmem:[#allocation2 + $0x1e8] sm:$0xff]
      %v3506 = vld [vmem:[#allocation2 + $0x1f0] sm:$0xff]
      %v3507 = vld [vmem:[#allocation2 + $0x1f8] sm:$0xff]
      %v3508 = vld [vmem:[#allocation2 + $0x200] sm:$0xff]
      %v3509 = vld [vmem:[#allocation2 + $0x208] sm:$0xff]
      %v3510 = vld [vmem:[#allocation2 + $0x210] sm:$0xff]
      %v3511 = vld [vmem:[#allocation2 + $0x218] sm:$0xff]
      %v3512 = vld [vmem:[#allocation2 + $0x220] sm:$0xff]
      %v3513 = vld [vmem:[#allocation2 + $0x228] sm:$0xff]
      %v3514 = vld [vmem:[#allocation2 + $0x230] sm:$0xff]
      %v3515 = vld [vmem:[#allocation2 + $0x238] sm:$0xff]
      %v3516 = vld [vmem:[#allocation2 + $0x240] sm:$0xff]
      %v3517 = vld [vmem:[#allocation2 + $0x248] sm:$0xff]
      %v3518 = vld [vmem:[#allocation2 + $0x250] sm:$0xff]
      %v3519 = vld [vmem:[#allocation2 + $0x258] sm:$0xff]
      %v3520 = vld [vmem:[#allocation2 + $0x260] sm:$0xff]
      %v3521 = vld [vmem:[#allocation2 + $0x268] sm:$0xff]
      %v3522 = vld [vmem:[#allocation2 + $0x270] sm:$0xff]
      %v3523 = vld [vmem:[#allocation2 + $0x278] sm:$0xff]
      %v3524 = vld [vmem:[#allocation2 + $0x280] sm:$0xff]
      %v3525 = vld [vmem:[#allocation2 + $0x288] sm:$0xff]
      %v3526 = vld [vmem:[#allocation2 + $0x290] sm:$0xff]
      %v3527 = vld [vmem:[#allocation2 + $0x298] sm:$0xff]
      %v3528 = vld [vmem:[#allocation2 + $0x2a0] sm:$0xff]
      %v3529 = vld [vmem:[#allocation2 + $0x2a8] sm:$0xff]
      %v3530 = vld [vmem:[#allocation2 + $0x2b0] sm:$0xff]
      %v3531 = vld [vmem:[#allocation2 + $0x2b8] sm:$0xff]
      %v3532 = vld [vmem:[#allocation2 + $0x2c0] sm:$0xff]
      %v3533 = vld [vmem:[#allocation2 + $0x2c8] sm:$0xff]
      %v3534 = vld [vmem:[#allocation2 + $0x2d0] sm:$0xff]
      %v3535 = vld [vmem:[#allocation2 + $0x2d8] sm:$0xff]
      %v3536 = vld [vmem:[#allocation2 + $0x2e0] sm:$0xff]
      %v3537 = vld [vmem:[#allocation2 + $0x2e8] sm:$0xff]
      %v3538 = vld [vmem:[#allocation2 + $0x2f0] sm:$0xff]
      %v3539 = vld [vmem:[#allocation2 + $0x2f8] sm:$0xff]
      %v3540 = vld [vmem:[#allocation2 + $0x300] sm:$0xff]
      %v3541 = vld [vmem:[#allocation2 + $0x308] sm:$0xff]
      %v3542 = vld [vmem:[#allocation2 + $0x310] sm:$0xff]
      %v3543 = vld [vmem:[#allocation2 + $0x318] sm:$0xff]
      %v3544 = vld [vmem:[#allocation2 + $0x320] sm:$0xff]
      %v3545 = vld [vmem:[#allocation2 + $0x328] sm:$0xff]
      %v3546 = vld [vmem:[#allocation2 + $0x330] sm:$0xff]
      %v3547 = vld [vmem:[#allocation2 + $0x338] sm:$0xff]
      %v3548 = vld [vmem:[#allocation2 + $0x340] sm:$0xff]
      %v3549 = vld [vmem:[#allocation2 + $0x348] sm:$0xff]
      %v3550 = vld [vmem:[#allocation2 + $0x350] sm:$0xff]
      %v3551 = vld [vmem:[#allocation2 + $0x358] sm:$0xff]
      %v3552 = vld [vmem:[#allocation2 + $0x360] sm:$0xff]
      %v3553 = vld [vmem:[#allocation2 + $0x368] sm:$0xff]
      %v3554 = vld [vmem:[#allocation2 + $0x370] sm:$0xff]
      %v3555 = vld [vmem:[#allocation2 + $0x378] sm:$0xff]
      %v3556 = vld [vmem:[#allocation2 + $0x380] sm:$0xff]
      %v3557 = vld [vmem:[#allocation2 + $0x388] sm:$0xff]
      %v3558 = vld [vmem:[#allocation2 + $0x390] sm:$0xff]
      %v3559 = vld [vmem:[#allocation2 + $0x398] sm:$0xff]
      %v3560 = vld [vmem:[#allocation2 + $0x3a0] sm:$0xff]
      %v3561 = vld [vmem:[#allocation2 + $0x3a8] sm:$0xff]
      %v3562 = vld [vmem:[#allocation2 + $0x3b0] sm:$0xff]
      %v3563 = vld [vmem:[#allocation2 + $0x3b8] sm:$0xff]
      %v3564 = vld [vmem:[#allocation2 + $0x3c0] sm:$0xff]
      %v3565 = vld [vmem:[#allocation2 + $0x3c8] sm:$0xff]
      %v3566 = vld [vmem:[#allocation2 + $0x3d0] sm:$0xff]
      %v3567 = vld [vmem:[#allocation2 + $0x3d8] sm:$0xff]
      %v3568 = vld [vmem:[#allocation2 + $0x3e0] sm:$0xff]
      %v3569 = vld [vmem:[#allocation2 + $0x3e8] sm:$0xff]
      %v3570 = vld [vmem:[#allocation2 + $0x3f0] sm:$0xff]
      %v3571 = vld [vmem:[#allocation2 + $0x3f8] sm:$0xff]
      %v3572 = vld [vmem:[#allocation2 + $0x400] sm:$0xff]
      %v3573 = vld [vmem:[#allocation2 + $0x408] sm:$0xff]
      %v3574 = vld [vmem:[#allocation2 + $0x410] sm:$0xff]
      %v3575 = vld [vmem:[#allocation2 + $0x418] sm:$0xff]
      %v3576 = vld [vmem:[#allocation2 + $0x420] sm:$0xff]
      %v3577 = vld [vmem:[#allocation2 + $0x428] sm:$0xff]
      %v3578 = vld [vmem:[#allocation2 + $0x430] sm:$0xff]
      %v3579 = vld [vmem:[#allocation2 + $0x438] sm:$0xff]
      %v3580 = vld [vmem:[#allocation2 + $0x440] sm:$0xff]
      %v3581 = vld [vmem:[#allocation2 + $0x448] sm:$0xff]
      %v3582 = vld [vmem:[#allocation2 + $0x450] sm:$0xff]
      %v3583 = vld [vmem:[#allocation2 + $0x458] sm:$0xff]
      %v3584 = vld [vmem:[#allocation2 + $0x460] sm:$0xff]
      %v3585 = vld [vmem:[#allocation2 + $0x468] sm:$0xff]
      %v3586 = vld [vmem:[#allocation2 + $0x470] sm:$0xff]
      %v3587 = vld [vmem:[#allocation2 + $0x478] sm:$0xff]
      %v3588 = vld [vmem:[#allocation2 + $0x480] sm:$0xff]
      %v3589 = vld [vmem:[#allocation2 + $0x488] sm:$0xff]
      %v3590 = vld [vmem:[#allocation2 + $0x490] sm:$0xff]
      %v3591 = vld [vmem:[#allocation2 + $0x498] sm:$0xff]
      %v3592 = vld [vmem:[#allocation2 + $0x4a0] sm:$0xff]
      %v3593 = vld [vmem:[#allocation2 + $0x4a8] sm:$0xff]
      %v3594 = vld [vmem:[#allocation2 + $0x4b0] sm:$0xff]
      %v3595 = vld [vmem:[#allocation2 + $0x4b8] sm:$0xff]
      %v3596 = vld [vmem:[#allocation2 + $0x4c0] sm:$0xff]
      %v3597 = vld [vmem:[#allocation2 + $0x4c8] sm:$0xff]
      %v3598 = vld [vmem:[#allocation2 + $0x4d0] sm:$0xff]
      %v3599 = vld [vmem:[#allocation2 + $0x4d8] sm:$0xff]
      %v3600 = vld [vmem:[#allocation2 + $0x4e0] sm:$0xff]
      %v3601 = vld [vmem:[#allocation2 + $0x4e8] sm:$0xff]
      %v3602 = vld [vmem:[#allocation2 + $0x4f0] sm:$0xff]
      %v3603 = vld [vmem:[#allocation2 + $0x4f8] sm:$0xff]
      %v3604 = vld [vmem:[#allocation2 + $0x500] sm:$0xff]
      %v3605 = vld [vmem:[#allocation2 + $0x508] sm:$0xff]
      %v3606 = vld [vmem:[#allocation2 + $0x510] sm:$0xff]
      %v3607 = vld [vmem:[#allocation2 + $0x518] sm:$0xff]
      %v3608 = vld [vmem:[#allocation2 + $0x520] sm:$0xff]
      %v3609 = vld [vmem:[#allocation2 + $0x528] sm:$0xff]
      %v3610 = vld [vmem:[#allocation2 + $0x530] sm:$0xff]
      %v3611 = vld [vmem:[#allocation2 + $0x538] sm:$0xff]
      %v3612 = vld [vmem:[#allocation2 + $0x540] sm:$0xff]
      %v3613 = vld [vmem:[#allocation2 + $0x548] sm:$0xff]
      %v3614 = vld [vmem:[#allocation2 + $0x550] sm:$0xff]
      %v3615 = vld [vmem:[#allocation2 + $0x558] sm:$0xff]
      %v3616 = vld [vmem:[#allocation2 + $0x560] sm:$0xff]
      %v3617 = vld [vmem:[#allocation2 + $0x568] sm:$0xff]
      %v3618 = vld [vmem:[#allocation2 + $0x570] sm:$0xff]
      %v3619 = vld [vmem:[#allocation2 + $0x578] sm:$0xff]
      %v3620 = vld [vmem:[#allocation2 + $0x580] sm:$0xff]
      %v3621 = vld [vmem:[#allocation2 + $0x588] sm:$0xff]
      %v3622 = vld [vmem:[#allocation2 + $0x590] sm:$0xff]
      %v3623 = vld [vmem:[#allocation2 + $0x598] sm:$0xff]
      %v3624 = vld [vmem:[%s2] sm:$0xff]
      %v3625 = vld [vmem:[%s2 + $0x8] sm:$0xff]
      %v3626 = vld [vmem:[%s2 + $0x10] sm:$0xff]
      %v3627 = vld [vmem:[%s2 + $0x18] sm:$0xff]
      %v3628 = vld [vmem:[%s2 + $0x20] sm:$0xff]
      %v3629 = vld [vmem:[%s2 + $0x28] sm:$0xff]
      %v3630 = vld [vmem:[%s2 + $0x30] sm:$0xff]
      %v3631 = vld [vmem:[%s2 + $0x38] sm:$0xff]
      %v3632 = vld [vmem:[%s2 + $0x40] sm:$0xff]
      %v3633 = vld [vmem:[%s2 + $0x48] sm:$0xff]
      %v3634 = vld [vmem:[%s2 + $0x50] sm:$0xff]
      %v3635 = vld [vmem:[%s2 + $0x58] sm:$0xff]
      %v3636 = vld [vmem:[%s2 + $0x60] sm:$0xff]
      %v3637 = vld [vmem:[%s2 + $0x68] sm:$0xff]
      %v3638 = vld [vmem:[%s2 + $0x70] sm:$0xff]
      %v3639 = vld [vmem:[%s2 + $0x78] sm:$0xff]
      %v3640 = vld [vmem:[%s2 + $0x80] sm:$0xff]
      %v3641 = vld [vmem:[%s2 + $0x88] sm:$0xff]
      %v3642 = vld [vmem:[%s2 + $0x90] sm:$0xff]
      %v3643 = vld [vmem:[%s2 + $0x98] sm:$0xff]
      %v3644 = vld [vmem:[%s2 + $0xa0] sm:$0xff]
      %v3645 = vld [vmem:[%s2 + $0xa8] sm:$0xff]
      %v3646 = vld [vmem:[%s2 + $0xb0] sm:$0xff]
      %v3647 = vld [vmem:[%s2 + $0xb8] sm:$0xff]
      %v3648 = vld [vmem:[%s2 + $0xc0] sm:$0xff]
      %v3649 = vld [vmem:[%s2 + $0xc8] sm:$0xff]
      %v3650 = vld [vmem:[%s2 + $0xd0] sm:$0xff]
      %v3651 = vld [vmem:[%s2 + $0xd8] sm:$0xff]
      %v3652 = vld [vmem:[%s2 + $0xe0] sm:$0xff]
      %v3653 = vld [vmem:[%s2 + $0xe8] sm:$0xff]
      %v3654 = vld [vmem:[%s2 + $0xf0] sm:$0xff]
      %v3655 = vld [vmem:[%s2 + $0xf8] sm:$0xff]
      %v3656 = vld [vmem:[%s2 + $0x100] sm:$0xff]
      %v3657 = vld [vmem:[%s2 + $0x108] sm:$0xff]
      %v3658 = vld [vmem:[%s2 + $0x110] sm:$0xff]
      %v3659 = vld [vmem:[%s2 + $0x118] sm:$0xff]
      %v3660 = vld [vmem:[%s2 + $0x120] sm:$0xff]
      %v3661 = vld [vmem:[%s2 + $0x128] sm:$0xff]
      %v3662 = vld [vmem:[%s2 + $0x130] sm:$0xff]
      %v3663 = vld [vmem:[%s2 + $0x138] sm:$0xff]
      %v3664 = vld [vmem:[%s2 + $0x140] sm:$0xff]
      %v3665 = vld [vmem:[%s2 + $0x148] sm:$0xff]
      %v3666 = vld [vmem:[%s2 + $0x150] sm:$0xff]
      %v3667 = vld [vmem:[%s2 + $0x158] sm:$0xff]
      %v3668 = vld [vmem:[%s2 + $0x160] sm:$0xff]
      %v3669 = vld [vmem:[%s2 + $0x168] sm:$0xff]
      %v3670 = vld [vmem:[%s2 + $0x170] sm:$0xff]
      %v3671 = vld [vmem:[%s2 + $0x178] sm:$0xff]
      %v3672 = vld [vmem:[%s2 + $0x180] sm:$0xff]
      %v3673 = vld [vmem:[%s2 + $0x188] sm:$0xff]
      %v3674 = vld [vmem:[%s2 + $0x190] sm:$0xff]
      %v3675 = vld [vmem:[%s2 + $0x198] sm:$0xff]
      %v3676 = vld [vmem:[%s2 + $0x1a0] sm:$0xff]
      %v3677 = vld [vmem:[%s2 + $0x1a8] sm:$0xff]
      %v3678 = vld [vmem:[%s2 + $0x1b0] sm:$0xff]
      %v3679 = vld [vmem:[%s2 + $0x1b8] sm:$0xff]
      %v3680 = vld [vmem:[%s2 + $0x1c0] sm:$0xff]
      %v3681 = vld [vmem:[%s2 + $0x1c8] sm:$0xff]
      %v3682 = vld [vmem:[%s2 + $0x1d0] sm:$0xff]
      %v3683 = vld [vmem:[%s2 + $0x1d8] sm:$0xff]
      %v3684 = vld [vmem:[%s2 + $0x1e0] sm:$0xff]
      %v3685 = vld [vmem:[%s2 + $0x1e8] sm:$0xff]
      %v3686 = vld [vmem:[%s2 + $0x1f0] sm:$0xff]
      %v3687 = vld [vmem:[%s2 + $0x1f8] sm:$0xff]
      %v3688 = vld [vmem:[%s2 + $0x200] sm:$0xff]
      %v3689 = vld [vmem:[%s2 + $0x208] sm:$0xff]
      %v3690 = vld [vmem:[%s2 + $0x210] sm:$0xff]
      %v3691 = vld [vmem:[%s2 + $0x218] sm:$0xff]
      %v3692 = vld [vmem:[%s2 + $0x220] sm:$0xff]
      %v3693 = vld [vmem:[%s2 + $0x228] sm:$0xff]
      %v3694 = vld [vmem:[%s2 + $0x230] sm:$0xff]
      %v3695 = vld [vmem:[%s2 + $0x238] sm:$0xff]
      %v3696 = vld [vmem:[%s3] sm:$0x1]
      %v3698 = vlaneseq
      %v3699 = vshrl.u32 %v3698, 7
      %v3700 = vsub.s32 0, %v3699
      %v3701 = vrot.slane %v3696, %v3700
      %vm3703 = vcmask 523264
      %v3705 = vsel %vm3703, %v3448, 0
      %v3708 = vsel %vm3703, %v3453, 0
      %v3711 = vsel %vm3703, %v3458, 0
      %v3714 = vsel %vm3703, %v3463, 0
      %v3717 = vsel %vm3703, %v3468, 0
      %v3720 = vsel %vm3703, %v3473, 0
      %v3723 = vsel %vm3703, %v3478, 0
      %v3726 = vsel %vm3703, %v3483, 0
      %v3729 = vsel %vm3703, %v3488, 0
      %v3732 = vsel %vm3703, %v3493, 0
      %v3735 = vsel %vm3703, %v3498, 0
      %v3738 = vsel %vm3703, %v3503, 0
      %v3741 = vsel %vm3703, %v3508, 0
      %v3744 = vsel %vm3703, %v3513, 0
      %v3747 = vsel %vm3703, %v3518, 0
      %v3750 = vsel %vm3703, %v3523, 0
      %v3753 = vsel %vm3703, %v3528, 0
      %v3756 = vsel %vm3703, %v3533, 0
      %v3759 = vsel %vm3703, %v3538, 0
      %v3762 = vsel %vm3703, %v3543, 0
      %v3765 = vsel %vm3703, %v3548, 0
      %v3768 = vsel %vm3703, %v3553, 0
      %v3771 = vsel %vm3703, %v3558, 0
      %v3774 = vsel %vm3703, %v3563, 0
      %v3777 = vsel %vm3703, %v3568, 0
      %v3780 = vsel %vm3703, %v3573, 0
      %v3783 = vsel %vm3703, %v3578, 0
      %v3786 = vsel %vm3703, %v3583, 0
      %v3789 = vsel %vm3703, %v3588, 0
      %v3792 = vsel %vm3703, %v3593, 0
      %v3795 = vsel %vm3703, %v3598, 0
      %v3798 = vsel %vm3703, %v3603, 0
      %v3801 = vsel %vm3703, %v3608, 0
      %v3804 = vsel %vm3703, %v3613, 0
      %v3807 = vsel %vm3703, %v3618, 0
      %v3810 = vsel %vm3703, %v3623, 0
      %3812 = vmatprep.subr.mxu0 0.0
      %3813 = vmatpush1.msra.mxu0 %v3639
      %3814 = vmatprep.subr.mxu0 0.0
      %3815 = vmatpush1.msra.mxu0 %v3638
      %3816 = vmatprep.subr.mxu0 0.0
      %3817 = vmatpush1.msra.mxu0 %v3637
      %3818 = vmatprep.subr.mxu0 0.0
      %3819 = vmatpush1.msra.mxu0 %v3636
      %3820 = vmatprep.subr.mxu0 0.0
      %3821 = vmatpush1.msra.mxu0 %v3635
      %3822 = vmatprep.subr.mxu0 0.0
      %3823 = vmatpush1.msra.mxu0 %v3634
      %3824 = vmatprep.subr.mxu0 0.0
      %3825 = vmatpush1.msra.mxu0 %v3633
      %3826 = vmatprep.subr.mxu0 0.0
      %3827 = vmatpush1.msra.mxu0 %v3632
      %3828 = vmatprep.subr.mxu0 0.0
      %3829 = vmatpush1.msra.mxu0 %v3631
      %3830 = vmatprep.subr.mxu0 0.0
      %3831 = vmatpush1.msra.mxu0 %v3630
      %3832 = vmatprep.subr.mxu0 0.0
      %3833 = vmatpush1.msra.mxu0 %v3629
      %3834 = vmatprep.subr.mxu0 0.0
      %3835 = vmatpush1.msra.mxu0 %v3628
      %3836 = vmatprep.subr.mxu0 0.0
      %3837 = vmatpush1.msra.mxu0 %v3627
      %3838 = vmatprep.subr.mxu0 0.0
      %3839 = vmatpush1.msra.mxu0 %v3626
      %3840 = vmatprep.subr.mxu0 0.0
      %3841 = vmatpush1.msra.mxu0 %v3625
      %3842 = vmatprep.subr.mxu0 0.0
      %3843 = vmatpush1.msra.mxu0 %v3624
      %3844 = vmatprep.subr.mxu0 0.0
      %3845 = vmatpush2.msra.mxu0 %v3655
      %3846 = vmatprep.subr.mxu0 0.0
      %3847 = vmatpush2.msra.mxu0 %v3654
      %3848 = vmatprep.subr.mxu0 0.0
      %3849 = vmatpush2.msra.mxu0 %v3653
      %3850 = vmatprep.subr.mxu0 0.0
      %3851 = vmatpush2.msra.mxu0 %v3652
      %3852 = vmatprep.subr.mxu0 0.0
      %3853 = vmatpush2.msra.mxu0 %v3651
      %3854 = vmatprep.subr.mxu0 0.0
      %3855 = vmatpush2.msra.mxu0 %v3650
      %3856 = vmatprep.subr.mxu0 0.0
      %3857 = vmatpush2.msra.mxu0 %v3649
      %3858 = vmatprep.subr.mxu0 0.0
      %3859 = vmatpush2.msra.mxu0 %v3648
      %3860 = vmatprep.subr.mxu0 0.0
      %3861 = vmatpush2.msra.mxu0 %v3647
      %3862 = vmatprep.subr.mxu0 0.0
      %3863 = vmatpush2.msra.mxu0 %v3646
      %3864 = vmatprep.subr.mxu0 0.0
      %3865 = vmatpush2.msra.mxu0 %v3645
      %3866 = vmatprep.subr.mxu0 0.0
      %3867 = vmatpush2.msra.mxu0 %v3644
      %3868 = vmatprep.subr.mxu0 0.0
      %3869 = vmatpush2.msra.mxu0 %v3643
      %3870 = vmatprep.subr.mxu0 0.0
      %3871 = vmatpush2.msra.mxu0 %v3642
      %3872 = vmatprep.subr.mxu0 0.0
      %3873 = vmatpush2.msra.mxu0 %v3641
      %3874 = vmatprep.subr.mxu0 0.0
      %3875 = vmatpush2.msra.mxu0 %v3640
      %3876 = vmatprep.mubr.f32.mxu0 %v3445
      %3877 = vmatmul.mubr.f32.gmra.mxu0 %v3444
      %v3878 = vpop.f32.mrf.mxu0
      %v3879 = vadd.f32 %v3701, %v3878
      %v3880 = vpop.f32.mrf.mxu0
      %3881 = vmatprep.mubr.f32.mxu0 %v3450
      %3882 = vmatmul.mubr.f32.gmra.mxu0 %v3449
      %v3883 = vpop.f32.mrf.mxu0
      %v3884 = vadd.f32 %v3701, %v3883
      %v3885 = vpop.f32.mrf.mxu0
      %3886 = vmatprep.mubr.f32.mxu0 %v3455
      %3887 = vmatmul.mubr.f32.gmra.mxu0 %v3454
      %v3888 = vpop.f32.mrf.mxu0
      %v3889 = vadd.f32 %v3701, %v3888
      %v3890 = vpop.f32.mrf.mxu0
      %3891 = vmatprep.mubr.f32.mxu0 %v3460
      %3892 = vmatmul.mubr.f32.gmra.mxu0 %v3459
      %v3893 = vpop.f32.mrf.mxu0
      %v3894 = vadd.f32 %v3701, %v3893
      %v3895 = vpop.f32.mrf.mxu0
      %3896 = vmatprep.mubr.f32.mxu0 %v3465
      %3897 = vmatmul.mubr.f32.gmra.mxu0 %v3464
      %v3898 = vpop.f32.mrf.mxu0
      %v3899 = vadd.f32 %v3701, %v3898
      %v3900 = vpop.f32.mrf.mxu0
      %3901 = vmatprep.mubr.f32.mxu0 %v3470
      %3902 = vmatmul.mubr.f32.gmra.mxu0 %v3469
      %v3903 = vpop.f32.mrf.mxu0
      %v3904 = vadd.f32 %v3701, %v3903
      %v3905 = vpop.f32.mrf.mxu0
      %3906 = vmatprep.mubr.f32.mxu0 %v3475
      %3907 = vmatmul.mubr.f32.gmra.mxu0 %v3474
      %v3908 = vpop.f32.mrf.mxu0
      %v3909 = vadd.f32 %v3701, %v3908
      %v3910 = vpop.f32.mrf.mxu0
      %3911 = vmatprep.mubr.f32.mxu0 %v3480
      %3912 = vmatmul.mubr.f32.gmra.mxu0 %v3479
      %v3913 = vpop.f32.mrf.mxu0
      %v3914 = vadd.f32 %v3701, %v3913
      %v3915 = vpop.f32.mrf.mxu0
      %3916 = vmatprep.mubr.f32.mxu0 %v3485
      %3917 = vmatmul.mubr.f32.gmra.mxu0 %v3484
      %v3918 = vpop.f32.mrf.mxu0
      %v3919 = vadd.f32 %v3701, %v3918
      %v3920 = vpop.f32.mrf.mxu0
      %3921 = vmatprep.mubr.f32.mxu0 %v3490
      %3922 = vmatmul.mubr.f32.gmra.mxu0 %v3489
      %v3923 = vpop.f32.mrf.mxu0
      %v3924 = vadd.f32 %v3701, %v3923
      %v3925 = vpop.f32.mrf.mxu0
      %3926 = vmatprep.mubr.f32.mxu0 %v3495
      %3927 = vmatmul.mubr.f32.gmra.mxu0 %v3494
      %v3928 = vpop.f32.mrf.mxu0
      %v3929 = vadd.f32 %v3701, %v3928
      %v3930 = vpop.f32.mrf.mxu0
      %3931 = vmatprep.mubr.f32.mxu0 %v3500
      %3932 = vmatmul.mubr.f32.gmra.mxu0 %v3499
      %v3933 = vpop.f32.mrf.mxu0
      %v3934 = vadd.f32 %v3701, %v3933
      %v3935 = vpop.f32.mrf.mxu0
      %3936 = vmatprep.mubr.f32.mxu0 %v3505
      %3937 = vmatmul.mubr.f32.gmra.mxu0 %v3504
      %v3938 = vpop.f32.mrf.mxu0
      %v3939 = vadd.f32 %v3701, %v3938
      %v3940 = vpop.f32.mrf.mxu0
      %3941 = vmatprep.mubr.f32.mxu0 %v3510
      %3942 = vmatmul.mubr.f32.gmra.mxu0 %v3509
      %v3943 = vpop.f32.mrf.mxu0
      %v3944 = vadd.f32 %v3701, %v3943
      %v3945 = vpop.f32.mrf.mxu0
      %3946 = vmatprep.mubr.f32.mxu0 %v3515
      %3947 = vmatmul.mubr.f32.gmra.mxu0 %v3514
      %v3948 = vpop.f32.mrf.mxu0
      %v3949 = vadd.f32 %v3701, %v3948
      %v3950 = vpop.f32.mrf.mxu0
      %3951 = vmatprep.mubr.f32.mxu0 %v3520
      %3952 = vmatmul.mubr.f32.gmra.mxu0 %v3519
      %v3953 = vpop.f32.mrf.mxu0
      %v3954 = vadd.f32 %v3701, %v3953
      %v3955 = vpop.f32.mrf.mxu0
      %3956 = vmatprep.mubr.f32.mxu0 %v3525
      %3957 = vmatmul.mubr.f32.gmra.mxu0 %v3524
      %v3958 = vpop.f32.mrf.mxu0
      %v3959 = vadd.f32 %v3701, %v3958
      %v3960 = vpop.f32.mrf.mxu0
      %3961 = vmatprep.mubr.f32.mxu0 %v3530
      %3962 = vmatmul.mubr.f32.gmra.mxu0 %v3529
      %v3963 = vpop.f32.mrf.mxu0
      %v3964 = vadd.f32 %v3701, %v3963
      %v3965 = vpop.f32.mrf.mxu0
      %3966 = vmatprep.mubr.f32.mxu0 %v3535
      %3967 = vmatmul.mubr.f32.gmra.mxu0 %v3534
      %v3968 = vpop.f32.mrf.mxu0
      %v3969 = vadd.f32 %v3701, %v3968
      %v3970 = vpop.f32.mrf.mxu0
      %3971 = vmatprep.mubr.f32.mxu0 %v3540
      %3972 = vmatmul.mubr.f32.gmra.mxu0 %v3539
      %v3973 = vpop.f32.mrf.mxu0
      %v3974 = vadd.f32 %v3701, %v3973
      %v3975 = vpop.f32.mrf.mxu0
      %3976 = vmatprep.mubr.f32.mxu0 %v3545
      %3977 = vmatmul.mubr.f32.gmra.mxu0 %v3544
      %v3978 = vpop.f32.mrf.mxu0
      %v3979 = vadd.f32 %v3701, %v3978
      %v3980 = vpop.f32.mrf.mxu0
      %3981 = vmatprep.mubr.f32.mxu0 %v3550
      %3982 = vmatmul.mubr.f32.gmra.mxu0 %v3549
      %v3983 = vpop.f32.mrf.mxu0
      %v3984 = vadd.f32 %v3701, %v3983
      %v3985 = vpop.f32.mrf.mxu0
      %3986 = vmatprep.mubr.f32.mxu0 %v3555
      %3987 = vmatmul.mubr.f32.gmra.mxu0 %v3554
      %v3988 = vpop.f32.mrf.mxu0
      %v3989 = vadd.f32 %v3701, %v3988
      %v3990 = vpop.f32.mrf.mxu0
      %3991 = vmatprep.mubr.f32.mxu0 %v3560
      %3992 = vmatmul.mubr.f32.gmra.mxu0 %v3559
      %v3993 = vpop.f32.mrf.mxu0
      %v3994 = vadd.f32 %v3701, %v3993
      %v3995 = vpop.f32.mrf.mxu0
      %3996 = vmatprep.mubr.f32.mxu0 %v3565
      %3997 = vmatmul.mubr.f32.gmra.mxu0 %v3564
      %v3998 = vpop.f32.mrf.mxu0
      %v3999 = vadd.f32 %v3701, %v3998
      %v4000 = vpop.f32.mrf.mxu0
      %4001 = vmatprep.mubr.f32.mxu0 %v3570
      %4002 = vmatmul.mubr.f32.gmra.mxu0 %v3569
      %v4003 = vpop.f32.mrf.mxu0
      %v4004 = vadd.f32 %v3701, %v4003
      %v4005 = vpop.f32.mrf.mxu0
      %4006 = vmatprep.mubr.f32.mxu0 %v3575
      %4007 = vmatmul.mubr.f32.gmra.mxu0 %v3574
      %v4008 = vpop.f32.mrf.mxu0
      %v4009 = vadd.f32 %v3701, %v4008
      %v4010 = vpop.f32.mrf.mxu0
      %4011 = vmatprep.mubr.f32.mxu0 %v3580
      %4012 = vmatmul.mubr.f32.gmra.mxu0 %v3579
      %v4013 = vpop.f32.mrf.mxu0
      %v4014 = vadd.f32 %v3701, %v4013
      %v4015 = vpop.f32.mrf.mxu0
      %4016 = vmatprep.mubr.f32.mxu0 %v3585
      %4017 = vmatmul.mubr.f32.gmra.mxu0 %v3584
      %v4018 = vpop.f32.mrf.mxu0
      %v4019 = vadd.f32 %v3701, %v4018
      %v4020 = vpop.f32.mrf.mxu0
      %4021 = vmatprep.mubr.f32.mxu0 %v3590
      %4022 = vmatmul.mubr.f32.gmra.mxu0 %v3589
      %v4023 = vpop.f32.mrf.mxu0
      %v4024 = vadd.f32 %v3701, %v4023
      %v4025 = vpop.f32.mrf.mxu0
      %4026 = vmatprep.mubr.f32.mxu0 %v3595
      %4027 = vmatmul.mubr.f32.gmra.mxu0 %v3594
      %v4028 = vpop.f32.mrf.mxu0
      %v4029 = vadd.f32 %v3701, %v4028
      %v4030 = vpop.f32.mrf.mxu0
      %4031 = vmatprep.mubr.f32.mxu0 %v3600
      %4032 = vmatmul.mubr.f32.gmra.mxu0 %v3599
      %v4033 = vpop.f32.mrf.mxu0
      %v4034 = vadd.f32 %v3701, %v4033
      %v4035 = vpop.f32.mrf.mxu0
      %4036 = vmatprep.mubr.f32.mxu0 %v3605
      %4037 = vmatmul.mubr.f32.gmra.mxu0 %v3604
      %v4038 = vpop.f32.mrf.mxu0
      %v4039 = vadd.f32 %v3701, %v4038
      %v4040 = vpop.f32.mrf.mxu0
      %4041 = vmatprep.mubr.f32.mxu0 %v3610
      %4042 = vmatmul.mubr.f32.gmra.mxu0 %v3609
      %v4043 = vpop.f32.mrf.mxu0
      %v4044 = vadd.f32 %v3701, %v4043
      %v4045 = vpop.f32.mrf.mxu0
      %4046 = vmatprep.mubr.f32.mxu0 %v3615
      %4047 = vmatmul.mubr.f32.gmra.mxu0 %v3614
      %v4048 = vpop.f32.mrf.mxu0
      %v4049 = vadd.f32 %v3701, %v4048
      %v4050 = vpop.f32.mrf.mxu0
      %4051 = vmatprep.mubr.f32.mxu0 %v3620
      %4052 = vmatmul.mubr.f32.gmra.mxu0 %v3619
      %v4053 = vpop.f32.mrf.mxu0
      %v4054 = vadd.f32 %v3701, %v4053
      %v4055 = vpop.f32.mrf.mxu0
      %4056 = vdwg.mxu0
      %4057 = vmatprep.subr.mxu0 0.0
      %4058 = vmatpush1.msra.mxu0 %v3671
      %4059 = vmatprep.subr.mxu0 0.0
      %4060 = vmatpush1.msra.mxu0 %v3670
      %4061 = vmatprep.subr.mxu0 0.0
      %4062 = vmatpush1.msra.mxu0 %v3669
      %4063 = vmatprep.subr.mxu0 0.0
      %4064 = vmatpush1.msra.mxu0 %v3668
      %4065 = vmatprep.subr.mxu0 0.0
      %4066 = vmatpush1.msra.mxu0 %v3667
      %4067 = vmatprep.subr.mxu0 0.0
      %4068 = vmatpush1.msra.mxu0 %v3666
      %4069 = vmatprep.subr.mxu0 0.0
      %4070 = vmatpush1.msra.mxu0 %v3665
      %4071 = vmatprep.subr.mxu0 0.0
      %4072 = vmatpush1.msra.mxu0 %v3664
      %4073 = vmatprep.subr.mxu0 0.0
      %4074 = vmatpush1.msra.mxu0 %v3663
      %4075 = vmatprep.subr.mxu0 0.0
      %4076 = vmatpush1.msra.mxu0 %v3662
      %4077 = vmatprep.subr.mxu0 0.0
      %4078 = vmatpush1.msra.mxu0 %v3661
      %4079 = vmatprep.subr.mxu0 0.0
      %4080 = vmatpush1.msra.mxu0 %v3660
      %4081 = vmatprep.subr.mxu0 0.0
      %4082 = vmatpush1.msra.mxu0 %v3659
      %4083 = vmatprep.subr.mxu0 0.0
      %4084 = vmatpush1.msra.mxu0 %v3658
      %4085 = vmatprep.subr.mxu0 0.0
      %4086 = vmatpush1.msra.mxu0 %v3657
      %4087 = vmatprep.subr.mxu0 0.0
      %4088 = vmatpush1.msra.mxu0 %v3656
      %4089 = vmatprep.subr.mxu0 0.0
      %4090 = vmatpush2.msra.mxu0 %v3687
      %4091 = vmatprep.subr.mxu0 0.0
      %4092 = vmatpush2.msra.mxu0 %v3686
      %4093 = vmatprep.subr.mxu0 0.0
      %4094 = vmatpush2.msra.mxu0 %v3685
      %4095 = vmatprep.subr.mxu0 0.0
      %4096 = vmatpush2.msra.mxu0 %v3684
      %4097 = vmatprep.subr.mxu0 0.0
      %4098 = vmatpush2.msra.mxu0 %v3683
      %4099 = vmatprep.subr.mxu0 0.0
      %4100 = vmatpush2.msra.mxu0 %v3682
      %4101 = vmatprep.subr.mxu0 0.0
      %4102 = vmatpush2.msra.mxu0 %v3681
      %4103 = vmatprep.subr.mxu0 0.0
      %4104 = vmatpush2.msra.mxu0 %v3680
      %4105 = vmatprep.subr.mxu0 0.0
      %4106 = vmatpush2.msra.mxu0 %v3679
      %4107 = vmatprep.subr.mxu0 0.0
      %4108 = vmatpush2.msra.mxu0 %v3678
      %4109 = vmatprep.subr.mxu0 0.0
      %4110 = vmatpush2.msra.mxu0 %v3677
      %4111 = vmatprep.subr.mxu0 0.0
      %4112 = vmatpush2.msra.mxu0 %v3676
      %4113 = vmatprep.subr.mxu0 0.0
      %4114 = vmatpush2.msra.mxu0 %v3675
      %4115 = vmatprep.subr.mxu0 0.0
      %4116 = vmatpush2.msra.mxu0 %v3674
      %4117 = vmatprep.subr.mxu0 0.0
      %4118 = vmatpush2.msra.mxu0 %v3673
      %4119 = vmatprep.subr.mxu0 0.0
      %4120 = vmatpush2.msra.mxu0 %v3672
      %4121 = vmatprep.mubr.f32.mxu0 %v3447
      %4122 = vmatmul.mubr.f32.gmra.mxu0 %v3446
      %v4123 = vpop.f32.mrf.mxu0
      %v4124 = vadd.f32 %v3879, %v4123
      %v4125 = vpop.f32.mrf.mxu0
      %4126 = vmatprep.mubr.f32.mxu0 %v3452
      %4127 = vmatmul.mubr.f32.gmra.mxu0 %v3451
      %v4128 = vpop.f32.mrf.mxu0
      %v4129 = vadd.f32 %v3884, %v4128
      %v4130 = vpop.f32.mrf.mxu0
      %4131 = vmatprep.mubr.f32.mxu0 %v3457
      %4132 = vmatmul.mubr.f32.gmra.mxu0 %v3456
      %v4133 = vpop.f32.mrf.mxu0
      %v4134 = vadd.f32 %v3889, %v4133
      %v4135 = vpop.f32.mrf.mxu0
      %4136 = vmatprep.mubr.f32.mxu0 %v3462
      %4137 = vmatmul.mubr.f32.gmra.mxu0 %v3461
      %v4138 = vpop.f32.mrf.mxu0
      %v4139 = vadd.f32 %v3894, %v4138
      %v4140 = vpop.f32.mrf.mxu0
      %4141 = vmatprep.mubr.f32.mxu0 %v3467
      %4142 = vmatmul.mubr.f32.gmra.mxu0 %v3466
      %v4143 = vpop.f32.mrf.mxu0
      %v4144 = vadd.f32 %v3899, %v4143
      %v4145 = vpop.f32.mrf.mxu0
      %4146 = vmatprep.mubr.f32.mxu0 %v3472
      %4147 = vmatmul.mubr.f32.gmra.mxu0 %v3471
      %v4148 = vpop.f32.mrf.mxu0
      %v4149 = vadd.f32 %v3904, %v4148
      %v4150 = vpop.f32.mrf.mxu0
      %4151 = vmatprep.mubr.f32.mxu0 %v3477
      %4152 = vmatmul.mubr.f32.gmra.mxu0 %v3476
      %v4153 = vpop.f32.mrf.mxu0
      %v4154 = vadd.f32 %v3909, %v4153
      %v4155 = vpop.f32.mrf.mxu0
      %4156 = vmatprep.mubr.f32.mxu0 %v3482
      %4157 = vmatmul.mubr.f32.gmra.mxu0 %v3481
      %v4158 = vpop.f32.mrf.mxu0
      %v4159 = vadd.f32 %v3914, %v4158
      %v4160 = vpop.f32.mrf.mxu0
      %4161 = vmatprep.mubr.f32.mxu0 %v3487
      %4162 = vmatmul.mubr.f32.gmra.mxu0 %v3486
      %v4163 = vpop.f32.mrf.mxu0
      %v4164 = vadd.f32 %v3919, %v4163
      %v4165 = vpop.f32.mrf.mxu0
      %4166 = vmatprep.mubr.f32.mxu0 %v3492
      %4167 = vmatmul.mubr.f32.gmra.mxu0 %v3491
      %v4168 = vpop.f32.mrf.mxu0
      %v4169 = vadd.f32 %v3924, %v4168
      %v4170 = vpop.f32.mrf.mxu0
      %4171 = vmatprep.mubr.f32.mxu0 %v3497
      %4172 = vmatmul.mubr.f32.gmra.mxu0 %v3496
      %v4173 = vpop.f32.mrf.mxu0
      %v4174 = vadd.f32 %v3929, %v4173
      %v4175 = vpop.f32.mrf.mxu0
      %4176 = vmatprep.mubr.f32.mxu0 %v3502
      %4177 = vmatmul.mubr.f32.gmra.mxu0 %v3501
      %v4178 = vpop.f32.mrf.mxu0
      %v4179 = vadd.f32 %v3934, %v4178
      %v4180 = vpop.f32.mrf.mxu0
      %4181 = vmatprep.mubr.f32.mxu0 %v3507
      %4182 = vmatmul.mubr.f32.gmra.mxu0 %v3506
      %v4183 = vpop.f32.mrf.mxu0
      %v4184 = vadd.f32 %v3939, %v4183
      %v4185 = vpop.f32.mrf.mxu0
      %4186 = vmatprep.mubr.f32.mxu0 %v3512
      %4187 = vmatmul.mubr.f32.gmra.mxu0 %v3511
      %v4188 = vpop.f32.mrf.mxu0
      %v4189 = vadd.f32 %v3944, %v4188
      %v4190 = vpop.f32.mrf.mxu0
      %4191 = vmatprep.mubr.f32.mxu0 %v3517
      %4192 = vmatmul.mubr.f32.gmra.mxu0 %v3516
      %v4193 = vpop.f32.mrf.mxu0
      %v4194 = vadd.f32 %v3949, %v4193
      %v4195 = vpop.f32.mrf.mxu0
      %4196 = vmatprep.mubr.f32.mxu0 %v3522
      %4197 = vmatmul.mubr.f32.gmra.mxu0 %v3521
      %v4198 = vpop.f32.mrf.mxu0
      %v4199 = vadd.f32 %v3954, %v4198
      %v4200 = vpop.f32.mrf.mxu0
      %4201 = vmatprep.mubr.f32.mxu0 %v3527
      %4202 = vmatmul.mubr.f32.gmra.mxu0 %v3526
      %v4203 = vpop.f32.mrf.mxu0
      %v4204 = vadd.f32 %v3959, %v4203
      %v4205 = vpop.f32.mrf.mxu0
      %4206 = vmatprep.mubr.f32.mxu0 %v3532
      %4207 = vmatmul.mubr.f32.gmra.mxu0 %v3531
      %v4208 = vpop.f32.mrf.mxu0
      %v4209 = vadd.f32 %v3964, %v4208
      %v4210 = vpop.f32.mrf.mxu0
      %4211 = vmatprep.mubr.f32.mxu0 %v3537
      %4212 = vmatmul.mubr.f32.gmra.mxu0 %v3536
      %v4213 = vpop.f32.mrf.mxu0
      %v4214 = vadd.f32 %v3969, %v4213
      %v4215 = vpop.f32.mrf.mxu0
      %4216 = vmatprep.mubr.f32.mxu0 %v3542
      %4217 = vmatmul.mubr.f32.gmra.mxu0 %v3541
      %v4218 = vpop.f32.mrf.mxu0
      %v4219 = vadd.f32 %v3974, %v4218
      %v4220 = vpop.f32.mrf.mxu0
      %4221 = vmatprep.mubr.f32.mxu0 %v3547
      %4222 = vmatmul.mubr.f32.gmra.mxu0 %v3546
      %v4223 = vpop.f32.mrf.mxu0
      %v4224 = vadd.f32 %v3979, %v4223
      %v4225 = vpop.f32.mrf.mxu0
      %4226 = vmatprep.mubr.f32.mxu0 %v3552
      %4227 = vmatmul.mubr.f32.gmra.mxu0 %v3551
      %v4228 = vpop.f32.mrf.mxu0
      %v4229 = vadd.f32 %v3984, %v4228
      %v4230 = vpop.f32.mrf.mxu0
      %4231 = vmatprep.mubr.f32.mxu0 %v3557
      %4232 = vmatmul.mubr.f32.gmra.mxu0 %v3556
      %v4233 = vpop.f32.mrf.mxu0
      %v4234 = vadd.f32 %v3989, %v4233
      %v4235 = vpop.f32.mrf.mxu0
      %4236 = vmatprep.mubr.f32.mxu0 %v3562
      %4237 = vmatmul.mubr.f32.gmra.mxu0 %v3561
      %v4238 = vpop.f32.mrf.mxu0
      %v4239 = vadd.f32 %v3994, %v4238
      %v4240 = vpop.f32.mrf.mxu0
      %4241 = vmatprep.mubr.f32.mxu0 %v3567
      %4242 = vmatmul.mubr.f32.gmra.mxu0 %v3566
      %v4243 = vpop.f32.mrf.mxu0
      %v4244 = vadd.f32 %v3999, %v4243
      %v4245 = vpop.f32.mrf.mxu0
      %4246 = vmatprep.mubr.f32.mxu0 %v3572
      %4247 = vmatmul.mubr.f32.gmra.mxu0 %v3571
      %v4248 = vpop.f32.mrf.mxu0
      %v4249 = vadd.f32 %v4004, %v4248
      %v4250 = vpop.f32.mrf.mxu0
      %4251 = vmatprep.mubr.f32.mxu0 %v3577
      %4252 = vmatmul.mubr.f32.gmra.mxu0 %v3576
      %v4253 = vpop.f32.mrf.mxu0
      %v4254 = vadd.f32 %v4009, %v4253
      %v4255 = vpop.f32.mrf.mxu0
      %4256 = vmatprep.mubr.f32.mxu0 %v3582
      %4257 = vmatmul.mubr.f32.gmra.mxu0 %v3581
      %v4258 = vpop.f32.mrf.mxu0
      %v4259 = vadd.f32 %v4014, %v4258
      %v4260 = vpop.f32.mrf.mxu0
      %4261 = vmatprep.mubr.f32.mxu0 %v3587
      %4262 = vmatmul.mubr.f32.gmra.mxu0 %v3586
      %v4263 = vpop.f32.mrf.mxu0
      %v4264 = vadd.f32 %v4019, %v4263
      %v4265 = vpop.f32.mrf.mxu0
      %4266 = vmatprep.mubr.f32.mxu0 %v3592
      %4267 = vmatmul.mubr.f32.gmra.mxu0 %v3591
      %v4268 = vpop.f32.mrf.mxu0
      %v4269 = vadd.f32 %v4024, %v4268
      %v4270 = vpop.f32.mrf.mxu0
      %4271 = vmatprep.mubr.f32.mxu0 %v3597
      %4272 = vmatmul.mubr.f32.gmra.mxu0 %v3596
      %v4273 = vpop.f32.mrf.mxu0
      %v4274 = vadd.f32 %v4029, %v4273
      %v4275 = vpop.f32.mrf.mxu0
      %4276 = vmatprep.mubr.f32.mxu0 %v3602
      %4277 = vmatmul.mubr.f32.gmra.mxu0 %v3601
      %v4278 = vpop.f32.mrf.mxu0
      %v4279 = vadd.f32 %v4034, %v4278
      %v4280 = vpop.f32.mrf.mxu0
      %4281 = vmatprep.mubr.f32.mxu0 %v3607
      %4282 = vmatmul.mubr.f32.gmra.mxu0 %v3606
      %v4283 = vpop.f32.mrf.mxu0
      %v4284 = vadd.f32 %v4039, %v4283
      %v4285 = vpop.f32.mrf.mxu0
      %4286 = vmatprep.mubr.f32.mxu0 %v3612
      %4287 = vmatmul.mubr.f32.gmra.mxu0 %v3611
      %v4288 = vpop.f32.mrf.mxu0
      %v4289 = vadd.f32 %v4044, %v4288
      %v4290 = vpop.f32.mrf.mxu0
      %4291 = vmatprep.mubr.f32.mxu0 %v3617
      %4292 = vmatmul.mubr.f32.gmra.mxu0 %v3616
      %v4293 = vpop.f32.mrf.mxu0
      %v4294 = vadd.f32 %v4049, %v4293
      %v4295 = vpop.f32.mrf.mxu0
      %4296 = vmatprep.mubr.f32.mxu0 %v3622
      %4297 = vmatmul.mubr.f32.gmra.mxu0 %v3621
      %v4298 = vpop.f32.mrf.mxu0
      %v4299 = vadd.f32 %v4054, %v4298
      %v4300 = vpop.f32.mrf.mxu0
      %4301 = vdwg.mxu0
      %4302 = vmatprep.subr.mxu0 0.0
      %4303 = vmatpush1.msra.mxu0 0.0
      %4304 = vmatprep.subr.mxu0 0.0
      %4305 = vmatpush1.msra.mxu0 0.0
      %4306 = vmatprep.subr.mxu0 0.0
      %4307 = vmatpush1.msra.mxu0 0.0
      %4308 = vmatprep.subr.mxu0 0.0
      %4309 = vmatpush1.msra.mxu0 0.0
      %4310 = vmatprep.subr.mxu0 0.0
      %4311 = vmatpush1.msra.mxu0 0.0
      %4312 = vmatprep.subr.mxu0 0.0
      %4313 = vmatpush1.msra.mxu0 0.0
      %4314 = vmatprep.subr.mxu0 0.0
      %4315 = vmatpush1.msra.mxu0 0.0
      %4316 = vmatprep.subr.mxu0 0.0
      %4317 = vmatpush1.msra.mxu0 0.0
      %4318 = vmatprep.subr.mxu0 0.0
      %4319 = vmatpush1.msra.mxu0 %v3695
      %4320 = vmatprep.subr.mxu0 0.0
      %4321 = vmatpush1.msra.mxu0 %v3694
      %4322 = vmatprep.subr.mxu0 0.0
      %4323 = vmatpush1.msra.mxu0 %v3693
      %4324 = vmatprep.subr.mxu0 0.0
      %4325 = vmatpush1.msra.mxu0 %v3692
      %4326 = vmatprep.subr.mxu0 0.0
      %4327 = vmatpush1.msra.mxu0 %v3691
      %4328 = vmatprep.subr.mxu0 0.0
      %4329 = vmatpush1.msra.mxu0 %v3690
      %4330 = vmatprep.subr.mxu0 0.0
      %4331 = vmatpush1.msra.mxu0 %v3689
      %4332 = vmatprep.subr.mxu0 0.0
      %4333 = vmatpush1.msra.mxu0 %v3688
      %4334 = vmatprep.subr.mxu0 0.0
      %4335 = vmatpush2.msra.mxu0 0.0
      %4336 = vmatprep.subr.mxu0 0.0
      %4337 = vmatpush2.msra.mxu0 0.0
      %4338 = vmatprep.subr.mxu0 0.0
      %4339 = vmatpush2.msra.mxu0 0.0
      %4340 = vmatprep.subr.mxu0 0.0
      %4341 = vmatpush2.msra.mxu0 0.0
      %4342 = vmatprep.subr.mxu0 0.0
      %4343 = vmatpush2.msra.mxu0 0.0
      %4344 = vmatprep.subr.mxu0 0.0
      %4345 = vmatpush2.msra.mxu0 0.0
      %4346 = vmatprep.subr.mxu0 0.0
      %4347 = vmatpush2.msra.mxu0 0.0
      %4348 = vmatprep.subr.mxu0 0.0
      %4349 = vmatpush2.msra.mxu0 0.0
      %4350 = vmatprep.subr.mxu0 0.0
      %4351 = vmatpush2.msra.mxu0 0.0
      %4352 = vmatprep.subr.mxu0 0.0
      %4353 = vmatpush2.msra.mxu0 0.0
      %4354 = vmatprep.subr.mxu0 0.0
      %4355 = vmatpush2.msra.mxu0 0.0
      %4356 = vmatprep.subr.mxu0 0.0
      %4357 = vmatpush2.msra.mxu0 0.0
      %4358 = vmatprep.subr.mxu0 0.0
      %4359 = vmatpush2.msra.mxu0 0.0
      %4360 = vmatprep.subr.mxu0 0.0
      %4361 = vmatpush2.msra.mxu0 0.0
      %4362 = vmatprep.subr.mxu0 0.0
      %4363 = vmatpush2.msra.mxu0 0.0
      %4364 = vmatprep.subr.mxu0 0.0
      %4365 = vmatpush2.msra.mxu0 0.0
      %4366 = vmatprep.mubr.f32.mxu0 0.0
      %4367 = vmatmul.mubr.f32.gmra.mxu0 %v3705
      %v4368 = vpop.f32.mrf.mxu0
      %v4369 = vadd.f32 %v4124, %v4368
      %v4370 = vpop.f32.mrf.mxu0
      %4371 = vmatprep.mubr.f32.mxu0 0.0
      %4372 = vmatmul.mubr.f32.gmra.mxu0 %v3708
      %v4373 = vpop.f32.mrf.mxu0
      %v4374 = vadd.f32 %v4129, %v4373
      %v4375 = vpop.f32.mrf.mxu0
      %4376 = vmatprep.mubr.f32.mxu0 0.0
      %4377 = vmatmul.mubr.f32.gmra.mxu0 %v3711
      %v4378 = vpop.f32.mrf.mxu0
      %v4379 = vadd.f32 %v4134, %v4378
      %v4380 = vpop.f32.mrf.mxu0
      %4381 = vmatprep.mubr.f32.mxu0 0.0
      %4382 = vmatmul.mubr.f32.gmra.mxu0 %v3714
      %v4383 = vpop.f32.mrf.mxu0
      %v4384 = vadd.f32 %v4139, %v4383
      %v4385 = vpop.f32.mrf.mxu0
      %4386 = vmatprep.mubr.f32.mxu0 0.0
      %4387 = vmatmul.mubr.f32.gmra.mxu0 %v3717
      %v4388 = vpop.f32.mrf.mxu0
      %v4389 = vadd.f32 %v4144, %v4388
      %v4390 = vpop.f32.mrf.mxu0
      %4391 = vmatprep.mubr.f32.mxu0 0.0
      %4392 = vmatmul.mubr.f32.gmra.mxu0 %v3720
      %v4393 = vpop.f32.mrf.mxu0
      %v4394 = vadd.f32 %v4149, %v4393
      %v4395 = vpop.f32.mrf.mxu0
      %4396 = vmatprep.mubr.f32.mxu0 0.0
      %4397 = vmatmul.mubr.f32.gmra.mxu0 %v3723
      %v4398 = vpop.f32.mrf.mxu0
      %v4399 = vadd.f32 %v4154, %v4398
      %v4400 = vpop.f32.mrf.mxu0
      %4401 = vmatprep.mubr.f32.mxu0 0.0
      %4402 = vmatmul.mubr.f32.gmra.mxu0 %v3726
      %v4403 = vpop.f32.mrf.mxu0
      %v4404 = vadd.f32 %v4159, %v4403
      %v4405 = vpop.f32.mrf.mxu0
      %4406 = vmatprep.mubr.f32.mxu0 0.0
      %4407 = vmatmul.mubr.f32.gmra.mxu0 %v3729
      %v4408 = vpop.f32.mrf.mxu0
      %v4409 = vadd.f32 %v4164, %v4408
      %v4410 = vpop.f32.mrf.mxu0
      %4411 = vmatprep.mubr.f32.mxu0 0.0
      %4412 = vmatmul.mubr.f32.gmra.mxu0 %v3732
      %v4413 = vpop.f32.mrf.mxu0
      %v4414 = vadd.f32 %v4169, %v4413
      %v4415 = vpop.f32.mrf.mxu0
      %4416 = vmatprep.mubr.f32.mxu0 0.0
      %4417 = vmatmul.mubr.f32.gmra.mxu0 %v3735
      %v4418 = vpop.f32.mrf.mxu0
      %v4419 = vadd.f32 %v4174, %v4418
      %v4420 = vpop.f32.mrf.mxu0
      %4421 = vmatprep.mubr.f32.mxu0 0.0
      %4422 = vmatmul.mubr.f32.gmra.mxu0 %v3738
      %v4423 = vpop.f32.mrf.mxu0
      %v4424 = vadd.f32 %v4179, %v4423
      %v4425 = vpop.f32.mrf.mxu0
      %4426 = vmatprep.mubr.f32.mxu0 0.0
      %4427 = vmatmul.mubr.f32.gmra.mxu0 %v3741
      %v4428 = vpop.f32.mrf.mxu0
      %v4429 = vadd.f32 %v4184, %v4428
      %v4430 = vpop.f32.mrf.mxu0
      %4431 = vmatprep.mubr.f32.mxu0 0.0
      %4432 = vmatmul.mubr.f32.gmra.mxu0 %v3744
      %v4433 = vpop.f32.mrf.mxu0
      %v4434 = vadd.f32 %v4189, %v4433
      %v4435 = vpop.f32.mrf.mxu0
      %4436 = vmatprep.mubr.f32.mxu0 0.0
      %4437 = vmatmul.mubr.f32.gmra.mxu0 %v3747
      %v4438 = vpop.f32.mrf.mxu0
      %v4439 = vadd.f32 %v4194, %v4438
      %v4440 = vpop.f32.mrf.mxu0
      %4441 = vmatprep.mubr.f32.mxu0 0.0
      %4442 = vmatmul.mubr.f32.gmra.mxu0 %v3750
      %v4443 = vpop.f32.mrf.mxu0
      %v4444 = vadd.f32 %v4199, %v4443
      %v4445 = vpop.f32.mrf.mxu0
      %4446 = vmatprep.mubr.f32.mxu0 0.0
      %4447 = vmatmul.mubr.f32.gmra.mxu0 %v3753
      %v4448 = vpop.f32.mrf.mxu0
      %v4449 = vadd.f32 %v4204, %v4448
      %v4450 = vpop.f32.mrf.mxu0
      %4451 = vmatprep.mubr.f32.mxu0 0.0
      %4452 = vmatmul.mubr.f32.gmra.mxu0 %v3756
      %v4453 = vpop.f32.mrf.mxu0
      %v4454 = vadd.f32 %v4209, %v4453
      %v4455 = vpop.f32.mrf.mxu0
      %4456 = vmatprep.mubr.f32.mxu0 0.0
      %4457 = vmatmul.mubr.f32.gmra.mxu0 %v3759
      %v4458 = vpop.f32.mrf.mxu0
      %v4459 = vadd.f32 %v4214, %v4458
      %v4460 = vpop.f32.mrf.mxu0
      %4461 = vmatprep.mubr.f32.mxu0 0.0
      %4462 = vmatmul.mubr.f32.gmra.mxu0 %v3762
      %v4463 = vpop.f32.mrf.mxu0
      %v4464 = vadd.f32 %v4219, %v4463
      %v4465 = vpop.f32.mrf.mxu0
      %4466 = vmatprep.mubr.f32.mxu0 0.0
      %4467 = vmatmul.mubr.f32.gmra.mxu0 %v3765
      %v4468 = vpop.f32.mrf.mxu0
      %v4469 = vadd.f32 %v4224, %v4468
      %v4470 = vpop.f32.mrf.mxu0
      %4471 = vmatprep.mubr.f32.mxu0 0.0
      %4472 = vmatmul.mubr.f32.gmra.mxu0 %v3768
      %v4473 = vpop.f32.mrf.mxu0
      %v4474 = vadd.f32 %v4229, %v4473
      %v4475 = vpop.f32.mrf.mxu0
      %4476 = vmatprep.mubr.f32.mxu0 0.0
      %4477 = vmatmul.mubr.f32.gmra.mxu0 %v3771
      %v4478 = vpop.f32.mrf.mxu0
      %v4479 = vadd.f32 %v4234, %v4478
      %v4480 = vpop.f32.mrf.mxu0
      %4481 = vmatprep.mubr.f32.mxu0 0.0
      %4482 = vmatmul.mubr.f32.gmra.mxu0 %v3774
      %v4483 = vpop.f32.mrf.mxu0
      %v4484 = vadd.f32 %v4239, %v4483
      %v4485 = vpop.f32.mrf.mxu0
      %4486 = vmatprep.mubr.f32.mxu0 0.0
      %4487 = vmatmul.mubr.f32.gmra.mxu0 %v3777
      %v4488 = vpop.f32.mrf.mxu0
      %v4489 = vadd.f32 %v4244, %v4488
      %v4490 = vpop.f32.mrf.mxu0
      %4491 = vmatprep.mubr.f32.mxu0 0.0
      %4492 = vmatmul.mubr.f32.gmra.mxu0 %v3780
      %v4493 = vpop.f32.mrf.mxu0
      %v4494 = vadd.f32 %v4249, %v4493
      %v4495 = vpop.f32.mrf.mxu0
      %4496 = vmatprep.mubr.f32.mxu0 0.0
      %4497 = vmatmul.mubr.f32.gmra.mxu0 %v3783
      %v4498 = vpop.f32.mrf.mxu0
      %v4499 = vadd.f32 %v4254, %v4498
      %v4500 = vpop.f32.mrf.mxu0
      %4501 = vmatprep.mubr.f32.mxu0 0.0
      %4502 = vmatmul.mubr.f32.gmra.mxu0 %v3786
      %v4503 = vpop.f32.mrf.mxu0
      %v4504 = vadd.f32 %v4259, %v4503
      %v4505 = vpop.f32.mrf.mxu0
      %4506 = vmatprep.mubr.f32.mxu0 0.0
      %4507 = vmatmul.mubr.f32.gmra.mxu0 %v3789
      %v4508 = vpop.f32.mrf.mxu0
      %v4509 = vadd.f32 %v4264, %v4508
      %v4510 = vpop.f32.mrf.mxu0
      %4511 = vmatprep.mubr.f32.mxu0 0.0
      %4512 = vmatmul.mubr.f32.gmra.mxu0 %v3792
      %v4513 = vpop.f32.mrf.mxu0
      %v4514 = vadd.f32 %v4269, %v4513
      %v4515 = vpop.f32.mrf.mxu0
      %4516 = vmatprep.mubr.f32.mxu0 0.0
      %4517 = vmatmul.mubr.f32.gmra.mxu0 %v3795
      %v4518 = vpop.f32.mrf.mxu0
      %v4519 = vadd.f32 %v4274, %v4518
      %v4520 = vpop.f32.mrf.mxu0
      %4521 = vmatprep.mubr.f32.mxu0 0.0
      %4522 = vmatmul.mubr.f32.gmra.mxu0 %v3798
      %v4523 = vpop.f32.mrf.mxu0
      %v4524 = vadd.f32 %v4279, %v4523
      %v4525 = vpop.f32.mrf.mxu0
      %4526 = vmatprep.mubr.f32.mxu0 0.0
      %4527 = vmatmul.mubr.f32.gmra.mxu0 %v3801
      %v4528 = vpop.f32.mrf.mxu0
      %v4529 = vadd.f32 %v4284, %v4528
      %v4530 = vpop.f32.mrf.mxu0
      %4531 = vmatprep.mubr.f32.mxu0 0.0
      %4532 = vmatmul.mubr.f32.gmra.mxu0 %v3804
      %v4533 = vpop.f32.mrf.mxu0
      %v4534 = vadd.f32 %v4289, %v4533
      %v4535 = vpop.f32.mrf.mxu0
      %4536 = vmatprep.mubr.f32.mxu0 0.0
      %4537 = vmatmul.mubr.f32.gmra.mxu0 %v3807
      %v4538 = vpop.f32.mrf.mxu0
      %v4539 = vadd.f32 %v4294, %v4538
      %v4540 = vpop.f32.mrf.mxu0
      %4541 = vmatprep.mubr.f32.mxu0 0.0
      %4542 = vmatmul.mubr.f32.gmra.mxu0 %v3810
      %v4543 = vpop.f32.mrf.mxu0
      %v4544 = vadd.f32 %v4299, %v4543
      %v4545 = vpop.f32.mrf.mxu0
      %4546 = vdwg.mxu0
      %v4547 = vmax.f32 %v4369, 0.0
      %v4548 = vmax.f32 %v4374, 0.0
      %v4549 = vmax.f32 %v4379, 0.0
      %v4550 = vmax.f32 %v4384, 0.0
      %v4551 = vmax.f32 %v4389, 0.0
      %v4552 = vmax.f32 %v4394, 0.0
      %v4553 = vmax.f32 %v4399, 0.0
      %v4554 = vmax.f32 %v4404, 0.0
      %v4555 = vmax.f32 %v4409, 0.0
      %v4556 = vmax.f32 %v4414, 0.0
      %v4557 = vmax.f32 %v4419, 0.0
      %v4558 = vmax.f32 %v4424, 0.0
      %v4559 = vmax.f32 %v4429, 0.0
      %v4560 = vmax.f32 %v4434, 0.0
      %v4561 = vmax.f32 %v4439, 0.0
      %v4562 = vmax.f32 %v4444, 0.0
      %v4563 = vmax.f32 %v4449, 0.0
      %v4564 = vmax.f32 %v4454, 0.0
      %v4565 = vmax.f32 %v4459, 0.0
      %v4566 = vmax.f32 %v4464, 0.0
      %v4567 = vmax.f32 %v4469, 0.0
      %v4568 = vmax.f32 %v4474, 0.0
      %v4569 = vmax.f32 %v4479, 0.0
      %v4570 = vmax.f32 %v4484, 0.0
      %v4571 = vmax.f32 %v4489, 0.0
      %v4572 = vmax.f32 %v4494, 0.0
      %v4573 = vmax.f32 %v4499, 0.0
      %v4574 = vmax.f32 %v4504, 0.0
      %v4575 = vmax.f32 %v4509, 0.0
      %v4576 = vmax.f32 %v4514, 0.0
      %v4577 = vmax.f32 %v4519, 0.0
      %v4578 = vmax.f32 %v4524, 0.0
      %v4579 = vmax.f32 %v4529, 0.0
      %v4580 = vmax.f32 %v4534, 0.0
      %v4581 = vmax.f32 %v4539, 0.0
      %v4582 = vmax.f32 %v4544, 0.0
      %v4583 = vlaneseq
      %v4584 = vshrl.u32 %v4583, 7
      %v4585 = vadd.s32 %v4584, 8
      %v4586 = vadd.s32 %v4584, 16
      %v4587 = vadd.s32 %v4584, 24
      %v4588 = vadd.s32 %v4584, 32
      %v4589 = vadd.s32 %v4584, 40
      %v4590 = vadd.s32 %v4584, 48
      %v4591 = vadd.s32 %v4584, 56
      %v4592 = vadd.s32 %v4584, 64
      %v4593 = vadd.s32 %v4584, 72
      %v4594 = vadd.s32 %v4584, 80
      %v4595 = vadd.s32 %v4584, 88
      %v4596 = vadd.s32 %v4584, 96
      %v4597 = vadd.s32 %v4584, 104
      %v4598 = vadd.s32 %v4584, 112
      %v4599 = vadd.s32 %v4584, 120
      %v4600 = vadd.s32 %v4584, 128
      %v4601 = vadd.s32 %v4584, 136
      %v4602 = vadd.s32 %v4584, 144
      %v4603 = vadd.s32 %v4584, 152
      %v4604 = vadd.s32 %v4584, 160
      %v4605 = vadd.s32 %v4584, 168
      %v4606 = vadd.s32 %v4584, 176
      %v4607 = vadd.s32 %v4584, 184
      %v4608 = vadd.s32 %v4584, 192
      %v4609 = vadd.s32 %v4584, 200
      %v4610 = vadd.s32 %v4584, 208
      %v4611 = vadd.s32 %v4584, 216
      %v4612 = vadd.s32 %v4584, 224
      %v4613 = vadd.s32 %v4584, 232
      %v4614 = vadd.s32 %v4584, 240
      %v4615 = vadd.s32 %v4584, 248
      %v4616 = vadd.s32 %v4584, 256
      %v4617 = vadd.s32 %v4584, 264
      %v4618 = vadd.s32 %v4584, 272
      %v4619 = vadd.s32 %v4584, 280
      %vm4620 = vcmp.lt.s32.totalorder %v4584, 0
      %v4621 = vsub.s32 0, %v4584
      %v4622 = vsel %vm4620, %v4621, %v4584
      %v4623 = vmul.u32.u64.compose %v4622, 3817748708
      %v4624 = vextract.low.u32 %v4623
      %v4625 = vextract.high.u32 %v4623
      %v4626 = vshrl.u32 %v4625, 4
      %v4627 = vmul.u32 %v4626, 18
      %v4628 = vsub.s32 %v4622, %v4627
      %v4629 = vsub.s32 0, %v4628
      %v4630 = vsel %vm4620, %v4629, %v4628
      %vm4631 = vcmp.lt.s32.totalorder %v4585, 0
      %v4632 = vsub.s32 0, %v4585
      %v4633 = vsel %vm4631, %v4632, %v4585
      %v4634 = vmul.u32.u64.compose %v4633, 3817748708
      %v4635 = vextract.low.u32 %v4634
      %v4636 = vextract.high.u32 %v4634
      %v4637 = vshrl.u32 %v4636, 4
      %v4638 = vmul.u32 %v4637, 18
      %v4639 = vsub.s32 %v4633, %v4638
      %v4640 = vsub.s32 0, %v4639
      %v4641 = vsel %vm4631, %v4640, %v4639
      %vm4642 = vcmp.lt.s32.totalorder %v4586, 0
      %v4643 = vsub.s32 0, %v4586
      %v4644 = vsel %vm4642, %v4643, %v4586
      %v4645 = vmul.u32.u64.compose %v4644, 3817748708
      %v4646 = vextract.low.u32 %v4645
      %v4647 = vextract.high.u32 %v4645
      %v4648 = vshrl.u32 %v4647, 4
      %v4649 = vmul.u32 %v4648, 18
      %v4650 = vsub.s32 %v4644, %v4649
      %v4651 = vsub.s32 0, %v4650
      %v4652 = vsel %vm4642, %v4651, %v4650
      %vm4653 = vcmp.lt.s32.totalorder %v4587, 0
      %v4654 = vsub.s32 0, %v4587
      %v4655 = vsel %vm4653, %v4654, %v4587
      %v4656 = vmul.u32.u64.compose %v4655, 3817748708
      %v4657 = vextract.low.u32 %v4656
      %v4658 = vextract.high.u32 %v4656
      %v4659 = vshrl.u32 %v4658, 4
      %v4660 = vmul.u32 %v4659, 18
      %v4661 = vsub.s32 %v4655, %v4660
      %v4662 = vsub.s32 0, %v4661
      %v4663 = vsel %vm4653, %v4662, %v4661
      %vm4664 = vcmp.lt.s32.totalorder %v4588, 0
      %v4665 = vsub.s32 0, %v4588
      %v4666 = vsel %vm4664, %v4665, %v4588
      %v4667 = vmul.u32.u64.compose %v4666, 3817748708
      %v4668 = vextract.low.u32 %v4667
      %v4669 = vextract.high.u32 %v4667
      %v4670 = vshrl.u32 %v4669, 4
      %v4671 = vmul.u32 %v4670, 18
      %v4672 = vsub.s32 %v4666, %v4671
      %v4673 = vsub.s32 0, %v4672
      %v4674 = vsel %vm4664, %v4673, %v4672
      %vm4675 = vcmp.lt.s32.totalorder %v4589, 0
      %v4676 = vsub.s32 0, %v4589
      %v4677 = vsel %vm4675, %v4676, %v4589
      %v4678 = vmul.u32.u64.compose %v4677, 3817748708
      %v4679 = vextract.low.u32 %v4678
      %v4680 = vextract.high.u32 %v4678
      %v4681 = vshrl.u32 %v4680, 4
      %v4682 = vmul.u32 %v4681, 18
      %v4683 = vsub.s32 %v4677, %v4682
      %v4684 = vsub.s32 0, %v4683
      %v4685 = vsel %vm4675, %v4684, %v4683
      %vm4686 = vcmp.lt.s32.totalorder %v4590, 0
      %v4687 = vsub.s32 0, %v4590
      %v4688 = vsel %vm4686, %v4687, %v4590
      %v4689 = vmul.u32.u64.compose %v4688, 3817748708
      %v4690 = vextract.low.u32 %v4689
      %v4691 = vextract.high.u32 %v4689
      %v4692 = vshrl.u32 %v4691, 4
      %v4693 = vmul.u32 %v4692, 18
      %v4694 = vsub.s32 %v4688, %v4693
      %v4695 = vsub.s32 0, %v4694
      %v4696 = vsel %vm4686, %v4695, %v4694
      %vm4697 = vcmp.lt.s32.totalorder %v4591, 0
      %v4698 = vsub.s32 0, %v4591
      %v4699 = vsel %vm4697, %v4698, %v4591
      %v4700 = vmul.u32.u64.compose %v4699, 3817748708
      %v4701 = vextract.low.u32 %v4700
      %v4702 = vextract.high.u32 %v4700
      %v4703 = vshrl.u32 %v4702, 4
      %v4704 = vmul.u32 %v4703, 18
      %v4705 = vsub.s32 %v4699, %v4704
      %v4706 = vsub.s32 0, %v4705
      %v4707 = vsel %vm4697, %v4706, %v4705
      %vm4708 = vcmp.lt.s32.totalorder %v4592, 0
      %v4709 = vsub.s32 0, %v4592
      %v4710 = vsel %vm4708, %v4709, %v4592
      %v4711 = vmul.u32.u64.compose %v4710, 3817748708
      %v4712 = vextract.low.u32 %v4711
      %v4713 = vextract.high.u32 %v4711
      %v4714 = vshrl.u32 %v4713, 4
      %v4715 = vmul.u32 %v4714, 18
      %v4716 = vsub.s32 %v4710, %v4715
      %v4717 = vsub.s32 0, %v4716
      %v4718 = vsel %vm4708, %v4717, %v4716
      %vm4719 = vcmp.lt.s32.totalorder %v4593, 0
      %v4720 = vsub.s32 0, %v4593
      %v4721 = vsel %vm4719, %v4720, %v4593
      %v4722 = vmul.u32.u64.compose %v4721, 3817748708
      %v4723 = vextract.low.u32 %v4722
      %v4724 = vextract.high.u32 %v4722
      %v4725 = vshrl.u32 %v4724, 4
      %v4726 = vmul.u32 %v4725, 18
      %v4727 = vsub.s32 %v4721, %v4726
      %v4728 = vsub.s32 0, %v4727
      %v4729 = vsel %vm4719, %v4728, %v4727
      %vm4730 = vcmp.lt.s32.totalorder %v4594, 0
      %v4731 = vsub.s32 0, %v4594
      %v4732 = vsel %vm4730, %v4731, %v4594
      %v4733 = vmul.u32.u64.compose %v4732, 3817748708
      %v4734 = vextract.low.u32 %v4733
      %v4735 = vextract.high.u32 %v4733
      %v4736 = vshrl.u32 %v4735, 4
      %v4737 = vmul.u32 %v4736, 18
      %v4738 = vsub.s32 %v4732, %v4737
      %v4739 = vsub.s32 0, %v4738
      %v4740 = vsel %vm4730, %v4739, %v4738
      %vm4741 = vcmp.lt.s32.totalorder %v4595, 0
      %v4742 = vsub.s32 0, %v4595
      %v4743 = vsel %vm4741, %v4742, %v4595
      %v4744 = vmul.u32.u64.compose %v4743, 3817748708
      %v4745 = vextract.low.u32 %v4744
      %v4746 = vextract.high.u32 %v4744
      %v4747 = vshrl.u32 %v4746, 4
      %v4748 = vmul.u32 %v4747, 18
      %v4749 = vsub.s32 %v4743, %v4748
      %v4750 = vsub.s32 0, %v4749
      %v4751 = vsel %vm4741, %v4750, %v4749
      %vm4752 = vcmp.lt.s32.totalorder %v4596, 0
      %v4753 = vsub.s32 0, %v4596
      %v4754 = vsel %vm4752, %v4753, %v4596
      %v4755 = vmul.u32.u64.compose %v4754, 3817748708
      %v4756 = vextract.low.u32 %v4755
      %v4757 = vextract.high.u32 %v4755
      %v4758 = vshrl.u32 %v4757, 4
      %v4759 = vmul.u32 %v4758, 18
      %v4760 = vsub.s32 %v4754, %v4759
      %v4761 = vsub.s32 0, %v4760
      %v4762 = vsel %vm4752, %v4761, %v4760
      %vm4763 = vcmp.lt.s32.totalorder %v4597, 0
      %v4764 = vsub.s32 0, %v4597
      %v4765 = vsel %vm4763, %v4764, %v4597
      %v4766 = vmul.u32.u64.compose %v4765, 3817748708
      %v4767 = vextract.low.u32 %v4766
      %v4768 = vextract.high.u32 %v4766
      %v4769 = vshrl.u32 %v4768, 4
      %v4770 = vmul.u32 %v4769, 18
      %v4771 = vsub.s32 %v4765, %v4770
      %v4772 = vsub.s32 0, %v4771
      %v4773 = vsel %vm4763, %v4772, %v4771
      %vm4774 = vcmp.lt.s32.totalorder %v4598, 0
      %v4775 = vsub.s32 0, %v4598
      %v4776 = vsel %vm4774, %v4775, %v4598
      %v4777 = vmul.u32.u64.compose %v4776, 3817748708
      %v4778 = vextract.low.u32 %v4777
      %v4779 = vextract.high.u32 %v4777
      %v4780 = vshrl.u32 %v4779, 4
      %v4781 = vmul.u32 %v4780, 18
      %v4782 = vsub.s32 %v4776, %v4781
      %v4783 = vsub.s32 0, %v4782
      %v4784 = vsel %vm4774, %v4783, %v4782
      %vm4785 = vcmp.lt.s32.totalorder %v4599, 0
      %v4786 = vsub.s32 0, %v4599
      %v4787 = vsel %vm4785, %v4786, %v4599
      %v4788 = vmul.u32.u64.compose %v4787, 3817748708
      %v4789 = vextract.low.u32 %v4788
      %v4790 = vextract.high.u32 %v4788
      %v4791 = vshrl.u32 %v4790, 4
      %v4792 = vmul.u32 %v4791, 18
      %v4793 = vsub.s32 %v4787, %v4792
      %v4794 = vsub.s32 0, %v4793
      %v4795 = vsel %vm4785, %v4794, %v4793
      %vm4796 = vcmp.lt.s32.totalorder %v4600, 0
      %v4797 = vsub.s32 0, %v4600
      %v4798 = vsel %vm4796, %v4797, %v4600
      %v4799 = vmul.u32.u64.compose %v4798, 3817748708
      %v4800 = vextract.low.u32 %v4799
      %v4801 = vextract.high.u32 %v4799
      %v4802 = vshrl.u32 %v4801, 4
      %v4803 = vmul.u32 %v4802, 18
      %v4804 = vsub.s32 %v4798, %v4803
      %v4805 = vsub.s32 0, %v4804
      %v4806 = vsel %vm4796, %v4805, %v4804
      %vm4807 = vcmp.lt.s32.totalorder %v4601, 0
      %v4808 = vsub.s32 0, %v4601
      %v4809 = vsel %vm4807, %v4808, %v4601
      %v4810 = vmul.u32.u64.compose %v4809, 3817748708
      %v4811 = vextract.low.u32 %v4810
      %v4812 = vextract.high.u32 %v4810
      %v4813 = vshrl.u32 %v4812, 4
      %v4814 = vmul.u32 %v4813, 18
      %v4815 = vsub.s32 %v4809, %v4814
      %v4816 = vsub.s32 0, %v4815
      %v4817 = vsel %vm4807, %v4816, %v4815
      %vm4818 = vcmp.lt.s32.totalorder %v4602, 0
      %v4819 = vsub.s32 0, %v4602
      %v4820 = vsel %vm4818, %v4819, %v4602
      %v4821 = vmul.u32.u64.compose %v4820, 3817748708
      %v4822 = vextract.low.u32 %v4821
      %v4823 = vextract.high.u32 %v4821
      %v4824 = vshrl.u32 %v4823, 4
      %v4825 = vmul.u32 %v4824, 18
      %v4826 = vsub.s32 %v4820, %v4825
      %v4827 = vsub.s32 0, %v4826
      %v4828 = vsel %vm4818, %v4827, %v4826
      %vm4829 = vcmp.lt.s32.totalorder %v4603, 0
      %v4830 = vsub.s32 0, %v4603
      %v4831 = vsel %vm4829, %v4830, %v4603
      %v4832 = vmul.u32.u64.compose %v4831, 3817748708
      %v4833 = vextract.low.u32 %v4832
      %v4834 = vextract.high.u32 %v4832
      %v4835 = vshrl.u32 %v4834, 4
      %v4836 = vmul.u32 %v4835, 18
      %v4837 = vsub.s32 %v4831, %v4836
      %v4838 = vsub.s32 0, %v4837
      %v4839 = vsel %vm4829, %v4838, %v4837
      %vm4840 = vcmp.lt.s32.totalorder %v4604, 0
      %v4841 = vsub.s32 0, %v4604
      %v4842 = vsel %vm4840, %v4841, %v4604
      %v4843 = vmul.u32.u64.compose %v4842, 3817748708
      %v4844 = vextract.low.u32 %v4843
      %v4845 = vextract.high.u32 %v4843
      %v4846 = vshrl.u32 %v4845, 4
      %v4847 = vmul.u32 %v4846, 18
      %v4848 = vsub.s32 %v4842, %v4847
      %v4849 = vsub.s32 0, %v4848
      %v4850 = vsel %vm4840, %v4849, %v4848
      %vm4851 = vcmp.lt.s32.totalorder %v4605, 0
      %v4852 = vsub.s32 0, %v4605
      %v4853 = vsel %vm4851, %v4852, %v4605
      %v4854 = vmul.u32.u64.compose %v4853, 3817748708
      %v4855 = vextract.low.u32 %v4854
      %v4856 = vextract.high.u32 %v4854
      %v4857 = vshrl.u32 %v4856, 4
      %v4858 = vmul.u32 %v4857, 18
      %v4859 = vsub.s32 %v4853, %v4858
      %v4860 = vsub.s32 0, %v4859
      %v4861 = vsel %vm4851, %v4860, %v4859
      %vm4862 = vcmp.lt.s32.totalorder %v4606, 0
      %v4863 = vsub.s32 0, %v4606
      %v4864 = vsel %vm4862, %v4863, %v4606
      %v4865 = vmul.u32.u64.compose %v4864, 3817748708
      %v4866 = vextract.low.u32 %v4865
      %v4867 = vextract.high.u32 %v4865
      %v4868 = vshrl.u32 %v4867, 4
      %v4869 = vmul.u32 %v4868, 18
      %v4870 = vsub.s32 %v4864, %v4869
      %v4871 = vsub.s32 0, %v4870
      %v4872 = vsel %vm4862, %v4871, %v4870
      %vm4873 = vcmp.lt.s32.totalorder %v4607, 0
      %v4874 = vsub.s32 0, %v4607
      %v4875 = vsel %vm4873, %v4874, %v4607
      %v4876 = vmul.u32.u64.compose %v4875, 3817748708
      %v4877 = vextract.low.u32 %v4876
      %v4878 = vextract.high.u32 %v4876
      %v4879 = vshrl.u32 %v4878, 4
      %v4880 = vmul.u32 %v4879, 18
      %v4881 = vsub.s32 %v4875, %v4880
      %v4882 = vsub.s32 0, %v4881
      %v4883 = vsel %vm4873, %v4882, %v4881
      %vm4884 = vcmp.lt.s32.totalorder %v4608, 0
      %v4885 = vsub.s32 0, %v4608
      %v4886 = vsel %vm4884, %v4885, %v4608
      %v4887 = vmul.u32.u64.compose %v4886, 3817748708
      %v4888 = vextract.low.u32 %v4887
      %v4889 = vextract.high.u32 %v4887
      %v4890 = vshrl.u32 %v4889, 4
      %v4891 = vmul.u32 %v4890, 18
      %v4892 = vsub.s32 %v4886, %v4891
      %v4893 = vsub.s32 0, %v4892
      %v4894 = vsel %vm4884, %v4893, %v4892
      %vm4895 = vcmp.lt.s32.totalorder %v4609, 0
      %v4896 = vsub.s32 0, %v4609
      %v4897 = vsel %vm4895, %v4896, %v4609
      %v4898 = vmul.u32.u64.compose %v4897, 3817748708
      %v4899 = vextract.low.u32 %v4898
      %v4900 = vextract.high.u32 %v4898
      %v4901 = vshrl.u32 %v4900, 4
      %v4902 = vmul.u32 %v4901, 18
      %v4903 = vsub.s32 %v4897, %v4902
      %v4904 = vsub.s32 0, %v4903
      %v4905 = vsel %vm4895, %v4904, %v4903
      %vm4906 = vcmp.lt.s32.totalorder %v4610, 0
      %v4907 = vsub.s32 0, %v4610
      %v4908 = vsel %vm4906, %v4907, %v4610
      %v4909 = vmul.u32.u64.compose %v4908, 3817748708
      %v4910 = vextract.low.u32 %v4909
      %v4911 = vextract.high.u32 %v4909
      %v4912 = vshrl.u32 %v4911, 4
      %v4913 = vmul.u32 %v4912, 18
      %v4914 = vsub.s32 %v4908, %v4913
      %v4915 = vsub.s32 0, %v4914
      %v4916 = vsel %vm4906, %v4915, %v4914
      %vm4917 = vcmp.lt.s32.totalorder %v4611, 0
      %v4918 = vsub.s32 0, %v4611
      %v4919 = vsel %vm4917, %v4918, %v4611
      %v4920 = vmul.u32.u64.compose %v4919, 3817748708
      %v4921 = vextract.low.u32 %v4920
      %v4922 = vextract.high.u32 %v4920
      %v4923 = vshrl.u32 %v4922, 4
      %v4924 = vmul.u32 %v4923, 18
      %v4925 = vsub.s32 %v4919, %v4924
      %v4926 = vsub.s32 0, %v4925
      %v4927 = vsel %vm4917, %v4926, %v4925
      %vm4928 = vcmp.lt.s32.totalorder %v4612, 0
      %v4929 = vsub.s32 0, %v4612
      %v4930 = vsel %vm4928, %v4929, %v4612
      %v4931 = vmul.u32.u64.compose %v4930, 3817748708
      %v4932 = vextract.low.u32 %v4931
      %v4933 = vextract.high.u32 %v4931
      %v4934 = vshrl.u32 %v4933, 4
      %v4935 = vmul.u32 %v4934, 18
      %v4936 = vsub.s32 %v4930, %v4935
      %v4937 = vsub.s32 0, %v4936
      %v4938 = vsel %vm4928, %v4937, %v4936
      %vm4939 = vcmp.lt.s32.totalorder %v4613, 0
      %v4940 = vsub.s32 0, %v4613
      %v4941 = vsel %vm4939, %v4940, %v4613
      %v4942 = vmul.u32.u64.compose %v4941, 3817748708
      %v4943 = vextract.low.u32 %v4942
      %v4944 = vextract.high.u32 %v4942
      %v4945 = vshrl.u32 %v4944, 4
      %v4946 = vmul.u32 %v4945, 18
      %v4947 = vsub.s32 %v4941, %v4946
      %v4948 = vsub.s32 0, %v4947
      %v4949 = vsel %vm4939, %v4948, %v4947
      %vm4950 = vcmp.lt.s32.totalorder %v4614, 0
      %v4951 = vsub.s32 0, %v4614
      %v4952 = vsel %vm4950, %v4951, %v4614
      %v4953 = vmul.u32.u64.compose %v4952, 3817748708
      %v4954 = vextract.low.u32 %v4953
      %v4955 = vextract.high.u32 %v4953
      %v4956 = vshrl.u32 %v4955, 4
      %v4957 = vmul.u32 %v4956, 18
      %v4958 = vsub.s32 %v4952, %v4957
      %v4959 = vsub.s32 0, %v4958
      %v4960 = vsel %vm4950, %v4959, %v4958
      %vm4961 = vcmp.lt.s32.totalorder %v4615, 0
      %v4962 = vsub.s32 0, %v4615
      %v4963 = vsel %vm4961, %v4962, %v4615
      %v4964 = vmul.u32.u64.compose %v4963, 3817748708
      %v4965 = vextract.low.u32 %v4964
      %v4966 = vextract.high.u32 %v4964
      %v4967 = vshrl.u32 %v4966, 4
      %v4968 = vmul.u32 %v4967, 18
      %v4969 = vsub.s32 %v4963, %v4968
      %v4970 = vsub.s32 0, %v4969
      %v4971 = vsel %vm4961, %v4970, %v4969
      %vm4972 = vcmp.lt.s32.totalorder %v4616, 0
      %v4973 = vsub.s32 0, %v4616
      %v4974 = vsel %vm4972, %v4973, %v4616
      %v4975 = vmul.u32.u64.compose %v4974, 3817748708
      %v4976 = vextract.low.u32 %v4975
      %v4977 = vextract.high.u32 %v4975
      %v4978 = vshrl.u32 %v4977, 4
      %v4979 = vmul.u32 %v4978, 18
      %v4980 = vsub.s32 %v4974, %v4979
      %v4981 = vsub.s32 0, %v4980
      %v4982 = vsel %vm4972, %v4981, %v4980
      %vm4983 = vcmp.lt.s32.totalorder %v4617, 0
      %v4984 = vsub.s32 0, %v4617
      %v4985 = vsel %vm4983, %v4984, %v4617
      %v4986 = vmul.u32.u64.compose %v4985, 3817748708
      %v4987 = vextract.low.u32 %v4986
      %v4988 = vextract.high.u32 %v4986
      %v4989 = vshrl.u32 %v4988, 4
      %v4990 = vmul.u32 %v4989, 18
      %v4991 = vsub.s32 %v4985, %v4990
      %v4992 = vsub.s32 0, %v4991
      %v4993 = vsel %vm4983, %v4992, %v4991
      %vm4994 = vcmp.lt.s32.totalorder %v4618, 0
      %v4995 = vsub.s32 0, %v4618
      %v4996 = vsel %vm4994, %v4995, %v4618
      %v4997 = vmul.u32.u64.compose %v4996, 3817748708
      %v4998 = vextract.low.u32 %v4997
      %v4999 = vextract.high.u32 %v4997
      %v5000 = vshrl.u32 %v4999, 4
      %v5001 = vmul.u32 %v5000, 18
      %v5002 = vsub.s32 %v4996, %v5001
      %v5003 = vsub.s32 0, %v5002
      %v5004 = vsel %vm4994, %v5003, %v5002
      %vm5005 = vcmp.lt.s32.totalorder %v4619, 0
      %v5006 = vsub.s32 0, %v4619
      %v5007 = vsel %vm5005, %v5006, %v4619
      %v5008 = vmul.u32.u64.compose %v5007, 3817748708
      %v5009 = vextract.low.u32 %v5008
      %v5010 = vextract.high.u32 %v5008
      %v5011 = vshrl.u32 %v5010, 4
      %v5012 = vmul.u32 %v5011, 18
      %v5013 = vsub.s32 %v5007, %v5012
      %v5014 = vsub.s32 0, %v5013
      %v5015 = vsel %vm5005, %v5014, %v5013
      %vm5016 = vcmp.ne.s32.totalorder %v4630, 0
      %vm5017 = vcmp.ne.s32.totalorder %v4641, 0
      %vm5018 = vcmp.ne.s32.totalorder %v4652, 0
      %vm5019 = vcmp.ne.s32.totalorder %v4663, 0
      %vm5020 = vcmp.ne.s32.totalorder %v4674, 0
      %vm5021 = vcmp.ne.s32.totalorder %v4685, 0
      %vm5022 = vcmp.ne.s32.totalorder %v4696, 0
      %vm5023 = vcmp.ne.s32.totalorder %v4707, 0
      %vm5024 = vcmp.ne.s32.totalorder %v4718, 0
      %vm5025 = vcmp.ne.s32.totalorder %v4729, 0
      %vm5026 = vcmp.ne.s32.totalorder %v4740, 0
      %vm5027 = vcmp.ne.s32.totalorder %v4751, 0
      %vm5028 = vcmp.ne.s32.totalorder %v4762, 0
      %vm5029 = vcmp.ne.s32.totalorder %v4773, 0
      %vm5030 = vcmp.ne.s32.totalorder %v4784, 0
      %vm5031 = vcmp.ne.s32.totalorder %v4795, 0
      %vm5032 = vcmp.ne.s32.totalorder %v4806, 0
      %vm5033 = vcmp.ne.s32.totalorder %v4817, 0
      %vm5034 = vcmp.ne.s32.totalorder %v4828, 0
      %vm5035 = vcmp.ne.s32.totalorder %v4839, 0
      %vm5036 = vcmp.ne.s32.totalorder %v4850, 0
      %vm5037 = vcmp.ne.s32.totalorder %v4861, 0
      %vm5038 = vcmp.ne.s32.totalorder %v4872, 0
      %vm5039 = vcmp.ne.s32.totalorder %v4883, 0
      %vm5040 = vcmp.ne.s32.totalorder %v4894, 0
      %vm5041 = vcmp.ne.s32.totalorder %v4905, 0
      %vm5042 = vcmp.ne.s32.totalorder %v4916, 0
      %vm5043 = vcmp.ne.s32.totalorder %v4927, 0
      %vm5044 = vcmp.ne.s32.totalorder %v4938, 0
      %vm5045 = vcmp.ne.s32.totalorder %v4949, 0
      %vm5046 = vcmp.ne.s32.totalorder %v4960, 0
      %vm5047 = vcmp.ne.s32.totalorder %v4971, 0
      %vm5048 = vcmp.ne.s32.totalorder %v4982, 0
      %vm5049 = vcmp.ne.s32.totalorder %v4993, 0
      %vm5050 = vcmp.ne.s32.totalorder %v5004, 0
      %vm5051 = vcmp.ne.s32.totalorder %v5015, 0
      %vm5052 = vcmp.lt.s32.totalorder %v4630, 0
      %vm5053 = vcmp.lt.s32.totalorder %v4641, 0
      %vm5054 = vcmp.lt.s32.totalorder %v4652, 0
      %vm5055 = vcmp.lt.s32.totalorder %v4663, 0
      %vm5056 = vcmp.lt.s32.totalorder %v4674, 0
      %vm5057 = vcmp.lt.s32.totalorder %v4685, 0
      %vm5058 = vcmp.lt.s32.totalorder %v4696, 0
      %vm5059 = vcmp.lt.s32.totalorder %v4707, 0
      %vm5060 = vcmp.lt.s32.totalorder %v4718, 0
      %vm5061 = vcmp.lt.s32.totalorder %v4729, 0
      %vm5062 = vcmp.lt.s32.totalorder %v4740, 0
      %vm5063 = vcmp.lt.s32.totalorder %v4751, 0
      %vm5064 = vcmp.lt.s32.totalorder %v4762, 0
      %vm5065 = vcmp.lt.s32.totalorder %v4773, 0
      %vm5066 = vcmp.lt.s32.totalorder %v4784, 0
      %vm5067 = vcmp.lt.s32.totalorder %v4795, 0
      %vm5068 = vcmp.lt.s32.totalorder %v4806, 0
      %vm5069 = vcmp.lt.s32.totalorder %v4817, 0
      %vm5070 = vcmp.lt.s32.totalorder %v4828, 0
      %vm5071 = vcmp.lt.s32.totalorder %v4839, 0
      %vm5072 = vcmp.lt.s32.totalorder %v4850, 0
      %vm5073 = vcmp.lt.s32.totalorder %v4861, 0
      %vm5074 = vcmp.lt.s32.totalorder %v4872, 0
      %vm5075 = vcmp.lt.s32.totalorder %v4883, 0
      %vm5076 = vcmp.lt.s32.totalorder %v4894, 0
      %vm5077 = vcmp.lt.s32.totalorder %v4905, 0
      %vm5078 = vcmp.lt.s32.totalorder %v4916, 0
      %vm5079 = vcmp.lt.s32.totalorder %v4927, 0
      %vm5080 = vcmp.lt.s32.totalorder %v4938, 0
      %vm5081 = vcmp.lt.s32.totalorder %v4949, 0
      %vm5082 = vcmp.lt.s32.totalorder %v4960, 0
      %vm5083 = vcmp.lt.s32.totalorder %v4971, 0
      %vm5084 = vcmp.lt.s32.totalorder %v4982, 0
      %vm5085 = vcmp.lt.s32.totalorder %v4993, 0
      %vm5086 = vcmp.lt.s32.totalorder %v5004, 0
      %vm5087 = vcmp.lt.s32.totalorder %v5015, 0
      %vm5088 = vmand %vm5052, %vm5016
      %vm5089 = vmand %vm5053, %vm5017
      %vm5090 = vmand %vm5054, %vm5018
      %vm5091 = vmand %vm5055, %vm5019
      %vm5092 = vmand %vm5056, %vm5020
      %vm5093 = vmand %vm5057, %vm5021
      %vm5094 = vmand %vm5058, %vm5022
      %vm5095 = vmand %vm5059, %vm5023
      %vm5096 = vmand %vm5060, %vm5024
      %vm5097 = vmand %vm5061, %vm5025
      %vm5098 = vmand %vm5062, %vm5026
      %vm5099 = vmand %vm5063, %vm5027
      %vm5100 = vmand %vm5064, %vm5028
      %vm5101 = vmand %vm5065, %vm5029
      %vm5102 = vmand %vm5066, %vm5030
      %vm5103 = vmand %vm5067, %vm5031
      %vm5104 = vmand %vm5068, %vm5032
      %vm5105 = vmand %vm5069, %vm5033
      %vm5106 = vmand %vm5070, %vm5034
      %vm5107 = vmand %vm5071, %vm5035
      %vm5108 = vmand %vm5072, %vm5036
      %vm5109 = vmand %vm5073, %vm5037
      %vm5110 = vmand %vm5074, %vm5038
      %vm5111 = vmand %vm5075, %vm5039
      %vm5112 = vmand %vm5076, %vm5040
      %vm5113 = vmand %vm5077, %vm5041
      %vm5114 = vmand %vm5078, %vm5042
      %vm5115 = vmand %vm5079, %vm5043
      %vm5116 = vmand %vm5080, %vm5044
      %vm5117 = vmand %vm5081, %vm5045
      %vm5118 = vmand %vm5082, %vm5046
      %vm5119 = vmand %vm5083, %vm5047
      %vm5120 = vmand %vm5084, %vm5048
      %vm5121 = vmand %vm5085, %vm5049
      %vm5122 = vmand %vm5086, %vm5050
      %vm5123 = vmand %vm5087, %vm5051
      %v5124 = vadd.s32 %v4630, 18
      %v5125 = vadd.s32 %v4641, 18
      %v5126 = vadd.s32 %v4652, 18
      %v5127 = vadd.s32 %v4663, 18
      %v5128 = vadd.s32 %v4674, 18
      %v5129 = vadd.s32 %v4685, 18
      %v5130 = vadd.s32 %v4696, 18
      %v5131 = vadd.s32 %v4707, 18
      %v5132 = vadd.s32 %v4718, 18
      %v5133 = vadd.s32 %v4729, 18
      %v5134 = vadd.s32 %v4740, 18
      %v5135 = vadd.s32 %v4751, 18
      %v5136 = vadd.s32 %v4762, 18
      %v5137 = vadd.s32 %v4773, 18
      %v5138 = vadd.s32 %v4784, 18
      %v5139 = vadd.s32 %v4795, 18
      %v5140 = vadd.s32 %v4806, 18
      %v5141 = vadd.s32 %v4817, 18
      %v5142 = vadd.s32 %v4828, 18
      %v5143 = vadd.s32 %v4839, 18
      %v5144 = vadd.s32 %v4850, 18
      %v5145 = vadd.s32 %v4861, 18
      %v5146 = vadd.s32 %v4872, 18
      %v5147 = vadd.s32 %v4883, 18
      %v5148 = vadd.s32 %v4894, 18
      %v5149 = vadd.s32 %v4905, 18
      %v5150 = vadd.s32 %v4916, 18
      %v5151 = vadd.s32 %v4927, 18
      %v5152 = vadd.s32 %v4938, 18
      %v5153 = vadd.s32 %v4949, 18
      %v5154 = vadd.s32 %v4960, 18
      %v5155 = vadd.s32 %v4971, 18
      %v5156 = vadd.s32 %v4982, 18
      %v5157 = vadd.s32 %v4993, 18
      %v5158 = vadd.s32 %v5004, 18
      %v5159 = vadd.s32 %v5015, 18
      %v5160 = vsel %vm5088, %v5124, %v4630
      %v5161 = vsel %vm5089, %v5125, %v4641
      %v5162 = vsel %vm5090, %v5126, %v4652
      %v5163 = vsel %vm5091, %v5127, %v4663
      %v5164 = vsel %vm5092, %v5128, %v4674
      %v5165 = vsel %vm5093, %v5129, %v4685
      %v5166 = vsel %vm5094, %v5130, %v4696
      %v5167 = vsel %vm5095, %v5131, %v4707
      %v5168 = vsel %vm5096, %v5132, %v4718
      %v5169 = vsel %vm5097, %v5133, %v4729
      %v5170 = vsel %vm5098, %v5134, %v4740
      %v5171 = vsel %vm5099, %v5135, %v4751
      %v5172 = vsel %vm5100, %v5136, %v4762
      %v5173 = vsel %vm5101, %v5137, %v4773
      %v5174 = vsel %vm5102, %v5138, %v4784
      %v5175 = vsel %vm5103, %v5139, %v4795
      %v5176 = vsel %vm5104, %v5140, %v4806
      %v5177 = vsel %vm5105, %v5141, %v4817
      %v5178 = vsel %vm5106, %v5142, %v4828
      %v5179 = vsel %vm5107, %v5143, %v4839
      %v5180 = vsel %vm5108, %v5144, %v4850
      %v5181 = vsel %vm5109, %v5145, %v4861
      %v5182 = vsel %vm5110, %v5146, %v4872
      %v5183 = vsel %vm5111, %v5147, %v4883
      %v5184 = vsel %vm5112, %v5148, %v4894
      %v5185 = vsel %vm5113, %v5149, %v4905
      %v5186 = vsel %vm5114, %v5150, %v4916
      %v5187 = vsel %vm5115, %v5151, %v4927
      %v5188 = vsel %vm5116, %v5152, %v4938
      %v5189 = vsel %vm5117, %v5153, %v4949
      %v5190 = vsel %vm5118, %v5154, %v4960
      %v5191 = vsel %vm5119, %v5155, %v4971
      %v5192 = vsel %vm5120, %v5156, %v4982
      %v5193 = vsel %vm5121, %v5157, %v4993
      %v5194 = vsel %vm5122, %v5158, %v5004
      %v5195 = vsel %vm5123, %v5159, %v5015
      %vm5196 = vcmp.ge.s32.totalorder %v5160, 1
      %vm5197 = vcmp.ge.s32.totalorder %v5161, 1
      %vm5198 = vcmp.ge.s32.totalorder %v5162, 1
      %vm5199 = vcmp.ge.s32.totalorder %v5163, 1
      %vm5200 = vcmp.ge.s32.totalorder %v5164, 1
      %vm5201 = vcmp.ge.s32.totalorder %v5165, 1
      %vm5202 = vcmp.ge.s32.totalorder %v5166, 1
      %vm5203 = vcmp.ge.s32.totalorder %v5167, 1
      %vm5204 = vcmp.ge.s32.totalorder %v5168, 1
      %vm5205 = vcmp.ge.s32.totalorder %v5169, 1
      %vm5206 = vcmp.ge.s32.totalorder %v5170, 1
      %vm5207 = vcmp.ge.s32.totalorder %v5171, 1
      %vm5208 = vcmp.ge.s32.totalorder %v5172, 1
      %vm5209 = vcmp.ge.s32.totalorder %v5173, 1
      %vm5210 = vcmp.ge.s32.totalorder %v5174, 1
      %vm5211 = vcmp.ge.s32.totalorder %v5175, 1
      %vm5212 = vcmp.ge.s32.totalorder %v5176, 1
      %vm5213 = vcmp.ge.s32.totalorder %v5177, 1
      %vm5214 = vcmp.ge.s32.totalorder %v5178, 1
      %vm5215 = vcmp.ge.s32.totalorder %v5179, 1
      %vm5216 = vcmp.ge.s32.totalorder %v5180, 1
      %vm5217 = vcmp.ge.s32.totalorder %v5181, 1
      %vm5218 = vcmp.ge.s32.totalorder %v5182, 1
      %vm5219 = vcmp.ge.s32.totalorder %v5183, 1
      %vm5220 = vcmp.ge.s32.totalorder %v5184, 1
      %vm5221 = vcmp.ge.s32.totalorder %v5185, 1
      %vm5222 = vcmp.ge.s32.totalorder %v5186, 1
      %vm5223 = vcmp.ge.s32.totalorder %v5187, 1
      %vm5224 = vcmp.ge.s32.totalorder %v5188, 1
      %vm5225 = vcmp.ge.s32.totalorder %v5189, 1
      %vm5226 = vcmp.ge.s32.totalorder %v5190, 1
      %vm5227 = vcmp.ge.s32.totalorder %v5191, 1
      %vm5228 = vcmp.ge.s32.totalorder %v5192, 1
      %vm5229 = vcmp.ge.s32.totalorder %v5193, 1
      %vm5230 = vcmp.ge.s32.totalorder %v5194, 1
      %vm5231 = vcmp.ge.s32.totalorder %v5195, 1
      %vm5232 = vcmp.le.s32.totalorder %v5160, 16
      %vm5233 = vcmp.le.s32.totalorder %v5161, 16
      %vm5234 = vcmp.le.s32.totalorder %v5162, 16
      %vm5235 = vcmp.le.s32.totalorder %v5163, 16
      %vm5236 = vcmp.le.s32.totalorder %v5164, 16
      %vm5237 = vcmp.le.s32.totalorder %v5165, 16
      %vm5238 = vcmp.le.s32.totalorder %v5166, 16
      %vm5239 = vcmp.le.s32.totalorder %v5167, 16
      %vm5240 = vcmp.le.s32.totalorder %v5168, 16
      %vm5241 = vcmp.le.s32.totalorder %v5169, 16
      %vm5242 = vcmp.le.s32.totalorder %v5170, 16
      %vm5243 = vcmp.le.s32.totalorder %v5171, 16
      %vm5244 = vcmp.le.s32.totalorder %v5172, 16
      %vm5245 = vcmp.le.s32.totalorder %v5173, 16
      %vm5246 = vcmp.le.s32.totalorder %v5174, 16
      %vm5247 = vcmp.le.s32.totalorder %v5175, 16
      %vm5248 = vcmp.le.s32.totalorder %v5176, 16
      %vm5249 = vcmp.le.s32.totalorder %v5177, 16
      %vm5250 = vcmp.le.s32.totalorder %v5178, 16
      %vm5251 = vcmp.le.s32.totalorder %v5179, 16
      %vm5252 = vcmp.le.s32.totalorder %v5180, 16
      %vm5253 = vcmp.le.s32.totalorder %v5181, 16
      %vm5254 = vcmp.le.s32.totalorder %v5182, 16
      %vm5255 = vcmp.le.s32.totalorder %v5183, 16
      %vm5256 = vcmp.le.s32.totalorder %v5184, 16
      %vm5257 = vcmp.le.s32.totalorder %v5185, 16
      %vm5258 = vcmp.le.s32.totalorder %v5186, 16
      %vm5259 = vcmp.le.s32.totalorder %v5187, 16
      %vm5260 = vcmp.le.s32.totalorder %v5188, 16
      %vm5261 = vcmp.le.s32.totalorder %v5189, 16
      %vm5262 = vcmp.le.s32.totalorder %v5190, 16
      %vm5263 = vcmp.le.s32.totalorder %v5191, 16
      %vm5264 = vcmp.le.s32.totalorder %v5192, 16
      %vm5265 = vcmp.le.s32.totalorder %v5193, 16
      %vm5266 = vcmp.le.s32.totalorder %v5194, 16
      %vm5267 = vcmp.le.s32.totalorder %v5195, 16
      %vm5268 = vmand %vm5196, %vm5232
      %vm5269 = vmand %vm5197, %vm5233
      %vm5270 = vmand %vm5198, %vm5234
      %vm5271 = vmand %vm5199, %vm5235
      %vm5272 = vmand %vm5200, %vm5236
      %vm5273 = vmand %vm5201, %vm5237
      %vm5274 = vmand %vm5202, %vm5238
      %vm5275 = vmand %vm5203, %vm5239
      %vm5276 = vmand %vm5204, %vm5240
      %vm5277 = vmand %vm5205, %vm5241
      %vm5278 = vmand %vm5206, %vm5242
      %vm5279 = vmand %vm5207, %vm5243
      %vm5280 = vmand %vm5208, %vm5244
      %vm5281 = vmand %vm5209, %vm5245
      %vm5282 = vmand %vm5210, %vm5246
      %vm5283 = vmand %vm5211, %vm5247
      %vm5284 = vmand %vm5212, %vm5248
      %vm5285 = vmand %vm5213, %vm5249
      %vm5286 = vmand %vm5214, %vm5250
      %vm5287 = vmand %vm5215, %vm5251
      %vm5288 = vmand %vm5216, %vm5252
      %vm5289 = vmand %vm5217, %vm5253
      %vm5290 = vmand %vm5218, %vm5254
      %vm5291 = vmand %vm5219, %vm5255
      %vm5292 = vmand %vm5220, %vm5256
      %vm5293 = vmand %vm5221, %vm5257
      %vm5294 = vmand %vm5222, %vm5258
      %vm5295 = vmand %vm5223, %vm5259
      %vm5296 = vmand %vm5224, %vm5260
      %vm5297 = vmand %vm5225, %vm5261
      %vm5298 = vmand %vm5226, %vm5262
      %vm5299 = vmand %vm5227, %vm5263
      %vm5300 = vmand %vm5228, %vm5264
      %vm5301 = vmand %vm5229, %vm5265
      %vm5302 = vmand %vm5230, %vm5266
      %vm5303 = vmand %vm5231, %vm5267
      %v5304 = vsel %vm5268, 1, 0
      %v5305 = vsel %vm5269, 1, 0
      %v5306 = vsel %vm5270, 1, 0
      %v5307 = vsel %vm5271, 1, 0
      %v5308 = vsel %vm5272, 1, 0
      %v5309 = vsel %vm5273, 1, 0
      %v5310 = vsel %vm5274, 1, 0
      %v5311 = vsel %vm5275, 1, 0
      %v5312 = vsel %vm5276, 1, 0
      %v5313 = vsel %vm5277, 1, 0
      %v5314 = vsel %vm5278, 1, 0
      %v5315 = vsel %vm5279, 1, 0
      %v5316 = vsel %vm5280, 1, 0
      %v5317 = vsel %vm5281, 1, 0
      %v5318 = vsel %vm5282, 1, 0
      %v5319 = vsel %vm5283, 1, 0
      %v5320 = vsel %vm5284, 1, 0
      %v5321 = vsel %vm5285, 1, 0
      %v5322 = vsel %vm5286, 1, 0
      %v5323 = vsel %vm5287, 1, 0
      %v5324 = vsel %vm5288, 1, 0
      %v5325 = vsel %vm5289, 1, 0
      %v5326 = vsel %vm5290, 1, 0
      %v5327 = vsel %vm5291, 1, 0
      %v5328 = vsel %vm5292, 1, 0
      %v5329 = vsel %vm5293, 1, 0
      %v5330 = vsel %vm5294, 1, 0
      %v5331 = vsel %vm5295, 1, 0
      %v5332 = vsel %vm5296, 1, 0
      %v5333 = vsel %vm5297, 1, 0
      %v5334 = vsel %vm5298, 1, 0
      %v5335 = vsel %vm5299, 1, 0
      %v5336 = vsel %vm5300, 1, 0
      %v5337 = vsel %vm5301, 1, 0
      %v5338 = vsel %vm5302, 1, 0
      %v5339 = vsel %vm5303, 1, 0
      %vm5340 = vcmp.eq.s32.totalorder %v5304, 1
      %vm5341 = vcmp.eq.s32.totalorder %v5305, 1
      %vm5342 = vcmp.eq.s32.totalorder %v5306, 1
      %vm5343 = vcmp.eq.s32.totalorder %v5307, 1
      %vm5344 = vcmp.eq.s32.totalorder %v5308, 1
      %vm5345 = vcmp.eq.s32.totalorder %v5309, 1
      %vm5346 = vcmp.eq.s32.totalorder %v5310, 1
      %vm5347 = vcmp.eq.s32.totalorder %v5311, 1
      %vm5348 = vcmp.eq.s32.totalorder %v5312, 1
      %vm5349 = vcmp.eq.s32.totalorder %v5313, 1
      %vm5350 = vcmp.eq.s32.totalorder %v5314, 1
      %vm5351 = vcmp.eq.s32.totalorder %v5315, 1
      %vm5352 = vcmp.eq.s32.totalorder %v5316, 1
      %vm5353 = vcmp.eq.s32.totalorder %v5317, 1
      %vm5354 = vcmp.eq.s32.totalorder %v5318, 1
      %vm5355 = vcmp.eq.s32.totalorder %v5319, 1
      %vm5356 = vcmp.eq.s32.totalorder %v5320, 1
      %vm5357 = vcmp.eq.s32.totalorder %v5321, 1
      %vm5358 = vcmp.eq.s32.totalorder %v5322, 1
      %vm5359 = vcmp.eq.s32.totalorder %v5323, 1
      %vm5360 = vcmp.eq.s32.totalorder %v5324, 1
      %vm5361 = vcmp.eq.s32.totalorder %v5325, 1
      %vm5362 = vcmp.eq.s32.totalorder %v5326, 1
      %vm5363 = vcmp.eq.s32.totalorder %v5327, 1
      %vm5364 = vcmp.eq.s32.totalorder %v5328, 1
      %vm5365 = vcmp.eq.s32.totalorder %v5329, 1
      %vm5366 = vcmp.eq.s32.totalorder %v5330, 1
      %vm5367 = vcmp.eq.s32.totalorder %v5331, 1
      %vm5368 = vcmp.eq.s32.totalorder %v5332, 1
      %vm5369 = vcmp.eq.s32.totalorder %v5333, 1
      %vm5370 = vcmp.eq.s32.totalorder %v5334, 1
      %vm5371 = vcmp.eq.s32.totalorder %v5335, 1
      %vm5372 = vcmp.eq.s32.totalorder %v5336, 1
      %vm5373 = vcmp.eq.s32.totalorder %v5337, 1
      %vm5374 = vcmp.eq.s32.totalorder %v5338, 1
      %vm5375 = vcmp.eq.s32.totalorder %v5339, 1
      %v5376 = vsel %vm5340, %v4547, 0.0
      %v5377 = vsel %vm5341, %v4548, 0.0
      %v5378 = vsel %vm5342, %v4549, 0.0
      %v5379 = vsel %vm5343, %v4550, 0.0
      %v5380 = vsel %vm5344, %v4551, 0.0
      %v5381 = vsel %vm5345, %v4552, 0.0
      %v5382 = vsel %vm5346, %v4553, 0.0
      %v5383 = vsel %vm5347, %v4554, 0.0
      %v5384 = vsel %vm5348, %v4555, 0.0
      %v5385 = vsel %vm5349, %v4556, 0.0
      %v5386 = vsel %vm5350, %v4557, 0.0
      %v5387 = vsel %vm5351, %v4558, 0.0
      %v5388 = vsel %vm5352, %v4559, 0.0
      %v5389 = vsel %vm5353, %v4560, 0.0
      %v5390 = vsel %vm5354, %v4561, 0.0
      %v5391 = vsel %vm5355, %v4562, 0.0
      %v5392 = vsel %vm5356, %v4563, 0.0
      %v5393 = vsel %vm5357, %v4564, 0.0
      %v5394 = vsel %vm5358, %v4565, 0.0
      %v5395 = vsel %vm5359, %v4566, 0.0
      %v5396 = vsel %vm5360, %v4567, 0.0
      %v5397 = vsel %vm5361, %v4568, 0.0
      %v5398 = vsel %vm5362, %v4569, 0.0
      %v5399 = vsel %vm5363, %v4570, 0.0
      %v5400 = vsel %vm5364, %v4571, 0.0
      %v5401 = vsel %vm5365, %v4572, 0.0
      %v5402 = vsel %vm5366, %v4573, 0.0
      %v5403 = vsel %vm5367, %v4574, 0.0
      %v5404 = vsel %vm5368, %v4575, 0.0
      %v5405 = vsel %vm5369, %v4576, 0.0
      %v5406 = vsel %vm5370, %v4577, 0.0
      %v5407 = vsel %vm5371, %v4578, 0.0
      %v5408 = vsel %vm5372, %v4579, 0.0
      %v5409 = vsel %vm5373, %v4580, 0.0
      %v5410 = vsel %vm5374, %v4581, 0.0
      %v5411 = vsel %vm5375, %v4582, 0.0
      %5412 = vst.msk [vmem:[#allocation3] sm:$0xff] %vm308, 0.0
      %5413 = vst.msk [vmem:[#allocation3 + $0x8] sm:$0xff] %vm308, 0.0
      %5414 = vst.msk [vmem:[#allocation3 + $0x10] sm:$0xff] %vm308, 0.0
      %5415 = vst.msk [vmem:[#allocation3 + $0x18] sm:$0xff] %vm308, 0.0
      %5416 = vst.msk [vmem:[#allocation3 + $0x20] sm:$0xff] %vm308, 0.0
      %5417 = vst.msk [vmem:[#allocation3 + $0x28] sm:$0xff] %vm308, 0.0
      %5418 = vst.msk [vmem:[#allocation3 + $0x30] sm:$0xff] %vm308, 0.0
      %5419 = vst.msk [vmem:[#allocation3 + $0x38] sm:$0xff] %vm308, 0.0
      %5420 = vst.msk [vmem:[#allocation3 + $0x40] sm:$0xff] %vm308, 0.0
      %5421 = vst.msk [vmem:[#allocation3 + $0x48] sm:$0xff] %vm308, 0.0
      %5422 = vst.msk [vmem:[#allocation3 + $0x50] sm:$0xff] %vm308, 0.0
      %5423 = vst.msk [vmem:[#allocation3 + $0x58] sm:$0xff] %vm308, 0.0
      %5424 = vst.msk [vmem:[#allocation3 + $0x60] sm:$0xff] %vm308, 0.0
      %5425 = vst.msk [vmem:[#allocation3 + $0x68] sm:$0xff] %vm308, 0.0
      %5426 = vst.msk [vmem:[#allocation3 + $0x70] sm:$0xff] %vm308, 0.0
      %5427 = vst.msk [vmem:[#allocation3 + $0x78] sm:$0xff] %vm308, 0.0
      %5428 = vst.msk [vmem:[#allocation3 + $0x80] sm:$0xff] %vm308, 0.0
      %5429 = vst.msk [vmem:[#allocation3 + $0x88] sm:$0xff] %vm308, 0.0
      %5430 = vst.msk [vmem:[#allocation3 + $0x90] sm:$0xff] %vm308, 0.0
      %5431 = vst.msk [vmem:[#allocation3 + $0x98] sm:$0xff] %vm308, 0.0
      %5432 = vst.msk [vmem:[#allocation3 + $0xa0] sm:$0xff] %vm308, 0.0
      %5433 = vst.msk [vmem:[#allocation3 + $0xa8] sm:$0xff] %vm308, 0.0
      %5434 = vst.msk [vmem:[#allocation3 + $0xb0] sm:$0xff] %vm308, 0.0
      %5435 = vst.msk [vmem:[#allocation3 + $0xb8] sm:$0xff] %vm308, 0.0
      %5436 = vst.msk [vmem:[#allocation3 + $0xc0] sm:$0xff] %vm308, 0.0
      %5437 = vst.msk [vmem:[#allocation3 + $0xc8] sm:$0xff] %vm308, 0.0
      %5438 = vst.msk [vmem:[#allocation3 + $0xd0] sm:$0xff] %vm308, 0.0
      %5439 = vst.msk [vmem:[#allocation3 + $0xd8] sm:$0xff] %vm308, 0.0
      %5440 = vst.msk [vmem:[#allocation3 + $0xe0] sm:$0xff] %vm308, 0.0
      %5441 = vst.msk [vmem:[#allocation3 + $0xe8] sm:$0xff] %vm308, 0.0
      %5442 = vst.msk [vmem:[#allocation3 + $0xf0] sm:$0xff] %vm308, 0.0
      %5443 = vst.msk [vmem:[#allocation3 + $0xf8] sm:$0xff] %vm308, 0.0
      %5444 = vst.msk [vmem:[#allocation3 + $0x100] sm:$0xff] %vm308, 0.0
      %5445 = vst.msk [vmem:[#allocation3 + $0x108] sm:$0xff] %vm308, 0.0
      %5446 = vst.msk [vmem:[#allocation3 + $0x110] sm:$0xff] %vm308, 0.0
      %5447 = vst.msk [vmem:[#allocation3 + $0x118] sm:$0xff] %vm308, 0.0
      %5448 = vst.msk [vmem:[#allocation3 + $0x120] sm:$0xff] %vm308, 0.0
      %5449 = vst.msk [vmem:[#allocation3 + $0x128] sm:$0xff] %vm308, 0.0
      %5450 = vst.msk [vmem:[#allocation3 + $0x130] sm:$0xff] %vm308, 0.0
      %5451 = vst.msk [vmem:[#allocation3 + $0x138] sm:$0xff] %vm308, 0.0
      %vm5452 = vcmask 259072
      %5453 = vst.msk [vmem:[#allocation3 + $0x140] sm:$0x3f] %vm5452, 0.0
      %5454 = vst.msk [vmem:[#allocation3 + $0x13] sm:$0xff] %vm308, %v5376
      %5455 = vst.msk [vmem:[#allocation3 + $0x1b] sm:$0xff] %vm308, %v5377
      %5456 = vst.msk [vmem:[#allocation3 + $0x23] sm:$0xff] %vm308, %v5378
      %5457 = vst.msk [vmem:[#allocation3 + $0x2b] sm:$0xff] %vm308, %v5379
      %5458 = vst.msk [vmem:[#allocation3 + $0x33] sm:$0xff] %vm308, %v5380
      %5459 = vst.msk [vmem:[#allocation3 + $0x3b] sm:$0xff] %vm308, %v5381
      %5460 = vst.msk [vmem:[#allocation3 + $0x43] sm:$0xff] %vm308, %v5382
      %5461 = vst.msk [vmem:[#allocation3 + $0x4b] sm:$0xff] %vm308, %v5383
      %5462 = vst.msk [vmem:[#allocation3 + $0x53] sm:$0xff] %vm308, %v5384
      %5463 = vst.msk [vmem:[#allocation3 + $0x5b] sm:$0xff] %vm308, %v5385
      %5464 = vst.msk [vmem:[#allocation3 + $0x63] sm:$0xff] %vm308, %v5386
      %5465 = vst.msk [vmem:[#allocation3 + $0x6b] sm:$0xff] %vm308, %v5387
      %5466 = vst.msk [vmem:[#allocation3 + $0x73] sm:$0xff] %vm308, %v5388
      %5467 = vst.msk [vmem:[#allocation3 + $0x7b] sm:$0xff] %vm308, %v5389
      %5468 = vst.msk [vmem:[#allocation3 + $0x83] sm:$0xff] %vm308, %v5390
      %5469 = vst.msk [vmem:[#allocation3 + $0x8b] sm:$0xff] %vm308, %v5391
      %5470 = vst.msk [vmem:[#allocation3 + $0x93] sm:$0xff] %vm308, %v5392
      %5471 = vst.msk [vmem:[#allocation3 + $0x9b] sm:$0xff] %vm308, %v5393
      %5472 = vst.msk [vmem:[#allocation3 + $0xa3] sm:$0xff] %vm308, %v5394
      %5473 = vst.msk [vmem:[#allocation3 + $0xab] sm:$0xff] %vm308, %v5395
      %5474 = vst.msk [vmem:[#allocation3 + $0xb3] sm:$0xff] %vm308, %v5396
      %5475 = vst.msk [vmem:[#allocation3 + $0xbb] sm:$0xff] %vm308, %v5397
      %5476 = vst.msk [vmem:[#allocation3 + $0xc3] sm:$0xff] %vm308, %v5398
      %5477 = vst.msk [vmem:[#allocation3 + $0xcb] sm:$0xff] %vm308, %v5399
      %5478 = vst.msk [vmem:[#allocation3 + $0xd3] sm:$0xff] %vm308, %v5400
      %5479 = vst.msk [vmem:[#allocation3 + $0xdb] sm:$0xff] %vm308, %v5401
      %5480 = vst.msk [vmem:[#allocation3 + $0xe3] sm:$0xff] %vm308, %v5402
      %5481 = vst.msk [vmem:[#allocation3 + $0xeb] sm:$0xff] %vm308, %v5403
      %5482 = vst.msk [vmem:[#allocation3 + $0xf3] sm:$0xff] %vm308, %v5404
      %5483 = vst.msk [vmem:[#allocation3 + $0xfb] sm:$0xff] %vm308, %v5405
      %5484 = vst.msk [vmem:[#allocation3 + $0x103] sm:$0xff] %vm308, %v5406
      %5485 = vst.msk [vmem:[#allocation3 + $0x10b] sm:$0xff] %vm308, %v5407
      %5486 = vst.msk [vmem:[#allocation3 + $0x113] sm:$0xff] %vm308, %v5408
      %5487 = vst.msk [vmem:[#allocation3 + $0x11b] sm:$0xff] %vm308, %v5409
      %5488 = vst.msk [vmem:[#allocation3 + $0x123] sm:$0xff] %vm308, %v5410
      %5489 = vst.msk [vmem:[#allocation3 + $0x12b] sm:$0xff] %vm308, %v5411
      %v5490 = vld [vmem:[#allocation3] sm:$0xff]
      %v5491 = vld [vmem:[#allocation3 + $0x8] sm:$0xff]
      %v5492 = vld [vmem:[#allocation3 + $0x10] sm:$0xff]
      %v5493 = vld [vmem:[#allocation3 + $0x18] sm:$0xff]
      %v5494 = vld [vmem:[#allocation3 + $0x20] sm:$0xff]
      %v5495 = vld [vmem:[#allocation3 + $0x28] sm:$0xff]
      %v5496 = vld [vmem:[#allocation3 + $0x30] sm:$0xff]
      %v5497 = vld [vmem:[#allocation3 + $0x38] sm:$0xff]
      %v5498 = vld [vmem:[#allocation3 + $0x40] sm:$0xff]
      %v5499 = vld [vmem:[#allocation3 + $0x48] sm:$0xff]
      %v5500 = vld [vmem:[#allocation3 + $0x50] sm:$0xff]
      %v5501 = vld [vmem:[#allocation3 + $0x58] sm:$0xff]
      %v5502 = vld [vmem:[#allocation3 + $0x60] sm:$0xff]
      %v5503 = vld [vmem:[#allocation3 + $0x68] sm:$0xff]
      %v5504 = vld [vmem:[#allocation3 + $0x70] sm:$0xff]
      %v5505 = vld [vmem:[#allocation3 + $0x78] sm:$0xff]
      %v5506 = vld [vmem:[#allocation3 + $0x80] sm:$0xff]
      %v5507 = vld [vmem:[#allocation3 + $0x88] sm:$0xff]
      %v5508 = vld [vmem:[#allocation3 + $0x90] sm:$0xff]
      %v5509 = vld [vmem:[#allocation3 + $0x98] sm:$0xff]
      %v5510 = vld [vmem:[#allocation3 + $0xa0] sm:$0xff]
      %v5511 = vld [vmem:[#allocation3 + $0xa8] sm:$0xff]
      %v5512 = vld [vmem:[#allocation3 + $0xb0] sm:$0xff]
      %v5513 = vld [vmem:[#allocation3 + $0xb8] sm:$0xff]
      %v5514 = vld [vmem:[#allocation3 + $0xc0] sm:$0xff]
      %v5515 = vld [vmem:[#allocation3 + $0xc8] sm:$0xff]
      %v5516 = vld [vmem:[#allocation3 + $0xd0] sm:$0xff]
      %v5517 = vld [vmem:[#allocation3 + $0xd8] sm:$0xff]
      %v5518 = vld [vmem:[#allocation3 + $0xe0] sm:$0xff]
      %v5519 = vld [vmem:[#allocation3 + $0xe8] sm:$0xff]
      %v5520 = vld [vmem:[#allocation3 + $0xf0] sm:$0xff]
      %v5521 = vld [vmem:[#allocation3 + $0xf8] sm:$0xff]
      %v5522 = vld [vmem:[#allocation3 + $0x100] sm:$0xff]
      %v5523 = vld [vmem:[#allocation3 + $0x108] sm:$0xff]
      %v5524 = vld [vmem:[#allocation3 + $0x110] sm:$0xff]
      %v5525 = vld [vmem:[#allocation3 + $0x118] sm:$0xff]
      %5526 = vst.msk [vmem:[#allocation4] sm:$0xff] %vm308, %v5490
      %5527 = vst.msk [vmem:[#allocation4 + $0x18] sm:$0xff] %vm308, %v5491
      %5528 = vst.msk [vmem:[#allocation4 + $0x30] sm:$0xff] %vm308, %v5492
      %5529 = vst.msk [vmem:[#allocation4 + $0x48] sm:$0xff] %vm308, %v5493
      %5530 = vst.msk [vmem:[#allocation4 + $0x60] sm:$0xff] %vm308, %v5494
      %5531 = vst.msk [vmem:[#allocation4 + $0x78] sm:$0xff] %vm308, %v5495
      %5532 = vst.msk [vmem:[#allocation4 + $0x90] sm:$0xff] %vm308, %v5496
      %5533 = vst.msk [vmem:[#allocation4 + $0xa8] sm:$0xff] %vm308, %v5497
      %5534 = vst.msk [vmem:[#allocation4 + $0xc0] sm:$0xff] %vm308, %v5498
      %5535 = vst.msk [vmem:[#allocation4 + $0xd8] sm:$0xff] %vm308, %v5499
      %5536 = vst.msk [vmem:[#allocation4 + $0xf0] sm:$0xff] %vm308, %v5500
      %5537 = vst.msk [vmem:[#allocation4 + $0x108] sm:$0xff] %vm308, %v5501
      %5538 = vst.msk [vmem:[#allocation4 + $0x120] sm:$0xff] %vm308, %v5502
      %5539 = vst.msk [vmem:[#allocation4 + $0x138] sm:$0xff] %vm308, %v5503
      %5540 = vst.msk [vmem:[#allocation4 + $0x150] sm:$0xff] %vm308, %v5504
      %5541 = vst.msk [vmem:[#allocation4 + $0x168] sm:$0xff] %vm308, %v5505
      %5542 = vst.msk [vmem:[#allocation4 + $0x180] sm:$0xff] %vm308, %v5506
      %5543 = vst.msk [vmem:[#allocation4 + $0x198] sm:$0xff] %vm308, %v5507
      %5544 = vst.msk [vmem:[#allocation4 + $0x1b0] sm:$0xff] %vm308, %v5508
      %5545 = vst.msk [vmem:[#allocation4 + $0x1c8] sm:$0xff] %vm308, %v5509
      %5546 = vst.msk [vmem:[#allocation4 + $0x1e0] sm:$0xff] %vm308, %v5510
      %5547 = vst.msk [vmem:[#allocation4 + $0x1f8] sm:$0xff] %vm308, %v5511
      %5548 = vst.msk [vmem:[#allocation4 + $0x210] sm:$0xff] %vm308, %v5512
      %5549 = vst.msk [vmem:[#allocation4 + $0x228] sm:$0xff] %vm308, %v5513
      %5550 = vst.msk [vmem:[#allocation4 + $0x240] sm:$0xff] %vm308, %v5514
      %5551 = vst.msk [vmem:[#allocation4 + $0x258] sm:$0xff] %vm308, %v5515
      %5552 = vst.msk [vmem:[#allocation4 + $0x270] sm:$0xff] %vm308, %v5516
      %5553 = vst.msk [vmem:[#allocation4 + $0x288] sm:$0xff] %vm308, %v5517
      %5554 = vst.msk [vmem:[#allocation4 + $0x2a0] sm:$0xff] %vm308, %v5518
      %5555 = vst.msk [vmem:[#allocation4 + $0x2b8] sm:$0xff] %vm308, %v5519
      %5556 = vst.msk [vmem:[#allocation4 + $0x2d0] sm:$0xff] %vm308, %v5520
      %5557 = vst.msk [vmem:[#allocation4 + $0x2e8] sm:$0xff] %vm308, %v5521
      %5558 = vst.msk [vmem:[#allocation4 + $0x300] sm:$0xff] %vm308, %v5522
      %5559 = vst.msk [vmem:[#allocation4 + $0x318] sm:$0xff] %vm308, %v5523
      %5560 = vst.msk [vmem:[#allocation4 + $0x330] sm:$0xff] %vm308, %v5524
      %5561 = vst.msk [vmem:[#allocation4 + $0x348] sm:$0xff] %vm308, %v5525
      %v5562 = vld [vmem:[#allocation3 + $0x1] sm:$0xff]
      %v5563 = vld [vmem:[#allocation3 + $0x9] sm:$0xff]
      %v5564 = vld [vmem:[#allocation3 + $0x11] sm:$0xff]
      %v5565 = vld [vmem:[#allocation3 + $0x19] sm:$0xff]
      %v5566 = vld [vmem:[#allocation3 + $0x21] sm:$0xff]
      %v5567 = vld [vmem:[#allocation3 + $0x29] sm:$0xff]
      %v5568 = vld [vmem:[#allocation3 + $0x31] sm:$0xff]
      %v5569 = vld [vmem:[#allocation3 + $0x39] sm:$0xff]
      %v5570 = vld [vmem:[#allocation3 + $0x41] sm:$0xff]
      %v5571 = vld [vmem:[#allocation3 + $0x49] sm:$0xff]
      %v5572 = vld [vmem:[#allocation3 + $0x51] sm:$0xff]
      %v5573 = vld [vmem:[#allocation3 + $0x59] sm:$0xff]
      %v5574 = vld [vmem:[#allocation3 + $0x61] sm:$0xff]
      %v5575 = vld [vmem:[#allocation3 + $0x69] sm:$0xff]
      %v5576 = vld [vmem:[#allocation3 + $0x71] sm:$0xff]
      %v5577 = vld [vmem:[#allocation3 + $0x79] sm:$0xff]
      %v5578 = vld [vmem:[#allocation3 + $0x81] sm:$0xff]
      %v5579 = vld [vmem:[#allocation3 + $0x89] sm:$0xff]
      %v5580 = vld [vmem:[#allocation3 + $0x91] sm:$0xff]
      %v5581 = vld [vmem:[#allocation3 + $0x99] sm:$0xff]
      %v5582 = vld [vmem:[#allocation3 + $0xa1] sm:$0xff]
      %v5583 = vld [vmem:[#allocation3 + $0xa9] sm:$0xff]
      %v5584 = vld [vmem:[#allocation3 + $0xb1] sm:$0xff]
      %v5585 = vld [vmem:[#allocation3 + $0xb9] sm:$0xff]
      %v5586 = vld [vmem:[#allocation3 + $0xc1] sm:$0xff]
      %v5587 = vld [vmem:[#allocation3 + $0xc9] sm:$0xff]
      %v5588 = vld [vmem:[#allocation3 + $0xd1] sm:$0xff]
      %v5589 = vld [vmem:[#allocation3 + $0xd9] sm:$0xff]
      %v5590 = vld [vmem:[#allocation3 + $0xe1] sm:$0xff]
      %v5591 = vld [vmem:[#allocation3 + $0xe9] sm:$0xff]
      %v5592 = vld [vmem:[#allocation3 + $0xf1] sm:$0xff]
      %v5593 = vld [vmem:[#allocation3 + $0xf9] sm:$0xff]
      %v5594 = vld [vmem:[#allocation3 + $0x101] sm:$0xff]
      %v5595 = vld [vmem:[#allocation3 + $0x109] sm:$0xff]
      %v5596 = vld [vmem:[#allocation3 + $0x111] sm:$0xff]
      %v5597 = vld [vmem:[#allocation3 + $0x119] sm:$0xff]
      %5634 = vrot.lane.b32.xlu0 %v5562, 32
      %v5635 = vpop.permute.xlu0 %5634
      %5636 = vrot.lane.b32.xlu0 %v5563, 32
      %v5637 = vpop.permute.xlu0 %5636
      %5638 = vrot.lane.b32.xlu0 %v5564, 32
      %v5639 = vpop.permute.xlu0 %5638
      %5640 = vrot.lane.b32.xlu0 %v5565, 32
      %v5641 = vpop.permute.xlu0 %5640
      %5642 = vrot.lane.b32.xlu0 %v5566, 32
      %v5643 = vpop.permute.xlu0 %5642
      %5644 = vrot.lane.b32.xlu0 %v5567, 32
      %v5645 = vpop.permute.xlu0 %5644
      %5646 = vrot.lane.b32.xlu0 %v5568, 32
      %v5647 = vpop.permute.xlu0 %5646
      %5648 = vrot.lane.b32.xlu0 %v5569, 32
      %v5649 = vpop.permute.xlu0 %5648
      %5650 = vrot.lane.b32.xlu0 %v5570, 32
      %v5651 = vpop.permute.xlu0 %5650
      %5652 = vrot.lane.b32.xlu0 %v5571, 32
      %v5653 = vpop.permute.xlu0 %5652
      %5654 = vrot.lane.b32.xlu0 %v5572, 32
      %v5655 = vpop.permute.xlu0 %5654
      %5656 = vrot.lane.b32.xlu0 %v5573, 32
      %v5657 = vpop.permute.xlu0 %5656
      %5658 = vrot.lane.b32.xlu0 %v5574, 32
      %v5659 = vpop.permute.xlu0 %5658
      %5660 = vrot.lane.b32.xlu0 %v5575, 32
      %v5661 = vpop.permute.xlu0 %5660
      %5662 = vrot.lane.b32.xlu0 %v5576, 32
      %v5663 = vpop.permute.xlu0 %5662
      %5664 = vrot.lane.b32.xlu0 %v5577, 32
      %v5665 = vpop.permute.xlu0 %5664
      %5666 = vrot.lane.b32.xlu0 %v5578, 32
      %v5667 = vpop.permute.xlu0 %5666
      %5668 = vrot.lane.b32.xlu0 %v5579, 32
      %v5669 = vpop.permute.xlu0 %5668
      %5670 = vrot.lane.b32.xlu0 %v5580, 32
      %v5671 = vpop.permute.xlu0 %5670
      %5672 = vrot.lane.b32.xlu0 %v5581, 32
      %v5673 = vpop.permute.xlu0 %5672
      %5674 = vrot.lane.b32.xlu0 %v5582, 32
      %v5675 = vpop.permute.xlu0 %5674
      %5676 = vrot.lane.b32.xlu0 %v5583, 32
      %v5677 = vpop.permute.xlu0 %5676
      %5678 = vrot.lane.b32.xlu0 %v5584, 32
      %v5679 = vpop.permute.xlu0 %5678
      %5680 = vrot.lane.b32.xlu0 %v5585, 32
      %v5681 = vpop.permute.xlu0 %5680
      %5682 = vrot.lane.b32.xlu0 %v5586, 32
      %v5683 = vpop.permute.xlu0 %5682
      %5684 = vrot.lane.b32.xlu0 %v5587, 32
      %v5685 = vpop.permute.xlu0 %5684
      %5686 = vrot.lane.b32.xlu0 %v5588, 32
      %v5687 = vpop.permute.xlu0 %5686
      %5688 = vrot.lane.b32.xlu0 %v5589, 32
      %v5689 = vpop.permute.xlu0 %5688
      %5690 = vrot.lane.b32.xlu0 %v5590, 32
      %v5691 = vpop.permute.xlu0 %5690
      %5692 = vrot.lane.b32.xlu0 %v5591, 32
      %v5693 = vpop.permute.xlu0 %5692
      %5694 = vrot.lane.b32.xlu0 %v5592, 32
      %v5695 = vpop.permute.xlu0 %5694
      %5696 = vrot.lane.b32.xlu0 %v5593, 32
      %v5697 = vpop.permute.xlu0 %5696
      %5698 = vrot.lane.b32.xlu0 %v5594, 32
      %v5699 = vpop.permute.xlu0 %5698
      %5700 = vrot.lane.b32.xlu0 %v5595, 32
      %v5701 = vpop.permute.xlu0 %5700
      %5702 = vrot.lane.b32.xlu0 %v5596, 32
      %v5703 = vpop.permute.xlu0 %5702
      %5704 = vrot.lane.b32.xlu0 %v5597, 32
      %v5705 = vpop.permute.xlu0 %5704
      %5742 = vst.msk [vmem:[#allocation4] sm:$0xff] %vm525, %v5635
      %5743 = vst.msk [vmem:[#allocation4 + $0x18] sm:$0xff] %vm525, %v5637
      %5744 = vst.msk [vmem:[#allocation4 + $0x30] sm:$0xff] %vm525, %v5639
      %5745 = vst.msk [vmem:[#allocation4 + $0x48] sm:$0xff] %vm525, %v5641
      %5746 = vst.msk [vmem:[#allocation4 + $0x60] sm:$0xff] %vm525, %v5643
      %5747 = vst.msk [vmem:[#allocation4 + $0x78] sm:$0xff] %vm525, %v5645
      %5748 = vst.msk [vmem:[#allocation4 + $0x90] sm:$0xff] %vm525, %v5647
      %5749 = vst.msk [vmem:[#allocation4 + $0xa8] sm:$0xff] %vm525, %v5649
      %5750 = vst.msk [vmem:[#allocation4 + $0xc0] sm:$0xff] %vm525, %v5651
      %5751 = vst.msk [vmem:[#allocation4 + $0xd8] sm:$0xff] %vm525, %v5653
      %5752 = vst.msk [vmem:[#allocation4 + $0xf0] sm:$0xff] %vm525, %v5655
      %5753 = vst.msk [vmem:[#allocation4 + $0x108] sm:$0xff] %vm525, %v5657
      %5754 = vst.msk [vmem:[#allocation4 + $0x120] sm:$0xff] %vm525, %v5659
      %5755 = vst.msk [vmem:[#allocation4 + $0x138] sm:$0xff] %vm525, %v5661
      %5756 = vst.msk [vmem:[#allocation4 + $0x150] sm:$0xff] %vm525, %v5663
      %5757 = vst.msk [vmem:[#allocation4 + $0x168] sm:$0xff] %vm525, %v5665
      %5758 = vst.msk [vmem:[#allocation4 + $0x180] sm:$0xff] %vm525, %v5667
      %5759 = vst.msk [vmem:[#allocation4 + $0x198] sm:$0xff] %vm525, %v5669
      %5760 = vst.msk [vmem:[#allocation4 + $0x1b0] sm:$0xff] %vm525, %v5671
      %5761 = vst.msk [vmem:[#allocation4 + $0x1c8] sm:$0xff] %vm525, %v5673
      %5762 = vst.msk [vmem:[#allocation4 + $0x1e0] sm:$0xff] %vm525, %v5675
      %5763 = vst.msk [vmem:[#allocation4 + $0x1f8] sm:$0xff] %vm525, %v5677
      %5764 = vst.msk [vmem:[#allocation4 + $0x210] sm:$0xff] %vm525, %v5679
      %5765 = vst.msk [vmem:[#allocation4 + $0x228] sm:$0xff] %vm525, %v5681
      %5766 = vst.msk [vmem:[#allocation4 + $0x240] sm:$0xff] %vm525, %v5683
      %5767 = vst.msk [vmem:[#allocation4 + $0x258] sm:$0xff] %vm525, %v5685
      %5768 = vst.msk [vmem:[#allocation4 + $0x270] sm:$0xff] %vm525, %v5687
      %5769 = vst.msk [vmem:[#allocation4 + $0x288] sm:$0xff] %vm525, %v5689
      %5770 = vst.msk [vmem:[#allocation4 + $0x2a0] sm:$0xff] %vm525, %v5691
      %5771 = vst.msk [vmem:[#allocation4 + $0x2b8] sm:$0xff] %vm525, %v5693
      %5772 = vst.msk [vmem:[#allocation4 + $0x2d0] sm:$0xff] %vm525, %v5695
      %5773 = vst.msk [vmem:[#allocation4 + $0x2e8] sm:$0xff] %vm525, %v5697
      %5774 = vst.msk [vmem:[#allocation4 + $0x300] sm:$0xff] %vm525, %v5699
      %5775 = vst.msk [vmem:[#allocation4 + $0x318] sm:$0xff] %vm525, %v5701
      %5776 = vst.msk [vmem:[#allocation4 + $0x330] sm:$0xff] %vm525, %v5703
      %5777 = vst.msk [vmem:[#allocation4 + $0x348] sm:$0xff] %vm525, %v5705
      %v5778 = vld [vmem:[#allocation3 + $0x2] sm:$0xff]
      %v5779 = vld [vmem:[#allocation3 + $0xa] sm:$0xff]
      %v5780 = vld [vmem:[#allocation3 + $0x12] sm:$0xff]
      %v5781 = vld [vmem:[#allocation3 + $0x1a] sm:$0xff]
      %v5782 = vld [vmem:[#allocation3 + $0x22] sm:$0xff]
      %v5783 = vld [vmem:[#allocation3 + $0x2a] sm:$0xff]
      %v5784 = vld [vmem:[#allocation3 + $0x32] sm:$0xff]
      %v5785 = vld [vmem:[#allocation3 + $0x3a] sm:$0xff]
      %v5786 = vld [vmem:[#allocation3 + $0x42] sm:$0xff]
      %v5787 = vld [vmem:[#allocation3 + $0x4a] sm:$0xff]
      %v5788 = vld [vmem:[#allocation3 + $0x52] sm:$0xff]
      %v5789 = vld [vmem:[#allocation3 + $0x5a] sm:$0xff]
      %v5790 = vld [vmem:[#allocation3 + $0x62] sm:$0xff]
      %v5791 = vld [vmem:[#allocation3 + $0x6a] sm:$0xff]
      %v5792 = vld [vmem:[#allocation3 + $0x72] sm:$0xff]
      %v5793 = vld [vmem:[#allocation3 + $0x7a] sm:$0xff]
      %v5794 = vld [vmem:[#allocation3 + $0x82] sm:$0xff]
      %v5795 = vld [vmem:[#allocation3 + $0x8a] sm:$0xff]
      %v5796 = vld [vmem:[#allocation3 + $0x92] sm:$0xff]
      %v5797 = vld [vmem:[#allocation3 + $0x9a] sm:$0xff]
      %v5798 = vld [vmem:[#allocation3 + $0xa2] sm:$0xff]
      %v5799 = vld [vmem:[#allocation3 + $0xaa] sm:$0xff]
      %v5800 = vld [vmem:[#allocation3 + $0xb2] sm:$0xff]
      %v5801 = vld [vmem:[#allocation3 + $0xba] sm:$0xff]
      %v5802 = vld [vmem:[#allocation3 + $0xc2] sm:$0xff]
      %v5803 = vld [vmem:[#allocation3 + $0xca] sm:$0xff]
      %v5804 = vld [vmem:[#allocation3 + $0xd2] sm:$0xff]
      %v5805 = vld [vmem:[#allocation3 + $0xda] sm:$0xff]
      %v5806 = vld [vmem:[#allocation3 + $0xe2] sm:$0xff]
      %v5807 = vld [vmem:[#allocation3 + $0xea] sm:$0xff]
      %v5808 = vld [vmem:[#allocation3 + $0xf2] sm:$0xff]
      %v5809 = vld [vmem:[#allocation3 + $0xfa] sm:$0xff]
      %v5810 = vld [vmem:[#allocation3 + $0x102] sm:$0xff]
      %v5811 = vld [vmem:[#allocation3 + $0x10a] sm:$0xff]
      %v5812 = vld [vmem:[#allocation3 + $0x112] sm:$0xff]
      %v5813 = vld [vmem:[#allocation3 + $0x11a] sm:$0xff]
      %5850 = vrot.lane.b32.xlu0 %v5778, 64
      %v5851 = vpop.permute.xlu0 %5850
      %5852 = vrot.lane.b32.xlu0 %v5779, 64
      %v5853 = vpop.permute.xlu0 %5852
      %5854 = vrot.lane.b32.xlu0 %v5780, 64
      %v5855 = vpop.permute.xlu0 %5854
      %5856 = vrot.lane.b32.xlu0 %v5781, 64
      %v5857 = vpop.permute.xlu0 %5856
      %5858 = vrot.lane.b32.xlu0 %v5782, 64
      %v5859 = vpop.permute.xlu0 %5858
      %5860 = vrot.lane.b32.xlu0 %v5783, 64
      %v5861 = vpop.permute.xlu0 %5860
      %5862 = vrot.lane.b32.xlu0 %v5784, 64
      %v5863 = vpop.permute.xlu0 %5862
      %5864 = vrot.lane.b32.xlu0 %v5785, 64
      %v5865 = vpop.permute.xlu0 %5864
      %5866 = vrot.lane.b32.xlu0 %v5786, 64
      %v5867 = vpop.permute.xlu0 %5866
      %5868 = vrot.lane.b32.xlu0 %v5787, 64
      %v5869 = vpop.permute.xlu0 %5868
      %5870 = vrot.lane.b32.xlu0 %v5788, 64
      %v5871 = vpop.permute.xlu0 %5870
      %5872 = vrot.lane.b32.xlu0 %v5789, 64
      %v5873 = vpop.permute.xlu0 %5872
      %5874 = vrot.lane.b32.xlu0 %v5790, 64
      %v5875 = vpop.permute.xlu0 %5874
      %5876 = vrot.lane.b32.xlu0 %v5791, 64
      %v5877 = vpop.permute.xlu0 %5876
      %5878 = vrot.lane.b32.xlu0 %v5792, 64
      %v5879 = vpop.permute.xlu0 %5878
      %5880 = vrot.lane.b32.xlu0 %v5793, 64
      %v5881 = vpop.permute.xlu0 %5880
      %5882 = vrot.lane.b32.xlu0 %v5794, 64
      %v5883 = vpop.permute.xlu0 %5882
      %5884 = vrot.lane.b32.xlu0 %v5795, 64
      %v5885 = vpop.permute.xlu0 %5884
      %5886 = vrot.lane.b32.xlu0 %v5796, 64
      %v5887 = vpop.permute.xlu0 %5886
      %5888 = vrot.lane.b32.xlu0 %v5797, 64
      %v5889 = vpop.permute.xlu0 %5888
      %5890 = vrot.lane.b32.xlu0 %v5798, 64
      %v5891 = vpop.permute.xlu0 %5890
      %5892 = vrot.lane.b32.xlu0 %v5799, 64
      %v5893 = vpop.permute.xlu0 %5892
      %5894 = vrot.lane.b32.xlu0 %v5800, 64
      %v5895 = vpop.permute.xlu0 %5894
      %5896 = vrot.lane.b32.xlu0 %v5801, 64
      %v5897 = vpop.permute.xlu0 %5896
      %5898 = vrot.lane.b32.xlu0 %v5802, 64
      %v5899 = vpop.permute.xlu0 %5898
      %5900 = vrot.lane.b32.xlu0 %v5803, 64
      %v5901 = vpop.permute.xlu0 %5900
      %5902 = vrot.lane.b32.xlu0 %v5804, 64
      %v5903 = vpop.permute.xlu0 %5902
      %5904 = vrot.lane.b32.xlu0 %v5805, 64
      %v5905 = vpop.permute.xlu0 %5904
      %5906 = vrot.lane.b32.xlu0 %v5806, 64
      %v5907 = vpop.permute.xlu0 %5906
      %5908 = vrot.lane.b32.xlu0 %v5807, 64
      %v5909 = vpop.permute.xlu0 %5908
      %5910 = vrot.lane.b32.xlu0 %v5808, 64
      %v5911 = vpop.permute.xlu0 %5910
      %5912 = vrot.lane.b32.xlu0 %v5809, 64
      %v5913 = vpop.permute.xlu0 %5912
      %5914 = vrot.lane.b32.xlu0 %v5810, 64
      %v5915 = vpop.permute.xlu0 %5914
      %5916 = vrot.lane.b32.xlu0 %v5811, 64
      %v5917 = vpop.permute.xlu0 %5916
      %5918 = vrot.lane.b32.xlu0 %v5812, 64
      %v5919 = vpop.permute.xlu0 %5918
      %5920 = vrot.lane.b32.xlu0 %v5813, 64
      %v5921 = vpop.permute.xlu0 %5920
      %5958 = vst.msk [vmem:[#allocation4] sm:$0xff] %vm742, %v5851
      %5959 = vst.msk [vmem:[#allocation4 + $0x18] sm:$0xff] %vm742, %v5853
      %5960 = vst.msk [vmem:[#allocation4 + $0x30] sm:$0xff] %vm742, %v5855
      %5961 = vst.msk [vmem:[#allocation4 + $0x48] sm:$0xff] %vm742, %v5857
      %5962 = vst.msk [vmem:[#allocation4 + $0x60] sm:$0xff] %vm742, %v5859
      %5963 = vst.msk [vmem:[#allocation4 + $0x78] sm:$0xff] %vm742, %v5861
      %5964 = vst.msk [vmem:[#allocation4 + $0x90] sm:$0xff] %vm742, %v5863
      %5965 = vst.msk [vmem:[#allocation4 + $0xa8] sm:$0xff] %vm742, %v5865
      %5966 = vst.msk [vmem:[#allocation4 + $0xc0] sm:$0xff] %vm742, %v5867
      %5967 = vst.msk [vmem:[#allocation4 + $0xd8] sm:$0xff] %vm742, %v5869
      %5968 = vst.msk [vmem:[#allocation4 + $0xf0] sm:$0xff] %vm742, %v5871
      %5969 = vst.msk [vmem:[#allocation4 + $0x108] sm:$0xff] %vm742, %v5873
      %5970 = vst.msk [vmem:[#allocation4 + $0x120] sm:$0xff] %vm742, %v5875
      %5971 = vst.msk [vmem:[#allocation4 + $0x138] sm:$0xff] %vm742, %v5877
      %5972 = vst.msk [vmem:[#allocation4 + $0x150] sm:$0xff] %vm742, %v5879
      %5973 = vst.msk [vmem:[#allocation4 + $0x168] sm:$0xff] %vm742, %v5881
      %5974 = vst.msk [vmem:[#allocation4 + $0x180] sm:$0xff] %vm742, %v5883
      %5975 = vst.msk [vmem:[#allocation4 + $0x198] sm:$0xff] %vm742, %v5885
      %5976 = vst.msk [vmem:[#allocation4 + $0x1b0] sm:$0xff] %vm742, %v5887
      %5977 = vst.msk [vmem:[#allocation4 + $0x1c8] sm:$0xff] %vm742, %v5889
      %5978 = vst.msk [vmem:[#allocation4 + $0x1e0] sm:$0xff] %vm742, %v5891
      %5979 = vst.msk [vmem:[#allocation4 + $0x1f8] sm:$0xff] %vm742, %v5893
      %5980 = vst.msk [vmem:[#allocation4 + $0x210] sm:$0xff] %vm742, %v5895
      %5981 = vst.msk [vmem:[#allocation4 + $0x228] sm:$0xff] %vm742, %v5897
      %5982 = vst.msk [vmem:[#allocation4 + $0x240] sm:$0xff] %vm742, %v5899
      %5983 = vst.msk [vmem:[#allocation4 + $0x258] sm:$0xff] %vm742, %v5901
      %5984 = vst.msk [vmem:[#allocation4 + $0x270] sm:$0xff] %vm742, %v5903
      %5985 = vst.msk [vmem:[#allocation4 + $0x288] sm:$0xff] %vm742, %v5905
      %5986 = vst.msk [vmem:[#allocation4 + $0x2a0] sm:$0xff] %vm742, %v5907
      %5987 = vst.msk [vmem:[#allocation4 + $0x2b8] sm:$0xff] %vm742, %v5909
      %5988 = vst.msk [vmem:[#allocation4 + $0x2d0] sm:$0xff] %vm742, %v5911
      %5989 = vst.msk [vmem:[#allocation4 + $0x2e8] sm:$0xff] %vm742, %v5913
      %5990 = vst.msk [vmem:[#allocation4 + $0x300] sm:$0xff] %vm742, %v5915
      %5991 = vst.msk [vmem:[#allocation4 + $0x318] sm:$0xff] %vm742, %v5917
      %5992 = vst.msk [vmem:[#allocation4 + $0x330] sm:$0xff] %vm742, %v5919
      %5993 = vst.msk [vmem:[#allocation4 + $0x348] sm:$0xff] %vm742, %v5921
      %v5994 = vld [vmem:[#allocation3 + $0x12] sm:$0xff]
      %v5995 = vld [vmem:[#allocation3 + $0x1a] sm:$0xff]
      %v5996 = vld [vmem:[#allocation3 + $0x22] sm:$0xff]
      %v5997 = vld [vmem:[#allocation3 + $0x2a] sm:$0xff]
      %v5998 = vld [vmem:[#allocation3 + $0x32] sm:$0xff]
      %v5999 = vld [vmem:[#allocation3 + $0x3a] sm:$0xff]
      %v6000 = vld [vmem:[#allocation3 + $0x42] sm:$0xff]
      %v6001 = vld [vmem:[#allocation3 + $0x4a] sm:$0xff]
      %v6002 = vld [vmem:[#allocation3 + $0x52] sm:$0xff]
      %v6003 = vld [vmem:[#allocation3 + $0x5a] sm:$0xff]
      %v6004 = vld [vmem:[#allocation3 + $0x62] sm:$0xff]
      %v6005 = vld [vmem:[#allocation3 + $0x6a] sm:$0xff]
      %v6006 = vld [vmem:[#allocation3 + $0x72] sm:$0xff]
      %v6007 = vld [vmem:[#allocation3 + $0x7a] sm:$0xff]
      %v6008 = vld [vmem:[#allocation3 + $0x82] sm:$0xff]
      %v6009 = vld [vmem:[#allocation3 + $0x8a] sm:$0xff]
      %v6010 = vld [vmem:[#allocation3 + $0x92] sm:$0xff]
      %v6011 = vld [vmem:[#allocation3 + $0x9a] sm:$0xff]
      %v6012 = vld [vmem:[#allocation3 + $0xa2] sm:$0xff]
      %v6013 = vld [vmem:[#allocation3 + $0xaa] sm:$0xff]
      %v6014 = vld [vmem:[#allocation3 + $0xb2] sm:$0xff]
      %v6015 = vld [vmem:[#allocation3 + $0xba] sm:$0xff]
      %v6016 = vld [vmem:[#allocation3 + $0xc2] sm:$0xff]
      %v6017 = vld [vmem:[#allocation3 + $0xca] sm:$0xff]
      %v6018 = vld [vmem:[#allocation3 + $0xd2] sm:$0xff]
      %v6019 = vld [vmem:[#allocation3 + $0xda] sm:$0xff]
      %v6020 = vld [vmem:[#allocation3 + $0xe2] sm:$0xff]
      %v6021 = vld [vmem:[#allocation3 + $0xea] sm:$0xff]
      %v6022 = vld [vmem:[#allocation3 + $0xf2] sm:$0xff]
      %v6023 = vld [vmem:[#allocation3 + $0xfa] sm:$0xff]
      %v6024 = vld [vmem:[#allocation3 + $0x102] sm:$0xff]
      %v6025 = vld [vmem:[#allocation3 + $0x10a] sm:$0xff]
      %v6026 = vld [vmem:[#allocation3 + $0x112] sm:$0xff]
      %v6027 = vld [vmem:[#allocation3 + $0x11a] sm:$0xff]
      %v6028 = vld [vmem:[#allocation3 + $0x122] sm:$0xff]
      %v6029 = vld [vmem:[#allocation3 + $0x12a] sm:$0xff]
      %6066 = vrot.lane.b32.xlu0 %v5994, 96
      %v6067 = vpop.permute.xlu0 %6066
      %6068 = vrot.lane.b32.xlu0 %v5995, 96
      %v6069 = vpop.permute.xlu0 %6068
      %6070 = vrot.lane.b32.xlu0 %v5996, 96
      %v6071 = vpop.permute.xlu0 %6070
      %6072 = vrot.lane.b32.xlu0 %v5997, 96
      %v6073 = vpop.permute.xlu0 %6072
      %6074 = vrot.lane.b32.xlu0 %v5998, 96
      %v6075 = vpop.permute.xlu0 %6074
      %6076 = vrot.lane.b32.xlu0 %v5999, 96
      %v6077 = vpop.permute.xlu0 %6076
      %6078 = vrot.lane.b32.xlu0 %v6000, 96
      %v6079 = vpop.permute.xlu0 %6078
      %6080 = vrot.lane.b32.xlu0 %v6001, 96
      %v6081 = vpop.permute.xlu0 %6080
      %6082 = vrot.lane.b32.xlu0 %v6002, 96
      %v6083 = vpop.permute.xlu0 %6082
      %6084 = vrot.lane.b32.xlu0 %v6003, 96
      %v6085 = vpop.permute.xlu0 %6084
      %6086 = vrot.lane.b32.xlu0 %v6004, 96
      %v6087 = vpop.permute.xlu0 %6086
      %6088 = vrot.lane.b32.xlu0 %v6005, 96
      %v6089 = vpop.permute.xlu0 %6088
      %6090 = vrot.lane.b32.xlu0 %v6006, 96
      %v6091 = vpop.permute.xlu0 %6090
      %6092 = vrot.lane.b32.xlu0 %v6007, 96
      %v6093 = vpop.permute.xlu0 %6092
      %6094 = vrot.lane.b32.xlu0 %v6008, 96
      %v6095 = vpop.permute.xlu0 %6094
      %6096 = vrot.lane.b32.xlu0 %v6009, 96
      %v6097 = vpop.permute.xlu0 %6096
      %6098 = vrot.lane.b32.xlu0 %v6010, 96
      %v6099 = vpop.permute.xlu0 %6098
      %6100 = vrot.lane.b32.xlu0 %v6011, 96
      %v6101 = vpop.permute.xlu0 %6100
      %6102 = vrot.lane.b32.xlu0 %v6012, 96
      %v6103 = vpop.permute.xlu0 %6102
      %6104 = vrot.lane.b32.xlu0 %v6013, 96
      %v6105 = vpop.permute.xlu0 %6104
      %6106 = vrot.lane.b32.xlu0 %v6014, 96
      %v6107 = vpop.permute.xlu0 %6106
      %6108 = vrot.lane.b32.xlu0 %v6015, 96
      %v6109 = vpop.permute.xlu0 %6108
      %6110 = vrot.lane.b32.xlu0 %v6016, 96
      %v6111 = vpop.permute.xlu0 %6110
      %6112 = vrot.lane.b32.xlu0 %v6017, 96
      %v6113 = vpop.permute.xlu0 %6112
      %6114 = vrot.lane.b32.xlu0 %v6018, 96
      %v6115 = vpop.permute.xlu0 %6114
      %6116 = vrot.lane.b32.xlu0 %v6019, 96
      %v6117 = vpop.permute.xlu0 %6116
      %6118 = vrot.lane.b32.xlu0 %v6020, 96
      %v6119 = vpop.permute.xlu0 %6118
      %6120 = vrot.lane.b32.xlu0 %v6021, 96
      %v6121 = vpop.permute.xlu0 %6120
      %6122 = vrot.lane.b32.xlu0 %v6022, 96
      %v6123 = vpop.permute.xlu0 %6122
      %6124 = vrot.lane.b32.xlu0 %v6023, 96
      %v6125 = vpop.permute.xlu0 %6124
      %6126 = vrot.lane.b32.xlu0 %v6024, 96
      %v6127 = vpop.permute.xlu0 %6126
      %6128 = vrot.lane.b32.xlu0 %v6025, 96
      %v6129 = vpop.permute.xlu0 %6128
      %6130 = vrot.lane.b32.xlu0 %v6026, 96
      %v6131 = vpop.permute.xlu0 %6130
      %6132 = vrot.lane.b32.xlu0 %v6027, 96
      %v6133 = vpop.permute.xlu0 %6132
      %6134 = vrot.lane.b32.xlu0 %v6028, 96
      %v6135 = vpop.permute.xlu0 %6134
      %6136 = vrot.lane.b32.xlu0 %v6029, 96
      %v6137 = vpop.permute.xlu0 %6136
      %6174 = vst.msk [vmem:[#allocation4] sm:$0xff] %vm959, %v6067
      %6175 = vst.msk [vmem:[#allocation4 + $0x18] sm:$0xff] %vm959, %v6069
      %6176 = vst.msk [vmem:[#allocation4 + $0x30] sm:$0xff] %vm959, %v6071
      %6177 = vst.msk [vmem:[#allocation4 + $0x48] sm:$0xff] %vm959, %v6073
      %6178 = vst.msk [vmem:[#allocation4 + $0x60] sm:$0xff] %vm959, %v6075
      %6179 = vst.msk [vmem:[#allocation4 + $0x78] sm:$0xff] %vm959, %v6077
      %6180 = vst.msk [vmem:[#allocation4 + $0x90] sm:$0xff] %vm959, %v6079
      %6181 = vst.msk [vmem:[#allocation4 + $0xa8] sm:$0xff] %vm959, %v6081
      %6182 = vst.msk [vmem:[#allocation4 + $0xc0] sm:$0xff] %vm959, %v6083
      %6183 = vst.msk [vmem:[#allocation4 + $0xd8] sm:$0xff] %vm959, %v6085
      %6184 = vst.msk [vmem:[#allocation4 + $0xf0] sm:$0xff] %vm959, %v6087
      %6185 = vst.msk [vmem:[#allocation4 + $0x108] sm:$0xff] %vm959, %v6089
      %6186 = vst.msk [vmem:[#allocation4 + $0x120] sm:$0xff] %vm959, %v6091
      %6187 = vst.msk [vmem:[#allocation4 + $0x138] sm:$0xff] %vm959, %v6093
      %6188 = vst.msk [vmem:[#allocation4 + $0x150] sm:$0xff] %vm959, %v6095
      %6189 = vst.msk [vmem:[#allocation4 + $0x168] sm:$0xff] %vm959, %v6097
      %6190 = vst.msk [vmem:[#allocation4 + $0x180] sm:$0xff] %vm959, %v6099
      %6191 = vst.msk [vmem:[#allocation4 + $0x198] sm:$0xff] %vm959, %v6101
      %6192 = vst.msk [vmem:[#allocation4 + $0x1b0] sm:$0xff] %vm959, %v6103
      %6193 = vst.msk [vmem:[#allocation4 + $0x1c8] sm:$0xff] %vm959, %v6105
      %6194 = vst.msk [vmem:[#allocation4 + $0x1e0] sm:$0xff] %vm959, %v6107
      %6195 = vst.msk [vmem:[#allocation4 + $0x1f8] sm:$0xff] %vm959, %v6109
      %6196 = vst.msk [vmem:[#allocation4 + $0x210] sm:$0xff] %vm959, %v6111
      %6197 = vst.msk [vmem:[#allocation4 + $0x228] sm:$0xff] %vm959, %v6113
      %6198 = vst.msk [vmem:[#allocation4 + $0x240] sm:$0xff] %vm959, %v6115
      %6199 = vst.msk [vmem:[#allocation4 + $0x258] sm:$0xff] %vm959, %v6117
      %6200 = vst.msk [vmem:[#allocation4 + $0x270] sm:$0xff] %vm959, %v6119
      %6201 = vst.msk [vmem:[#allocation4 + $0x288] sm:$0xff] %vm959, %v6121
      %6202 = vst.msk [vmem:[#allocation4 + $0x2a0] sm:$0xff] %vm959, %v6123
      %6203 = vst.msk [vmem:[#allocation4 + $0x2b8] sm:$0xff] %vm959, %v6125
      %6204 = vst.msk [vmem:[#allocation4 + $0x2d0] sm:$0xff] %vm959, %v6127
      %6205 = vst.msk [vmem:[#allocation4 + $0x2e8] sm:$0xff] %vm959, %v6129
      %6206 = vst.msk [vmem:[#allocation4 + $0x300] sm:$0xff] %vm959, %v6131
      %6207 = vst.msk [vmem:[#allocation4 + $0x318] sm:$0xff] %vm959, %v6133
      %6208 = vst.msk [vmem:[#allocation4 + $0x330] sm:$0xff] %vm959, %v6135
      %6209 = vst.msk [vmem:[#allocation4 + $0x348] sm:$0xff] %vm959, %v6137
      %v6210 = vld [vmem:[#allocation3 + $0x13] sm:$0xff]
      %v6211 = vld [vmem:[#allocation3 + $0x1b] sm:$0xff]
      %v6212 = vld [vmem:[#allocation3 + $0x23] sm:$0xff]
      %v6213 = vld [vmem:[#allocation3 + $0x2b] sm:$0xff]
      %v6214 = vld [vmem:[#allocation3 + $0x33] sm:$0xff]
      %v6215 = vld [vmem:[#allocation3 + $0x3b] sm:$0xff]
      %v6216 = vld [vmem:[#allocation3 + $0x43] sm:$0xff]
      %v6217 = vld [vmem:[#allocation3 + $0x4b] sm:$0xff]
      %v6218 = vld [vmem:[#allocation3 + $0x53] sm:$0xff]
      %v6219 = vld [vmem:[#allocation3 + $0x5b] sm:$0xff]
      %v6220 = vld [vmem:[#allocation3 + $0x63] sm:$0xff]
      %v6221 = vld [vmem:[#allocation3 + $0x6b] sm:$0xff]
      %v6222 = vld [vmem:[#allocation3 + $0x73] sm:$0xff]
      %v6223 = vld [vmem:[#allocation3 + $0x7b] sm:$0xff]
      %v6224 = vld [vmem:[#allocation3 + $0x83] sm:$0xff]
      %v6225 = vld [vmem:[#allocation3 + $0x8b] sm:$0xff]
      %v6226 = vld [vmem:[#allocation3 + $0x93] sm:$0xff]
      %v6227 = vld [vmem:[#allocation3 + $0x9b] sm:$0xff]
      %v6228 = vld [vmem:[#allocation3 + $0xa3] sm:$0xff]
      %v6229 = vld [vmem:[#allocation3 + $0xab] sm:$0xff]
      %v6230 = vld [vmem:[#allocation3 + $0xb3] sm:$0xff]
      %v6231 = vld [vmem:[#allocation3 + $0xbb] sm:$0xff]
      %v6232 = vld [vmem:[#allocation3 + $0xc3] sm:$0xff]
      %v6233 = vld [vmem:[#allocation3 + $0xcb] sm:$0xff]
      %v6234 = vld [vmem:[#allocation3 + $0xd3] sm:$0xff]
      %v6235 = vld [vmem:[#allocation3 + $0xdb] sm:$0xff]
      %v6236 = vld [vmem:[#allocation3 + $0xe3] sm:$0xff]
      %v6237 = vld [vmem:[#allocation3 + $0xeb] sm:$0xff]
      %v6238 = vld [vmem:[#allocation3 + $0xf3] sm:$0xff]
      %v6239 = vld [vmem:[#allocation3 + $0xfb] sm:$0xff]
      %v6240 = vld [vmem:[#allocation3 + $0x103] sm:$0xff]
      %v6241 = vld [vmem:[#allocation3 + $0x10b] sm:$0xff]
      %v6242 = vld [vmem:[#allocation3 + $0x113] sm:$0xff]
      %v6243 = vld [vmem:[#allocation3 + $0x11b] sm:$0xff]
      %v6244 = vld [vmem:[#allocation3 + $0x123] sm:$0xff]
      %v6245 = vld [vmem:[#allocation3 + $0x12b] sm:$0xff]
      %6246 = vst.msk [vmem:[#allocation4 + $0x8] sm:$0xff] %vm308, %v6210
      %6247 = vst.msk [vmem:[#allocation4 + $0x20] sm:$0xff] %vm308, %v6211
      %6248 = vst.msk [vmem:[#allocation4 + $0x38] sm:$0xff] %vm308, %v6212
      %6249 = vst.msk [vmem:[#allocation4 + $0x50] sm:$0xff] %vm308, %v6213
      %6250 = vst.msk [vmem:[#allocation4 + $0x68] sm:$0xff] %vm308, %v6214
      %6251 = vst.msk [vmem:[#allocation4 + $0x80] sm:$0xff] %vm308, %v6215
      %6252 = vst.msk [vmem:[#allocation4 + $0x98] sm:$0xff] %vm308, %v6216
      %6253 = vst.msk [vmem:[#allocation4 + $0xb0] sm:$0xff] %vm308, %v6217
      %6254 = vst.msk [vmem:[#allocation4 + $0xc8] sm:$0xff] %vm308, %v6218
      %6255 = vst.msk [vmem:[#allocation4 + $0xe0] sm:$0xff] %vm308, %v6219
      %6256 = vst.msk [vmem:[#allocation4 + $0xf8] sm:$0xff] %vm308, %v6220
      %6257 = vst.msk [vmem:[#allocation4 + $0x110] sm:$0xff] %vm308, %v6221
      %6258 = vst.msk [vmem:[#allocation4 + $0x128] sm:$0xff] %vm308, %v6222
      %6259 = vst.msk [vmem:[#allocation4 + $0x140] sm:$0xff] %vm308, %v6223
      %6260 = vst.msk [vmem:[#allocation4 + $0x158] sm:$0xff] %vm308, %v6224
      %6261 = vst.msk [vmem:[#allocation4 + $0x170] sm:$0xff] %vm308, %v6225
      %6262 = vst.msk [vmem:[#allocation4 + $0x188] sm:$0xff] %vm308, %v6226
      %6263 = vst.msk [vmem:[#allocation4 + $0x1a0] sm:$0xff] %vm308, %v6227
      %6264 = vst.msk [vmem:[#allocation4 + $0x1b8] sm:$0xff] %vm308, %v6228
      %6265 = vst.msk [vmem:[#allocation4 + $0x1d0] sm:$0xff] %vm308, %v6229
      %6266 = vst.msk [vmem:[#allocation4 + $0x1e8] sm:$0xff] %vm308, %v6230
      %6267 = vst.msk [vmem:[#allocation4 + $0x200] sm:$0xff] %vm308, %v6231
      %6268 = vst.msk [vmem:[#allocation4 + $0x218] sm:$0xff] %vm308, %v6232
      %6269 = vst.msk [vmem:[#allocation4 + $0x230] sm:$0xff] %vm308, %v6233
      %6270 = vst.msk [vmem:[#allocation4 + $0x248] sm:$0xff] %vm308, %v6234
      %6271 = vst.msk [vmem:[#allocation4 + $0x260] sm:$0xff] %vm308, %v6235
      %6272 = vst.msk [vmem:[#allocation4 + $0x278] sm:$0xff] %vm308, %v6236
      %6273 = vst.msk [vmem:[#allocation4 + $0x290] sm:$0xff] %vm308, %v6237
      %6274 = vst.msk [vmem:[#allocation4 + $0x2a8] sm:$0xff] %vm308, %v6238
      %6275 = vst.msk [vmem:[#allocation4 + $0x2c0] sm:$0xff] %vm308, %v6239
      %6276 = vst.msk [vmem:[#allocation4 + $0x2d8] sm:$0xff] %vm308, %v6240
      %6277 = vst.msk [vmem:[#allocation4 + $0x2f0] sm:$0xff] %vm308, %v6241
      %6278 = vst.msk [vmem:[#allocation4 + $0x308] sm:$0xff] %vm308, %v6242
      %6279 = vst.msk [vmem:[#allocation4 + $0x320] sm:$0xff] %vm308, %v6243
      %6280 = vst.msk [vmem:[#allocation4 + $0x338] sm:$0xff] %vm308, %v6244
      %6281 = vst.msk [vmem:[#allocation4 + $0x350] sm:$0xff] %vm308, %v6245
      %v6282 = vld [vmem:[#allocation3 + $0x14] sm:$0xff]
      %v6283 = vld [vmem:[#allocation3 + $0x1c] sm:$0xff]
      %v6284 = vld [vmem:[#allocation3 + $0x24] sm:$0xff]
      %v6285 = vld [vmem:[#allocation3 + $0x2c] sm:$0xff]
      %v6286 = vld [vmem:[#allocation3 + $0x34] sm:$0xff]
      %v6287 = vld [vmem:[#allocation3 + $0x3c] sm:$0xff]
      %v6288 = vld [vmem:[#allocation3 + $0x44] sm:$0xff]
      %v6289 = vld [vmem:[#allocation3 + $0x4c] sm:$0xff]
      %v6290 = vld [vmem:[#allocation3 + $0x54] sm:$0xff]
      %v6291 = vld [vmem:[#allocation3 + $0x5c] sm:$0xff]
      %v6292 = vld [vmem:[#allocation3 + $0x64] sm:$0xff]
      %v6293 = vld [vmem:[#allocation3 + $0x6c] sm:$0xff]
      %v6294 = vld [vmem:[#allocation3 + $0x74] sm:$0xff]
      %v6295 = vld [vmem:[#allocation3 + $0x7c] sm:$0xff]
      %v6296 = vld [vmem:[#allocation3 + $0x84] sm:$0xff]
      %v6297 = vld [vmem:[#allocation3 + $0x8c] sm:$0xff]
      %v6298 = vld [vmem:[#allocation3 + $0x94] sm:$0xff]
      %v6299 = vld [vmem:[#allocation3 + $0x9c] sm:$0xff]
      %v6300 = vld [vmem:[#allocation3 + $0xa4] sm:$0xff]
      %v6301 = vld [vmem:[#allocation3 + $0xac] sm:$0xff]
      %v6302 = vld [vmem:[#allocation3 + $0xb4] sm:$0xff]
      %v6303 = vld [vmem:[#allocation3 + $0xbc] sm:$0xff]
      %v6304 = vld [vmem:[#allocation3 + $0xc4] sm:$0xff]
      %v6305 = vld [vmem:[#allocation3 + $0xcc] sm:$0xff]
      %v6306 = vld [vmem:[#allocation3 + $0xd4] sm:$0xff]
      %v6307 = vld [vmem:[#allocation3 + $0xdc] sm:$0xff]
      %v6308 = vld [vmem:[#allocation3 + $0xe4] sm:$0xff]
      %v6309 = vld [vmem:[#allocation3 + $0xec] sm:$0xff]
      %v6310 = vld [vmem:[#allocation3 + $0xf4] sm:$0xff]
      %v6311 = vld [vmem:[#allocation3 + $0xfc] sm:$0xff]
      %v6312 = vld [vmem:[#allocation3 + $0x104] sm:$0xff]
      %v6313 = vld [vmem:[#allocation3 + $0x10c] sm:$0xff]
      %v6314 = vld [vmem:[#allocation3 + $0x114] sm:$0xff]
      %v6315 = vld [vmem:[#allocation3 + $0x11c] sm:$0xff]
      %v6316 = vld [vmem:[#allocation3 + $0x124] sm:$0xff]
      %v6317 = vld [vmem:[#allocation3 + $0x12c] sm:$0xff]
      %6354 = vrot.lane.b32.xlu0 %v6282, 32
      %v6355 = vpop.permute.xlu0 %6354
      %6356 = vrot.lane.b32.xlu0 %v6283, 32
      %v6357 = vpop.permute.xlu0 %6356
      %6358 = vrot.lane.b32.xlu0 %v6284, 32
      %v6359 = vpop.permute.xlu0 %6358
      %6360 = vrot.lane.b32.xlu0 %v6285, 32
      %v6361 = vpop.permute.xlu0 %6360
      %6362 = vrot.lane.b32.xlu0 %v6286, 32
      %v6363 = vpop.permute.xlu0 %6362
      %6364 = vrot.lane.b32.xlu0 %v6287, 32
      %v6365 = vpop.permute.xlu0 %6364
      %6366 = vrot.lane.b32.xlu0 %v6288, 32
      %v6367 = vpop.permute.xlu0 %6366
      %6368 = vrot.lane.b32.xlu0 %v6289, 32
      %v6369 = vpop.permute.xlu0 %6368
      %6370 = vrot.lane.b32.xlu0 %v6290, 32
      %v6371 = vpop.permute.xlu0 %6370
      %6372 = vrot.lane.b32.xlu0 %v6291, 32
      %v6373 = vpop.permute.xlu0 %6372
      %6374 = vrot.lane.b32.xlu0 %v6292, 32
      %v6375 = vpop.permute.xlu0 %6374
      %6376 = vrot.lane.b32.xlu0 %v6293, 32
      %v6377 = vpop.permute.xlu0 %6376
      %6378 = vrot.lane.b32.xlu0 %v6294, 32
      %v6379 = vpop.permute.xlu0 %6378
      %6380 = vrot.lane.b32.xlu0 %v6295, 32
      %v6381 = vpop.permute.xlu0 %6380
      %6382 = vrot.lane.b32.xlu0 %v6296, 32
      %v6383 = vpop.permute.xlu0 %6382
      %6384 = vrot.lane.b32.xlu0 %v6297, 32
      %v6385 = vpop.permute.xlu0 %6384
      %6386 = vrot.lane.b32.xlu0 %v6298, 32
      %v6387 = vpop.permute.xlu0 %6386
      %6388 = vrot.lane.b32.xlu0 %v6299, 32
      %v6389 = vpop.permute.xlu0 %6388
      %6390 = vrot.lane.b32.xlu0 %v6300, 32
      %v6391 = vpop.permute.xlu0 %6390
      %6392 = vrot.lane.b32.xlu0 %v6301, 32
      %v6393 = vpop.permute.xlu0 %6392
      %6394 = vrot.lane.b32.xlu0 %v6302, 32
      %v6395 = vpop.permute.xlu0 %6394
      %6396 = vrot.lane.b32.xlu0 %v6303, 32
      %v6397 = vpop.permute.xlu0 %6396
      %6398 = vrot.lane.b32.xlu0 %v6304, 32
      %v6399 = vpop.permute.xlu0 %6398
      %6400 = vrot.lane.b32.xlu0 %v6305, 32
      %v6401 = vpop.permute.xlu0 %6400
      %6402 = vrot.lane.b32.xlu0 %v6306, 32
      %v6403 = vpop.permute.xlu0 %6402
      %6404 = vrot.lane.b32.xlu0 %v6307, 32
      %v6405 = vpop.permute.xlu0 %6404
      %6406 = vrot.lane.b32.xlu0 %v6308, 32
      %v6407 = vpop.permute.xlu0 %6406
      %6408 = vrot.lane.b32.xlu0 %v6309, 32
      %v6409 = vpop.permute.xlu0 %6408
      %6410 = vrot.lane.b32.xlu0 %v6310, 32
      %v6411 = vpop.permute.xlu0 %6410
      %6412 = vrot.lane.b32.xlu0 %v6311, 32
      %v6413 = vpop.permute.xlu0 %6412
      %6414 = vrot.lane.b32.xlu0 %v6312, 32
      %v6415 = vpop.permute.xlu0 %6414
      %6416 = vrot.lane.b32.xlu0 %v6313, 32
      %v6417 = vpop.permute.xlu0 %6416
      %6418 = vrot.lane.b32.xlu0 %v6314, 32
      %v6419 = vpop.permute.xlu0 %6418
      %6420 = vrot.lane.b32.xlu0 %v6315, 32
      %v6421 = vpop.permute.xlu0 %6420
      %6422 = vrot.lane.b32.xlu0 %v6316, 32
      %v6423 = vpop.permute.xlu0 %6422
      %6424 = vrot.lane.b32.xlu0 %v6317, 32
      %v6425 = vpop.permute.xlu0 %6424
      %6462 = vst.msk [vmem:[#allocation4 + $0x8] sm:$0xff] %vm525, %v6355
      %6463 = vst.msk [vmem:[#allocation4 + $0x20] sm:$0xff] %vm525, %v6357
      %6464 = vst.msk [vmem:[#allocation4 + $0x38] sm:$0xff] %vm525, %v6359
      %6465 = vst.msk [vmem:[#allocation4 + $0x50] sm:$0xff] %vm525, %v6361
      %6466 = vst.msk [vmem:[#allocation4 + $0x68] sm:$0xff] %vm525, %v6363
      %6467 = vst.msk [vmem:[#allocation4 + $0x80] sm:$0xff] %vm525, %v6365
      %6468 = vst.msk [vmem:[#allocation4 + $0x98] sm:$0xff] %vm525, %v6367
      %6469 = vst.msk [vmem:[#allocation4 + $0xb0] sm:$0xff] %vm525, %v6369
      %6470 = vst.msk [vmem:[#allocation4 + $0xc8] sm:$0xff] %vm525, %v6371
      %6471 = vst.msk [vmem:[#allocation4 + $0xe0] sm:$0xff] %vm525, %v6373
      %6472 = vst.msk [vmem:[#allocation4 + $0xf8] sm:$0xff] %vm525, %v6375
      %6473 = vst.msk [vmem:[#allocation4 + $0x110] sm:$0xff] %vm525, %v6377
      %6474 = vst.msk [vmem:[#allocation4 + $0x128] sm:$0xff] %vm525, %v6379
      %6475 = vst.msk [vmem:[#allocation4 + $0x140] sm:$0xff] %vm525, %v6381
      %6476 = vst.msk [vmem:[#allocation4 + $0x158] sm:$0xff] %vm525, %v6383
      %6477 = vst.msk [vmem:[#allocation4 + $0x170] sm:$0xff] %vm525, %v6385
      %6478 = vst.msk [vmem:[#allocation4 + $0x188] sm:$0xff] %vm525, %v6387
      %6479 = vst.msk [vmem:[#allocation4 + $0x1a0] sm:$0xff] %vm525, %v6389
      %6480 = vst.msk [vmem:[#allocation4 + $0x1b8] sm:$0xff] %vm525, %v6391
      %6481 = vst.msk [vmem:[#allocation4 + $0x1d0] sm:$0xff] %vm525, %v6393
      %6482 = vst.msk [vmem:[#allocation4 + $0x1e8] sm:$0xff] %vm525, %v6395
      %6483 = vst.msk [vmem:[#allocation4 + $0x200] sm:$0xff] %vm525, %v6397
      %6484 = vst.msk [vmem:[#allocation4 + $0x218] sm:$0xff] %vm525, %v6399
      %6485 = vst.msk [vmem:[#allocation4 + $0x230] sm:$0xff] %vm525, %v6401
      %6486 = vst.msk [vmem:[#allocation4 + $0x248] sm:$0xff] %vm525, %v6403
      %6487 = vst.msk [vmem:[#allocation4 + $0x260] sm:$0xff] %vm525, %v6405
      %6488 = vst.msk [vmem:[#allocation4 + $0x278] sm:$0xff] %vm525, %v6407
      %6489 = vst.msk [vmem:[#allocation4 + $0x290] sm:$0xff] %vm525, %v6409
      %6490 = vst.msk [vmem:[#allocation4 + $0x2a8] sm:$0xff] %vm525, %v6411
      %6491 = vst.msk [vmem:[#allocation4 + $0x2c0] sm:$0xff] %vm525, %v6413
      %6492 = vst.msk [vmem:[#allocation4 + $0x2d8] sm:$0xff] %vm525, %v6415
      %6493 = vst.msk [vmem:[#allocation4 + $0x2f0] sm:$0xff] %vm525, %v6417
      %6494 = vst.msk [vmem:[#allocation4 + $0x308] sm:$0xff] %vm525, %v6419
      %6495 = vst.msk [vmem:[#allocation4 + $0x320] sm:$0xff] %vm525, %v6421
      %6496 = vst.msk [vmem:[#allocation4 + $0x338] sm:$0xff] %vm525, %v6423
      %6497 = vst.msk [vmem:[#allocation4 + $0x350] sm:$0xff] %vm525, %v6425
      %v6498 = vld [vmem:[#allocation3 + $0x24] sm:$0xff]
      %v6499 = vld [vmem:[#allocation3 + $0x2c] sm:$0xff]
      %v6500 = vld [vmem:[#allocation3 + $0x34] sm:$0xff]
      %v6501 = vld [vmem:[#allocation3 + $0x3c] sm:$0xff]
      %v6502 = vld [vmem:[#allocation3 + $0x44] sm:$0xff]
      %v6503 = vld [vmem:[#allocation3 + $0x4c] sm:$0xff]
      %v6504 = vld [vmem:[#allocation3 + $0x54] sm:$0xff]
      %v6505 = vld [vmem:[#allocation3 + $0x5c] sm:$0xff]
      %v6506 = vld [vmem:[#allocation3 + $0x64] sm:$0xff]
      %v6507 = vld [vmem:[#allocation3 + $0x6c] sm:$0xff]
      %v6508 = vld [vmem:[#allocation3 + $0x74] sm:$0xff]
      %v6509 = vld [vmem:[#allocation3 + $0x7c] sm:$0xff]
      %v6510 = vld [vmem:[#allocation3 + $0x84] sm:$0xff]
      %v6511 = vld [vmem:[#allocation3 + $0x8c] sm:$0xff]
      %v6512 = vld [vmem:[#allocation3 + $0x94] sm:$0xff]
      %v6513 = vld [vmem:[#allocation3 + $0x9c] sm:$0xff]
      %v6514 = vld [vmem:[#allocation3 + $0xa4] sm:$0xff]
      %v6515 = vld [vmem:[#allocation3 + $0xac] sm:$0xff]
      %v6516 = vld [vmem:[#allocation3 + $0xb4] sm:$0xff]
      %v6517 = vld [vmem:[#allocation3 + $0xbc] sm:$0xff]
      %v6518 = vld [vmem:[#allocation3 + $0xc4] sm:$0xff]
      %v6519 = vld [vmem:[#allocation3 + $0xcc] sm:$0xff]
      %v6520 = vld [vmem:[#allocation3 + $0xd4] sm:$0xff]
      %v6521 = vld [vmem:[#allocation3 + $0xdc] sm:$0xff]
      %v6522 = vld [vmem:[#allocation3 + $0xe4] sm:$0xff]
      %v6523 = vld [vmem:[#allocation3 + $0xec] sm:$0xff]
      %v6524 = vld [vmem:[#allocation3 + $0xf4] sm:$0xff]
      %v6525 = vld [vmem:[#allocation3 + $0xfc] sm:$0xff]
      %v6526 = vld [vmem:[#allocation3 + $0x104] sm:$0xff]
      %v6527 = vld [vmem:[#allocation3 + $0x10c] sm:$0xff]
      %v6528 = vld [vmem:[#allocation3 + $0x114] sm:$0xff]
      %v6529 = vld [vmem:[#allocation3 + $0x11c] sm:$0xff]
      %v6530 = vld [vmem:[#allocation3 + $0x124] sm:$0xff]
      %v6531 = vld [vmem:[#allocation3 + $0x12c] sm:$0xff]
      %v6532 = vld [vmem:[#allocation3 + $0x134] sm:$0xff]
      %v6533 = vld [vmem:[#allocation3 + $0x13c] sm:$0xff]
      %6570 = vrot.lane.b32.xlu0 %v6498, 64
      %v6571 = vpop.permute.xlu0 %6570
      %6572 = vrot.lane.b32.xlu0 %v6499, 64
      %v6573 = vpop.permute.xlu0 %6572
      %6574 = vrot.lane.b32.xlu0 %v6500, 64
      %v6575 = vpop.permute.xlu0 %6574
      %6576 = vrot.lane.b32.xlu0 %v6501, 64
      %v6577 = vpop.permute.xlu0 %6576
      %6578 = vrot.lane.b32.xlu0 %v6502, 64
      %v6579 = vpop.permute.xlu0 %6578
      %6580 = vrot.lane.b32.xlu0 %v6503, 64
      %v6581 = vpop.permute.xlu0 %6580
      %6582 = vrot.lane.b32.xlu0 %v6504, 64
      %v6583 = vpop.permute.xlu0 %6582
      %6584 = vrot.lane.b32.xlu0 %v6505, 64
      %v6585 = vpop.permute.xlu0 %6584
      %6586 = vrot.lane.b32.xlu0 %v6506, 64
      %v6587 = vpop.permute.xlu0 %6586
      %6588 = vrot.lane.b32.xlu0 %v6507, 64
      %v6589 = vpop.permute.xlu0 %6588
      %6590 = vrot.lane.b32.xlu0 %v6508, 64
      %v6591 = vpop.permute.xlu0 %6590
      %6592 = vrot.lane.b32.xlu0 %v6509, 64
      %v6593 = vpop.permute.xlu0 %6592
      %6594 = vrot.lane.b32.xlu0 %v6510, 64
      %v6595 = vpop.permute.xlu0 %6594
      %6596 = vrot.lane.b32.xlu0 %v6511, 64
      %v6597 = vpop.permute.xlu0 %6596
      %6598 = vrot.lane.b32.xlu0 %v6512, 64
      %v6599 = vpop.permute.xlu0 %6598
      %6600 = vrot.lane.b32.xlu0 %v6513, 64
      %v6601 = vpop.permute.xlu0 %6600
      %6602 = vrot.lane.b32.xlu0 %v6514, 64
      %v6603 = vpop.permute.xlu0 %6602
      %6604 = vrot.lane.b32.xlu0 %v6515, 64
      %v6605 = vpop.permute.xlu0 %6604
      %6606 = vrot.lane.b32.xlu0 %v6516, 64
      %v6607 = vpop.permute.xlu0 %6606
      %6608 = vrot.lane.b32.xlu0 %v6517, 64
      %v6609 = vpop.permute.xlu0 %6608
      %6610 = vrot.lane.b32.xlu0 %v6518, 64
      %v6611 = vpop.permute.xlu0 %6610
      %6612 = vrot.lane.b32.xlu0 %v6519, 64
      %v6613 = vpop.permute.xlu0 %6612
      %6614 = vrot.lane.b32.xlu0 %v6520, 64
      %v6615 = vpop.permute.xlu0 %6614
      %6616 = vrot.lane.b32.xlu0 %v6521, 64
      %v6617 = vpop.permute.xlu0 %6616
      %6618 = vrot.lane.b32.xlu0 %v6522, 64
      %v6619 = vpop.permute.xlu0 %6618
      %6620 = vrot.lane.b32.xlu0 %v6523, 64
      %v6621 = vpop.permute.xlu0 %6620
      %6622 = vrot.lane.b32.xlu0 %v6524, 64
      %v6623 = vpop.permute.xlu0 %6622
      %6624 = vrot.lane.b32.xlu0 %v6525, 64
      %v6625 = vpop.permute.xlu0 %6624
      %6626 = vrot.lane.b32.xlu0 %v6526, 64
      %v6627 = vpop.permute.xlu0 %6626
      %6628 = vrot.lane.b32.xlu0 %v6527, 64
      %v6629 = vpop.permute.xlu0 %6628
      %6630 = vrot.lane.b32.xlu0 %v6528, 64
      %v6631 = vpop.permute.xlu0 %6630
      %6632 = vrot.lane.b32.xlu0 %v6529, 64
      %v6633 = vpop.permute.xlu0 %6632
      %6634 = vrot.lane.b32.xlu0 %v6530, 64
      %v6635 = vpop.permute.xlu0 %6634
      %6636 = vrot.lane.b32.xlu0 %v6531, 64
      %v6637 = vpop.permute.xlu0 %6636
      %6638 = vrot.lane.b32.xlu0 %v6532, 64
      %v6639 = vpop.permute.xlu0 %6638
      %6640 = vrot.lane.b32.xlu0 %v6533, 64
      %v6641 = vpop.permute.xlu0 %6640
      %6678 = vst.msk [vmem:[#allocation4 + $0x8] sm:$0xff] %vm742, %v6571
      %6679 = vst.msk [vmem:[#allocation4 + $0x20] sm:$0xff] %vm742, %v6573
      %6680 = vst.msk [vmem:[#allocation4 + $0x38] sm:$0xff] %vm742, %v6575
      %6681 = vst.msk [vmem:[#allocation4 + $0x50] sm:$0xff] %vm742, %v6577
      %6682 = vst.msk [vmem:[#allocation4 + $0x68] sm:$0xff] %vm742, %v6579
      %6683 = vst.msk [vmem:[#allocation4 + $0x80] sm:$0xff] %vm742, %v6581
      %6684 = vst.msk [vmem:[#allocation4 + $0x98] sm:$0xff] %vm742, %v6583
      %6685 = vst.msk [vmem:[#allocation4 + $0xb0] sm:$0xff] %vm742, %v6585
      %6686 = vst.msk [vmem:[#allocation4 + $0xc8] sm:$0xff] %vm742, %v6587
      %6687 = vst.msk [vmem:[#allocation4 + $0xe0] sm:$0xff] %vm742, %v6589
      %6688 = vst.msk [vmem:[#allocation4 + $0xf8] sm:$0xff] %vm742, %v6591
      %6689 = vst.msk [vmem:[#allocation4 + $0x110] sm:$0xff] %vm742, %v6593
      %6690 = vst.msk [vmem:[#allocation4 + $0x128] sm:$0xff] %vm742, %v6595
      %6691 = vst.msk [vmem:[#allocation4 + $0x140] sm:$0xff] %vm742, %v6597
      %6692 = vst.msk [vmem:[#allocation4 + $0x158] sm:$0xff] %vm742, %v6599
      %6693 = vst.msk [vmem:[#allocation4 + $0x170] sm:$0xff] %vm742, %v6601
      %6694 = vst.msk [vmem:[#allocation4 + $0x188] sm:$0xff] %vm742, %v6603
      %6695 = vst.msk [vmem:[#allocation4 + $0x1a0] sm:$0xff] %vm742, %v6605
      %6696 = vst.msk [vmem:[#allocation4 + $0x1b8] sm:$0xff] %vm742, %v6607
      %6697 = vst.msk [vmem:[#allocation4 + $0x1d0] sm:$0xff] %vm742, %v6609
      %6698 = vst.msk [vmem:[#allocation4 + $0x1e8] sm:$0xff] %vm742, %v6611
      %6699 = vst.msk [vmem:[#allocation4 + $0x200] sm:$0xff] %vm742, %v6613
      %6700 = vst.msk [vmem:[#allocation4 + $0x218] sm:$0xff] %vm742, %v6615
      %6701 = vst.msk [vmem:[#allocation4 + $0x230] sm:$0xff] %vm742, %v6617
      %6702 = vst.msk [vmem:[#allocation4 + $0x248] sm:$0xff] %vm742, %v6619
      %6703 = vst.msk [vmem:[#allocation4 + $0x260] sm:$0xff] %vm742, %v6621
      %6704 = vst.msk [vmem:[#allocation4 + $0x278] sm:$0xff] %vm742, %v6623
      %6705 = vst.msk [vmem:[#allocation4 + $0x290] sm:$0xff] %vm742, %v6625
      %6706 = vst.msk [vmem:[#allocation4 + $0x2a8] sm:$0xff] %vm742, %v6627
      %6707 = vst.msk [vmem:[#allocation4 + $0x2c0] sm:$0xff] %vm742, %v6629
      %6708 = vst.msk [vmem:[#allocation4 + $0x2d8] sm:$0xff] %vm742, %v6631
      %6709 = vst.msk [vmem:[#allocation4 + $0x2f0] sm:$0xff] %vm742, %v6633
      %6710 = vst.msk [vmem:[#allocation4 + $0x308] sm:$0xff] %vm742, %v6635
      %6711 = vst.msk [vmem:[#allocation4 + $0x320] sm:$0xff] %vm742, %v6637
      %6712 = vst.msk [vmem:[#allocation4 + $0x338] sm:$0xff] %vm742, %v6639
      %6713 = vst.msk [vmem:[#allocation4 + $0x350] sm:$0xff] %vm742, %v6641
      %v6714 = vld [vmem:[#allocation3 + $0x25] sm:$0xff]
      %v6715 = vld [vmem:[#allocation3 + $0x2d] sm:$0xff]
      %v6716 = vld [vmem:[#allocation3 + $0x35] sm:$0xff]
      %v6717 = vld [vmem:[#allocation3 + $0x3d] sm:$0xff]
      %v6718 = vld [vmem:[#allocation3 + $0x45] sm:$0xff]
      %v6719 = vld [vmem:[#allocation3 + $0x4d] sm:$0xff]
      %v6720 = vld [vmem:[#allocation3 + $0x55] sm:$0xff]
      %v6721 = vld [vmem:[#allocation3 + $0x5d] sm:$0xff]
      %v6722 = vld [vmem:[#allocation3 + $0x65] sm:$0xff]
      %v6723 = vld [vmem:[#allocation3 + $0x6d] sm:$0xff]
      %v6724 = vld [vmem:[#allocation3 + $0x75] sm:$0xff]
      %v6725 = vld [vmem:[#allocation3 + $0x7d] sm:$0xff]
      %v6726 = vld [vmem:[#allocation3 + $0x85] sm:$0xff]
      %v6727 = vld [vmem:[#allocation3 + $0x8d] sm:$0xff]
      %v6728 = vld [vmem:[#allocation3 + $0x95] sm:$0xff]
      %v6729 = vld [vmem:[#allocation3 + $0x9d] sm:$0xff]
      %v6730 = vld [vmem:[#allocation3 + $0xa5] sm:$0xff]
      %v6731 = vld [vmem:[#allocation3 + $0xad] sm:$0xff]
      %v6732 = vld [vmem:[#allocation3 + $0xb5] sm:$0xff]
      %v6733 = vld [vmem:[#allocation3 + $0xbd] sm:$0xff]
      %v6734 = vld [vmem:[#allocation3 + $0xc5] sm:$0xff]
      %v6735 = vld [vmem:[#allocation3 + $0xcd] sm:$0xff]
      %v6736 = vld [vmem:[#allocation3 + $0xd5] sm:$0xff]
      %v6737 = vld [vmem:[#allocation3 + $0xdd] sm:$0xff]
      %v6738 = vld [vmem:[#allocation3 + $0xe5] sm:$0xff]
      %v6739 = vld [vmem:[#allocation3 + $0xed] sm:$0xff]
      %v6740 = vld [vmem:[#allocation3 + $0xf5] sm:$0xff]
      %v6741 = vld [vmem:[#allocation3 + $0xfd] sm:$0xff]
      %v6742 = vld [vmem:[#allocation3 + $0x105] sm:$0xff]
      %v6743 = vld [vmem:[#allocation3 + $0x10d] sm:$0xff]
      %v6744 = vld [vmem:[#allocation3 + $0x115] sm:$0xff]
      %v6745 = vld [vmem:[#allocation3 + $0x11d] sm:$0xff]
      %v6746 = vld [vmem:[#allocation3 + $0x125] sm:$0xff]
      %v6747 = vld [vmem:[#allocation3 + $0x12d] sm:$0xff]
      %v6748 = vld [vmem:[#allocation3 + $0x135] sm:$0xff]
      %v6749 = vld [vmem:[#allocation3 + $0x13d] sm:$0xff]
      %6786 = vrot.lane.b32.xlu0 %v6714, 96
      %v6787 = vpop.permute.xlu0 %6786
      %6788 = vrot.lane.b32.xlu0 %v6715, 96
      %v6789 = vpop.permute.xlu0 %6788
      %6790 = vrot.lane.b32.xlu0 %v6716, 96
      %v6791 = vpop.permute.xlu0 %6790
      %6792 = vrot.lane.b32.xlu0 %v6717, 96
      %v6793 = vpop.permute.xlu0 %6792
      %6794 = vrot.lane.b32.xlu0 %v6718, 96
      %v6795 = vpop.permute.xlu0 %6794
      %6796 = vrot.lane.b32.xlu0 %v6719, 96
      %v6797 = vpop.permute.xlu0 %6796
      %6798 = vrot.lane.b32.xlu0 %v6720, 96
      %v6799 = vpop.permute.xlu0 %6798
      %6800 = vrot.lane.b32.xlu0 %v6721, 96
      %v6801 = vpop.permute.xlu0 %6800
      %6802 = vrot.lane.b32.xlu0 %v6722, 96
      %v6803 = vpop.permute.xlu0 %6802
      %6804 = vrot.lane.b32.xlu0 %v6723, 96
      %v6805 = vpop.permute.xlu0 %6804
      %6806 = vrot.lane.b32.xlu0 %v6724, 96
      %v6807 = vpop.permute.xlu0 %6806
      %6808 = vrot.lane.b32.xlu0 %v6725, 96
      %v6809 = vpop.permute.xlu0 %6808
      %6810 = vrot.lane.b32.xlu0 %v6726, 96
      %v6811 = vpop.permute.xlu0 %6810
      %6812 = vrot.lane.b32.xlu0 %v6727, 96
      %v6813 = vpop.permute.xlu0 %6812
      %6814 = vrot.lane.b32.xlu0 %v6728, 96
      %v6815 = vpop.permute.xlu0 %6814
      %6816 = vrot.lane.b32.xlu0 %v6729, 96
      %v6817 = vpop.permute.xlu0 %6816
      %6818 = vrot.lane.b32.xlu0 %v6730, 96
      %v6819 = vpop.permute.xlu0 %6818
      %6820 = vrot.lane.b32.xlu0 %v6731, 96
      %v6821 = vpop.permute.xlu0 %6820
      %6822 = vrot.lane.b32.xlu0 %v6732, 96
      %v6823 = vpop.permute.xlu0 %6822
      %6824 = vrot.lane.b32.xlu0 %v6733, 96
      %v6825 = vpop.permute.xlu0 %6824
      %6826 = vrot.lane.b32.xlu0 %v6734, 96
      %v6827 = vpop.permute.xlu0 %6826
      %6828 = vrot.lane.b32.xlu0 %v6735, 96
      %v6829 = vpop.permute.xlu0 %6828
      %6830 = vrot.lane.b32.xlu0 %v6736, 96
      %v6831 = vpop.permute.xlu0 %6830
      %6832 = vrot.lane.b32.xlu0 %v6737, 96
      %v6833 = vpop.permute.xlu0 %6832
      %6834 = vrot.lane.b32.xlu0 %v6738, 96
      %v6835 = vpop.permute.xlu0 %6834
      %6836 = vrot.lane.b32.xlu0 %v6739, 96
      %v6837 = vpop.permute.xlu0 %6836
      %6838 = vrot.lane.b32.xlu0 %v6740, 96
      %v6839 = vpop.permute.xlu0 %6838
      %6840 = vrot.lane.b32.xlu0 %v6741, 96
      %v6841 = vpop.permute.xlu0 %6840
      %6842 = vrot.lane.b32.xlu0 %v6742, 96
      %v6843 = vpop.permute.xlu0 %6842
      %6844 = vrot.lane.b32.xlu0 %v6743, 96
      %v6845 = vpop.permute.xlu0 %6844
      %6846 = vrot.lane.b32.xlu0 %v6744, 96
      %v6847 = vpop.permute.xlu0 %6846
      %6848 = vrot.lane.b32.xlu0 %v6745, 96
      %v6849 = vpop.permute.xlu0 %6848
      %6850 = vrot.lane.b32.xlu0 %v6746, 96
      %v6851 = vpop.permute.xlu0 %6850
      %6852 = vrot.lane.b32.xlu0 %v6747, 96
      %v6853 = vpop.permute.xlu0 %6852
      %6854 = vrot.lane.b32.xlu0 %v6748, 96
      %v6855 = vpop.permute.xlu0 %6854
      %6856 = vrot.lane.b32.xlu0 %v6749, 96
      %v6857 = vpop.permute.xlu0 %6856
      %6894 = vst.msk [vmem:[#allocation4 + $0x8] sm:$0xff] %vm959, %v6787
      %6895 = vst.msk [vmem:[#allocation4 + $0x20] sm:$0xff] %vm959, %v6789
      %6896 = vst.msk [vmem:[#allocation4 + $0x38] sm:$0xff] %vm959, %v6791
      %6897 = vst.msk [vmem:[#allocation4 + $0x50] sm:$0xff] %vm959, %v6793
      %6898 = vst.msk [vmem:[#allocation4 + $0x68] sm:$0xff] %vm959, %v6795
      %6899 = vst.msk [vmem:[#allocation4 + $0x80] sm:$0xff] %vm959, %v6797
      %6900 = vst.msk [vmem:[#allocation4 + $0x98] sm:$0xff] %vm959, %v6799
      %6901 = vst.msk [vmem:[#allocation4 + $0xb0] sm:$0xff] %vm959, %v6801
      %6902 = vst.msk [vmem:[#allocation4 + $0xc8] sm:$0xff] %vm959, %v6803
      %6903 = vst.msk [vmem:[#allocation4 + $0xe0] sm:$0xff] %vm959, %v6805
      %6904 = vst.msk [vmem:[#allocation4 + $0xf8] sm:$0xff] %vm959, %v6807
      %6905 = vst.msk [vmem:[#allocation4 + $0x110] sm:$0xff] %vm959, %v6809
      %6906 = vst.msk [vmem:[#allocation4 + $0x128] sm:$0xff] %vm959, %v6811
      %6907 = vst.msk [vmem:[#allocation4 + $0x140] sm:$0xff] %vm959, %v6813
      %6908 = vst.msk [vmem:[#allocation4 + $0x158] sm:$0xff] %vm959, %v6815
      %6909 = vst.msk [vmem:[#allocation4 + $0x170] sm:$0xff] %vm959, %v6817
      %6910 = vst.msk [vmem:[#allocation4 + $0x188] sm:$0xff] %vm959, %v6819
      %6911 = vst.msk [vmem:[#allocation4 + $0x1a0] sm:$0xff] %vm959, %v6821
      %6912 = vst.msk [vmem:[#allocation4 + $0x1b8] sm:$0xff] %vm959, %v6823
      %6913 = vst.msk [vmem:[#allocation4 + $0x1d0] sm:$0xff] %vm959, %v6825
      %6914 = vst.msk [vmem:[#allocation4 + $0x1e8] sm:$0xff] %vm959, %v6827
      %6915 = vst.msk [vmem:[#allocation4 + $0x200] sm:$0xff] %vm959, %v6829
      %6916 = vst.msk [vmem:[#allocation4 + $0x218] sm:$0xff] %vm959, %v6831
      %6917 = vst.msk [vmem:[#allocation4 + $0x230] sm:$0xff] %vm959, %v6833
      %6918 = vst.msk [vmem:[#allocation4 + $0x248] sm:$0xff] %vm959, %v6835
      %6919 = vst.msk [vmem:[#allocation4 + $0x260] sm:$0xff] %vm959, %v6837
      %6920 = vst.msk [vmem:[#allocation4 + $0x278] sm:$0xff] %vm959, %v6839
      %6921 = vst.msk [vmem:[#allocation4 + $0x290] sm:$0xff] %vm959, %v6841
      %6922 = vst.msk [vmem:[#allocation4 + $0x2a8] sm:$0xff] %vm959, %v6843
      %6923 = vst.msk [vmem:[#allocation4 + $0x2c0] sm:$0xff] %vm959, %v6845
      %6924 = vst.msk [vmem:[#allocation4 + $0x2d8] sm:$0xff] %vm959, %v6847
      %6925 = vst.msk [vmem:[#allocation4 + $0x2f0] sm:$0xff] %vm959, %v6849
      %6926 = vst.msk [vmem:[#allocation4 + $0x308] sm:$0xff] %vm959, %v6851
      %6927 = vst.msk [vmem:[#allocation4 + $0x320] sm:$0xff] %vm959, %v6853
      %6928 = vst.msk [vmem:[#allocation4 + $0x338] sm:$0xff] %vm959, %v6855
      %6929 = vst.msk [vmem:[#allocation4 + $0x350] sm:$0xff] %vm959, %v6857
      %v6930 = vld [vmem:[#allocation3 + $0x26] sm:$0xff]
      %v6931 = vld [vmem:[#allocation3 + $0x2e] sm:$0xff]
      %v6932 = vld [vmem:[#allocation3 + $0x36] sm:$0xff]
      %v6933 = vld [vmem:[#allocation3 + $0x3e] sm:$0xff]
      %v6934 = vld [vmem:[#allocation3 + $0x46] sm:$0xff]
      %v6935 = vld [vmem:[#allocation3 + $0x4e] sm:$0xff]
      %v6936 = vld [vmem:[#allocation3 + $0x56] sm:$0xff]
      %v6937 = vld [vmem:[#allocation3 + $0x5e] sm:$0xff]
      %v6938 = vld [vmem:[#allocation3 + $0x66] sm:$0xff]
      %v6939 = vld [vmem:[#allocation3 + $0x6e] sm:$0xff]
      %v6940 = vld [vmem:[#allocation3 + $0x76] sm:$0xff]
      %v6941 = vld [vmem:[#allocation3 + $0x7e] sm:$0xff]
      %v6942 = vld [vmem:[#allocation3 + $0x86] sm:$0xff]
      %v6943 = vld [vmem:[#allocation3 + $0x8e] sm:$0xff]
      %v6944 = vld [vmem:[#allocation3 + $0x96] sm:$0xff]
      %v6945 = vld [vmem:[#allocation3 + $0x9e] sm:$0xff]
      %v6946 = vld [vmem:[#allocation3 + $0xa6] sm:$0xff]
      %v6947 = vld [vmem:[#allocation3 + $0xae] sm:$0xff]
      %v6948 = vld [vmem:[#allocation3 + $0xb6] sm:$0xff]
      %v6949 = vld [vmem:[#allocation3 + $0xbe] sm:$0xff]
      %v6950 = vld [vmem:[#allocation3 + $0xc6] sm:$0xff]
      %v6951 = vld [vmem:[#allocation3 + $0xce] sm:$0xff]
      %v6952 = vld [vmem:[#allocation3 + $0xd6] sm:$0xff]
      %v6953 = vld [vmem:[#allocation3 + $0xde] sm:$0xff]
      %v6954 = vld [vmem:[#allocation3 + $0xe6] sm:$0xff]
      %v6955 = vld [vmem:[#allocation3 + $0xee] sm:$0xff]
      %v6956 = vld [vmem:[#allocation3 + $0xf6] sm:$0xff]
      %v6957 = vld [vmem:[#allocation3 + $0xfe] sm:$0xff]
      %v6958 = vld [vmem:[#allocation3 + $0x106] sm:$0xff]
      %v6959 = vld [vmem:[#allocation3 + $0x10e] sm:$0xff]
      %v6960 = vld [vmem:[#allocation3 + $0x116] sm:$0xff]
      %v6961 = vld [vmem:[#allocation3 + $0x11e] sm:$0xff]
      %v6962 = vld [vmem:[#allocation3 + $0x126] sm:$0xff]
      %v6963 = vld [vmem:[#allocation3 + $0x12e] sm:$0xff]
      %v6964 = vld [vmem:[#allocation3 + $0x136] sm:$0xff]
      %v6965 = vld [vmem:[#allocation3 + $0x13e] sm:$0xff]
      %6966 = vst.msk [vmem:[#allocation4 + $0x10] sm:$0xff] %vm308, %v6930
      %6967 = vst.msk [vmem:[#allocation4 + $0x28] sm:$0xff] %vm308, %v6931
      %6968 = vst.msk [vmem:[#allocation4 + $0x40] sm:$0xff] %vm308, %v6932
      %6969 = vst.msk [vmem:[#allocation4 + $0x58] sm:$0xff] %vm308, %v6933
      %6970 = vst.msk [vmem:[#allocation4 + $0x70] sm:$0xff] %vm308, %v6934
      %6971 = vst.msk [vmem:[#allocation4 + $0x88] sm:$0xff] %vm308, %v6935
      %6972 = vst.msk [vmem:[#allocation4 + $0xa0] sm:$0xff] %vm308, %v6936
      %6973 = vst.msk [vmem:[#allocation4 + $0xb8] sm:$0xff] %vm308, %v6937
      %6974 = vst.msk [vmem:[#allocation4 + $0xd0] sm:$0xff] %vm308, %v6938
      %6975 = vst.msk [vmem:[#allocation4 + $0xe8] sm:$0xff] %vm308, %v6939
      %6976 = vst.msk [vmem:[#allocation4 + $0x100] sm:$0xff] %vm308, %v6940
      %6977 = vst.msk [vmem:[#allocation4 + $0x118] sm:$0xff] %vm308, %v6941
      %6978 = vst.msk [vmem:[#allocation4 + $0x130] sm:$0xff] %vm308, %v6942
      %6979 = vst.msk [vmem:[#allocation4 + $0x148] sm:$0xff] %vm308, %v6943
      %6980 = vst.msk [vmem:[#allocation4 + $0x160] sm:$0xff] %vm308, %v6944
      %6981 = vst.msk [vmem:[#allocation4 + $0x178] sm:$0xff] %vm308, %v6945
      %6982 = vst.msk [vmem:[#allocation4 + $0x190] sm:$0xff] %vm308, %v6946
      %6983 = vst.msk [vmem:[#allocation4 + $0x1a8] sm:$0xff] %vm308, %v6947
      %6984 = vst.msk [vmem:[#allocation4 + $0x1c0] sm:$0xff] %vm308, %v6948
      %6985 = vst.msk [vmem:[#allocation4 + $0x1d8] sm:$0xff] %vm308, %v6949
      %6986 = vst.msk [vmem:[#allocation4 + $0x1f0] sm:$0xff] %vm308, %v6950
      %6987 = vst.msk [vmem:[#allocation4 + $0x208] sm:$0xff] %vm308, %v6951
      %6988 = vst.msk [vmem:[#allocation4 + $0x220] sm:$0xff] %vm308, %v6952
      %6989 = vst.msk [vmem:[#allocation4 + $0x238] sm:$0xff] %vm308, %v6953
      %6990 = vst.msk [vmem:[#allocation4 + $0x250] sm:$0xff] %vm308, %v6954
      %6991 = vst.msk [vmem:[#allocation4 + $0x268] sm:$0xff] %vm308, %v6955
      %6992 = vst.msk [vmem:[#allocation4 + $0x280] sm:$0xff] %vm308, %v6956
      %6993 = vst.msk [vmem:[#allocation4 + $0x298] sm:$0xff] %vm308, %v6957
      %6994 = vst.msk [vmem:[#allocation4 + $0x2b0] sm:$0xff] %vm308, %v6958
      %6995 = vst.msk [vmem:[#allocation4 + $0x2c8] sm:$0xff] %vm308, %v6959
      %6996 = vst.msk [vmem:[#allocation4 + $0x2e0] sm:$0xff] %vm308, %v6960
      %6997 = vst.msk [vmem:[#allocation4 + $0x2f8] sm:$0xff] %vm308, %v6961
      %6998 = vst.msk [vmem:[#allocation4 + $0x310] sm:$0xff] %vm308, %v6962
      %6999 = vst.msk [vmem:[#allocation4 + $0x328] sm:$0xff] %vm308, %v6963
      %7000 = vst.msk [vmem:[#allocation4 + $0x340] sm:$0xff] %vm308, %v6964
      %7001 = vst.msk [vmem:[#allocation4 + $0x358] sm:$0xff] %vm308, %v6965
      %v7002 = vld [vmem:[#allocation4] sm:$0xff]
      %v7003 = vld [vmem:[#allocation4 + $0x8] sm:$0xff]
      %v7004 = vld [vmem:[#allocation4 + $0x10] sm:$0xff]
      %v7005 = vld [vmem:[#allocation4 + $0x18] sm:$0xff]
      %v7006 = vld [vmem:[#allocation4 + $0x20] sm:$0xff]
      %v7007 = vld [vmem:[#allocation4 + $0x28] sm:$0xff]
      %v7008 = vld [vmem:[#allocation4 + $0x30] sm:$0xff]
      %v7009 = vld [vmem:[#allocation4 + $0x38] sm:$0xff]
      %v7010 = vld [vmem:[#allocation4 + $0x40] sm:$0xff]
      %v7011 = vld [vmem:[#allocation4 + $0x48] sm:$0xff]
      %v7012 = vld [vmem:[#allocation4 + $0x50] sm:$0xff]
      %v7013 = vld [vmem:[#allocation4 + $0x58] sm:$0xff]
      %v7014 = vld [vmem:[#allocation4 + $0x60] sm:$0xff]
      %v7015 = vld [vmem:[#allocation4 + $0x68] sm:$0xff]
      %v7016 = vld [vmem:[#allocation4 + $0x70] sm:$0xff]
      %v7017 = vld [vmem:[#allocation4 + $0x78] sm:$0xff]
      %v7018 = vld [vmem:[#allocation4 + $0x80] sm:$0xff]
      %v7019 = vld [vmem:[#allocation4 + $0x88] sm:$0xff]
      %v7020 = vld [vmem:[#allocation4 + $0x90] sm:$0xff]
      %v7021 = vld [vmem:[#allocation4 + $0x98] sm:$0xff]
      %v7022 = vld [vmem:[#allocation4 + $0xa0] sm:$0xff]
      %v7023 = vld [vmem:[#allocation4 + $0xa8] sm:$0xff]
      %v7024 = vld [vmem:[#allocation4 + $0xb0] sm:$0xff]
      %v7025 = vld [vmem:[#allocation4 + $0xb8] sm:$0xff]
      %v7026 = vld [vmem:[#allocation4 + $0xc0] sm:$0xff]
      %v7027 = vld [vmem:[#allocation4 + $0xc8] sm:$0xff]
      %v7028 = vld [vmem:[#allocation4 + $0xd0] sm:$0xff]
      %v7029 = vld [vmem:[#allocation4 + $0xd8] sm:$0xff]
      %v7030 = vld [vmem:[#allocation4 + $0xe0] sm:$0xff]
      %v7031 = vld [vmem:[#allocation4 + $0xe8] sm:$0xff]
      %v7032 = vld [vmem:[#allocation4 + $0xf0] sm:$0xff]
      %v7033 = vld [vmem:[#allocation4 + $0xf8] sm:$0xff]
      %v7034 = vld [vmem:[#allocation4 + $0x100] sm:$0xff]
      %v7035 = vld [vmem:[#allocation4 + $0x108] sm:$0xff]
      %v7036 = vld [vmem:[#allocation4 + $0x110] sm:$0xff]
      %v7037 = vld [vmem:[#allocation4 + $0x118] sm:$0xff]
      %v7038 = vld [vmem:[#allocation4 + $0x120] sm:$0xff]
      %v7039 = vld [vmem:[#allocation4 + $0x128] sm:$0xff]
      %v7040 = vld [vmem:[#allocation4 + $0x130] sm:$0xff]
      %v7041 = vld [vmem:[#allocation4 + $0x138] sm:$0xff]
      %v7042 = vld [vmem:[#allocation4 + $0x140] sm:$0xff]
      %v7043 = vld [vmem:[#allocation4 + $0x148] sm:$0xff]
      %v7044 = vld [vmem:[#allocation4 + $0x150] sm:$0xff]
      %v7045 = vld [vmem:[#allocation4 + $0x158] sm:$0xff]
      %v7046 = vld [vmem:[#allocation4 + $0x160] sm:$0xff]
      %v7047 = vld [vmem:[#allocation4 + $0x168] sm:$0xff]
      %v7048 = vld [vmem:[#allocation4 + $0x170] sm:$0xff]
      %v7049 = vld [vmem:[#allocation4 + $0x178] sm:$0xff]
      %v7050 = vld [vmem:[#allocation4 + $0x180] sm:$0xff]
      %v7051 = vld [vmem:[#allocation4 + $0x188] sm:$0xff]
      %v7052 = vld [vmem:[#allocation4 + $0x190] sm:$0xff]
      %v7053 = vld [vmem:[#allocation4 + $0x198] sm:$0xff]
      %v7054 = vld [vmem:[#allocation4 + $0x1a0] sm:$0xff]
      %v7055 = vld [vmem:[#allocation4 + $0x1a8] sm:$0xff]
      %v7056 = vld [vmem:[#allocation4 + $0x1b0] sm:$0xff]
      %v7057 = vld [vmem:[#allocation4 + $0x1b8] sm:$0xff]
      %v7058 = vld [vmem:[#allocation4 + $0x1c0] sm:$0xff]
      %v7059 = vld [vmem:[#allocation4 + $0x1c8] sm:$0xff]
      %v7060 = vld [vmem:[#allocation4 + $0x1d0] sm:$0xff]
      %v7061 = vld [vmem:[#allocation4 + $0x1d8] sm:$0xff]
      %v7062 = vld [vmem:[#allocation4 + $0x1e0] sm:$0xff]
      %v7063 = vld [vmem:[#allocation4 + $0x1e8] sm:$0xff]
      %v7064 = vld [vmem:[#allocation4 + $0x1f0] sm:$0xff]
      %v7065 = vld [vmem:[#allocation4 + $0x1f8] sm:$0xff]
      %v7066 = vld [vmem:[#allocation4 + $0x200] sm:$0xff]
      %v7067 = vld [vmem:[#allocation4 + $0x208] sm:$0xff]
      %v7068 = vld [vmem:[#allocation4 + $0x210] sm:$0xff]
      %v7069 = vld [vmem:[#allocation4 + $0x218] sm:$0xff]
      %v7070 = vld [vmem:[#allocation4 + $0x220] sm:$0xff]
      %v7071 = vld [vmem:[#allocation4 + $0x228] sm:$0xff]
      %v7072 = vld [vmem:[#allocation4 + $0x230] sm:$0xff]
      %v7073 = vld [vmem:[#allocation4 + $0x238] sm:$0xff]
      %v7074 = vld [vmem:[#allocation4 + $0x240] sm:$0xff]
      %v7075 = vld [vmem:[#allocation4 + $0x248] sm:$0xff]
      %v7076 = vld [vmem:[#allocation4 + $0x250] sm:$0xff]
      %v7077 = vld [vmem:[#allocation4 + $0x258] sm:$0xff]
      %v7078 = vld [vmem:[#allocation4 + $0x260] sm:$0xff]
      %v7079 = vld [vmem:[#allocation4 + $0x268] sm:$0xff]
      %v7080 = vld [vmem:[#allocation4 + $0x270] sm:$0xff]
      %v7081 = vld [vmem:[#allocation4 + $0x278] sm:$0xff]
      %v7082 = vld [vmem:[#allocation4 + $0x280] sm:$0xff]
      %v7083 = vld [vmem:[#allocation4 + $0x288] sm:$0xff]
      %v7084 = vld [vmem:[#allocation4 + $0x290] sm:$0xff]
      %v7085 = vld [vmem:[#allocation4 + $0x298] sm:$0xff]
      %v7086 = vld [vmem:[#allocation4 + $0x2a0] sm:$0xff]
      %v7087 = vld [vmem:[#allocation4 + $0x2a8] sm:$0xff]
      %v7088 = vld [vmem:[#allocation4 + $0x2b0] sm:$0xff]
      %v7089 = vld [vmem:[#allocation4 + $0x2b8] sm:$0xff]
      %v7090 = vld [vmem:[#allocation4 + $0x2c0] sm:$0xff]
      %v7091 = vld [vmem:[#allocation4 + $0x2c8] sm:$0xff]
      %v7092 = vld [vmem:[#allocation4 + $0x2d0] sm:$0xff]
      %v7093 = vld [vmem:[#allocation4 + $0x2d8] sm:$0xff]
      %v7094 = vld [vmem:[#allocation4 + $0x2e0] sm:$0xff]
      %v7095 = vld [vmem:[#allocation4 + $0x2e8] sm:$0xff]
      %v7096 = vld [vmem:[#allocation4 + $0x2f0] sm:$0xff]
      %v7097 = vld [vmem:[#allocation4 + $0x2f8] sm:$0xff]
      %v7098 = vld [vmem:[#allocation4 + $0x300] sm:$0xff]
      %v7099 = vld [vmem:[#allocation4 + $0x308] sm:$0xff]
      %v7100 = vld [vmem:[#allocation4 + $0x310] sm:$0xff]
      %v7101 = vld [vmem:[#allocation4 + $0x318] sm:$0xff]
      %v7102 = vld [vmem:[#allocation4 + $0x320] sm:$0xff]
      %v7103 = vld [vmem:[#allocation4 + $0x328] sm:$0xff]
      %v7104 = vld [vmem:[#allocation4 + $0x330] sm:$0xff]
      %v7105 = vld [vmem:[#allocation4 + $0x338] sm:$0xff]
      %v7106 = vld [vmem:[#allocation4 + $0x340] sm:$0xff]
      %v7107 = vld [vmem:[#allocation4 + $0x348] sm:$0xff]
      %v7108 = vld [vmem:[#allocation4 + $0x350] sm:$0xff]
      %v7109 = vld [vmem:[#allocation4 + $0x358] sm:$0xff]
      %v7110 = vld [vmem:[%s4] sm:$0xff]
      %v7111 = vld [vmem:[%s4 + $0x8] sm:$0xff]
      %v7112 = vld [vmem:[%s4 + $0x10] sm:$0xff]
      %v7113 = vld [vmem:[%s4 + $0x18] sm:$0xff]
      %v7114 = vld [vmem:[%s4 + $0x20] sm:$0xff]
      %v7115 = vld [vmem:[%s4 + $0x28] sm:$0xff]
      %v7116 = vld [vmem:[%s4 + $0x30] sm:$0xff]
      %v7117 = vld [vmem:[%s4 + $0x38] sm:$0xff]
      %v7118 = vld [vmem:[%s4 + $0x40] sm:$0xff]
      %v7119 = vld [vmem:[%s4 + $0x48] sm:$0xff]
      %v7120 = vld [vmem:[%s4 + $0x50] sm:$0xff]
      %v7121 = vld [vmem:[%s4 + $0x58] sm:$0xff]
      %v7122 = vld [vmem:[%s4 + $0x60] sm:$0xff]
      %v7123 = vld [vmem:[%s4 + $0x68] sm:$0xff]
      %v7124 = vld [vmem:[%s4 + $0x70] sm:$0xff]
      %v7125 = vld [vmem:[%s4 + $0x78] sm:$0xff]
      %v7126 = vld [vmem:[%s4 + $0x80] sm:$0xff]
      %v7127 = vld [vmem:[%s4 + $0x88] sm:$0xff]
      %v7128 = vld [vmem:[%s4 + $0x90] sm:$0xff]
      %v7129 = vld [vmem:[%s4 + $0x98] sm:$0xff]
      %v7130 = vld [vmem:[%s4 + $0xa0] sm:$0xff]
      %v7131 = vld [vmem:[%s4 + $0xa8] sm:$0xff]
      %v7132 = vld [vmem:[%s4 + $0xb0] sm:$0xff]
      %v7133 = vld [vmem:[%s4 + $0xb8] sm:$0xff]
      %v7134 = vld [vmem:[%s4 + $0xc0] sm:$0xff]
      %v7135 = vld [vmem:[%s4 + $0xc8] sm:$0xff]
      %v7136 = vld [vmem:[%s4 + $0xd0] sm:$0xff]
      %v7137 = vld [vmem:[%s4 + $0xd8] sm:$0xff]
      %v7138 = vld [vmem:[%s4 + $0xe0] sm:$0xff]
      %v7139 = vld [vmem:[%s4 + $0xe8] sm:$0xff]
      %v7140 = vld [vmem:[%s4 + $0xf0] sm:$0xff]
      %v7141 = vld [vmem:[%s4 + $0xf8] sm:$0xff]
      %v7142 = vld [vmem:[%s4 + $0x100] sm:$0xff]
      %v7143 = vld [vmem:[%s4 + $0x108] sm:$0xff]
      %v7144 = vld [vmem:[%s4 + $0x110] sm:$0xff]
      %v7145 = vld [vmem:[%s4 + $0x118] sm:$0xff]
      %v7146 = vld [vmem:[%s5] sm:$0x1]
      %v7148 = vlaneseq
      %v7149 = vshrl.u32 %v7148, 7
      %v7150 = vsub.s32 0, %v7149
      %v7151 = vrot.slane %v7146, %v7150
      %v7154 = vsel %vm308, %v7004, 0
      %v7157 = vsel %vm308, %v7007, 0
      %v7160 = vsel %vm308, %v7010, 0
      %v7163 = vsel %vm308, %v7013, 0
      %v7166 = vsel %vm308, %v7016, 0
      %v7169 = vsel %vm308, %v7019, 0
      %v7172 = vsel %vm308, %v7022, 0
      %v7175 = vsel %vm308, %v7025, 0
      %v7178 = vsel %vm308, %v7028, 0
      %v7181 = vsel %vm308, %v7031, 0
      %v7184 = vsel %vm308, %v7034, 0
      %v7187 = vsel %vm308, %v7037, 0
      %v7190 = vsel %vm308, %v7040, 0
      %v7193 = vsel %vm308, %v7043, 0
      %v7196 = vsel %vm308, %v7046, 0
      %v7199 = vsel %vm308, %v7049, 0
      %v7202 = vsel %vm308, %v7052, 0
      %v7205 = vsel %vm308, %v7055, 0
      %v7208 = vsel %vm308, %v7058, 0
      %v7211 = vsel %vm308, %v7061, 0
      %v7214 = vsel %vm308, %v7064, 0
      %v7217 = vsel %vm308, %v7067, 0
      %v7220 = vsel %vm308, %v7070, 0
      %v7223 = vsel %vm308, %v7073, 0
      %v7226 = vsel %vm308, %v7076, 0
      %v7229 = vsel %vm308, %v7079, 0
      %v7232 = vsel %vm308, %v7082, 0
      %v7235 = vsel %vm308, %v7085, 0
      %v7238 = vsel %vm308, %v7088, 0
      %v7241 = vsel %vm308, %v7091, 0
      %v7244 = vsel %vm308, %v7094, 0
      %v7247 = vsel %vm308, %v7097, 0
      %v7250 = vsel %vm308, %v7100, 0
      %v7253 = vsel %vm308, %v7103, 0
      %v7256 = vsel %vm308, %v7106, 0
      %v7259 = vsel %vm308, %v7109, 0
      %7261 = vmatprep.subr.mxu0 0.0
      %7262 = vmatpush1.msra.mxu0 %v7125
      %7263 = vmatprep.subr.mxu0 0.0
      %7264 = vmatpush1.msra.mxu0 %v7124
      %7265 = vmatprep.subr.mxu0 0.0
      %7266 = vmatpush1.msra.mxu0 %v7123
      %7267 = vmatprep.subr.mxu0 0.0
      %7268 = vmatpush1.msra.mxu0 %v7122
      %7269 = vmatprep.subr.mxu0 0.0
      %7270 = vmatpush1.msra.mxu0 %v7121
      %7271 = vmatprep.subr.mxu0 0.0
      %7272 = vmatpush1.msra.mxu0 %v7120
      %7273 = vmatprep.subr.mxu0 0.0
      %7274 = vmatpush1.msra.mxu0 %v7119
      %7275 = vmatprep.subr.mxu0 0.0
      %7276 = vmatpush1.msra.mxu0 %v7118
      %7277 = vmatprep.subr.mxu0 0.0
      %7278 = vmatpush1.msra.mxu0 %v7117
      %7279 = vmatprep.subr.mxu0 0.0
      %7280 = vmatpush1.msra.mxu0 %v7116
      %7281 = vmatprep.subr.mxu0 0.0
      %7282 = vmatpush1.msra.mxu0 %v7115
      %7283 = vmatprep.subr.mxu0 0.0
      %7284 = vmatpush1.msra.mxu0 %v7114
      %7285 = vmatprep.subr.mxu0 0.0
      %7286 = vmatpush1.msra.mxu0 %v7113
      %7287 = vmatprep.subr.mxu0 0.0
      %7288 = vmatpush1.msra.mxu0 %v7112
      %7289 = vmatprep.subr.mxu0 0.0
      %7290 = vmatpush1.msra.mxu0 %v7111
      %7291 = vmatprep.subr.mxu0 0.0
      %7292 = vmatpush1.msra.mxu0 %v7110
      %7293 = vmatprep.subr.mxu0 0.0
      %7294 = vmatpush2.msra.mxu0 %v7141
      %7295 = vmatprep.subr.mxu0 0.0
      %7296 = vmatpush2.msra.mxu0 %v7140
      %7297 = vmatprep.subr.mxu0 0.0
      %7298 = vmatpush2.msra.mxu0 %v7139
      %7299 = vmatprep.subr.mxu0 0.0
      %7300 = vmatpush2.msra.mxu0 %v7138
      %7301 = vmatprep.subr.mxu0 0.0
      %7302 = vmatpush2.msra.mxu0 %v7137
      %7303 = vmatprep.subr.mxu0 0.0
      %7304 = vmatpush2.msra.mxu0 %v7136
      %7305 = vmatprep.subr.mxu0 0.0
      %7306 = vmatpush2.msra.mxu0 %v7135
      %7307 = vmatprep.subr.mxu0 0.0
      %7308 = vmatpush2.msra.mxu0 %v7134
      %7309 = vmatprep.subr.mxu0 0.0
      %7310 = vmatpush2.msra.mxu0 %v7133
      %7311 = vmatprep.subr.mxu0 0.0
      %7312 = vmatpush2.msra.mxu0 %v7132
      %7313 = vmatprep.subr.mxu0 0.0
      %7314 = vmatpush2.msra.mxu0 %v7131
      %7315 = vmatprep.subr.mxu0 0.0
      %7316 = vmatpush2.msra.mxu0 %v7130
      %7317 = vmatprep.subr.mxu0 0.0
      %7318 = vmatpush2.msra.mxu0 %v7129
      %7319 = vmatprep.subr.mxu0 0.0
      %7320 = vmatpush2.msra.mxu0 %v7128
      %7321 = vmatprep.subr.mxu0 0.0
      %7322 = vmatpush2.msra.mxu0 %v7127
      %7323 = vmatprep.subr.mxu0 0.0
      %7324 = vmatpush2.msra.mxu0 %v7126
      %7325 = vmatprep.mubr.f32.mxu0 %v7003
      %7326 = vmatmul.mubr.f32.gmra.mxu0 %v7002
      %v7327 = vpop.f32.mrf.mxu0
      %v7328 = vadd.f32 %v7151, %v7327
      %v7329 = vpop.f32.mrf.mxu0
      %7330 = vmatprep.mubr.f32.mxu0 %v7006
      %7331 = vmatmul.mubr.f32.gmra.mxu0 %v7005
      %v7332 = vpop.f32.mrf.mxu0
      %v7333 = vadd.f32 %v7151, %v7332
      %v7334 = vpop.f32.mrf.mxu0
      %7335 = vmatprep.mubr.f32.mxu0 %v7009
      %7336 = vmatmul.mubr.f32.gmra.mxu0 %v7008
      %v7337 = vpop.f32.mrf.mxu0
      %v7338 = vadd.f32 %v7151, %v7337
      %v7339 = vpop.f32.mrf.mxu0
      %7340 = vmatprep.mubr.f32.mxu0 %v7012
      %7341 = vmatmul.mubr.f32.gmra.mxu0 %v7011
      %v7342 = vpop.f32.mrf.mxu0
      %v7343 = vadd.f32 %v7151, %v7342
      %v7344 = vpop.f32.mrf.mxu0
      %7345 = vmatprep.mubr.f32.mxu0 %v7015
      %7346 = vmatmul.mubr.f32.gmra.mxu0 %v7014
      %v7347 = vpop.f32.mrf.mxu0
      %v7348 = vadd.f32 %v7151, %v7347
      %v7349 = vpop.f32.mrf.mxu0
      %7350 = vmatprep.mubr.f32.mxu0 %v7018
      %7351 = vmatmul.mubr.f32.gmra.mxu0 %v7017
      %v7352 = vpop.f32.mrf.mxu0
      %v7353 = vadd.f32 %v7151, %v7352
      %v7354 = vpop.f32.mrf.mxu0
      %7355 = vmatprep.mubr.f32.mxu0 %v7021
      %7356 = vmatmul.mubr.f32.gmra.mxu0 %v7020
      %v7357 = vpop.f32.mrf.mxu0
      %v7358 = vadd.f32 %v7151, %v7357
      %v7359 = vpop.f32.mrf.mxu0
      %7360 = vmatprep.mubr.f32.mxu0 %v7024
      %7361 = vmatmul.mubr.f32.gmra.mxu0 %v7023
      %v7362 = vpop.f32.mrf.mxu0
      %v7363 = vadd.f32 %v7151, %v7362
      %v7364 = vpop.f32.mrf.mxu0
      %7365 = vmatprep.mubr.f32.mxu0 %v7027
      %7366 = vmatmul.mubr.f32.gmra.mxu0 %v7026
      %v7367 = vpop.f32.mrf.mxu0
      %v7368 = vadd.f32 %v7151, %v7367
      %v7369 = vpop.f32.mrf.mxu0
      %7370 = vmatprep.mubr.f32.mxu0 %v7030
      %7371 = vmatmul.mubr.f32.gmra.mxu0 %v7029
      %v7372 = vpop.f32.mrf.mxu0
      %v7373 = vadd.f32 %v7151, %v7372
      %v7374 = vpop.f32.mrf.mxu0
      %7375 = vmatprep.mubr.f32.mxu0 %v7033
      %7376 = vmatmul.mubr.f32.gmra.mxu0 %v7032
      %v7377 = vpop.f32.mrf.mxu0
      %v7378 = vadd.f32 %v7151, %v7377
      %v7379 = vpop.f32.mrf.mxu0
      %7380 = vmatprep.mubr.f32.mxu0 %v7036
      %7381 = vmatmul.mubr.f32.gmra.mxu0 %v7035
      %v7382 = vpop.f32.mrf.mxu0
      %v7383 = vadd.f32 %v7151, %v7382
      %v7384 = vpop.f32.mrf.mxu0
      %7385 = vmatprep.mubr.f32.mxu0 %v7039
      %7386 = vmatmul.mubr.f32.gmra.mxu0 %v7038
      %v7387 = vpop.f32.mrf.mxu0
      %v7388 = vadd.f32 %v7151, %v7387
      %v7389 = vpop.f32.mrf.mxu0
      %7390 = vmatprep.mubr.f32.mxu0 %v7042
      %7391 = vmatmul.mubr.f32.gmra.mxu0 %v7041
      %v7392 = vpop.f32.mrf.mxu0
      %v7393 = vadd.f32 %v7151, %v7392
      %v7394 = vpop.f32.mrf.mxu0
      %7395 = vmatprep.mubr.f32.mxu0 %v7045
      %7396 = vmatmul.mubr.f32.gmra.mxu0 %v7044
      %v7397 = vpop.f32.mrf.mxu0
      %v7398 = vadd.f32 %v7151, %v7397
      %v7399 = vpop.f32.mrf.mxu0
      %7400 = vmatprep.mubr.f32.mxu0 %v7048
      %7401 = vmatmul.mubr.f32.gmra.mxu0 %v7047
      %v7402 = vpop.f32.mrf.mxu0
      %v7403 = vadd.f32 %v7151, %v7402
      %v7404 = vpop.f32.mrf.mxu0
      %7405 = vmatprep.mubr.f32.mxu0 %v7051
      %7406 = vmatmul.mubr.f32.gmra.mxu0 %v7050
      %v7407 = vpop.f32.mrf.mxu0
      %v7408 = vadd.f32 %v7151, %v7407
      %v7409 = vpop.f32.mrf.mxu0
      %7410 = vmatprep.mubr.f32.mxu0 %v7054
      %7411 = vmatmul.mubr.f32.gmra.mxu0 %v7053
      %v7412 = vpop.f32.mrf.mxu0
      %v7413 = vadd.f32 %v7151, %v7412
      %v7414 = vpop.f32.mrf.mxu0
      %7415 = vmatprep.mubr.f32.mxu0 %v7057
      %7416 = vmatmul.mubr.f32.gmra.mxu0 %v7056
      %v7417 = vpop.f32.mrf.mxu0
      %v7418 = vadd.f32 %v7151, %v7417
      %v7419 = vpop.f32.mrf.mxu0
      %7420 = vmatprep.mubr.f32.mxu0 %v7060
      %7421 = vmatmul.mubr.f32.gmra.mxu0 %v7059
      %v7422 = vpop.f32.mrf.mxu0
      %v7423 = vadd.f32 %v7151, %v7422
      %v7424 = vpop.f32.mrf.mxu0
      %7425 = vmatprep.mubr.f32.mxu0 %v7063
      %7426 = vmatmul.mubr.f32.gmra.mxu0 %v7062
      %v7427 = vpop.f32.mrf.mxu0
      %v7428 = vadd.f32 %v7151, %v7427
      %v7429 = vpop.f32.mrf.mxu0
      %7430 = vmatprep.mubr.f32.mxu0 %v7066
      %7431 = vmatmul.mubr.f32.gmra.mxu0 %v7065
      %v7432 = vpop.f32.mrf.mxu0
      %v7433 = vadd.f32 %v7151, %v7432
      %v7434 = vpop.f32.mrf.mxu0
      %7435 = vmatprep.mubr.f32.mxu0 %v7069
      %7436 = vmatmul.mubr.f32.gmra.mxu0 %v7068
      %v7437 = vpop.f32.mrf.mxu0
      %v7438 = vadd.f32 %v7151, %v7437
      %v7439 = vpop.f32.mrf.mxu0
      %7440 = vmatprep.mubr.f32.mxu0 %v7072
      %7441 = vmatmul.mubr.f32.gmra.mxu0 %v7071
      %v7442 = vpop.f32.mrf.mxu0
      %v7443 = vadd.f32 %v7151, %v7442
      %v7444 = vpop.f32.mrf.mxu0
      %7445 = vmatprep.mubr.f32.mxu0 %v7075
      %7446 = vmatmul.mubr.f32.gmra.mxu0 %v7074
      %v7447 = vpop.f32.mrf.mxu0
      %v7448 = vadd.f32 %v7151, %v7447
      %v7449 = vpop.f32.mrf.mxu0
      %7450 = vmatprep.mubr.f32.mxu0 %v7078
      %7451 = vmatmul.mubr.f32.gmra.mxu0 %v7077
      %v7452 = vpop.f32.mrf.mxu0
      %v7453 = vadd.f32 %v7151, %v7452
      %v7454 = vpop.f32.mrf.mxu0
      %7455 = vmatprep.mubr.f32.mxu0 %v7081
      %7456 = vmatmul.mubr.f32.gmra.mxu0 %v7080
      %v7457 = vpop.f32.mrf.mxu0
      %v7458 = vadd.f32 %v7151, %v7457
      %v7459 = vpop.f32.mrf.mxu0
      %7460 = vmatprep.mubr.f32.mxu0 %v7084
      %7461 = vmatmul.mubr.f32.gmra.mxu0 %v7083
      %v7462 = vpop.f32.mrf.mxu0
      %v7463 = vadd.f32 %v7151, %v7462
      %v7464 = vpop.f32.mrf.mxu0
      %7465 = vmatprep.mubr.f32.mxu0 %v7087
      %7466 = vmatmul.mubr.f32.gmra.mxu0 %v7086
      %v7467 = vpop.f32.mrf.mxu0
      %v7468 = vadd.f32 %v7151, %v7467
      %v7469 = vpop.f32.mrf.mxu0
      %7470 = vmatprep.mubr.f32.mxu0 %v7090
      %7471 = vmatmul.mubr.f32.gmra.mxu0 %v7089
      %v7472 = vpop.f32.mrf.mxu0
      %v7473 = vadd.f32 %v7151, %v7472
      %v7474 = vpop.f32.mrf.mxu0
      %7475 = vmatprep.mubr.f32.mxu0 %v7093
      %7476 = vmatmul.mubr.f32.gmra.mxu0 %v7092
      %v7477 = vpop.f32.mrf.mxu0
      %v7478 = vadd.f32 %v7151, %v7477
      %v7479 = vpop.f32.mrf.mxu0
      %7480 = vmatprep.mubr.f32.mxu0 %v7096
      %7481 = vmatmul.mubr.f32.gmra.mxu0 %v7095
      %v7482 = vpop.f32.mrf.mxu0
      %v7483 = vadd.f32 %v7151, %v7482
      %v7484 = vpop.f32.mrf.mxu0
      %7485 = vmatprep.mubr.f32.mxu0 %v7099
      %7486 = vmatmul.mubr.f32.gmra.mxu0 %v7098
      %v7487 = vpop.f32.mrf.mxu0
      %v7488 = vadd.f32 %v7151, %v7487
      %v7489 = vpop.f32.mrf.mxu0
      %7490 = vmatprep.mubr.f32.mxu0 %v7102
      %7491 = vmatmul.mubr.f32.gmra.mxu0 %v7101
      %v7492 = vpop.f32.mrf.mxu0
      %v7493 = vadd.f32 %v7151, %v7492
      %v7494 = vpop.f32.mrf.mxu0
      %7495 = vmatprep.mubr.f32.mxu0 %v7105
      %7496 = vmatmul.mubr.f32.gmra.mxu0 %v7104
      %v7497 = vpop.f32.mrf.mxu0
      %v7498 = vadd.f32 %v7151, %v7497
      %v7499 = vpop.f32.mrf.mxu0
      %7500 = vmatprep.mubr.f32.mxu0 %v7108
      %7501 = vmatmul.mubr.f32.gmra.mxu0 %v7107
      %v7502 = vpop.f32.mrf.mxu0
      %v7503 = vadd.f32 %v7151, %v7502
      %v7504 = vpop.f32.mrf.mxu0
      %7505 = vdwg.mxu0
      %7506 = vmatprep.subr.mxu0 0.0
      %7507 = vmatpush1.msra.mxu0 0.0
      %7508 = vmatprep.subr.mxu0 0.0
      %7509 = vmatpush1.msra.mxu0 0.0
      %7510 = vmatprep.subr.mxu0 0.0
      %7511 = vmatpush1.msra.mxu0 0.0
      %7512 = vmatprep.subr.mxu0 0.0
      %7513 = vmatpush1.msra.mxu0 0.0
      %7514 = vmatprep.subr.mxu0 0.0
      %7515 = vmatpush1.msra.mxu0 0.0
      %7516 = vmatprep.subr.mxu0 0.0
      %7517 = vmatpush1.msra.mxu0 0.0
      %7518 = vmatprep.subr.mxu0 0.0
      %7519 = vmatpush1.msra.mxu0 0.0
      %7520 = vmatprep.subr.mxu0 0.0
      %7521 = vmatpush1.msra.mxu0 0.0
      %7522 = vmatprep.subr.mxu0 0.0
      %7523 = vmatpush1.msra.mxu0 0.0
      %7524 = vmatprep.subr.mxu0 0.0
      %7525 = vmatpush1.msra.mxu0 0.0
      %7526 = vmatprep.subr.mxu0 0.0
      %7527 = vmatpush1.msra.mxu0 0.0
      %7528 = vmatprep.subr.mxu0 0.0
      %7529 = vmatpush1.msra.mxu0 0.0
      %7530 = vmatprep.subr.mxu0 0.0
      %7531 = vmatpush1.msra.mxu0 %v7145
      %7532 = vmatprep.subr.mxu0 0.0
      %7533 = vmatpush1.msra.mxu0 %v7144
      %7534 = vmatprep.subr.mxu0 0.0
      %7535 = vmatpush1.msra.mxu0 %v7143
      %7536 = vmatprep.subr.mxu0 0.0
      %7537 = vmatpush1.msra.mxu0 %v7142
      %7538 = vmatprep.subr.mxu0 0.0
      %7539 = vmatpush2.msra.mxu0 0.0
      %7540 = vmatprep.subr.mxu0 0.0
      %7541 = vmatpush2.msra.mxu0 0.0
      %7542 = vmatprep.subr.mxu0 0.0
      %7543 = vmatpush2.msra.mxu0 0.0
      %7544 = vmatprep.subr.mxu0 0.0
      %7545 = vmatpush2.msra.mxu0 0.0
      %7546 = vmatprep.subr.mxu0 0.0
      %7547 = vmatpush2.msra.mxu0 0.0
      %7548 = vmatprep.subr.mxu0 0.0
      %7549 = vmatpush2.msra.mxu0 0.0
      %7550 = vmatprep.subr.mxu0 0.0
      %7551 = vmatpush2.msra.mxu0 0.0
      %7552 = vmatprep.subr.mxu0 0.0
      %7553 = vmatpush2.msra.mxu0 0.0
      %7554 = vmatprep.subr.mxu0 0.0
      %7555 = vmatpush2.msra.mxu0 0.0
      %7556 = vmatprep.subr.mxu0 0.0
      %7557 = vmatpush2.msra.mxu0 0.0
      %7558 = vmatprep.subr.mxu0 0.0
      %7559 = vmatpush2.msra.mxu0 0.0
      %7560 = vmatprep.subr.mxu0 0.0
      %7561 = vmatpush2.msra.mxu0 0.0
      %7562 = vmatprep.subr.mxu0 0.0
      %7563 = vmatpush2.msra.mxu0 0.0
      %7564 = vmatprep.subr.mxu0 0.0
      %7565 = vmatpush2.msra.mxu0 0.0
      %7566 = vmatprep.subr.mxu0 0.0
      %7567 = vmatpush2.msra.mxu0 0.0
      %7568 = vmatprep.subr.mxu0 0.0
      %7569 = vmatpush2.msra.mxu0 0.0
      %7570 = vmatprep.mubr.f32.mxu0 0.0
      %7571 = vmatmul.mubr.f32.gmra.mxu0 %v7154
      %v7572 = vpop.f32.mrf.mxu0
      %v7573 = vadd.f32 %v7328, %v7572
      %v7574 = vpop.f32.mrf.mxu0
      %7575 = vmatprep.mubr.f32.mxu0 0.0
      %7576 = vmatmul.mubr.f32.gmra.mxu0 %v7157
      %v7577 = vpop.f32.mrf.mxu0
      %v7578 = vadd.f32 %v7333, %v7577
      %v7579 = vpop.f32.mrf.mxu0
      %7580 = vmatprep.mubr.f32.mxu0 0.0
      %7581 = vmatmul.mubr.f32.gmra.mxu0 %v7160
      %v7582 = vpop.f32.mrf.mxu0
      %v7583 = vadd.f32 %v7338, %v7582
      %v7584 = vpop.f32.mrf.mxu0
      %7585 = vmatprep.mubr.f32.mxu0 0.0
      %7586 = vmatmul.mubr.f32.gmra.mxu0 %v7163
      %v7587 = vpop.f32.mrf.mxu0
      %v7588 = vadd.f32 %v7343, %v7587
      %v7589 = vpop.f32.mrf.mxu0
      %7590 = vmatprep.mubr.f32.mxu0 0.0
      %7591 = vmatmul.mubr.f32.gmra.mxu0 %v7166
      %v7592 = vpop.f32.mrf.mxu0
      %v7593 = vadd.f32 %v7348, %v7592
      %v7594 = vpop.f32.mrf.mxu0
      %7595 = vmatprep.mubr.f32.mxu0 0.0
      %7596 = vmatmul.mubr.f32.gmra.mxu0 %v7169
      %v7597 = vpop.f32.mrf.mxu0
      %v7598 = vadd.f32 %v7353, %v7597
      %v7599 = vpop.f32.mrf.mxu0
      %7600 = vmatprep.mubr.f32.mxu0 0.0
      %7601 = vmatmul.mubr.f32.gmra.mxu0 %v7172
      %v7602 = vpop.f32.mrf.mxu0
      %v7603 = vadd.f32 %v7358, %v7602
      %v7604 = vpop.f32.mrf.mxu0
      %7605 = vmatprep.mubr.f32.mxu0 0.0
      %7606 = vmatmul.mubr.f32.gmra.mxu0 %v7175
      %v7607 = vpop.f32.mrf.mxu0
      %v7608 = vadd.f32 %v7363, %v7607
      %v7609 = vpop.f32.mrf.mxu0
      %7610 = vmatprep.mubr.f32.mxu0 0.0
      %7611 = vmatmul.mubr.f32.gmra.mxu0 %v7178
      %v7612 = vpop.f32.mrf.mxu0
      %v7613 = vadd.f32 %v7368, %v7612
      %v7614 = vpop.f32.mrf.mxu0
      %7615 = vmatprep.mubr.f32.mxu0 0.0
      %7616 = vmatmul.mubr.f32.gmra.mxu0 %v7181
      %v7617 = vpop.f32.mrf.mxu0
      %v7618 = vadd.f32 %v7373, %v7617
      %v7619 = vpop.f32.mrf.mxu0
      %7620 = vmatprep.mubr.f32.mxu0 0.0
      %7621 = vmatmul.mubr.f32.gmra.mxu0 %v7184
      %v7622 = vpop.f32.mrf.mxu0
      %v7623 = vadd.f32 %v7378, %v7622
      %v7624 = vpop.f32.mrf.mxu0
      %7625 = vmatprep.mubr.f32.mxu0 0.0
      %7626 = vmatmul.mubr.f32.gmra.mxu0 %v7187
      %v7627 = vpop.f32.mrf.mxu0
      %v7628 = vadd.f32 %v7383, %v7627
      %v7629 = vpop.f32.mrf.mxu0
      %7630 = vmatprep.mubr.f32.mxu0 0.0
      %7631 = vmatmul.mubr.f32.gmra.mxu0 %v7190
      %v7632 = vpop.f32.mrf.mxu0
      %v7633 = vadd.f32 %v7388, %v7632
      %v7634 = vpop.f32.mrf.mxu0
      %7635 = vmatprep.mubr.f32.mxu0 0.0
      %7636 = vmatmul.mubr.f32.gmra.mxu0 %v7193
      %v7637 = vpop.f32.mrf.mxu0
      %v7638 = vadd.f32 %v7393, %v7637
      %v7639 = vpop.f32.mrf.mxu0
      %7640 = vmatprep.mubr.f32.mxu0 0.0
      %7641 = vmatmul.mubr.f32.gmra.mxu0 %v7196
      %v7642 = vpop.f32.mrf.mxu0
      %v7643 = vadd.f32 %v7398, %v7642
      %v7644 = vpop.f32.mrf.mxu0
      %7645 = vmatprep.mubr.f32.mxu0 0.0
      %7646 = vmatmul.mubr.f32.gmra.mxu0 %v7199
      %v7647 = vpop.f32.mrf.mxu0
      %v7648 = vadd.f32 %v7403, %v7647
      %v7649 = vpop.f32.mrf.mxu0
      %7650 = vmatprep.mubr.f32.mxu0 0.0
      %7651 = vmatmul.mubr.f32.gmra.mxu0 %v7202
      %v7652 = vpop.f32.mrf.mxu0
      %v7653 = vadd.f32 %v7408, %v7652
      %v7654 = vpop.f32.mrf.mxu0
      %7655 = vmatprep.mubr.f32.mxu0 0.0
      %7656 = vmatmul.mubr.f32.gmra.mxu0 %v7205
      %v7657 = vpop.f32.mrf.mxu0
      %v7658 = vadd.f32 %v7413, %v7657
      %v7659 = vpop.f32.mrf.mxu0
      %7660 = vmatprep.mubr.f32.mxu0 0.0
      %7661 = vmatmul.mubr.f32.gmra.mxu0 %v7208
      %v7662 = vpop.f32.mrf.mxu0
      %v7663 = vadd.f32 %v7418, %v7662
      %v7664 = vpop.f32.mrf.mxu0
      %7665 = vmatprep.mubr.f32.mxu0 0.0
      %7666 = vmatmul.mubr.f32.gmra.mxu0 %v7211
      %v7667 = vpop.f32.mrf.mxu0
      %v7668 = vadd.f32 %v7423, %v7667
      %v7669 = vpop.f32.mrf.mxu0
      %7670 = vmatprep.mubr.f32.mxu0 0.0
      %7671 = vmatmul.mubr.f32.gmra.mxu0 %v7214
      %v7672 = vpop.f32.mrf.mxu0
      %v7673 = vadd.f32 %v7428, %v7672
      %v7674 = vpop.f32.mrf.mxu0
      %7675 = vmatprep.mubr.f32.mxu0 0.0
      %7676 = vmatmul.mubr.f32.gmra.mxu0 %v7217
      %v7677 = vpop.f32.mrf.mxu0
      %v7678 = vadd.f32 %v7433, %v7677
      %v7679 = vpop.f32.mrf.mxu0
      %7680 = vmatprep.mubr.f32.mxu0 0.0
      %7681 = vmatmul.mubr.f32.gmra.mxu0 %v7220
      %v7682 = vpop.f32.mrf.mxu0
      %v7683 = vadd.f32 %v7438, %v7682
      %v7684 = vpop.f32.mrf.mxu0
      %7685 = vmatprep.mubr.f32.mxu0 0.0
      %7686 = vmatmul.mubr.f32.gmra.mxu0 %v7223
      %v7687 = vpop.f32.mrf.mxu0
      %v7688 = vadd.f32 %v7443, %v7687
      %v7689 = vpop.f32.mrf.mxu0
      %7690 = vmatprep.mubr.f32.mxu0 0.0
      %7691 = vmatmul.mubr.f32.gmra.mxu0 %v7226
      %v7692 = vpop.f32.mrf.mxu0
      %v7693 = vadd.f32 %v7448, %v7692
      %v7694 = vpop.f32.mrf.mxu0
      %7695 = vmatprep.mubr.f32.mxu0 0.0
      %7696 = vmatmul.mubr.f32.gmra.mxu0 %v7229
      %v7697 = vpop.f32.mrf.mxu0
      %v7698 = vadd.f32 %v7453, %v7697
      %v7699 = vpop.f32.mrf.mxu0
      %7700 = vmatprep.mubr.f32.mxu0 0.0
      %7701 = vmatmul.mubr.f32.gmra.mxu0 %v7232
      %v7702 = vpop.f32.mrf.mxu0
      %v7703 = vadd.f32 %v7458, %v7702
      %v7704 = vpop.f32.mrf.mxu0
      %7705 = vmatprep.mubr.f32.mxu0 0.0
      %7706 = vmatmul.mubr.f32.gmra.mxu0 %v7235
      %v7707 = vpop.f32.mrf.mxu0
      %v7708 = vadd.f32 %v7463, %v7707
      %v7709 = vpop.f32.mrf.mxu0
      %7710 = vmatprep.mubr.f32.mxu0 0.0
      %7711 = vmatmul.mubr.f32.gmra.mxu0 %v7238
      %v7712 = vpop.f32.mrf.mxu0
      %v7713 = vadd.f32 %v7468, %v7712
      %v7714 = vpop.f32.mrf.mxu0
      %7715 = vmatprep.mubr.f32.mxu0 0.0
      %7716 = vmatmul.mubr.f32.gmra.mxu0 %v7241
      %v7717 = vpop.f32.mrf.mxu0
      %v7718 = vadd.f32 %v7473, %v7717
      %v7719 = vpop.f32.mrf.mxu0
      %7720 = vmatprep.mubr.f32.mxu0 0.0
      %7721 = vmatmul.mubr.f32.gmra.mxu0 %v7244
      %v7722 = vpop.f32.mrf.mxu0
      %v7723 = vadd.f32 %v7478, %v7722
      %v7724 = vpop.f32.mrf.mxu0
      %7725 = vmatprep.mubr.f32.mxu0 0.0
      %7726 = vmatmul.mubr.f32.gmra.mxu0 %v7247
      %v7727 = vpop.f32.mrf.mxu0
      %v7728 = vadd.f32 %v7483, %v7727
      %v7729 = vpop.f32.mrf.mxu0
      %7730 = vmatprep.mubr.f32.mxu0 0.0
      %7731 = vmatmul.mubr.f32.gmra.mxu0 %v7250
      %v7732 = vpop.f32.mrf.mxu0
      %v7733 = vadd.f32 %v7488, %v7732
      %v7734 = vpop.f32.mrf.mxu0
      %7735 = vmatprep.mubr.f32.mxu0 0.0
      %7736 = vmatmul.mubr.f32.gmra.mxu0 %v7253
      %v7737 = vpop.f32.mrf.mxu0
      %v7738 = vadd.f32 %v7493, %v7737
      %v7739 = vpop.f32.mrf.mxu0
      %7740 = vmatprep.mubr.f32.mxu0 0.0
      %7741 = vmatmul.mubr.f32.gmra.mxu0 %v7256
      %v7742 = vpop.f32.mrf.mxu0
      %v7743 = vadd.f32 %v7498, %v7742
      %v7744 = vpop.f32.mrf.mxu0
      %7745 = vmatprep.mubr.f32.mxu0 0.0
      %7746 = vmatmul.mubr.f32.gmra.mxu0 %v7259
      %v7747 = vpop.f32.mrf.mxu0
      %v7748 = vadd.f32 %v7503, %v7747
      %v7749 = vpop.f32.mrf.mxu0
      %7750 = vdwg.mxu0
      %v7751 = vmax.f32 %v7573, 0.0
      %v7752 = vmax.f32 %v7578, 0.0
      %v7753 = vmax.f32 %v7583, 0.0
      %v7754 = vmax.f32 %v7588, 0.0
      %v7755 = vmax.f32 %v7593, 0.0
      %v7756 = vmax.f32 %v7598, 0.0
      %v7757 = vmax.f32 %v7603, 0.0
      %v7758 = vmax.f32 %v7608, 0.0
      %v7759 = vmax.f32 %v7613, 0.0
      %v7760 = vmax.f32 %v7618, 0.0
      %v7761 = vmax.f32 %v7623, 0.0
      %v7762 = vmax.f32 %v7628, 0.0
      %v7763 = vmax.f32 %v7633, 0.0
      %v7764 = vmax.f32 %v7638, 0.0
      %v7765 = vmax.f32 %v7643, 0.0
      %v7766 = vmax.f32 %v7648, 0.0
      %v7767 = vmax.f32 %v7653, 0.0
      %v7768 = vmax.f32 %v7658, 0.0
      %v7769 = vmax.f32 %v7663, 0.0
      %v7770 = vmax.f32 %v7668, 0.0
      %v7771 = vmax.f32 %v7673, 0.0
      %v7772 = vmax.f32 %v7678, 0.0
      %v7773 = vmax.f32 %v7683, 0.0
      %v7774 = vmax.f32 %v7688, 0.0
      %v7775 = vmax.f32 %v7693, 0.0
      %v7776 = vmax.f32 %v7698, 0.0
      %v7777 = vmax.f32 %v7703, 0.0
      %v7778 = vmax.f32 %v7708, 0.0
      %v7779 = vmax.f32 %v7713, 0.0
      %v7780 = vmax.f32 %v7718, 0.0
      %v7781 = vmax.f32 %v7723, 0.0
      %v7782 = vmax.f32 %v7728, 0.0
      %v7783 = vmax.f32 %v7733, 0.0
      %v7784 = vmax.f32 %v7738, 0.0
      %v7785 = vmax.f32 %v7743, 0.0
      %v7786 = vmax.f32 %v7748, 0.0
      %7787 = vst.msk [vmem:[%s271] sm:$0xff] %vm308, %v7751
      %7788 = vst.msk [vmem:[%s271 + $0x8] sm:$0xff] %vm308, %v7752
      %7789 = vst.msk [vmem:[%s271 + $0x10] sm:$0xff] %vm308, %v7753
      %7790 = vst.msk [vmem:[%s271 + $0x18] sm:$0xff] %vm308, %v7754
      %7791 = vst.msk [vmem:[%s271 + $0x20] sm:$0xff] %vm308, %v7755
      %7792 = vst.msk [vmem:[%s271 + $0x28] sm:$0xff] %vm308, %v7756
      %7793 = vst.msk [vmem:[%s271 + $0x30] sm:$0xff] %vm308, %v7757
      %7794 = vst.msk [vmem:[%s271 + $0x38] sm:$0xff] %vm308, %v7758
      %7795 = vst.msk [vmem:[%s271 + $0x40] sm:$0xff] %vm308, %v7759
      %7796 = vst.msk [vmem:[%s271 + $0x48] sm:$0xff] %vm308, %v7760
      %7797 = vst.msk [vmem:[%s271 + $0x50] sm:$0xff] %vm308, %v7761
      %7798 = vst.msk [vmem:[%s271 + $0x58] sm:$0xff] %vm308, %v7762
      %7799 = vst.msk [vmem:[%s271 + $0x60] sm:$0xff] %vm308, %v7763
      %7800 = vst.msk [vmem:[%s271 + $0x68] sm:$0xff] %vm308, %v7764
      %7801 = vst.msk [vmem:[%s271 + $0x70] sm:$0xff] %vm308, %v7765
      %7802 = vst.msk [vmem:[%s271 + $0x78] sm:$0xff] %vm308, %v7766
      %7803 = vst.msk [vmem:[%s271 + $0x80] sm:$0xff] %vm308, %v7767
      %7804 = vst.msk [vmem:[%s271 + $0x88] sm:$0xff] %vm308, %v7768
      %7805 = vst.msk [vmem:[%s271 + $0x90] sm:$0xff] %vm308, %v7769
      %7806 = vst.msk [vmem:[%s271 + $0x98] sm:$0xff] %vm308, %v7770
      %7807 = vst.msk [vmem:[%s271 + $0xa0] sm:$0xff] %vm308, %v7771
      %7808 = vst.msk [vmem:[%s271 + $0xa8] sm:$0xff] %vm308, %v7772
      %7809 = vst.msk [vmem:[%s271 + $0xb0] sm:$0xff] %vm308, %v7773
      %7810 = vst.msk [vmem:[%s271 + $0xb8] sm:$0xff] %vm308, %v7774
      %7811 = vst.msk [vmem:[%s271 + $0xc0] sm:$0xff] %vm308, %v7775
      %7812 = vst.msk [vmem:[%s271 + $0xc8] sm:$0xff] %vm308, %v7776
      %7813 = vst.msk [vmem:[%s271 + $0xd0] sm:$0xff] %vm308, %v7777
      %7814 = vst.msk [vmem:[%s271 + $0xd8] sm:$0xff] %vm308, %v7778
      %7815 = vst.msk [vmem:[%s271 + $0xe0] sm:$0xff] %vm308, %v7779
      %7816 = vst.msk [vmem:[%s271 + $0xe8] sm:$0xff] %vm308, %v7780
      %7817 = vst.msk [vmem:[%s271 + $0xf0] sm:$0xff] %vm308, %v7781
      %7818 = vst.msk [vmem:[%s271 + $0xf8] sm:$0xff] %vm308, %v7782
      %7819 = vst.msk [vmem:[%s271 + $0x100] sm:$0xff] %vm308, %v7783
      %7820 = vst.msk [vmem:[%s271 + $0x108] sm:$0xff] %vm308, %v7784
      %7821 = vst.msk [vmem:[%s271 + $0x110] sm:$0xff] %vm308, %v7785
      %7822 = vst.msk [vmem:[%s271 + $0x118] sm:$0xff] %vm308, %v7786
      %p7823 = scmp.lt.s32.totalorder %s17, 1
      %s7824 = scalar_select %p7823, %s17, 1
      %s7825 = smul.addr %s7824, 36
      %s7826 = smul.addr %s7825, 8
      %s7827 = scalar_lea.vmem %s6, %s7826
      // Predicated region
      $region45: #{unet_decoder_block_forward.3} parent=43 // pred_check
        %p7828 = pneg %p171
      $region46: #{unet_decoder_block_forward.3} parent=43 // pred_check_branch
        %7830 = sbr.rel (%p7828) target = $region48
      $region47: #{unet_decoder_block_forward.3} parent=43 // pred_region
        _
      $region48: #{unet_decoder_block_forward.3} parent=43 // pred_fallthru
        _
    $region44: #{unet_decoder_block_forward.3} parent=5 // pred_fallthru
      _
    %p7831 = scmp.le.s32.totalorder 2, %s12
    // Predicated region
    $region49: #{unet_decoder_block_forward.3} parent=5 // pred_check
      %p7832 = pneg %p7831
    $region50: #{unet_decoder_block_forward.3} parent=5 // pred_check_branch
      %7834 = sbr.rel (%p7832) target = $region52
    $region51: #{unet_decoder_block_forward.3} parent=5 // pred_region
      %s7835 = ssub.s32 %s12, 2
      // Predicated region
      $region53: #{unet_decoder_block_forward.3} parent=51 // pred_check
        %p7836 = pneg %p177
      $region54: #{unet_decoder_block_forward.3} parent=51 // pred_check_branch
        %7838 = sbr.rel (%p7836) target = $region56
      $region55: #{unet_decoder_block_forward.3} parent=51 // pred_region
        %p7839 = scmp.lt.s32.totalorder %s18, 1
        %s7840 = scalar_select %p7839, %s18, 1
        %s7841 = smul.addr %s7840, 36
        %s7842 = smul.addr %s7841, 8
        %s7843 = scalar_lea.vmem %s6, %s7842
      $region56: #{unet_decoder_block_forward.3} parent=51 // pred_fallthru
        _
    $region52: #{unet_decoder_block_forward.3} parent=5 // pred_fallthru
      _
  $region6: #{unet_decoder_block_forward.3} parent=0 // loop_footer
    %s16 = sadd.s32 1, %s12
  $region7: #{unet_decoder_block_forward.3} parent=0 // loop_footer_branch
    %11 = sbr.rel target = $region3
  $region8: #{unet_decoder_block_forward.3} parent=0 // loop_exit
    _

</llo_original>
